<compile_context>
chip_gen: v5e
topology: v5e:2x2
jax: 0.10.0
libtpu: 0.0.40
codegen_flags: <defaults>
</compile_context>

<pallas_src>
import math
from functools import partial

import jax
import jax.numpy as jnp
from jax.experimental import pallas as pl
from jax.experimental.pallas import tpu as pltpu

BN_EPS = 1e-5
KERNEL_SIZE = 3          # resnet20 uses 3x3 convs; padding=1 is hardcoded in the module
NUM_CLASSES = 10
NUM_BLOCKS = (3, 3, 3)   # resnet20
VMEM_LIMIT = 32 * 1024 * 1024  # safe on v5e/v6e/v7x; tiles are far below this


# ---------------------------------------------------------------------------
# Pallas kernels
# ---------------------------------------------------------------------------
def conv_stats_kernel(p_ref, w_ref, y_ref, stats_ref):
    """One M-tile of the im2col conv matmul + per-tile BN partial sums.

    p_ref     : [TM, K]       bf16 im2col patches tile
    w_ref     : [K, Cout]     f32 conv weight (cast to bf16 for the MXU)
    y_ref     : [TM, Cout]    f32 conv output tile (pre-BN)
    stats_ref : [1, 2, Cout]  f32 per-tile (sum, sum-of-squares) over rows
    """
    y = jnp.dot(p_ref[...].astype(jnp.bfloat16),
                w_ref[...].astype(jnp.bfloat16),
                preferred_element_type=jnp.float32)
    y_ref[...] = y
    stats_ref[0, 0:1, :] = jnp.sum(y, axis=0, keepdims=True)
    stats_ref[0, 1:2, :] = jnp.sum(y * y, axis=0, keepdims=True)


def bn_apply_kernel(y_ref, scale_ref, shift_ref, *rest, relu: bool, has_res: bool):
    """(y * scale + shift) (+ residual) (ReLU) for one M-tile.

    y_ref     : [TM, Cout] f32     pre-BN conv output tile
    scale_ref : [1, Cout]  f32     gamma / sqrt(var + eps)
    shift_ref : [1, Cout]  f32     beta - mean * scale
    r_ref     : [TM, Cout] bf16    (optional residual, added after BN)
    o_ref     : [TM, Cout] bf16
    """
    if has_res:
        r_ref, o_ref = rest
    else:
        (o_ref,) = rest
    y = y_ref[...] * scale_ref[...] + shift_ref[...]
    if has_res:
        y = y + r_ref[...].astype(jnp.float32)
    if relu:
        y = jnp.maximum(y, 0.0)
    o_ref[...] = y.astype(o_ref.dtype)


def head_kernel(x_ref, w_ref, b_ref, o_ref):
    """Global average pool over the spatial axis + Linear (tiny, fits VMEM whole).

    x_ref : [N, H*W, C] bf16
    w_ref : [C, num_classes] f32
    b_ref : [1, num_classes] f32
    o_ref : [N, num_classes] f32
    """
    pooled = jnp.mean(x_ref[...].astype(jnp.float32), axis=1)  # [N, C]
    o_ref[...] = (
        jnp.dot(pooled.astype(jnp.bfloat16), w_ref[...].astype(jnp.bfloat16),
                preferred_element_type=jnp.float32)
        + b_ref[...]
    )


# ---------------------------------------------------------------------------
# Glue: im2col, padding helpers, fused conv+BN wrapper
# ---------------------------------------------------------------------------
def _im2col(x, kh, kw, stride, pad):
    """x: [N,H,W,C] -> patches [N*Ho*Wo, kh*kw*C] (same dtype), plus (Ho, Wo).

    kh/kw/stride/pad are Python ints (static), so this traces cleanly under jit.
    """
    n, h, w, c = x.shape
    xp = jnp.pad(x, ((0, 0), (pad, pad), (pad, pad), (0, 0)))
    ho = (h + 2 * pad - kh) // stride + 1
    wo = (w + 2 * pad - kw) // stride + 1
    cols = []
    for i in range(kh):
        for j in range(kw):
            cols.append(xp[:, i:i + ho * stride:stride, j:j + wo * stride:stride, :])
    patches = jnp.stack(cols, axis=3)                 # [N, Ho, Wo, kh*kw, C]
    patches = patches.reshape(n * ho * wo, kh * kw * c)
    return patches, ho, wo


def _round_up(x, m):
    return ((x + m - 1) // m) * m


def _pad_rows(a, m_pad):
    m = a.shape[0]
    if m_pad == m:
        return a
    return jnp.pad(a, ((0, m_pad - m), (0, 0)))


def conv_bn(x, p, *, stride, kh=KERNEL_SIZE, kw=KERNEL_SIZE, pad=1,
            residual=None, relu=True, tm=512):
    """Conv (im2col matmul) + BatchNorm (batch stats) [+ residual] [+ ReLU].

    x        : [N, H, W, Cin]  bf16 activations
    p        : {'w': [kh*kw*Cin, Cout] f32, 'gamma': [Cout], 'beta': [Cout]}
    residual : optional [N, Ho, Wo, Cout] added after BN (before ReLU)
    returns  : [N, Ho, Wo, Cout] bf16
    """
    n = x.shape[0]
    patches, ho, wo = _im2col(x, kh, kw, stride, pad)
    m, k = patches.shape
    cout = p["w"].shape[1]

    tm = min(tm, _round_up(m, 8))
    m_pad = _round_up(m, tm)
    num_tiles = m_pad // tm
    patches = _pad_rows(patches, m_pad)

    cparams = pltpu.CompilerParams(
        dimension_semantics=("parallel",),
        vmem_limit_bytes=VMEM_LIMIT,
    )

    # ---- Pass 1: tiled MXU matmul + per-tile BN partial sums (parallel grid).
    y, stats = pl.pallas_call(
        conv_stats_kernel,
        out_shape=(
            jax.ShapeDtypeStruct((m_pad, cout), jnp.float32),
            jax.ShapeDtypeStruct((num_tiles, 2, cout), jnp.float32),
        ),
        grid=(num_tiles,),
        in_specs=[
            pl.BlockSpec((tm, k), lambda i: (i, 0)),
            pl.BlockSpec((k, cout), lambda i: (0, 0)),
        ],
        out_specs=(
            pl.BlockSpec((tm, cout), lambda i: (i, 0)),
            pl.BlockSpec((1, 2, cout), lambda i: (i, 0, 0)),
        ),
        compiler_params=cparams,
    )(patches, p["w"])

    # ---- Finish BN reduction over the FULL M outside the kernel (tiny vectors).
    # Zero-padded rows contribute nothing to sum/sumsq, so divide by the true M.
    col_sum = jnp.sum(stats[:, 0, :], axis=0)
    col_sqsum = jnp.sum(stats[:, 1, :], axis=0)
    mean = col_sum / m
    var = jnp.maximum(col_sqsum / m - mean * mean, 0.0)   # biased var (train fwd)
    scale = p["gamma"] * jax.lax.rsqrt(var + BN_EPS)
    shift = p["beta"] - mean * scale

    inputs = [y, scale.reshape(1, cout), shift.reshape(1, cout)]
    in_specs = [
        pl.BlockSpec((tm, cout), lambda i: (i, 0)),
        pl.BlockSpec((1, cout), lambda i: (0, 0)),
        pl.BlockSpec((1, cout), lambda i: (0, 0)),
    ]
    has_res = residual is not None
    if has_res:
        inputs.append(_pad_rows(residual.reshape(m, cout), m_pad))
        in_specs.append(pl.BlockSpec((tm, cout), lambda i: (i, 0)))

    # ---- Pass 2: tiled BN apply (+ residual, + ReLU), parallel grid.
    out = pl.pallas_call(
        partial(bn_apply_kernel, relu=relu, has_res=has_res),
        out_shape=jax.ShapeDtypeStruct((m_pad, cout), jnp.bfloat16),
        grid=(num_tiles,),
        in_specs=in_specs,
        out_specs=pl.BlockSpec((tm, cout), lambda i: (i, 0)),
        compiler_params=cparams,
    )(*inputs)

    return out[:m].reshape(n, ho, wo, cout)


def pad_and_subsample(x, planes):
    """Option-'A' shortcut (PadAndSubsample) in NHWC:
    x[:, ::2, ::2, :] then zero channel-pad planes//4 on each side."""
    x = x[:, ::2, ::2, :]
    cpad = planes // 4
    return jnp.pad(x, ((0, 0), (0, 0), (0, 0), (cpad, cpad)))


def head(x, p):
    """x: [N,H,W,C] bf16 -> logits [N, num_classes] f32."""
    n, h, w, c = x.shape
    nc = p["w"].shape[1]
    vmem = pl.BlockSpec(memory_space=pltpu.MemorySpace.VMEM)
    return pl.pallas_call(
        head_kernel,
        out_shape=jax.ShapeDtypeStruct((n, nc), jnp.float32),
        in_specs=[vmem, vmem, vmem],
        out_specs=vmem,
        compiler_params=pltpu.CompilerParams(vmem_limit_bytes=VMEM_LIMIT),
    )(x.reshape(n, h * w, c), p["w"], p["b"].reshape(1, -1))


# ---------------------------------------------------------------------------
# Static architecture description (kept OUT of the jitted params pytree so
# strides / kernel sizes stay Python ints — fixes the TracerIntegerConversion).
# ---------------------------------------------------------------------------
def _block_configs(num_blocks=NUM_BLOCKS):
    cfgs = []
    in_planes = 16
    for li, (planes, stride0) in enumerate(zip((16, 32, 64), (1, 2, 2))):
        strides = [stride0] + [1] * (num_blocks[li] - 1)
        for bi, s in enumerate(strides):
            cfgs.append(dict(
                name=f"layer{li + 1}_block{bi}",
                in_planes=in_planes, planes=planes, stride=s,
                pad_shortcut=(s != 1 or in_planes != planes),
            ))
            in_planes = planes
    return cfgs


# ---------------------------------------------------------------------------
# Parameter initialization (shapes / init match the PyTorch weights_init)
# ---------------------------------------------------------------------------
def _xavier_normal(key, shape, fan_in, fan_out):
    std = math.sqrt(2.0 / (fan_in + fan_out))
    return std * jax.random.normal(key, shape, dtype=jnp.float32)


def _make_conv_bn_params(key, cin, cout, k):
    kw_, kg = jax.random.split(key)
    # Conv2d weight stored directly in im2col-matmul layout [k*k*cin, cout];
    # xavier_normal fans match nn.Conv2d: fan_in=cin*k*k, fan_out=cout*k*k.
    w = _xavier_normal(kw_, (k * k * cin, cout), cin * k * k, cout * k * k)
    gamma = 1.0 + 0.02 * jax.random.normal(kg, (cout,), dtype=jnp.float32)  # N(1, 0.02)
    beta = jnp.zeros((cout,), dtype=jnp.float32)
    return {"w": w, "gamma": gamma, "beta": beta}


def init_params(key, num_classes=NUM_CLASSES, k=KERNEL_SIZE):
    keys = iter(jax.random.split(key, 64))
    params = {"conv1": _make_conv_bn_params(next(keys), 3, 16, k)}
    for cfg in _block_configs():
        params[cfg["name"]] = {
            "c1": _make_conv_bn_params(next(keys), cfg["in_planes"], cfg["planes"], k),
            "c2": _make_conv_bn_params(next(keys), cfg["planes"], cfg["planes"], k),
        }
    kw_, kb = jax.random.split(next(keys))
    params["linear"] = {
        "w": _xavier_normal(kw_, (64, num_classes), 64, num_classes),
        "b": jax.random.normal(kb, (num_classes,), dtype=jnp.float32),
    }
    return params


# ---------------------------------------------------------------------------
# Forward pass (mirrors ResNet.forward with BasicBlock, option-'A' shortcuts)
# ---------------------------------------------------------------------------
def resnet_forward(params, x_nchw):
    x = jnp.transpose(x_nchw, (0, 2, 3, 1)).astype(jnp.bfloat16)  # NCHW -> NHWC

    # out = relu(bn1(conv1(x)))
    out = conv_bn(x, params["conv1"], stride=1, relu=True)

    for cfg in _block_configs():
        blk = params[cfg["name"]]
        identity = out
        # out = relu(bn1(conv1(x)))
        h = conv_bn(out, blk["c1"], stride=cfg["stride"], relu=True)
        # shortcut: identity, or PadAndSubsample (option 'A') when shape changes
        shortcut = pad_and_subsample(identity, cfg["planes"]) if cfg["pad_shortcut"] else identity
        # out = relu(bn2(conv2(h)) + shortcut)
        out = conv_bn(h, blk["c2"], stride=1, residual=shortcut, relu=True)

    # global avg pool + linear
    return head(out, params["linear"])


# ---------------------------------------------------------------------------
if __name__ == "__main__":
    key = jax.random.PRNGKey(0)
    pkey, xkey = jax.random.split(key)

    params = init_params(pkey)

    # CINIC-10-shaped input (NCHW like the PyTorch module): batch=2, 3x32x32.
    x = jax.random.normal(xkey, (2, 3, 32, 32), dtype=jnp.float32)

    logits = jax.jit(resnet_forward)(params, x)
    jax.block_until_ready(logits)

    assert logits.shape == (2, 10)
    assert bool(jnp.all(jnp.isfinite(logits)))
    print("KERNEL_OK")
</pallas_src>

<mosaic_0001>
module attributes {stable_mosaic.version = 11 : i64} {
  func.func @conv_stats_kernel(%arg0: i32, %arg1: memref<512x27xbf16, #tpu.memory_space<vmem>>, %arg2: memref<27x16xf32, #tpu.memory_space<vmem>>, %arg3: memref<512x16xf32, #tpu.memory_space<vmem>>, %arg4: memref<1x2x16xf32, #tpu.memory_space<vmem>>) attributes {dimension_semantics = [#tpu.dimension_semantics<parallel>], iteration_bounds = array<i64: 4>, scalar_prefetch = 0 : i64, scratch_operands = 0 : i64, tpu.core_type = #tpu.core_type<tc>, window_params = [{transform_indices = @transform_0, window_bounds = array<i64: 512, 27>}, {pipeline_mode = #tpu.pipeline_mode<synchronous>, transform_indices = @transform_1, window_bounds = array<i64: 27, 16>}, {transform_indices = @transform_2, window_bounds = array<i64: 512, 16>}, {transform_indices = @transform_3, window_bounds = array<i64: 1, 2, 16>}]} {
    %c0 = arith.constant 0 : index
    %c0_0 = arith.constant 0 : index
    %0 = vector.load %arg1[%c0, %c0_0] : memref<512x27xbf16, #tpu.memory_space<vmem>>, vector<512x27xbf16>
    %c0_1 = arith.constant 0 : index
    %c0_2 = arith.constant 0 : index
    %1 = vector.load %arg2[%c0_1, %c0_2] : memref<27x16xf32, #tpu.memory_space<vmem>>, vector<27x16xf32>
    %2 = arith.truncf %1 : vector<27x16xf32> to vector<27x16xbf16>
    %cst = arith.constant dense<0.000000e+00> : vector<512x16xf32>
    %3 = tpu.matmul %0, %2, %cst {dimension_numbers = #tpu.dot_dimension_numbers<[1], [0], [0], [1], [0, 0, 1, 1], [], []>} : vector<512x27xbf16>, vector<27x16xbf16>, vector<512x16xf32> -> vector<512x16xf32>
    %c0_3 = arith.constant 0 : index
    %c0_4 = arith.constant 0 : index
    %4 = vector.load %arg3[%c0_3, %c0_4] : memref<512x16xf32, #tpu.memory_space<vmem>>, vector<512x16xf32>
    tpu.vector_store %arg3[%c0_3, %c0_4], %3 {strides = array<i32>} : memref<512x16xf32, #tpu.memory_space<vmem>>, vector<512x16xf32>,
    %cst_5 = arith.constant dense<0.000000e+00> : vector<16xf32>
    %5 = vector.multi_reduction <add>, %3, %cst_5 [0] : vector<512x16xf32> to vector<16xf32>
    %6 = vector.shape_cast %5 : vector<16xf32> to vector<1x16xf32>
    %c0_6 = arith.constant 0 : index
    %c0_7 = arith.constant 0 : index
    %c0_8 = arith.constant 0 : index
    %7 = vector.load %arg4[%c0_6, %c0_7, %c0_8] : memref<1x2x16xf32, #tpu.memory_space<vmem>>, vector<1x1x16xf32>
    %8 = vector.shape_cast %7 : vector<1x1x16xf32> to vector<1x16xf32>
    %9 = vector.shape_cast %6 : vector<1x16xf32> to vector<1x1x16xf32>
    tpu.vector_store %arg4[%c0_6, %c0_7, %c0_8], %9 {strides = array<i32>} : memref<1x2x16xf32, #tpu.memory_space<vmem>>, vector<1x1x16xf32>,
    %10 = arith.mulf %3, %3 : vector<512x16xf32>
    %cst_9 = arith.constant dense<0.000000e+00> : vector<16xf32>
    %11 = vector.multi_reduction <add>, %10, %cst_9 [0] : vector<512x16xf32> to vector<16xf32>
    %12 = vector.shape_cast %11 : vector<16xf32> to vector<1x16xf32>
    %c0_10 = arith.constant 0 : index
    %c1 = arith.constant 1 : index
    %c0_11 = arith.constant 0 : index
    %13 = vector.load %arg4[%c0_10, %c1, %c0_11] : memref<1x2x16xf32, #tpu.memory_space<vmem>>, vector<1x1x16xf32>
    %14 = vector.shape_cast %13 : vector<1x1x16xf32> to vector<1x16xf32>
    %15 = vector.shape_cast %12 : vector<1x16xf32> to vector<1x1x16xf32>
    tpu.vector_store %arg4[%c0_10, %c1, %c0_11], %15 {strides = array<i32>} : memref<1x2x16xf32, #tpu.memory_space<vmem>>, vector<1x1x16xf32>,
    return
  }
  func.func @transform_0(%arg0: i32) -> (i32, i32) {
    %c0_i32 = arith.constant 0 : i32
    %c0_i32_0 = arith.constant 0 : i32
    return %arg0, %c0_i32 : i32, i32
  }
  func.func @transform_1(%arg0: i32) -> (i32, i32) {
    %c0_i32 = arith.constant 0 : i32
    %c0_i32_0 = arith.constant 0 : i32
    %c0_i32_1 = arith.constant 0 : i32
    return %c0_i32, %c0_i32_0 : i32, i32
  }
  func.func @transform_2(%arg0: i32) -> (i32, i32) {
    %c0_i32 = arith.constant 0 : i32
    %c0_i32_0 = arith.constant 0 : i32
    return %arg0, %c0_i32 : i32, i32
  }
  func.func @transform_3(%arg0: i32) -> (i32, i32, i32) {
    %c0_i32 = arith.constant 0 : i32
    %c0_i32_0 = arith.constant 0 : i32
    %c0_i32_1 = arith.constant 0 : i32
    return %arg0, %c0_i32, %c0_i32_0 : i32, i32, i32
  }
}

module attributes {stable_mosaic.version = 11 : i64} {
  func.func @bn_apply_kernel(%arg0: i32, %arg1: memref<512x16xf32, #tpu.memory_space<vmem>>, %arg2: memref<1x16xf32, #tpu.memory_space<vmem>>, %arg3: memref<1x16xf32, #tpu.memory_space<vmem>>, %arg4: memref<512x16xbf16, #tpu.memory_space<vmem>>) attributes {dimension_semantics = [#tpu.dimension_semantics<parallel>], iteration_bounds = array<i64: 4>, scalar_prefetch = 0 : i64, scratch_operands = 0 : i64, tpu.core_type = #tpu.core_type<tc>, window_params = [{transform_indices = @transform_0, window_bounds = array<i64: 512, 16>}, {pipeline_mode = #tpu.pipeline_mode<synchronous>, transform_indices = @transform_1, window_bounds = array<i64: 1, 16>}, {pipeline_mode = #tpu.pipeline_mode<synchronous>, transform_indices = @transform_2, window_bounds = array<i64: 1, 16>}, {transform_indices = @transform_3, window_bounds = array<i64: 512, 16>}]} {
    %c0 = arith.constant 0 : index
    %c0_0 = arith.constant 0 : index
    %0 = vector.load %arg1[%c0, %c0_0] : memref<512x16xf32, #tpu.memory_space<vmem>>, vector<512x16xf32>
    %c0_1 = arith.constant 0 : index
    %c0_2 = arith.constant 0 : index
    %1 = vector.load %arg2[%c0_1, %c0_2] : memref<1x16xf32, #tpu.memory_space<vmem>>, vector<1x16xf32>
    %2 = vector.broadcast %1 : vector<1x16xf32> to vector<512x16xf32>
    %3 = arith.mulf %0, %2 : vector<512x16xf32>
    %c0_3 = arith.constant 0 : index
    %c0_4 = arith.constant 0 : index
    %4 = vector.load %arg3[%c0_3, %c0_4] : memref<1x16xf32, #tpu.memory_space<vmem>>, vector<1x16xf32>
    %5 = vector.broadcast %4 : vector<1x16xf32> to vector<512x16xf32>
    %6 = arith.addf %3, %5 : vector<512x16xf32>
    %cst = arith.constant 0.000000e+00 : f32
    %7 = vector.broadcast %cst : f32 to vector<512x16xf32>
    %8 = arith.maximumf %6, %7 : vector<512x16xf32>
    %9 = arith.truncf %8 : vector<512x16xf32> to vector<512x16xbf16>
    %c0_5 = arith.constant 0 : index
    %c0_6 = arith.constant 0 : index
    %10 = vector.load %arg4[%c0_5, %c0_6] : memref<512x16xbf16, #tpu.memory_space<vmem>>, vector<512x16xbf16>
    tpu.vector_store %arg4[%c0_5, %c0_6], %9 {strides = array<i32>} : memref<512x16xbf16, #tpu.memory_space<vmem>>, vector<512x16xbf16>,
    return
  }
  func.func @transform_0(%arg0: i32) -> (i32, i32) {
    %c0_i32 = arith.constant 0 : i32
    %c0_i32_0 = arith.constant 0 : i32
    return %arg0, %c0_i32 : i32, i32
  }
  func.func @transform_1(%arg0: i32) -> (i32, i32) {
    %c0_i32 = arith.constant 0 : i32
    %c0_i32_0 = arith.constant 0 : i32
    %c0_i32_1 = arith.constant 0 : i32
    return %c0_i32, %c0_i32_0 : i32, i32
  }
  func.func @transform_2(%arg0: i32) -> (i32, i32) {
    %c0_i32 = arith.constant 0 : i32
    %c0_i32_0 = arith.constant 0 : i32
    %c0_i32_1 = arith.constant 0 : i32
    return %c0_i32, %c0_i32_0 : i32, i32
  }
  func.func @transform_3(%arg0: i32) -> (i32, i32) {
    %c0_i32 = arith.constant 0 : i32
    %c0_i32_0 = arith.constant 0 : i32
    return %arg0, %c0_i32 : i32, i32
  }
}

module attributes {stable_mosaic.version = 11 : i64} {
  func.func @conv_stats_kernel(%arg0: i32, %arg1: memref<512x144xbf16, #tpu.memory_space<vmem>>, %arg2: memref<144x16xf32, #tpu.memory_space<vmem>>, %arg3: memref<512x16xf32, #tpu.memory_space<vmem>>, %arg4: memref<1x2x16xf32, #tpu.memory_space<vmem>>) attributes {dimension_semantics = [#tpu.dimension_semantics<parallel>], iteration_bounds = array<i64: 4>, scalar_prefetch = 0 : i64, scratch_operands = 0 : i64, tpu.core_type = #tpu.core_type<tc>, window_params = [{transform_indices = @transform_0, window_bounds = array<i64: 512, 144>}, {pipeline_mode = #tpu.pipeline_mode<synchronous>, transform_indices = @transform_1, window_bounds = array<i64: 144, 16>}, {transform_indices = @transform_2, window_bounds = array<i64: 512, 16>}, {transform_indices = @transform_3, window_bounds = array<i64: 1, 2, 16>}]} {
    %c0 = arith.constant 0 : index
    %c0_0 = arith.constant 0 : index
    %0 = vector.load %arg1[%c0, %c0_0] : memref<512x144xbf16, #tpu.memory_space<vmem>>, vector<512x144xbf16>
    %c0_1 = arith.constant 0 : index
    %c0_2 = arith.constant 0 : index
    %1 = vector.load %arg2[%c0_1, %c0_2] : memref<144x16xf32, #tpu.memory_space<vmem>>, vector<144x16xf32>
    %2 = arith.truncf %1 : vector<144x16xf32> to vector<144x16xbf16>
    %cst = arith.constant dense<0.000000e+00> : vector<512x16xf32>
    %3 = tpu.matmul %0, %2, %cst {dimension_numbers = #tpu.dot_dimension_numbers<[1], [0], [0], [1], [0, 0, 1, 1], [], []>} : vector<512x144xbf16>, vector<144x16xbf16>, vector<512x16xf32> -> vector<512x16xf32>
    %c0_3 = arith.constant 0 : index
    %c0_4 = arith.constant 0 : index
    %4 = vector.load %arg3[%c0_3, %c0_4] : memref<512x16xf32, #tpu.memory_space<vmem>>, vector<512x16xf32>
    tpu.vector_store %arg3[%c0_3, %c0_4], %3 {strides = array<i32>} : memref<512x16xf32, #tpu.memory_space<vmem>>, vector<512x16xf32>,
    %cst_5 = arith.constant dense<0.000000e+00> : vector<16xf32>
    %5 = vector.multi_reduction <add>, %3, %cst_5 [0] : vector<512x16xf32> to vector<16xf32>
    %6 = vector.shape_cast %5 : vector<16xf32> to vector<1x16xf32>
    %c0_6 = arith.constant 0 : index
    %c0_7 = arith.constant 0 : index
    %c0_8 = arith.constant 0 : index
    %7 = vector.load %arg4[%c0_6, %c0_7, %c0_8] : memref<1x2x16xf32, #tpu.memory_space<vmem>>, vector<1x1x16xf32>
    %8 = vector.shape_cast %7 : vector<1x1x16xf32> to vector<1x16xf32>
    %9 = vector.shape_cast %6 : vector<1x16xf32> to vector<1x1x16xf32>
    tpu.vector_store %arg4[%c0_6, %c0_7, %c0_8], %9 {strides = array<i32>} : memref<1x2x16xf32, #tpu.memory_space<vmem>>, vector<1x1x16xf32>,
    %10 = arith.mulf %3, %3 : vector<512x16xf32>
    %cst_9 = arith.constant dense<0.000000e+00> : vector<16xf32>
    %11 = vector.multi_reduction <add>, %10, %cst_9 [0] : vector<512x16xf32> to vector<16xf32>
    %12 = vector.shape_cast %11 : vector<16xf32> to vector<1x16xf32>
    %c0_10 = arith.constant 0 : index
    %c1 = arith.constant 1 : index
    %c0_11 = arith.constant 0 : index
    %13 = vector.load %arg4[%c0_10, %c1, %c0_11] : memref<1x2x16xf32, #tpu.memory_space<vmem>>, vector<1x1x16xf32>
    %14 = vector.shape_cast %13 : vector<1x1x16xf32> to vector<1x16xf32>
    %15 = vector.shape_cast %12 : vector<1x16xf32> to vector<1x1x16xf32>
    tpu.vector_store %arg4[%c0_10, %c1, %c0_11], %15 {strides = array<i32>} : memref<1x2x16xf32, #tpu.memory_space<vmem>>, vector<1x1x16xf32>,
    return
  }
  func.func @transform_0(%arg0: i32) -> (i32, i32) {
    %c0_i32 = arith.constant 0 : i32
    %c0_i32_0 = arith.constant 0 : i32
    return %arg0, %c0_i32 : i32, i32
  }
  func.func @transform_1(%arg0: i32) -> (i32, i32) {
    %c0_i32 = arith.constant 0 : i32
    %c0_i32_0 = arith.constant 0 : i32
    %c0_i32_1 = arith.constant 0 : i32
    return %c0_i32, %c0_i32_0 : i32, i32
  }
  func.func @transform_2(%arg0: i32) -> (i32, i32) {
    %c0_i32 = arith.constant 0 : i32
    %c0_i32_0 = arith.constant 0 : i32
    return %arg0, %c0_i32 : i32, i32
  }
  func.func @transform_3(%arg0: i32) -> (i32, i32, i32) {
    %c0_i32 = arith.constant 0 : i32
    %c0_i32_0 = arith.constant 0 : i32
    %c0_i32_1 = arith.constant 0 : i32
    return %arg0, %c0_i32, %c0_i32_0 : i32, i32, i32
  }
}

module attributes {stable_mosaic.version = 11 : i64} {
  func.func @bn_apply_kernel(%arg0: i32, %arg1: memref<512x16xf32, #tpu.memory_space<vmem>>, %arg2: memref<1x16xf32, #tpu.memory_space<vmem>>, %arg3: memref<1x16xf32, #tpu.memory_space<vmem>>, %arg4: memref<512x16xbf16, #tpu.memory_space<vmem>>, %arg5: memref<512x16xbf16, #tpu.memory_space<vmem>>) attributes {dimension_semantics = [#tpu.dimension_semantics<parallel>], iteration_bounds = array<i64: 4>, scalar_prefetch = 0 : i64, scratch_operands = 0 : i64, tpu.core_type = #tpu.core_type<tc>, window_params = [{transform_indices = @transform_0, window_bounds = array<i64: 512, 16>}, {pipeline_mode = #tpu.pipeline_mode<synchronous>, transform_indices = @transform_1, window_bounds = array<i64: 1, 16>}, {pipeline_mode = #tpu.pipeline_mode<synchronous>, transform_indices = @transform_2, window_bounds = array<i64: 1, 16>}, {transform_indices = @transform_3, window_bounds = array<i64: 512, 16>}, {transform_indices = @transform_4, window_bounds = array<i64: 512, 16>}]} {
    %c0 = arith.constant 0 : index
    %c0_0 = arith.constant 0 : index
    %0 = vector.load %arg1[%c0, %c0_0] : memref<512x16xf32, #tpu.memory_space<vmem>>, vector<512x16xf32>
    %c0_1 = arith.constant 0 : index
    %c0_2 = arith.constant 0 : index
    %1 = vector.load %arg2[%c0_1, %c0_2] : memref<1x16xf32, #tpu.memory_space<vmem>>, vector<1x16xf32>
    %2 = vector.broadcast %1 : vector<1x16xf32> to vector<512x16xf32>
    %3 = arith.mulf %0, %2 : vector<512x16xf32>
    %c0_3 = arith.constant 0 : index
    %c0_4 = arith.constant 0 : index
    %4 = vector.load %arg3[%c0_3, %c0_4] : memref<1x16xf32, #tpu.memory_space<vmem>>, vector<1x16xf32>
    %5 = vector.broadcast %4 : vector<1x16xf32> to vector<512x16xf32>
    %6 = arith.addf %3, %5 : vector<512x16xf32>
    %c0_5 = arith.constant 0 : index
    %c0_6 = arith.constant 0 : index
    %7 = vector.load %arg4[%c0_5, %c0_6] : memref<512x16xbf16, #tpu.memory_space<vmem>>, vector<512x16xbf16>
    %8 = arith.extf %7 : vector<512x16xbf16> to vector<512x16xf32>
    %9 = arith.addf %6, %8 : vector<512x16xf32>
    %cst = arith.constant 0.000000e+00 : f32
    %10 = vector.broadcast %cst : f32 to vector<512x16xf32>
    %11 = arith.maximumf %9, %10 : vector<512x16xf32>
    %12 = arith.truncf %11 : vector<512x16xf32> to vector<512x16xbf16>
    %c0_7 = arith.constant 0 : index
    %c0_8 = arith.constant 0 : index
    %13 = vector.load %arg5[%c0_7, %c0_8] : memref<512x16xbf16, #tpu.memory_space<vmem>>, vector<512x16xbf16>
    tpu.vector_store %arg5[%c0_7, %c0_8], %12 {strides = array<i32>} : memref<512x16xbf16, #tpu.memory_space<vmem>>, vector<512x16xbf16>,
    return
  }
  func.func @transform_0(%arg0: i32) -> (i32, i32) {
    %c0_i32 = arith.constant 0 : i32
    %c0_i32_0 = arith.constant 0 : i32
    return %arg0, %c0_i32 : i32, i32
  }
  func.func @transform_1(%arg0: i32) -> (i32, i32) {
    %c0_i32 = arith.constant 0 : i32
    %c0_i32_0 = arith.constant 0 : i32
    %c0_i32_1 = arith.constant 0 : i32
    return %c0_i32, %c0_i32_0 : i32, i32
  }
  func.func @transform_2(%arg0: i32) -> (i32, i32) {
    %c0_i32 = arith.constant 0 : i32
    %c0_i32_0 = arith.constant 0 : i32
    %c0_i32_1 = arith.constant 0 : i32
    return %c0_i32, %c0_i32_0 : i32, i32
  }
  func.func @transform_3(%arg0: i32) -> (i32, i32) {
    %c0_i32 = arith.constant 0 : i32
    %c0_i32_0 = arith.constant 0 : i32
    return %arg0, %c0_i32 : i32, i32
  }
  func.func @transform_4(%arg0: i32) -> (i32, i32) {
    %c0_i32 = arith.constant 0 : i32
    %c0_i32_0 = arith.constant 0 : i32
    return %arg0, %c0_i32 : i32, i32
  }
}

module attributes {stable_mosaic.version = 11 : i64} {
  func.func @conv_stats_kernel(%arg0: i32, %arg1: memref<512x144xbf16, #tpu.memory_space<vmem>>, %arg2: memref<144x32xf32, #tpu.memory_space<vmem>>, %arg3: memref<512x32xf32, #tpu.memory_space<vmem>>, %arg4: memref<1x2x32xf32, #tpu.memory_space<vmem>>) attributes {dimension_semantics = [#tpu.dimension_semantics<parallel>], iteration_bounds = array<i64: 1>, scalar_prefetch = 0 : i64, scratch_operands = 0 : i64, tpu.core_type = #tpu.core_type<tc>, window_params = [{transform_indices = @transform_0, window_bounds = array<i64: 512, 144>}, {pipeline_mode = #tpu.pipeline_mode<synchronous>, transform_indices = @transform_1, window_bounds = array<i64: 144, 32>}, {transform_indices = @transform_2, window_bounds = array<i64: 512, 32>}, {transform_indices = @transform_3, window_bounds = array<i64: 1, 2, 32>}]} {
    %c0 = arith.constant 0 : index
    %c0_0 = arith.constant 0 : index
    %0 = vector.load %arg1[%c0, %c0_0] : memref<512x144xbf16, #tpu.memory_space<vmem>>, vector<512x144xbf16>
    %c0_1 = arith.constant 0 : index
    %c0_2 = arith.constant 0 : index
    %1 = vector.load %arg2[%c0_1, %c0_2] : memref<144x32xf32, #tpu.memory_space<vmem>>, vector<144x32xf32>
    %2 = arith.truncf %1 : vector<144x32xf32> to vector<144x32xbf16>
    %cst = arith.constant dense<0.000000e+00> : vector<512x32xf32>
    %3 = tpu.matmul %0, %2, %cst {dimension_numbers = #tpu.dot_dimension_numbers<[1], [0], [0], [1], [0, 0, 1, 1], [], []>} : vector<512x144xbf16>, vector<144x32xbf16>, vector<512x32xf32> -> vector<512x32xf32>
    %c0_3 = arith.constant 0 : index
    %c0_4 = arith.constant 0 : index
    %4 = vector.load %arg3[%c0_3, %c0_4] : memref<512x32xf32, #tpu.memory_space<vmem>>, vector<512x32xf32>
    tpu.vector_store %arg3[%c0_3, %c0_4], %3 {strides = array<i32>} : memref<512x32xf32, #tpu.memory_space<vmem>>, vector<512x32xf32>,
    %cst_5 = arith.constant dense<0.000000e+00> : vector<32xf32>
    %5 = vector.multi_reduction <add>, %3, %cst_5 [0] : vector<512x32xf32> to vector<32xf32>
    %6 = vector.shape_cast %5 : vector<32xf32> to vector<1x32xf32>
    %c0_6 = arith.constant 0 : index
    %c0_7 = arith.constant 0 : index
    %c0_8 = arith.constant 0 : index
    %7 = vector.load %arg4[%c0_6, %c0_7, %c0_8] : memref<1x2x32xf32, #tpu.memory_space<vmem>>, vector<1x1x32xf32>
    %8 = vector.shape_cast %7 : vector<1x1x32xf32> to vector<1x32xf32>
    %9 = vector.shape_cast %6 : vector<1x32xf32> to vector<1x1x32xf32>
    tpu.vector_store %arg4[%c0_6, %c0_7, %c0_8], %9 {strides = array<i32>} : memref<1x2x32xf32, #tpu.memory_space<vmem>>, vector<1x1x32xf32>,
    %10 = arith.mulf %3, %3 : vector<512x32xf32>
    %cst_9 = arith.constant dense<0.000000e+00> : vector<32xf32>
    %11 = vector.multi_reduction <add>, %10, %cst_9 [0] : vector<512x32xf32> to vector<32xf32>
    %12 = vector.shape_cast %11 : vector<32xf32> to vector<1x32xf32>
    %c0_10 = arith.constant 0 : index
    %c1 = arith.constant 1 : index
    %c0_11 = arith.constant 0 : index
    %13 = vector.load %arg4[%c0_10, %c1, %c0_11] : memref<1x2x32xf32, #tpu.memory_space<vmem>>, vector<1x1x32xf32>
    %14 = vector.shape_cast %13 : vector<1x1x32xf32> to vector<1x32xf32>
    %15 = vector.shape_cast %12 : vector<1x32xf32> to vector<1x1x32xf32>
    tpu.vector_store %arg4[%c0_10, %c1, %c0_11], %15 {strides = array<i32>} : memref<1x2x32xf32, #tpu.memory_space<vmem>>, vector<1x1x32xf32>,
    return
  }
  func.func @transform_0(%arg0: i32) -> (i32, i32) {
    %c0_i32 = arith.constant 0 : i32
    %c0_i32_0 = arith.constant 0 : i32
    return %arg0, %c0_i32 : i32, i32
  }
  func.func @transform_1(%arg0: i32) -> (i32, i32) {
    %c0_i32 = arith.constant 0 : i32
    %c0_i32_0 = arith.constant 0 : i32
    %c0_i32_1 = arith.constant 0 : i32
    return %c0_i32, %c0_i32_0 : i32, i32
  }
  func.func @transform_2(%arg0: i32) -> (i32, i32) {
    %c0_i32 = arith.constant 0 : i32
    %c0_i32_0 = arith.constant 0 : i32
    return %arg0, %c0_i32 : i32, i32
  }
  func.func @transform_3(%arg0: i32) -> (i32, i32, i32) {
    %c0_i32 = arith.constant 0 : i32
    %c0_i32_0 = arith.constant 0 : i32
    %c0_i32_1 = arith.constant 0 : i32
    return %arg0, %c0_i32, %c0_i32_0 : i32, i32, i32
  }
}

module attributes {stable_mosaic.version = 11 : i64} {
  func.func @bn_apply_kernel(%arg0: i32, %arg1: memref<512x32xf32, #tpu.memory_space<vmem>>, %arg2: memref<1x32xf32, #tpu.memory_space<vmem>>, %arg3: memref<1x32xf32, #tpu.memory_space<vmem>>, %arg4: memref<512x32xbf16, #tpu.memory_space<vmem>>) attributes {dimension_semantics = [#tpu.dimension_semantics<parallel>], iteration_bounds = array<i64: 1>, scalar_prefetch = 0 : i64, scratch_operands = 0 : i64, tpu.core_type = #tpu.core_type<tc>, window_params = [{transform_indices = @transform_0, window_bounds = array<i64: 512, 32>}, {pipeline_mode = #tpu.pipeline_mode<synchronous>, transform_indices = @transform_1, window_bounds = array<i64: 1, 32>}, {pipeline_mode = #tpu.pipeline_mode<synchronous>, transform_indices = @transform_2, window_bounds = array<i64: 1, 32>}, {transform_indices = @transform_3, window_bounds = array<i64: 512, 32>}]} {
    %c0 = arith.constant 0 : index
    %c0_0 = arith.constant 0 : index
    %0 = vector.load %arg1[%c0, %c0_0] : memref<512x32xf32, #tpu.memory_space<vmem>>, vector<512x32xf32>
    %c0_1 = arith.constant 0 : index
    %c0_2 = arith.constant 0 : index
    %1 = vector.load %arg2[%c0_1, %c0_2] : memref<1x32xf32, #tpu.memory_space<vmem>>, vector<1x32xf32>
    %2 = vector.broadcast %1 : vector<1x32xf32> to vector<512x32xf32>
    %3 = arith.mulf %0, %2 : vector<512x32xf32>
    %c0_3 = arith.constant 0 : index
    %c0_4 = arith.constant 0 : index
    %4 = vector.load %arg3[%c0_3, %c0_4] : memref<1x32xf32, #tpu.memory_space<vmem>>, vector<1x32xf32>
    %5 = vector.broadcast %4 : vector<1x32xf32> to vector<512x32xf32>
    %6 = arith.addf %3, %5 : vector<512x32xf32>
    %cst = arith.constant 0.000000e+00 : f32
    %7 = vector.broadcast %cst : f32 to vector<512x32xf32>
    %8 = arith.maximumf %6, %7 : vector<512x32xf32>
    %9 = arith.truncf %8 : vector<512x32xf32> to vector<512x32xbf16>
    %c0_5 = arith.constant 0 : index
    %c0_6 = arith.constant 0 : index
    %10 = vector.load %arg4[%c0_5, %c0_6] : memref<512x32xbf16, #tpu.memory_space<vmem>>, vector<512x32xbf16>
    tpu.vector_store %arg4[%c0_5, %c0_6], %9 {strides = array<i32>} : memref<512x32xbf16, #tpu.memory_space<vmem>>, vector<512x32xbf16>,
    return
  }
  func.func @transform_0(%arg0: i32) -> (i32, i32) {
    %c0_i32 = arith.constant 0 : i32
    %c0_i32_0 = arith.constant 0 : i32
    return %arg0, %c0_i32 : i32, i32
  }
  func.func @transform_1(%arg0: i32) -> (i32, i32) {
    %c0_i32 = arith.constant 0 : i32
    %c0_i32_0 = arith.constant 0 : i32
    %c0_i32_1 = arith.constant 0 : i32
    return %c0_i32, %c0_i32_0 : i32, i32
  }
  func.func @transform_2(%arg0: i32) -> (i32, i32) {
    %c0_i32 = arith.constant 0 : i32
    %c0_i32_0 = arith.constant 0 : i32
    %c0_i32_1 = arith.constant 0 : i32
    return %c0_i32, %c0_i32_0 : i32, i32
  }
  func.func @transform_3(%arg0: i32) -> (i32, i32) {
    %c0_i32 = arith.constant 0 : i32
    %c0_i32_0 = arith.constant 0 : i32
    return %arg0, %c0_i32 : i32, i32
  }
}

module attributes {stable_mosaic.version = 11 : i64} {
  func.func @conv_stats_kernel(%arg0: i32, %arg1: memref<512x288xbf16, #tpu.memory_space<vmem>>, %arg2: memref<288x32xf32, #tpu.memory_space<vmem>>, %arg3: memref<512x32xf32, #tpu.memory_space<vmem>>, %arg4: memref<1x2x32xf32, #tpu.memory_space<vmem>>) attributes {dimension_semantics = [#tpu.dimension_semantics<parallel>], iteration_bounds = array<i64: 1>, scalar_prefetch = 0 : i64, scratch_operands = 0 : i64, tpu.core_type = #tpu.core_type<tc>, window_params = [{transform_indices = @transform_0, window_bounds = array<i64: 512, 288>}, {pipeline_mode = #tpu.pipeline_mode<synchronous>, transform_indices = @transform_1, window_bounds = array<i64: 288, 32>}, {transform_indices = @transform_2, window_bounds = array<i64: 512, 32>}, {transform_indices = @transform_3, window_bounds = array<i64: 1, 2, 32>}]} {
    %c0 = arith.constant 0 : index
    %c0_0 = arith.constant 0 : index
    %0 = vector.load %arg1[%c0, %c0_0] : memref<512x288xbf16, #tpu.memory_space<vmem>>, vector<512x288xbf16>
    %c0_1 = arith.constant 0 : index
    %c0_2 = arith.constant 0 : index
    %1 = vector.load %arg2[%c0_1, %c0_2] : memref<288x32xf32, #tpu.memory_space<vmem>>, vector<288x32xf32>
    %2 = arith.truncf %1 : vector<288x32xf32> to vector<288x32xbf16>
    %cst = arith.constant dense<0.000000e+00> : vector<512x32xf32>
    %3 = tpu.matmul %0, %2, %cst {dimension_numbers = #tpu.dot_dimension_numbers<[1], [0], [0], [1], [0, 0, 1, 1], [], []>} : vector<512x288xbf16>, vector<288x32xbf16>, vector<512x32xf32> -> vector<512x32xf32>
    %c0_3 = arith.constant 0 : index
    %c0_4 = arith.constant 0 : index
    %4 = vector.load %arg3[%c0_3, %c0_4] : memref<512x32xf32, #tpu.memory_space<vmem>>, vector<512x32xf32>
    tpu.vector_store %arg3[%c0_3, %c0_4], %3 {strides = array<i32>} : memref<512x32xf32, #tpu.memory_space<vmem>>, vector<512x32xf32>,
    %cst_5 = arith.constant dense<0.000000e+00> : vector<32xf32>
    %5 = vector.multi_reduction <add>, %3, %cst_5 [0] : vector<512x32xf32> to vector<32xf32>
    %6 = vector.shape_cast %5 : vector<32xf32> to vector<1x32xf32>
    %c0_6 = arith.constant 0 : index
    %c0_7 = arith.constant 0 : index
    %c0_8 = arith.constant 0 : index
    %7 = vector.load %arg4[%c0_6, %c0_7, %c0_8] : memref<1x2x32xf32, #tpu.memory_space<vmem>>, vector<1x1x32xf32>
    %8 = vector.shape_cast %7 : vector<1x1x32xf32> to vector<1x32xf32>
    %9 = vector.shape_cast %6 : vector<1x32xf32> to vector<1x1x32xf32>
    tpu.vector_store %arg4[%c0_6, %c0_7, %c0_8], %9 {strides = array<i32>} : memref<1x2x32xf32, #tpu.memory_space<vmem>>, vector<1x1x32xf32>,
    %10 = arith.mulf %3, %3 : vector<512x32xf32>
    %cst_9 = arith.constant dense<0.000000e+00> : vector<32xf32>
    %11 = vector.multi_reduction <add>, %10, %cst_9 [0] : vector<512x32xf32> to vector<32xf32>
    %12 = vector.shape_cast %11 : vector<32xf32> to vector<1x32xf32>
    %c0_10 = arith.constant 0 : index
    %c1 = arith.constant 1 : index
    %c0_11 = arith.constant 0 : index
    %13 = vector.load %arg4[%c0_10, %c1, %c0_11] : memref<1x2x32xf32, #tpu.memory_space<vmem>>, vector<1x1x32xf32>
    %14 = vector.shape_cast %13 : vector<1x1x32xf32> to vector<1x32xf32>
    %15 = vector.shape_cast %12 : vector<1x32xf32> to vector<1x1x32xf32>
    tpu.vector_store %arg4[%c0_10, %c1, %c0_11], %15 {strides = array<i32>} : memref<1x2x32xf32, #tpu.memory_space<vmem>>, vector<1x1x32xf32>,
    return
  }
  func.func @transform_0(%arg0: i32) -> (i32, i32) {
    %c0_i32 = arith.constant 0 : i32
    %c0_i32_0 = arith.constant 0 : i32
    return %arg0, %c0_i32 : i32, i32
  }
  func.func @transform_1(%arg0: i32) -> (i32, i32) {
    %c0_i32 = arith.constant 0 : i32
    %c0_i32_0 = arith.constant 0 : i32
    %c0_i32_1 = arith.constant 0 : i32
    return %c0_i32, %c0_i32_0 : i32, i32
  }
  func.func @transform_2(%arg0: i32) -> (i32, i32) {
    %c0_i32 = arith.constant 0 : i32
    %c0_i32_0 = arith.constant 0 : i32
    return %arg0, %c0_i32 : i32, i32
  }
  func.func @transform_3(%arg0: i32) -> (i32, i32, i32) {
    %c0_i32 = arith.constant 0 : i32
    %c0_i32_0 = arith.constant 0 : i32
    %c0_i32_1 = arith.constant 0 : i32
    return %arg0, %c0_i32, %c0_i32_0 : i32, i32, i32
  }
}

module attributes {stable_mosaic.version = 11 : i64} {
  func.func @bn_apply_kernel(%arg0: i32, %arg1: memref<512x32xf32, #tpu.memory_space<vmem>>, %arg2: memref<1x32xf32, #tpu.memory_space<vmem>>, %arg3: memref<1x32xf32, #tpu.memory_space<vmem>>, %arg4: memref<512x32xbf16, #tpu.memory_space<vmem>>, %arg5: memref<512x32xbf16, #tpu.memory_space<vmem>>) attributes {dimension_semantics = [#tpu.dimension_semantics<parallel>], iteration_bounds = array<i64: 1>, scalar_prefetch = 0 : i64, scratch_operands = 0 : i64, tpu.core_type = #tpu.core_type<tc>, window_params = [{transform_indices = @transform_0, window_bounds = array<i64: 512, 32>}, {pipeline_mode = #tpu.pipeline_mode<synchronous>, transform_indices = @transform_1, window_bounds = array<i64: 1, 32>}, {pipeline_mode = #tpu.pipeline_mode<synchronous>, transform_indices = @transform_2, window_bounds = array<i64: 1, 32>}, {transform_indices = @transform_3, window_bounds = array<i64: 512, 32>}, {transform_indices = @transform_4, window_bounds = array<i64: 512, 32>}]} {
    %c0 = arith.constant 0 : index
    %c0_0 = arith.constant 0 : index
    %0 = vector.load %arg1[%c0, %c0_0] : memref<512x32xf32, #tpu.memory_space<vmem>>, vector<512x32xf32>
    %c0_1 = arith.constant 0 : index
    %c0_2 = arith.constant 0 : index
    %1 = vector.load %arg2[%c0_1, %c0_2] : memref<1x32xf32, #tpu.memory_space<vmem>>, vector<1x32xf32>
    %2 = vector.broadcast %1 : vector<1x32xf32> to vector<512x32xf32>
    %3 = arith.mulf %0, %2 : vector<512x32xf32>
    %c0_3 = arith.constant 0 : index
    %c0_4 = arith.constant 0 : index
    %4 = vector.load %arg3[%c0_3, %c0_4] : memref<1x32xf32, #tpu.memory_space<vmem>>, vector<1x32xf32>
    %5 = vector.broadcast %4 : vector<1x32xf32> to vector<512x32xf32>
    %6 = arith.addf %3, %5 : vector<512x32xf32>
    %c0_5 = arith.constant 0 : index
    %c0_6 = arith.constant 0 : index
    %7 = vector.load %arg4[%c0_5, %c0_6] : memref<512x32xbf16, #tpu.memory_space<vmem>>, vector<512x32xbf16>
    %8 = arith.extf %7 : vector<512x32xbf16> to vector<512x32xf32>
    %9 = arith.addf %6, %8 : vector<512x32xf32>
    %cst = arith.constant 0.000000e+00 : f32
    %10 = vector.broadcast %cst : f32 to vector<512x32xf32>
    %11 = arith.maximumf %9, %10 : vector<512x32xf32>
    %12 = arith.truncf %11 : vector<512x32xf32> to vector<512x32xbf16>
    %c0_7 = arith.constant 0 : index
    %c0_8 = arith.constant 0 : index
    %13 = vector.load %arg5[%c0_7, %c0_8] : memref<512x32xbf16, #tpu.memory_space<vmem>>, vector<512x32xbf16>
    tpu.vector_store %arg5[%c0_7, %c0_8], %12 {strides = array<i32>} : memref<512x32xbf16, #tpu.memory_space<vmem>>, vector<512x32xbf16>,
    return
  }
  func.func @transform_0(%arg0: i32) -> (i32, i32) {
    %c0_i32 = arith.constant 0 : i32
    %c0_i32_0 = arith.constant 0 : i32
    return %arg0, %c0_i32 : i32, i32
  }
  func.func @transform_1(%arg0: i32) -> (i32, i32) {
    %c0_i32 = arith.constant 0 : i32
    %c0_i32_0 = arith.constant 0 : i32
    %c0_i32_1 = arith.constant 0 : i32
    return %c0_i32, %c0_i32_0 : i32, i32
  }
  func.func @transform_2(%arg0: i32) -> (i32, i32) {
    %c0_i32 = arith.constant 0 : i32
    %c0_i32_0 = arith.constant 0 : i32
    %c0_i32_1 = arith.constant 0 : i32
    return %c0_i32, %c0_i32_0 : i32, i32
  }
  func.func @transform_3(%arg0: i32) -> (i32, i32) {
    %c0_i32 = arith.constant 0 : i32
    %c0_i32_0 = arith.constant 0 : i32
    return %arg0, %c0_i32 : i32, i32
  }
  func.func @transform_4(%arg0: i32) -> (i32, i32) {
    %c0_i32 = arith.constant 0 : i32
    %c0_i32_0 = arith.constant 0 : i32
    return %arg0, %c0_i32 : i32, i32
  }
}

module attributes {stable_mosaic.version = 11 : i64} {
  func.func @conv_stats_kernel(%arg0: i32, %arg1: memref<128x288xbf16, #tpu.memory_space<vmem>>, %arg2: memref<288x64xf32, #tpu.memory_space<vmem>>, %arg3: memref<128x64xf32, #tpu.memory_space<vmem>>, %arg4: memref<1x2x64xf32, #tpu.memory_space<vmem>>) attributes {dimension_semantics = [#tpu.dimension_semantics<parallel>], iteration_bounds = array<i64: 1>, scalar_prefetch = 0 : i64, scratch_operands = 0 : i64, tpu.core_type = #tpu.core_type<tc>, window_params = [{transform_indices = @transform_0, window_bounds = array<i64: 128, 288>}, {pipeline_mode = #tpu.pipeline_mode<synchronous>, transform_indices = @transform_1, window_bounds = array<i64: 288, 64>}, {transform_indices = @transform_2, window_bounds = array<i64: 128, 64>}, {transform_indices = @transform_3, window_bounds = array<i64: 1, 2, 64>}]} {
    %c0 = arith.constant 0 : index
    %c0_0 = arith.constant 0 : index
    %0 = vector.load %arg1[%c0, %c0_0] : memref<128x288xbf16, #tpu.memory_space<vmem>>, vector<128x288xbf16>
    %c0_1 = arith.constant 0 : index
    %c0_2 = arith.constant 0 : index
    %1 = vector.load %arg2[%c0_1, %c0_2] : memref<288x64xf32, #tpu.memory_space<vmem>>, vector<288x64xf32>
    %2 = arith.truncf %1 : vector<288x64xf32> to vector<288x64xbf16>
    %cst = arith.constant dense<0.000000e+00> : vector<128x64xf32>
    %3 = tpu.matmul %0, %2, %cst {dimension_numbers = #tpu.dot_dimension_numbers<[1], [0], [0], [1], [0, 0, 1, 1], [], []>} : vector<128x288xbf16>, vector<288x64xbf16>, vector<128x64xf32> -> vector<128x64xf32>
    %c0_3 = arith.constant 0 : index
    %c0_4 = arith.constant 0 : index
    %4 = vector.load %arg3[%c0_3, %c0_4] : memref<128x64xf32, #tpu.memory_space<vmem>>, vector<128x64xf32>
    tpu.vector_store %arg3[%c0_3, %c0_4], %3 {strides = array<i32>} : memref<128x64xf32, #tpu.memory_space<vmem>>, vector<128x64xf32>,
    %cst_5 = arith.constant dense<0.000000e+00> : vector<64xf32>
    %5 = vector.multi_reduction <add>, %3, %cst_5 [0] : vector<128x64xf32> to vector<64xf32>
    %6 = vector.shape_cast %5 : vector<64xf32> to vector<1x64xf32>
    %c0_6 = arith.constant 0 : index
    %c0_7 = arith.constant 0 : index
    %c0_8 = arith.constant 0 : index
    %7 = vector.load %arg4[%c0_6, %c0_7, %c0_8] : memref<1x2x64xf32, #tpu.memory_space<vmem>>, vector<1x1x64xf32>
    %8 = vector.shape_cast %7 : vector<1x1x64xf32> to vector<1x64xf32>
    %9 = vector.shape_cast %6 : vector<1x64xf32> to vector<1x1x64xf32>
    tpu.vector_store %arg4[%c0_6, %c0_7, %c0_8], %9 {strides = array<i32>} : memref<1x2x64xf32, #tpu.memory_space<vmem>>, vector<1x1x64xf32>,
    %10 = arith.mulf %3, %3 : vector<128x64xf32>
    %cst_9 = arith.constant dense<0.000000e+00> : vector<64xf32>
    %11 = vector.multi_reduction <add>, %10, %cst_9 [0] : vector<128x64xf32> to vector<64xf32>
    %12 = vector.shape_cast %11 : vector<64xf32> to vector<1x64xf32>
    %c0_10 = arith.constant 0 : index
    %c1 = arith.constant 1 : index
    %c0_11 = arith.constant 0 : index
    %13 = vector.load %arg4[%c0_10, %c1, %c0_11] : memref<1x2x64xf32, #tpu.memory_space<vmem>>, vector<1x1x64xf32>
    %14 = vector.shape_cast %13 : vector<1x1x64xf32> to vector<1x64xf32>
    %15 = vector.shape_cast %12 : vector<1x64xf32> to vector<1x1x64xf32>
    tpu.vector_store %arg4[%c0_10, %c1, %c0_11], %15 {strides = array<i32>} : memref<1x2x64xf32, #tpu.memory_space<vmem>>, vector<1x1x64xf32>,
    return
  }
  func.func @transform_0(%arg0: i32) -> (i32, i32) {
    %c0_i32 = arith.constant 0 : i32
    %c0_i32_0 = arith.constant 0 : i32
    return %arg0, %c0_i32 : i32, i32
  }
  func.func @transform_1(%arg0: i32) -> (i32, i32) {
    %c0_i32 = arith.constant 0 : i32
    %c0_i32_0 = arith.constant 0 : i32
    %c0_i32_1 = arith.constant 0 : i32
    return %c0_i32, %c0_i32_0 : i32, i32
  }
  func.func @transform_2(%arg0: i32) -> (i32, i32) {
    %c0_i32 = arith.constant 0 : i32
    %c0_i32_0 = arith.constant 0 : i32
    return %arg0, %c0_i32 : i32, i32
  }
  func.func @transform_3(%arg0: i32) -> (i32, i32, i32) {
    %c0_i32 = arith.constant 0 : i32
    %c0_i32_0 = arith.constant 0 : i32
    %c0_i32_1 = arith.constant 0 : i32
    return %arg0, %c0_i32, %c0_i32_0 : i32, i32, i32
  }
}

module attributes {stable_mosaic.version = 11 : i64} {
  func.func @bn_apply_kernel(%arg0: i32, %arg1: memref<128x64xf32, #tpu.memory_space<vmem>>, %arg2: memref<1x64xf32, #tpu.memory_space<vmem>>, %arg3: memref<1x64xf32, #tpu.memory_space<vmem>>, %arg4: memref<128x64xbf16, #tpu.memory_space<vmem>>) attributes {dimension_semantics = [#tpu.dimension_semantics<parallel>], iteration_bounds = array<i64: 1>, scalar_prefetch = 0 : i64, scratch_operands = 0 : i64, tpu.core_type = #tpu.core_type<tc>, window_params = [{transform_indices = @transform_0, window_bounds = array<i64: 128, 64>}, {pipeline_mode = #tpu.pipeline_mode<synchronous>, transform_indices = @transform_1, window_bounds = array<i64: 1, 64>}, {pipeline_mode = #tpu.pipeline_mode<synchronous>, transform_indices = @transform_2, window_bounds = array<i64: 1, 64>}, {transform_indices = @transform_3, window_bounds = array<i64: 128, 64>}]} {
    %c0 = arith.constant 0 : index
    %c0_0 = arith.constant 0 : index
    %0 = vector.load %arg1[%c0, %c0_0] : memref<128x64xf32, #tpu.memory_space<vmem>>, vector<128x64xf32>
    %c0_1 = arith.constant 0 : index
    %c0_2 = arith.constant 0 : index
    %1 = vector.load %arg2[%c0_1, %c0_2] : memref<1x64xf32, #tpu.memory_space<vmem>>, vector<1x64xf32>
    %2 = vector.broadcast %1 : vector<1x64xf32> to vector<128x64xf32>
    %3 = arith.mulf %0, %2 : vector<128x64xf32>
    %c0_3 = arith.constant 0 : index
    %c0_4 = arith.constant 0 : index
    %4 = vector.load %arg3[%c0_3, %c0_4] : memref<1x64xf32, #tpu.memory_space<vmem>>, vector<1x64xf32>
    %5 = vector.broadcast %4 : vector<1x64xf32> to vector<128x64xf32>
    %6 = arith.addf %3, %5 : vector<128x64xf32>
    %cst = arith.constant 0.000000e+00 : f32
    %7 = vector.broadcast %cst : f32 to vector<128x64xf32>
    %8 = arith.maximumf %6, %7 : vector<128x64xf32>
    %9 = arith.truncf %8 : vector<128x64xf32> to vector<128x64xbf16>
    %c0_5 = arith.constant 0 : index
    %c0_6 = arith.constant 0 : index
    %10 = vector.load %arg4[%c0_5, %c0_6] : memref<128x64xbf16, #tpu.memory_space<vmem>>, vector<128x64xbf16>
    tpu.vector_store %arg4[%c0_5, %c0_6], %9 {strides = array<i32>} : memref<128x64xbf16, #tpu.memory_space<vmem>>, vector<128x64xbf16>,
    return
  }
  func.func @transform_0(%arg0: i32) -> (i32, i32) {
    %c0_i32 = arith.constant 0 : i32
    %c0_i32_0 = arith.constant 0 : i32
    return %arg0, %c0_i32 : i32, i32
  }
  func.func @transform_1(%arg0: i32) -> (i32, i32) {
    %c0_i32 = arith.constant 0 : i32
    %c0_i32_0 = arith.constant 0 : i32
    %c0_i32_1 = arith.constant 0 : i32
    return %c0_i32, %c0_i32_0 : i32, i32
  }
  func.func @transform_2(%arg0: i32) -> (i32, i32) {
    %c0_i32 = arith.constant 0 : i32
    %c0_i32_0 = arith.constant 0 : i32
    %c0_i32_1 = arith.constant 0 : i32
    return %c0_i32, %c0_i32_0 : i32, i32
  }
  func.func @transform_3(%arg0: i32) -> (i32, i32) {
    %c0_i32 = arith.constant 0 : i32
    %c0_i32_0 = arith.constant 0 : i32
    return %arg0, %c0_i32 : i32, i32
  }
}

module attributes {stable_mosaic.version = 11 : i64} {
  func.func @conv_stats_kernel(%arg0: i32, %arg1: memref<128x576xbf16, #tpu.memory_space<vmem>>, %arg2: memref<576x64xf32, #tpu.memory_space<vmem>>, %arg3: memref<128x64xf32, #tpu.memory_space<vmem>>, %arg4: memref<1x2x64xf32, #tpu.memory_space<vmem>>) attributes {dimension_semantics = [#tpu.dimension_semantics<parallel>], iteration_bounds = array<i64: 1>, scalar_prefetch = 0 : i64, scratch_operands = 0 : i64, tpu.core_type = #tpu.core_type<tc>, window_params = [{transform_indices = @transform_0, window_bounds = array<i64: 128, 576>}, {pipeline_mode = #tpu.pipeline_mode<synchronous>, transform_indices = @transform_1, window_bounds = array<i64: 576, 64>}, {transform_indices = @transform_2, window_bounds = array<i64: 128, 64>}, {transform_indices = @transform_3, window_bounds = array<i64: 1, 2, 64>}]} {
    %c0 = arith.constant 0 : index
    %c0_0 = arith.constant 0 : index
    %0 = vector.load %arg1[%c0, %c0_0] : memref<128x576xbf16, #tpu.memory_space<vmem>>, vector<128x576xbf16>
    %c0_1 = arith.constant 0 : index
    %c0_2 = arith.constant 0 : index
    %1 = vector.load %arg2[%c0_1, %c0_2] : memref<576x64xf32, #tpu.memory_space<vmem>>, vector<576x64xf32>
    %2 = arith.truncf %1 : vector<576x64xf32> to vector<576x64xbf16>
    %cst = arith.constant dense<0.000000e+00> : vector<128x64xf32>
    %3 = tpu.matmul %0, %2, %cst {dimension_numbers = #tpu.dot_dimension_numbers<[1], [0], [0], [1], [0, 0, 1, 1], [], []>} : vector<128x576xbf16>, vector<576x64xbf16>, vector<128x64xf32> -> vector<128x64xf32>
    %c0_3 = arith.constant 0 : index
    %c0_4 = arith.constant 0 : index
    %4 = vector.load %arg3[%c0_3, %c0_4] : memref<128x64xf32, #tpu.memory_space<vmem>>, vector<128x64xf32>
    tpu.vector_store %arg3[%c0_3, %c0_4], %3 {strides = array<i32>} : memref<128x64xf32, #tpu.memory_space<vmem>>, vector<128x64xf32>,
    %cst_5 = arith.constant dense<0.000000e+00> : vector<64xf32>
    %5 = vector.multi_reduction <add>, %3, %cst_5 [0] : vector<128x64xf32> to vector<64xf32>
    %6 = vector.shape_cast %5 : vector<64xf32> to vector<1x64xf32>
    %c0_6 = arith.constant 0 : index
    %c0_7 = arith.constant 0 : index
    %c0_8 = arith.constant 0 : index
    %7 = vector.load %arg4[%c0_6, %c0_7, %c0_8] : memref<1x2x64xf32, #tpu.memory_space<vmem>>, vector<1x1x64xf32>
    %8 = vector.shape_cast %7 : vector<1x1x64xf32> to vector<1x64xf32>
    %9 = vector.shape_cast %6 : vector<1x64xf32> to vector<1x1x64xf32>
    tpu.vector_store %arg4[%c0_6, %c0_7, %c0_8], %9 {strides = array<i32>} : memref<1x2x64xf32, #tpu.memory_space<vmem>>, vector<1x1x64xf32>,
    %10 = arith.mulf %3, %3 : vector<128x64xf32>
    %cst_9 = arith.constant dense<0.000000e+00> : vector<64xf32>
    %11 = vector.multi_reduction <add>, %10, %cst_9 [0] : vector<128x64xf32> to vector<64xf32>
    %12 = vector.shape_cast %11 : vector<64xf32> to vector<1x64xf32>
    %c0_10 = arith.constant 0 : index
    %c1 = arith.constant 1 : index
    %c0_11 = arith.constant 0 : index
    %13 = vector.load %arg4[%c0_10, %c1, %c0_11] : memref<1x2x64xf32, #tpu.memory_space<vmem>>, vector<1x1x64xf32>
    %14 = vector.shape_cast %13 : vector<1x1x64xf32> to vector<1x64xf32>
    %15 = vector.shape_cast %12 : vector<1x64xf32> to vector<1x1x64xf32>
    tpu.vector_store %arg4[%c0_10, %c1, %c0_11], %15 {strides = array<i32>} : memref<1x2x64xf32, #tpu.memory_space<vmem>>, vector<1x1x64xf32>,
    return
  }
  func.func @transform_0(%arg0: i32) -> (i32, i32) {
    %c0_i32 = arith.constant 0 : i32
    %c0_i32_0 = arith.constant 0 : i32
    return %arg0, %c0_i32 : i32, i32
  }
  func.func @transform_1(%arg0: i32) -> (i32, i32) {
    %c0_i32 = arith.constant 0 : i32
    %c0_i32_0 = arith.constant 0 : i32
    %c0_i32_1 = arith.constant 0 : i32
    return %c0_i32, %c0_i32_0 : i32, i32
  }
  func.func @transform_2(%arg0: i32) -> (i32, i32) {
    %c0_i32 = arith.constant 0 : i32
    %c0_i32_0 = arith.constant 0 : i32
    return %arg0, %c0_i32 : i32, i32
  }
  func.func @transform_3(%arg0: i32) -> (i32, i32, i32) {
    %c0_i32 = arith.constant 0 : i32
    %c0_i32_0 = arith.constant 0 : i32
    %c0_i32_1 = arith.constant 0 : i32
    return %arg0, %c0_i32, %c0_i32_0 : i32, i32, i32
  }
}

module attributes {stable_mosaic.version = 11 : i64} {
  func.func @bn_apply_kernel(%arg0: i32, %arg1: memref<128x64xf32, #tpu.memory_space<vmem>>, %arg2: memref<1x64xf32, #tpu.memory_space<vmem>>, %arg3: memref<1x64xf32, #tpu.memory_space<vmem>>, %arg4: memref<128x64xbf16, #tpu.memory_space<vmem>>, %arg5: memref<128x64xbf16, #tpu.memory_space<vmem>>) attributes {dimension_semantics = [#tpu.dimension_semantics<parallel>], iteration_bounds = array<i64: 1>, scalar_prefetch = 0 : i64, scratch_operands = 0 : i64, tpu.core_type = #tpu.core_type<tc>, window_params = [{transform_indices = @transform_0, window_bounds = array<i64: 128, 64>}, {pipeline_mode = #tpu.pipeline_mode<synchronous>, transform_indices = @transform_1, window_bounds = array<i64: 1, 64>}, {pipeline_mode = #tpu.pipeline_mode<synchronous>, transform_indices = @transform_2, window_bounds = array<i64: 1, 64>}, {transform_indices = @transform_3, window_bounds = array<i64: 128, 64>}, {transform_indices = @transform_4, window_bounds = array<i64: 128, 64>}]} {
    %c0 = arith.constant 0 : index
    %c0_0 = arith.constant 0 : index
    %0 = vector.load %arg1[%c0, %c0_0] : memref<128x64xf32, #tpu.memory_space<vmem>>, vector<128x64xf32>
    %c0_1 = arith.constant 0 : index
    %c0_2 = arith.constant 0 : index
    %1 = vector.load %arg2[%c0_1, %c0_2] : memref<1x64xf32, #tpu.memory_space<vmem>>, vector<1x64xf32>
    %2 = vector.broadcast %1 : vector<1x64xf32> to vector<128x64xf32>
    %3 = arith.mulf %0, %2 : vector<128x64xf32>
    %c0_3 = arith.constant 0 : index
    %c0_4 = arith.constant 0 : index
    %4 = vector.load %arg3[%c0_3, %c0_4] : memref<1x64xf32, #tpu.memory_space<vmem>>, vector<1x64xf32>
    %5 = vector.broadcast %4 : vector<1x64xf32> to vector<128x64xf32>
    %6 = arith.addf %3, %5 : vector<128x64xf32>
    %c0_5 = arith.constant 0 : index
    %c0_6 = arith.constant 0 : index
    %7 = vector.load %arg4[%c0_5, %c0_6] : memref<128x64xbf16, #tpu.memory_space<vmem>>, vector<128x64xbf16>
    %8 = arith.extf %7 : vector<128x64xbf16> to vector<128x64xf32>
    %9 = arith.addf %6, %8 : vector<128x64xf32>
    %cst = arith.constant 0.000000e+00 : f32
    %10 = vector.broadcast %cst : f32 to vector<128x64xf32>
    %11 = arith.maximumf %9, %10 : vector<128x64xf32>
    %12 = arith.truncf %11 : vector<128x64xf32> to vector<128x64xbf16>
    %c0_7 = arith.constant 0 : index
    %c0_8 = arith.constant 0 : index
    %13 = vector.load %arg5[%c0_7, %c0_8] : memref<128x64xbf16, #tpu.memory_space<vmem>>, vector<128x64xbf16>
    tpu.vector_store %arg5[%c0_7, %c0_8], %12 {strides = array<i32>} : memref<128x64xbf16, #tpu.memory_space<vmem>>, vector<128x64xbf16>,
    return
  }
  func.func @transform_0(%arg0: i32) -> (i32, i32) {
    %c0_i32 = arith.constant 0 : i32
    %c0_i32_0 = arith.constant 0 : i32
    return %arg0, %c0_i32 : i32, i32
  }
  func.func @transform_1(%arg0: i32) -> (i32, i32) {
    %c0_i32 = arith.constant 0 : i32
    %c0_i32_0 = arith.constant 0 : i32
    %c0_i32_1 = arith.constant 0 : i32
    return %c0_i32, %c0_i32_0 : i32, i32
  }
  func.func @transform_2(%arg0: i32) -> (i32, i32) {
    %c0_i32 = arith.constant 0 : i32
    %c0_i32_0 = arith.constant 0 : i32
    %c0_i32_1 = arith.constant 0 : i32
    return %c0_i32, %c0_i32_0 : i32, i32
  }
  func.func @transform_3(%arg0: i32) -> (i32, i32) {
    %c0_i32 = arith.constant 0 : i32
    %c0_i32_0 = arith.constant 0 : i32
    return %arg0, %c0_i32 : i32, i32
  }
  func.func @transform_4(%arg0: i32) -> (i32, i32) {
    %c0_i32 = arith.constant 0 : i32
    %c0_i32_0 = arith.constant 0 : i32
    return %arg0, %c0_i32 : i32, i32
  }
}

module attributes {stable_mosaic.version = 11 : i64} {
  func.func @head_kernel(%arg0: memref<2x64x64xbf16, #tpu.memory_space<vmem>>, %arg1: memref<64x10xf32, #tpu.memory_space<vmem>>, %arg2: memref<1x10xf32, #tpu.memory_space<vmem>>, %arg3: memref<2x10xf32, #tpu.memory_space<vmem>>) attributes {dimension_semantics = [], scalar_prefetch = 0 : i64, scratch_operands = 0 : i64, tpu.core_type = #tpu.core_type<tc>} {
    %c0 = arith.constant 0 : index
    %c0_0 = arith.constant 0 : index
    %c0_1 = arith.constant 0 : index
    %0 = vector.load %arg0[%c0, %c0_0, %c0_1] : memref<2x64x64xbf16, #tpu.memory_space<vmem>>, vector<2x64x64xbf16>
    %1 = arith.extf %0 : vector<2x64x64xbf16> to vector<2x64x64xf32>
    %cst = arith.constant dense<0.000000e+00> : vector<2x64xf32>
    %2 = vector.multi_reduction <add>, %1, %cst [1] : vector<2x64x64xf32> to vector<2x64xf32>
    %cst_2 = arith.constant 6.400000e+01 : f32
    %3 = vector.broadcast %cst_2 : f32 to vector<2x64xf32>
    %4 = arith.divf %2, %3 : vector<2x64xf32>
    %5 = arith.truncf %4 : vector<2x64xf32> to vector<2x64xbf16>
    %c0_3 = arith.constant 0 : index
    %c0_4 = arith.constant 0 : index
    %6 = vector.load %arg1[%c0_3, %c0_4] : memref<64x10xf32, #tpu.memory_space<vmem>>, vector<64x10xf32>
    %7 = arith.truncf %6 : vector<64x10xf32> to vector<64x10xbf16>
    %cst_5 = arith.constant dense<0.000000e+00> : vector<2x10xf32>
    %8 = tpu.matmul %5, %7, %cst_5 {dimension_numbers = #tpu.dot_dimension_numbers<[1], [0], [0], [1], [0, 0, 1, 1], [], []>} : vector<2x64xbf16>, vector<64x10xbf16>, vector<2x10xf32> -> vector<2x10xf32>
    %c0_6 = arith.constant 0 : index
    %c0_7 = arith.constant 0 : index
    %9 = vector.load %arg2[%c0_6, %c0_7] : memref<1x10xf32, #tpu.memory_space<vmem>>, vector<1x10xf32>
    %10 = vector.broadcast %9 : vector<1x10xf32> to vector<2x10xf32>
    %11 = arith.addf %8, %10 : vector<2x10xf32>
    %c0_8 = arith.constant 0 : index
    %c0_9 = arith.constant 0 : index
    %12 = vector.load %arg3[%c0_8, %c0_9] : memref<2x10xf32, #tpu.memory_space<vmem>>, vector<2x10xf32>
    tpu.vector_store %arg3[%c0_8, %c0_9], %11 {strides = array<i32>} : memref<2x10xf32, #tpu.memory_space<vmem>>, vector<2x10xf32>,
    return
  }
}

</mosaic_0001>

<llo_original>
// kernel: resnet_forward.40
$region0: #{resnet_forward.40}
  #allocation0 [shape = 'u32[]', space=smem, size = 0x4, offset = 0x4, fixed_abs, tag = 'smem constant byte address 0x4 - core index']
  #allocation1 [shape = 'u32[72,128]{1,0:T(1,128)}', space=vmem, size = 0x9000, scoped, tag = 'internal scratch']
  %s0 = inlined_call_operand.vmem [shape: f32[2048,16], index: 0, kind: input, shape index: {}]
  %s1 = inlined_call_operand.vmem [shape: f32[1,16], index: 1, kind: input, shape index: {}]
  %s2 = inlined_call_operand.vmem [shape: f32[1,16], index: 2, kind: input, shape index: {}]
  %s3 = inlined_call_operand.vmem [shape: bf16[2048,16], index: 3, kind: output, shape index: {}]
  %s4 = sld [smem:[#allocation0]]
  $region45: #{resnet_forward.40} parent=0
    _
  %s6 = ssub.s32 1, %s4
  %s7 = scalar_select 0, %s6, %s4
  loop: start=0, step=1, limit=6
  $region2: #{resnet_forward.40} parent=0 // loop_pre_header
    _
  $region3: #{resnet_forward.40} parent=0 // loop_header
    %s9 = sphi 0, %s13
    %p10 = scmp.ge.s32.totalorder %s9, 6
    %s19 = sphi 0, %s21
    %s22 = sphi 0, %s19
    %s23 = sphi 0, %s22
    %s39 = sphi 0, %s23
    %s43 = sphi 0, %s43
    %s45 = sphi 0, %s43
    %s46 = sphi 0, %s45
    %s60 = sphi 0, %s46
    %s64 = sphi 0, %s64
    %s66 = sphi 0, %s64
    %s67 = sphi 0, %s66
    %s81 = sphi 0, %s67
    %s87 = sphi 0, %s89
    %s90 = sphi 0, %s87
    %s91 = sphi 0, %s90
    %s107 = sphi 0, %s91
  $region4: #{resnet_forward.40} parent=0 // loop_header_branch
    %12 = sbr.rel (%p10) target = $region8
  $region5: #{resnet_forward.40} parent=0 // loop_body
    %s14 = ssub.s32 %s9, 1
    %s15 = ssub.s32 %s9, 2
    %s16 = sadd.s32 %s9, 1
    %s17 = ssub.s32 %s9, %s16
    %p18 = scmp.eq.s32.totalorder %s17, 0
    %s20 = sadd.s32 %s19, 1
    %s21 = scalar_select %p18, %s19, %s20
    %p24 = pneg %p18
    %p25 = scmp.eq.s32.totalorder %s9, 3
    %p26 = por %p24, %p25
    %p27 = scmp.ne.s32.totalorder %s19, %s22
    %p28 = scmp.eq.s32.totalorder %s9, 0
    %p29 = por %p27, %p28
    %p30 = scmp.ne.s32.totalorder %s19, %s22
    %p31 = scmp.eq.s32.totalorder %s14, 3
    %p32 = por %p30, %p31
    %p33 = scmp.ne.s32.totalorder %s22, %s23
    %p34 = scmp.eq.s32.totalorder %s14, 0
    %p35 = por %p33, %p34
    %p36 = scmp.ne.s32.totalorder %s22, %s23
    %p37 = scmp.eq.s32.totalorder %s15, 3
    %p38 = por %p36, %p37
    %p40 = scmp.ne.s32.totalorder %s23, %s39
    %p41 = scmp.eq.s32.totalorder %s15, 0
    %p42 = por %p40, %p41
    %s44 = sadd.s32 %s43, 1
    %p47 = scmp.eq.s32.totalorder %s9, 3
    %p48 = scmp.ne.s32.totalorder %s43, %s45
    %p49 = scmp.eq.s32.totalorder %s9, 0
    %p50 = por %p48, %p49
    %p51 = scmp.ne.s32.totalorder %s43, %s45
    %p52 = scmp.eq.s32.totalorder %s14, 3
    %p53 = por %p51, %p52
    %p54 = scmp.ne.s32.totalorder %s45, %s46
    %p55 = scmp.eq.s32.totalorder %s14, 0
    %p56 = por %p54, %p55
    %p57 = scmp.ne.s32.totalorder %s45, %s46
    %p58 = scmp.eq.s32.totalorder %s15, 3
    %p59 = por %p57, %p58
    %p61 = scmp.ne.s32.totalorder %s46, %s60
    %p62 = scmp.eq.s32.totalorder %s15, 0
    %p63 = por %p61, %p62
    %s65 = sadd.s32 %s64, 1
    %p68 = scmp.eq.s32.totalorder %s9, 3
    %p69 = scmp.ne.s32.totalorder %s64, %s66
    %p70 = scmp.eq.s32.totalorder %s9, 0
    %p71 = por %p69, %p70
    %p72 = scmp.ne.s32.totalorder %s64, %s66
    %p73 = scmp.eq.s32.totalorder %s14, 3
    %p74 = por %p72, %p73
    %p75 = scmp.ne.s32.totalorder %s66, %s67
    %p76 = scmp.eq.s32.totalorder %s14, 0
    %p77 = por %p75, %p76
    %p78 = scmp.ne.s32.totalorder %s66, %s67
    %p79 = scmp.eq.s32.totalorder %s15, 3
    %p80 = por %p78, %p79
    %p82 = scmp.ne.s32.totalorder %s67, %s81
    %p83 = scmp.eq.s32.totalorder %s15, 0
    %p84 = por %p82, %p83
    %s85 = ssub.s32 %s9, %s16
    %p86 = scmp.eq.s32.totalorder %s85, 0
    %s88 = sadd.s32 %s87, 1
    %s89 = scalar_select %p86, %s87, %s88
    %p92 = pneg %p86
    %p93 = scmp.eq.s32.totalorder %s9, 3
    %p94 = por %p92, %p93
    %p95 = scmp.ne.s32.totalorder %s87, %s90
    %p96 = scmp.eq.s32.totalorder %s9, 0
    %p97 = por %p95, %p96
    %p98 = scmp.ne.s32.totalorder %s87, %s90
    %p99 = scmp.eq.s32.totalorder %s14, 3
    %p100 = por %p98, %p99
    %p101 = scmp.ne.s32.totalorder %s90, %s91
    %p102 = scmp.eq.s32.totalorder %s14, 0
    %p103 = por %p101, %p102
    %p104 = scmp.ne.s32.totalorder %s90, %s91
    %p105 = scmp.eq.s32.totalorder %s15, 3
    %p106 = por %p104, %p105
    %p108 = scmp.ne.s32.totalorder %s91, %s107
    %p109 = scmp.eq.s32.totalorder %s15, 0
    %p110 = por %p108, %p109
    %p111 = scmp.le.s32.totalorder 1, %s9
    %p112 = scmp.lt.s32.totalorder %s9, 5
    %p113 = pnand %p111, %p112
    %p114 = pneg %p113
    // Predicated region
    $region9: #{resnet_forward.40} parent=5 // pred_check
      _
    $region10: #{resnet_forward.40} parent=5 // pred_check_branch
      %116 = sbr.rel (%p113) target = $region12
    $region11: #{resnet_forward.40} parent=5 // pred_region
      %s117 = ssub.s32 %s9, 1
      // Predicated region
      $region13: #{resnet_forward.40} parent=11 // pred_check
        %p118 = pneg %p56
      $region14: #{resnet_forward.40} parent=11 // pred_check_branch
        %120 = sbr.rel (%p118) target = $region16
      $region15: #{resnet_forward.40} parent=11 // pred_region
        _
      $region16: #{resnet_forward.40} parent=11 // pred_fallthru
        _
      // Predicated region
      $region17: #{resnet_forward.40} parent=11 // pred_check
        %p121 = pneg %p77
      $region18: #{resnet_forward.40} parent=11 // pred_check_branch
        %123 = sbr.rel (%p121) target = $region20
      $region19: #{resnet_forward.40} parent=11 // pred_region
        _
      $region20: #{resnet_forward.40} parent=11 // pred_fallthru
        _
    $region12: #{resnet_forward.40} parent=5 // pred_fallthru
      _
    %p124 = scmp.lt.s32.totalorder %s9, 4
    // Predicated region
    $region21: #{resnet_forward.40} parent=5 // pred_check
      %p125 = pneg %p124
    $region22: #{resnet_forward.40} parent=5 // pred_check_branch
      %127 = sbr.rel (%p125) target = $region24
    $region23: #{resnet_forward.40} parent=5 // pred_region
      // Predicated region
      $region25: #{resnet_forward.40} parent=23 // pred_check
        %p128 = pneg %p29
      $region26: #{resnet_forward.40} parent=23 // pred_check_branch
        %130 = sbr.rel (%p128) target = $region28
      $region27: #{resnet_forward.40} parent=23 // pred_region
        %s131 = smul.u32 64, %s9
        %p132 = scmp.lt.s32.totalorder %s131, 255
        %s133 = scalar_select %p132, %s131, 255
        %s134 = smul.addr %s133, 8
        %s135 = scalar_lea.vmem %s0, %s134
        %s136 = smul.u32 64, %s9
      $region28: #{resnet_forward.40} parent=23 // pred_fallthru
        _
    $region24: #{resnet_forward.40} parent=5 // pred_fallthru
      _
    %p137 = scmp.le.s32.totalorder 1, %s9
    %p138 = scmp.lt.s32.totalorder %s9, 5
    %p139 = pnand %p137, %p138
    %p140 = pneg %p139
    // Predicated region
    $region29: #{resnet_forward.40} parent=5 // pred_check
      _
    $region30: #{resnet_forward.40} parent=5 // pred_check_branch
      %142 = sbr.rel (%p139) target = $region32
    $region31: #{resnet_forward.40} parent=5 // pred_region
      %s143 = ssub.s32 %s9, 1
      %s144 = smul.u32 64, %s14
      %p145 = scmp.lt.s32.totalorder %s144, 255
      %s146 = scalar_select %p145, %s144, 255
      %s147 = smul.addr %s146, 8
      %s148 = scalar_lea.vmem %s0, %s147
      %p149 = pneg %p35
      %p150 = pneg %p32
      %p151 = pneg %p56
      %p152 = pneg %p53
      %p153 = pneg %p77
      %p154 = pneg %p74
      %p155 = pneg %p103
      %p156 = pneg %p100
      %s157 = smul.u32 64, %s14
      %p158 = scmp.lt.s32.totalorder %s157, 255
      %s159 = scalar_select %p158, %s157, 255
      %s160 = smul.addr %s159, 4
      %s161 = scalar_lea.vmem %s3, %s160
      %s162 = smul.u32 64, %s14
      %p163 = scmp.lt.s32.totalorder %s162, 255
      %s164 = scalar_select %p163, %s162, 255
      %s165 = smul.addr %s164, 8
      %s166 = scalar_lea.vmem %s0, %s165
      %s167 = smul.u32 64, %s14
      %s168 = smul.u32 64, %s14
      %p169 = scmp.lt.s32.totalorder %s168, 255
      %s170 = scalar_select %p169, %s168, 255
      %s171 = smul.addr %s170, 4
      %s172 = scalar_lea.vmem %s3, %s171
      %s173 = smul.u32 64, %s14
      %v174 = vld [vmem:[%s166] sm:$0xff]
      %v175 = vld [vmem:[%s166 + $0x8] sm:$0xff]
      %v176 = vld [vmem:[%s166 + $0x10] sm:$0xff]
      %v177 = vld [vmem:[%s166 + $0x18] sm:$0xff]
      %v178 = vld [vmem:[%s166 + $0x20] sm:$0xff]
      %v179 = vld [vmem:[%s166 + $0x28] sm:$0xff]
      %v180 = vld [vmem:[%s166 + $0x30] sm:$0xff]
      %v181 = vld [vmem:[%s166 + $0x38] sm:$0xff]
      %v182 = vld [vmem:[%s166 + $0x40] sm:$0xff]
      %v183 = vld [vmem:[%s166 + $0x48] sm:$0xff]
      %v184 = vld [vmem:[%s166 + $0x50] sm:$0xff]
      %v185 = vld [vmem:[%s166 + $0x58] sm:$0xff]
      %v186 = vld [vmem:[%s166 + $0x60] sm:$0xff]
      %v187 = vld [vmem:[%s166 + $0x68] sm:$0xff]
      %v188 = vld [vmem:[%s166 + $0x70] sm:$0xff]
      %v189 = vld [vmem:[%s166 + $0x78] sm:$0xff]
      %v190 = vld [vmem:[%s166 + $0x80] sm:$0xff]
      %v191 = vld [vmem:[%s166 + $0x88] sm:$0xff]
      %v192 = vld [vmem:[%s166 + $0x90] sm:$0xff]
      %v193 = vld [vmem:[%s166 + $0x98] sm:$0xff]
      %v194 = vld [vmem:[%s166 + $0xa0] sm:$0xff]
      %v195 = vld [vmem:[%s166 + $0xa8] sm:$0xff]
      %v196 = vld [vmem:[%s166 + $0xb0] sm:$0xff]
      %v197 = vld [vmem:[%s166 + $0xb8] sm:$0xff]
      %v198 = vld [vmem:[%s166 + $0xc0] sm:$0xff]
      %v199 = vld [vmem:[%s166 + $0xc8] sm:$0xff]
      %v200 = vld [vmem:[%s166 + $0xd0] sm:$0xff]
      %v201 = vld [vmem:[%s166 + $0xd8] sm:$0xff]
      %v202 = vld [vmem:[%s166 + $0xe0] sm:$0xff]
      %v203 = vld [vmem:[%s166 + $0xe8] sm:$0xff]
      %v204 = vld [vmem:[%s166 + $0xf0] sm:$0xff]
      %v205 = vld [vmem:[%s166 + $0xf8] sm:$0xff]
      %v206 = vld [vmem:[%s166 + $0x100] sm:$0xff]
      %v207 = vld [vmem:[%s166 + $0x108] sm:$0xff]
      %v208 = vld [vmem:[%s166 + $0x110] sm:$0xff]
      %v209 = vld [vmem:[%s166 + $0x118] sm:$0xff]
      %v210 = vld [vmem:[%s166 + $0x120] sm:$0xff]
      %v211 = vld [vmem:[%s166 + $0x128] sm:$0xff]
      %v212 = vld [vmem:[%s166 + $0x130] sm:$0xff]
      %v213 = vld [vmem:[%s166 + $0x138] sm:$0xff]
      %v214 = vld [vmem:[%s166 + $0x140] sm:$0xff]
      %v215 = vld [vmem:[%s166 + $0x148] sm:$0xff]
      %v216 = vld [vmem:[%s166 + $0x150] sm:$0xff]
      %v217 = vld [vmem:[%s166 + $0x158] sm:$0xff]
      %v218 = vld [vmem:[%s166 + $0x160] sm:$0xff]
      %v219 = vld [vmem:[%s166 + $0x168] sm:$0xff]
      %v220 = vld [vmem:[%s166 + $0x170] sm:$0xff]
      %v221 = vld [vmem:[%s166 + $0x178] sm:$0xff]
      %v222 = vld [vmem:[%s166 + $0x180] sm:$0xff]
      %v223 = vld [vmem:[%s166 + $0x188] sm:$0xff]
      %v224 = vld [vmem:[%s166 + $0x190] sm:$0xff]
      %v225 = vld [vmem:[%s166 + $0x198] sm:$0xff]
      %v226 = vld [vmem:[%s166 + $0x1a0] sm:$0xff]
      %v227 = vld [vmem:[%s166 + $0x1a8] sm:$0xff]
      %v228 = vld [vmem:[%s166 + $0x1b0] sm:$0xff]
      %v229 = vld [vmem:[%s166 + $0x1b8] sm:$0xff]
      %v230 = vld [vmem:[%s166 + $0x1c0] sm:$0xff]
      %v231 = vld [vmem:[%s166 + $0x1c8] sm:$0xff]
      %v232 = vld [vmem:[%s166 + $0x1d0] sm:$0xff]
      %v233 = vld [vmem:[%s166 + $0x1d8] sm:$0xff]
      %v234 = vld [vmem:[%s166 + $0x1e0] sm:$0xff]
      %v235 = vld [vmem:[%s166 + $0x1e8] sm:$0xff]
      %v236 = vld [vmem:[%s166 + $0x1f0] sm:$0xff]
      %v237 = vld [vmem:[%s166 + $0x1f8] sm:$0xff]
      %v238 = vld [vmem:[%s1] sm:$0x1]
      %v240 = vperm.slane %v238, 0
      %v242 = vmul.f32 %v174, %v240
      %v243 = vmul.f32 %v175, %v240
      %v244 = vmul.f32 %v176, %v240
      %v245 = vmul.f32 %v177, %v240
      %v246 = vmul.f32 %v178, %v240
      %v247 = vmul.f32 %v179, %v240
      %v248 = vmul.f32 %v180, %v240
      %v249 = vmul.f32 %v181, %v240
      %v250 = vmul.f32 %v182, %v240
      %v251 = vmul.f32 %v183, %v240
      %v252 = vmul.f32 %v184, %v240
      %v253 = vmul.f32 %v185, %v240
      %v254 = vmul.f32 %v186, %v240
      %v255 = vmul.f32 %v187, %v240
      %v256 = vmul.f32 %v188, %v240
      %v257 = vmul.f32 %v189, %v240
      %v258 = vmul.f32 %v190, %v240
      %v259 = vmul.f32 %v191, %v240
      %v260 = vmul.f32 %v192, %v240
      %v261 = vmul.f32 %v193, %v240
      %v262 = vmul.f32 %v194, %v240
      %v263 = vmul.f32 %v195, %v240
      %v264 = vmul.f32 %v196, %v240
      %v265 = vmul.f32 %v197, %v240
      %v266 = vmul.f32 %v198, %v240
      %v267 = vmul.f32 %v199, %v240
      %v268 = vmul.f32 %v200, %v240
      %v269 = vmul.f32 %v201, %v240
      %v270 = vmul.f32 %v202, %v240
      %v271 = vmul.f32 %v203, %v240
      %v272 = vmul.f32 %v204, %v240
      %v273 = vmul.f32 %v205, %v240
      %v274 = vmul.f32 %v206, %v240
      %v275 = vmul.f32 %v207, %v240
      %v276 = vmul.f32 %v208, %v240
      %v277 = vmul.f32 %v209, %v240
      %v278 = vmul.f32 %v210, %v240
      %v279 = vmul.f32 %v211, %v240
      %v280 = vmul.f32 %v212, %v240
      %v281 = vmul.f32 %v213, %v240
      %v282 = vmul.f32 %v214, %v240
      %v283 = vmul.f32 %v215, %v240
      %v284 = vmul.f32 %v216, %v240
      %v285 = vmul.f32 %v217, %v240
      %v286 = vmul.f32 %v218, %v240
      %v287 = vmul.f32 %v219, %v240
      %v288 = vmul.f32 %v220, %v240
      %v289 = vmul.f32 %v221, %v240
      %v290 = vmul.f32 %v222, %v240
      %v291 = vmul.f32 %v223, %v240
      %v292 = vmul.f32 %v224, %v240
      %v293 = vmul.f32 %v225, %v240
      %v294 = vmul.f32 %v226, %v240
      %v295 = vmul.f32 %v227, %v240
      %v296 = vmul.f32 %v228, %v240
      %v297 = vmul.f32 %v229, %v240
      %v298 = vmul.f32 %v230, %v240
      %v299 = vmul.f32 %v231, %v240
      %v300 = vmul.f32 %v232, %v240
      %v301 = vmul.f32 %v233, %v240
      %v302 = vmul.f32 %v234, %v240
      %v303 = vmul.f32 %v235, %v240
      %v304 = vmul.f32 %v236, %v240
      %v305 = vmul.f32 %v237, %v240
      %v306 = vld [vmem:[%s2] sm:$0x1]
      %v308 = vperm.slane %v306, 0
      %v310 = vadd.f32 %v242, %v308
      %v311 = vadd.f32 %v243, %v308
      %v312 = vadd.f32 %v244, %v308
      %v313 = vadd.f32 %v245, %v308
      %v314 = vadd.f32 %v246, %v308
      %v315 = vadd.f32 %v247, %v308
      %v316 = vadd.f32 %v248, %v308
      %v317 = vadd.f32 %v249, %v308
      %v318 = vadd.f32 %v250, %v308
      %v319 = vadd.f32 %v251, %v308
      %v320 = vadd.f32 %v252, %v308
      %v321 = vadd.f32 %v253, %v308
      %v322 = vadd.f32 %v254, %v308
      %v323 = vadd.f32 %v255, %v308
      %v324 = vadd.f32 %v256, %v308
      %v325 = vadd.f32 %v257, %v308
      %v326 = vadd.f32 %v258, %v308
      %v327 = vadd.f32 %v259, %v308
      %v328 = vadd.f32 %v260, %v308
      %v329 = vadd.f32 %v261, %v308
      %v330 = vadd.f32 %v262, %v308
      %v331 = vadd.f32 %v263, %v308
      %v332 = vadd.f32 %v264, %v308
      %v333 = vadd.f32 %v265, %v308
      %v334 = vadd.f32 %v266, %v308
      %v335 = vadd.f32 %v267, %v308
      %v336 = vadd.f32 %v268, %v308
      %v337 = vadd.f32 %v269, %v308
      %v338 = vadd.f32 %v270, %v308
      %v339 = vadd.f32 %v271, %v308
      %v340 = vadd.f32 %v272, %v308
      %v341 = vadd.f32 %v273, %v308
      %v342 = vadd.f32 %v274, %v308
      %v343 = vadd.f32 %v275, %v308
      %v344 = vadd.f32 %v276, %v308
      %v345 = vadd.f32 %v277, %v308
      %v346 = vadd.f32 %v278, %v308
      %v347 = vadd.f32 %v279, %v308
      %v348 = vadd.f32 %v280, %v308
      %v349 = vadd.f32 %v281, %v308
      %v350 = vadd.f32 %v282, %v308
      %v351 = vadd.f32 %v283, %v308
      %v352 = vadd.f32 %v284, %v308
      %v353 = vadd.f32 %v285, %v308
      %v354 = vadd.f32 %v286, %v308
      %v355 = vadd.f32 %v287, %v308
      %v356 = vadd.f32 %v288, %v308
      %v357 = vadd.f32 %v289, %v308
      %v358 = vadd.f32 %v290, %v308
      %v359 = vadd.f32 %v291, %v308
      %v360 = vadd.f32 %v292, %v308
      %v361 = vadd.f32 %v293, %v308
      %v362 = vadd.f32 %v294, %v308
      %v363 = vadd.f32 %v295, %v308
      %v364 = vadd.f32 %v296, %v308
      %v365 = vadd.f32 %v297, %v308
      %v366 = vadd.f32 %v298, %v308
      %v367 = vadd.f32 %v299, %v308
      %v368 = vadd.f32 %v300, %v308
      %v369 = vadd.f32 %v301, %v308
      %v370 = vadd.f32 %v302, %v308
      %v371 = vadd.f32 %v303, %v308
      %v372 = vadd.f32 %v304, %v308
      %v373 = vadd.f32 %v305, %v308
      %v374 = vmax.f32 %v310, 0.0
      %v375 = vmax.f32 %v311, 0.0
      %v376 = vmax.f32 %v312, 0.0
      %v377 = vmax.f32 %v313, 0.0
      %v378 = vmax.f32 %v314, 0.0
      %v379 = vmax.f32 %v315, 0.0
      %v380 = vmax.f32 %v316, 0.0
      %v381 = vmax.f32 %v317, 0.0
      %v382 = vmax.f32 %v318, 0.0
      %v383 = vmax.f32 %v319, 0.0
      %v384 = vmax.f32 %v320, 0.0
      %v385 = vmax.f32 %v321, 0.0
      %v386 = vmax.f32 %v322, 0.0
      %v387 = vmax.f32 %v323, 0.0
      %v388 = vmax.f32 %v324, 0.0
      %v389 = vmax.f32 %v325, 0.0
      %v390 = vmax.f32 %v326, 0.0
      %v391 = vmax.f32 %v327, 0.0
      %v392 = vmax.f32 %v328, 0.0
      %v393 = vmax.f32 %v329, 0.0
      %v394 = vmax.f32 %v330, 0.0
      %v395 = vmax.f32 %v331, 0.0
      %v396 = vmax.f32 %v332, 0.0
      %v397 = vmax.f32 %v333, 0.0
      %v398 = vmax.f32 %v334, 0.0
      %v399 = vmax.f32 %v335, 0.0
      %v400 = vmax.f32 %v336, 0.0
      %v401 = vmax.f32 %v337, 0.0
      %v402 = vmax.f32 %v338, 0.0
      %v403 = vmax.f32 %v339, 0.0
      %v404 = vmax.f32 %v340, 0.0
      %v405 = vmax.f32 %v341, 0.0
      %v406 = vmax.f32 %v342, 0.0
      %v407 = vmax.f32 %v343, 0.0
      %v408 = vmax.f32 %v344, 0.0
      %v409 = vmax.f32 %v345, 0.0
      %v410 = vmax.f32 %v346, 0.0
      %v411 = vmax.f32 %v347, 0.0
      %v412 = vmax.f32 %v348, 0.0
      %v413 = vmax.f32 %v349, 0.0
      %v414 = vmax.f32 %v350, 0.0
      %v415 = vmax.f32 %v351, 0.0
      %v416 = vmax.f32 %v352, 0.0
      %v417 = vmax.f32 %v353, 0.0
      %v418 = vmax.f32 %v354, 0.0
      %v419 = vmax.f32 %v355, 0.0
      %v420 = vmax.f32 %v356, 0.0
      %v421 = vmax.f32 %v357, 0.0
      %v422 = vmax.f32 %v358, 0.0
      %v423 = vmax.f32 %v359, 0.0
      %v424 = vmax.f32 %v360, 0.0
      %v425 = vmax.f32 %v361, 0.0
      %v426 = vmax.f32 %v362, 0.0
      %v427 = vmax.f32 %v363, 0.0
      %v428 = vmax.f32 %v364, 0.0
      %v429 = vmax.f32 %v365, 0.0
      %v430 = vmax.f32 %v366, 0.0
      %v431 = vmax.f32 %v367, 0.0
      %v432 = vmax.f32 %v368, 0.0
      %v433 = vmax.f32 %v369, 0.0
      %v434 = vmax.f32 %v370, 0.0
      %v435 = vmax.f32 %v371, 0.0
      %v436 = vmax.f32 %v372, 0.0
      %v437 = vmax.f32 %v373, 0.0
      %v438 = vpack.c.bf16 %v374, %v374
      %v439 = vpack.c.bf16 %v375, %v375
      %v440 = vpack.c.bf16 %v376, %v376
      %v441 = vpack.c.bf16 %v377, %v377
      %v442 = vpack.c.bf16 %v378, %v378
      %v443 = vpack.c.bf16 %v379, %v379
      %v444 = vpack.c.bf16 %v380, %v380
      %v445 = vpack.c.bf16 %v381, %v381
      %v446 = vpack.c.bf16 %v382, %v382
      %v447 = vpack.c.bf16 %v383, %v383
      %v448 = vpack.c.bf16 %v384, %v384
      %v449 = vpack.c.bf16 %v385, %v385
      %v450 = vpack.c.bf16 %v386, %v386
      %v451 = vpack.c.bf16 %v387, %v387
      %v452 = vpack.c.bf16 %v388, %v388
      %v453 = vpack.c.bf16 %v389, %v389
      %v454 = vpack.c.bf16 %v390, %v390
      %v455 = vpack.c.bf16 %v391, %v391
      %v456 = vpack.c.bf16 %v392, %v392
      %v457 = vpack.c.bf16 %v393, %v393
      %v458 = vpack.c.bf16 %v394, %v394
      %v459 = vpack.c.bf16 %v395, %v395
      %v460 = vpack.c.bf16 %v396, %v396
      %v461 = vpack.c.bf16 %v397, %v397
      %v462 = vpack.c.bf16 %v398, %v398
      %v463 = vpack.c.bf16 %v399, %v399
      %v464 = vpack.c.bf16 %v400, %v400
      %v465 = vpack.c.bf16 %v401, %v401
      %v466 = vpack.c.bf16 %v402, %v402
      %v467 = vpack.c.bf16 %v403, %v403
      %v468 = vpack.c.bf16 %v404, %v404
      %v469 = vpack.c.bf16 %v405, %v405
      %v470 = vpack.c.bf16 %v406, %v406
      %v471 = vpack.c.bf16 %v407, %v407
      %v472 = vpack.c.bf16 %v408, %v408
      %v473 = vpack.c.bf16 %v409, %v409
      %v474 = vpack.c.bf16 %v410, %v410
      %v475 = vpack.c.bf16 %v411, %v411
      %v476 = vpack.c.bf16 %v412, %v412
      %v477 = vpack.c.bf16 %v413, %v413
      %v478 = vpack.c.bf16 %v414, %v414
      %v479 = vpack.c.bf16 %v415, %v415
      %v480 = vpack.c.bf16 %v416, %v416
      %v481 = vpack.c.bf16 %v417, %v417
      %v482 = vpack.c.bf16 %v418, %v418
      %v483 = vpack.c.bf16 %v419, %v419
      %v484 = vpack.c.bf16 %v420, %v420
      %v485 = vpack.c.bf16 %v421, %v421
      %v486 = vpack.c.bf16 %v422, %v422
      %v487 = vpack.c.bf16 %v423, %v423
      %v488 = vpack.c.bf16 %v424, %v424
      %v489 = vpack.c.bf16 %v425, %v425
      %v490 = vpack.c.bf16 %v426, %v426
      %v491 = vpack.c.bf16 %v427, %v427
      %v492 = vpack.c.bf16 %v428, %v428
      %v493 = vpack.c.bf16 %v429, %v429
      %v494 = vpack.c.bf16 %v430, %v430
      %v495 = vpack.c.bf16 %v431, %v431
      %v496 = vpack.c.bf16 %v432, %v432
      %v497 = vpack.c.bf16 %v433, %v433
      %v498 = vpack.c.bf16 %v434, %v434
      %v499 = vpack.c.bf16 %v435, %v435
      %v500 = vpack.c.bf16 %v436, %v436
      %v501 = vpack.c.bf16 %v437, %v437
      %vm502 = vcmask 125952
      %503 = vst.msk [vmem:[%s172] sm:$0xf] %vm502, %v438
      %504 = vst.msk [vmem:[%s172 + $0x4] sm:$0xf] %vm502, %v439
      %505 = vst.msk [vmem:[%s172 + $0x8] sm:$0xf] %vm502, %v440
      %506 = vst.msk [vmem:[%s172 + $0xc] sm:$0xf] %vm502, %v441
      %507 = vst.msk [vmem:[%s172 + $0x10] sm:$0xf] %vm502, %v442
      %508 = vst.msk [vmem:[%s172 + $0x14] sm:$0xf] %vm502, %v443
      %509 = vst.msk [vmem:[%s172 + $0x18] sm:$0xf] %vm502, %v444
      %510 = vst.msk [vmem:[%s172 + $0x1c] sm:$0xf] %vm502, %v445
      %511 = vst.msk [vmem:[%s172 + $0x20] sm:$0xf] %vm502, %v446
      %512 = vst.msk [vmem:[%s172 + $0x24] sm:$0xf] %vm502, %v447
      %513 = vst.msk [vmem:[%s172 + $0x28] sm:$0xf] %vm502, %v448
      %514 = vst.msk [vmem:[%s172 + $0x2c] sm:$0xf] %vm502, %v449
      %515 = vst.msk [vmem:[%s172 + $0x30] sm:$0xf] %vm502, %v450
      %516 = vst.msk [vmem:[%s172 + $0x34] sm:$0xf] %vm502, %v451
      %517 = vst.msk [vmem:[%s172 + $0x38] sm:$0xf] %vm502, %v452
      %518 = vst.msk [vmem:[%s172 + $0x3c] sm:$0xf] %vm502, %v453
      %519 = vst.msk [vmem:[%s172 + $0x40] sm:$0xf] %vm502, %v454
      %520 = vst.msk [vmem:[%s172 + $0x44] sm:$0xf] %vm502, %v455
      %521 = vst.msk [vmem:[%s172 + $0x48] sm:$0xf] %vm502, %v456
      %522 = vst.msk [vmem:[%s172 + $0x4c] sm:$0xf] %vm502, %v457
      %523 = vst.msk [vmem:[%s172 + $0x50] sm:$0xf] %vm502, %v458
      %524 = vst.msk [vmem:[%s172 + $0x54] sm:$0xf] %vm502, %v459
      %525 = vst.msk [vmem:[%s172 + $0x58] sm:$0xf] %vm502, %v460
      %526 = vst.msk [vmem:[%s172 + $0x5c] sm:$0xf] %vm502, %v461
      %527 = vst.msk [vmem:[%s172 + $0x60] sm:$0xf] %vm502, %v462
      %528 = vst.msk [vmem:[%s172 + $0x64] sm:$0xf] %vm502, %v463
      %529 = vst.msk [vmem:[%s172 + $0x68] sm:$0xf] %vm502, %v464
      %530 = vst.msk [vmem:[%s172 + $0x6c] sm:$0xf] %vm502, %v465
      %531 = vst.msk [vmem:[%s172 + $0x70] sm:$0xf] %vm502, %v466
      %532 = vst.msk [vmem:[%s172 + $0x74] sm:$0xf] %vm502, %v467
      %533 = vst.msk [vmem:[%s172 + $0x78] sm:$0xf] %vm502, %v468
      %534 = vst.msk [vmem:[%s172 + $0x7c] sm:$0xf] %vm502, %v469
      %535 = vst.msk [vmem:[%s172 + $0x80] sm:$0xf] %vm502, %v470
      %536 = vst.msk [vmem:[%s172 + $0x84] sm:$0xf] %vm502, %v471
      %537 = vst.msk [vmem:[%s172 + $0x88] sm:$0xf] %vm502, %v472
      %538 = vst.msk [vmem:[%s172 + $0x8c] sm:$0xf] %vm502, %v473
      %539 = vst.msk [vmem:[%s172 + $0x90] sm:$0xf] %vm502, %v474
      %540 = vst.msk [vmem:[%s172 + $0x94] sm:$0xf] %vm502, %v475
      %541 = vst.msk [vmem:[%s172 + $0x98] sm:$0xf] %vm502, %v476
      %542 = vst.msk [vmem:[%s172 + $0x9c] sm:$0xf] %vm502, %v477
      %543 = vst.msk [vmem:[%s172 + $0xa0] sm:$0xf] %vm502, %v478
      %544 = vst.msk [vmem:[%s172 + $0xa4] sm:$0xf] %vm502, %v479
      %545 = vst.msk [vmem:[%s172 + $0xa8] sm:$0xf] %vm502, %v480
      %546 = vst.msk [vmem:[%s172 + $0xac] sm:$0xf] %vm502, %v481
      %547 = vst.msk [vmem:[%s172 + $0xb0] sm:$0xf] %vm502, %v482
      %548 = vst.msk [vmem:[%s172 + $0xb4] sm:$0xf] %vm502, %v483
      %549 = vst.msk [vmem:[%s172 + $0xb8] sm:$0xf] %vm502, %v484
      %550 = vst.msk [vmem:[%s172 + $0xbc] sm:$0xf] %vm502, %v485
      %551 = vst.msk [vmem:[%s172 + $0xc0] sm:$0xf] %vm502, %v486
      %552 = vst.msk [vmem:[%s172 + $0xc4] sm:$0xf] %vm502, %v487
      %553 = vst.msk [vmem:[%s172 + $0xc8] sm:$0xf] %vm502, %v488
      %554 = vst.msk [vmem:[%s172 + $0xcc] sm:$0xf] %vm502, %v489
      %555 = vst.msk [vmem:[%s172 + $0xd0] sm:$0xf] %vm502, %v490
      %556 = vst.msk [vmem:[%s172 + $0xd4] sm:$0xf] %vm502, %v491
      %557 = vst.msk [vmem:[%s172 + $0xd8] sm:$0xf] %vm502, %v492
      %558 = vst.msk [vmem:[%s172 + $0xdc] sm:$0xf] %vm502, %v493
      %559 = vst.msk [vmem:[%s172 + $0xe0] sm:$0xf] %vm502, %v494
      %560 = vst.msk [vmem:[%s172 + $0xe4] sm:$0xf] %vm502, %v495
      %561 = vst.msk [vmem:[%s172 + $0xe8] sm:$0xf] %vm502, %v496
      %562 = vst.msk [vmem:[%s172 + $0xec] sm:$0xf] %vm502, %v497
      %563 = vst.msk [vmem:[%s172 + $0xf0] sm:$0xf] %vm502, %v498
      %564 = vst.msk [vmem:[%s172 + $0xf4] sm:$0xf] %vm502, %v499
      %565 = vst.msk [vmem:[%s172 + $0xf8] sm:$0xf] %vm502, %v500
      %566 = vst.msk [vmem:[%s172 + $0xfc] sm:$0xf] %vm502, %v501
      %s567 = smul.u32 64, %s14
      %p568 = scmp.lt.s32.totalorder %s567, 255
      %s569 = scalar_select %p568, %s567, 255
      %s570 = smul.addr %s569, 4
      %s571 = scalar_lea.vmem %s3, %s570
      // Predicated region
      $region33: #{resnet_forward.40} parent=31 // pred_check
        %p572 = pneg %p100
      $region34: #{resnet_forward.40} parent=31 // pred_check_branch
        %574 = sbr.rel (%p572) target = $region36
      $region35: #{resnet_forward.40} parent=31 // pred_region
        %s575 = smul.u32 64, %s14
      $region36: #{resnet_forward.40} parent=31 // pred_fallthru
        _
    $region32: #{resnet_forward.40} parent=5 // pred_fallthru
      _
    %p576 = scmp.le.s32.totalorder 2, %s9
    // Predicated region
    $region37: #{resnet_forward.40} parent=5 // pred_check
      %p577 = pneg %p576
    $region38: #{resnet_forward.40} parent=5 // pred_check_branch
      %579 = sbr.rel (%p577) target = $region40
    $region39: #{resnet_forward.40} parent=5 // pred_region
      %s580 = ssub.s32 %s9, 2
      // Predicated region
      $region41: #{resnet_forward.40} parent=39 // pred_check
        %p581 = pneg %p106
      $region42: #{resnet_forward.40} parent=39 // pred_check_branch
        %583 = sbr.rel (%p581) target = $region44
      $region43: #{resnet_forward.40} parent=39 // pred_region
        %s584 = smul.u32 64, %s15
        %p585 = scmp.lt.s32.totalorder %s584, 255
        %s586 = scalar_select %p585, %s584, 255
        %s587 = smul.addr %s586, 4
        %s588 = scalar_lea.vmem %s3, %s587
      $region44: #{resnet_forward.40} parent=39 // pred_fallthru
        _
    $region40: #{resnet_forward.40} parent=5 // pred_fallthru
      _
  $region6: #{resnet_forward.40} parent=0 // loop_footer
    %s13 = sadd.s32 1, %s9
  $region7: #{resnet_forward.40} parent=0 // loop_footer_branch
    %8 = sbr.rel target = $region3
  $region8: #{resnet_forward.40} parent=0 // loop_exit
    _

// kernel: resnet_forward.39
$region0: #{resnet_forward.39}
  #allocation0 [shape = 'u32[]', space=smem, size = 0x4, offset = 0x4, fixed_abs, tag = 'smem constant byte address 0x4 - core index']
  #allocation1 [shape = 'u32[72,128]{1,0:T(1,128)}', space=vmem, size = 0x9000, scoped, tag = 'internal scratch']
  %s0 = inlined_call_operand.vmem [shape: bf16[2048,27], index: 0, kind: input, shape index: {}]
  %s1 = inlined_call_operand.vmem [shape: f32[27,16], index: 1, kind: input, shape index: {}]
  %s2 = inlined_call_operand.vmem [shape: f32[2048,16], index: 2, kind: output, shape index: {0}]
  %s3 = inlined_call_operand.vmem [shape: f32[4,2,16], index: 3, kind: output, shape index: {1}]
  %4 = xla_tuple %s2, %s3
  %s5 = sld [smem:[#allocation0]]
  $region49: #{resnet_forward.39} parent=0
    _
  %s7 = ssub.s32 1, %s5
  %s8 = scalar_select 0, %s7, %s5
  loop: start=0, step=1, limit=6
  $region2: #{resnet_forward.39} parent=0 // loop_pre_header
    _
  $region3: #{resnet_forward.39} parent=0 // loop_header
    %s10 = sphi 0, %s14
    %p11 = scmp.ge.s32.totalorder %s10, 6
    %s20 = sphi 0, %s22
    %s23 = sphi 0, %s20
    %s24 = sphi 0, %s23
    %s40 = sphi 0, %s24
    %s44 = sphi 0, %s44
    %s46 = sphi 0, %s44
    %s47 = sphi 0, %s46
    %s61 = sphi 0, %s47
    %s67 = sphi 0, %s69
    %s70 = sphi 0, %s67
    %s71 = sphi 0, %s70
    %s87 = sphi 0, %s71
    %s93 = sphi 0, %s95
    %s96 = sphi 0, %s93
    %s97 = sphi 0, %s96
    %s113 = sphi 0, %s97
  $region4: #{resnet_forward.39} parent=0 // loop_header_branch
    %13 = sbr.rel (%p11) target = $region8
  $region5: #{resnet_forward.39} parent=0 // loop_body
    %s15 = ssub.s32 %s10, 1
    %s16 = ssub.s32 %s10, 2
    %s17 = sadd.s32 %s10, 1
    %s18 = ssub.s32 %s10, %s17
    %p19 = scmp.eq.s32.totalorder %s18, 0
    %s21 = sadd.s32 %s20, 1
    %s22 = scalar_select %p19, %s20, %s21
    %p25 = pneg %p19
    %p26 = scmp.eq.s32.totalorder %s10, 3
    %p27 = por %p25, %p26
    %p28 = scmp.ne.s32.totalorder %s20, %s23
    %p29 = scmp.eq.s32.totalorder %s10, 0
    %p30 = por %p28, %p29
    %p31 = scmp.ne.s32.totalorder %s20, %s23
    %p32 = scmp.eq.s32.totalorder %s15, 3
    %p33 = por %p31, %p32
    %p34 = scmp.ne.s32.totalorder %s23, %s24
    %p35 = scmp.eq.s32.totalorder %s15, 0
    %p36 = por %p34, %p35
    %p37 = scmp.ne.s32.totalorder %s23, %s24
    %p38 = scmp.eq.s32.totalorder %s16, 3
    %p39 = por %p37, %p38
    %p41 = scmp.ne.s32.totalorder %s24, %s40
    %p42 = scmp.eq.s32.totalorder %s16, 0
    %p43 = por %p41, %p42
    %s45 = sadd.s32 %s44, 1
    %p48 = scmp.eq.s32.totalorder %s10, 3
    %p49 = scmp.ne.s32.totalorder %s44, %s46
    %p50 = scmp.eq.s32.totalorder %s10, 0
    %p51 = por %p49, %p50
    %p52 = scmp.ne.s32.totalorder %s44, %s46
    %p53 = scmp.eq.s32.totalorder %s15, 3
    %p54 = por %p52, %p53
    %p55 = scmp.ne.s32.totalorder %s46, %s47
    %p56 = scmp.eq.s32.totalorder %s15, 0
    %p57 = por %p55, %p56
    %p58 = scmp.ne.s32.totalorder %s46, %s47
    %p59 = scmp.eq.s32.totalorder %s16, 3
    %p60 = por %p58, %p59
    %p62 = scmp.ne.s32.totalorder %s47, %s61
    %p63 = scmp.eq.s32.totalorder %s16, 0
    %p64 = por %p62, %p63
    %s65 = ssub.s32 %s10, %s17
    %p66 = scmp.eq.s32.totalorder %s65, 0
    %s68 = sadd.s32 %s67, 1
    %s69 = scalar_select %p66, %s67, %s68
    %p72 = pneg %p66
    %p73 = scmp.eq.s32.totalorder %s10, 3
    %p74 = por %p72, %p73
    %p75 = scmp.ne.s32.totalorder %s67, %s70
    %p76 = scmp.eq.s32.totalorder %s10, 0
    %p77 = por %p75, %p76
    %p78 = scmp.ne.s32.totalorder %s67, %s70
    %p79 = scmp.eq.s32.totalorder %s15, 3
    %p80 = por %p78, %p79
    %p81 = scmp.ne.s32.totalorder %s70, %s71
    %p82 = scmp.eq.s32.totalorder %s15, 0
    %p83 = por %p81, %p82
    %p84 = scmp.ne.s32.totalorder %s70, %s71
    %p85 = scmp.eq.s32.totalorder %s16, 3
    %p86 = por %p84, %p85
    %p88 = scmp.ne.s32.totalorder %s71, %s87
    %p89 = scmp.eq.s32.totalorder %s16, 0
    %p90 = por %p88, %p89
    %s91 = ssub.s32 %s10, %s17
    %p92 = scmp.eq.s32.totalorder %s91, 0
    %s94 = sadd.s32 %s93, 1
    %s95 = scalar_select %p92, %s93, %s94
    %p98 = pneg %p92
    %p99 = scmp.eq.s32.totalorder %s10, 3
    %p100 = por %p98, %p99
    %p101 = scmp.ne.s32.totalorder %s93, %s96
    %p102 = scmp.eq.s32.totalorder %s10, 0
    %p103 = por %p101, %p102
    %p104 = scmp.ne.s32.totalorder %s93, %s96
    %p105 = scmp.eq.s32.totalorder %s15, 3
    %p106 = por %p104, %p105
    %p107 = scmp.ne.s32.totalorder %s96, %s97
    %p108 = scmp.eq.s32.totalorder %s15, 0
    %p109 = por %p107, %p108
    %p110 = scmp.ne.s32.totalorder %s96, %s97
    %p111 = scmp.eq.s32.totalorder %s16, 3
    %p112 = por %p110, %p111
    %p114 = scmp.ne.s32.totalorder %s97, %s113
    %p115 = scmp.eq.s32.totalorder %s16, 0
    %p116 = por %p114, %p115
    %p117 = scmp.le.s32.totalorder 1, %s10
    %p118 = scmp.lt.s32.totalorder %s10, 5
    %p119 = pnand %p117, %p118
    %p120 = pneg %p119
    // Predicated region
    $region9: #{resnet_forward.39} parent=5 // pred_check
      _
    $region10: #{resnet_forward.39} parent=5 // pred_check_branch
      %122 = sbr.rel (%p119) target = $region12
    $region11: #{resnet_forward.39} parent=5 // pred_region
      %s123 = ssub.s32 %s10, 1
      // Predicated region
      $region13: #{resnet_forward.39} parent=11 // pred_check
        %p124 = pneg %p57
      $region14: #{resnet_forward.39} parent=11 // pred_check_branch
        %126 = sbr.rel (%p124) target = $region16
      $region15: #{resnet_forward.39} parent=11 // pred_region
        _
      $region16: #{resnet_forward.39} parent=11 // pred_fallthru
        _
    $region12: #{resnet_forward.39} parent=5 // pred_fallthru
      _
    %p127 = scmp.lt.s32.totalorder %s10, 4
    // Predicated region
    $region17: #{resnet_forward.39} parent=5 // pred_check
      %p128 = pneg %p127
    $region18: #{resnet_forward.39} parent=5 // pred_check_branch
      %130 = sbr.rel (%p128) target = $region20
    $region19: #{resnet_forward.39} parent=5 // pred_region
      // Predicated region
      $region21: #{resnet_forward.39} parent=19 // pred_check
        %p131 = pneg %p30
      $region22: #{resnet_forward.39} parent=19 // pred_check_branch
        %133 = sbr.rel (%p131) target = $region24
      $region23: #{resnet_forward.39} parent=19 // pred_region
        %s134 = smul.u32 64, %s10
        %p135 = scmp.lt.s32.totalorder %s134, 255
        %s136 = scalar_select %p135, %s134, 255
        %s137 = smul.addr %s136, 4
        %s138 = scalar_lea.vmem %s0, %s137
        %s139 = smul.u32 64, %s10
      $region24: #{resnet_forward.39} parent=19 // pred_fallthru
        _
    $region20: #{resnet_forward.39} parent=5 // pred_fallthru
      _
    %p140 = scmp.le.s32.totalorder 1, %s10
    %p141 = scmp.lt.s32.totalorder %s10, 5
    %p142 = pnand %p140, %p141
    %p143 = pneg %p142
    // Predicated region
    $region25: #{resnet_forward.39} parent=5 // pred_check
      _
    $region26: #{resnet_forward.39} parent=5 // pred_check_branch
      %145 = sbr.rel (%p142) target = $region28
    $region27: #{resnet_forward.39} parent=5 // pred_region
      %s146 = ssub.s32 %s10, 1
      %s147 = smul.u32 64, %s15
      %p148 = scmp.lt.s32.totalorder %s147, 255
      %s149 = scalar_select %p148, %s147, 255
      %s150 = smul.addr %s149, 4
      %s151 = scalar_lea.vmem %s0, %s150
      %p152 = pneg %p36
      %p153 = pneg %p33
      %p154 = pneg %p57
      %p155 = pneg %p54
      %p156 = pneg %p83
      %p157 = pneg %p80
      %s158 = smul.u32 64, %s15
      %p159 = scmp.lt.s32.totalorder %s158, 255
      %s160 = scalar_select %p159, %s158, 255
      %s161 = smul.addr %s160, 8
      %s162 = scalar_lea.vmem %s2, %s161
      %p163 = pneg %p109
      %p164 = pneg %p106
      %p165 = scmp.lt.s32.totalorder %s15, 3
      %s166 = scalar_select %p165, %s15, 3
      %s167 = smul.addr %s166, 2
      %s168 = scalar_lea.vmem %s3, %s167
      %s169 = smul.u32 64, %s15
      %p170 = scmp.lt.s32.totalorder %s169, 255
      %s171 = scalar_select %p170, %s169, 255
      %s172 = smul.addr %s171, 4
      %s173 = scalar_lea.vmem %s0, %s172
      %s174 = smul.u32 64, %s15
      %s175 = smul.u32 64, %s15
      %p176 = scmp.lt.s32.totalorder %s175, 255
      %s177 = scalar_select %p176, %s175, 255
      %s178 = smul.addr %s177, 8
      %s179 = scalar_lea.vmem %s2, %s178
      %s180 = smul.u32 64, %s15
      %p181 = scmp.lt.s32.totalorder %s15, 3
      %s182 = scalar_select %p181, %s15, 3
      %s183 = smul.addr %s182, 2
      %s184 = scalar_lea.vmem %s3, %s183
      %v186 = vld [vmem:[%s173] sm:$0xf]
      %v187 = vld [vmem:[%s173 + $0x4] sm:$0xf]
      %v188 = vld [vmem:[%s173 + $0x8] sm:$0xf]
      %v189 = vld [vmem:[%s173 + $0xc] sm:$0xf]
      %v190 = vld [vmem:[%s173 + $0x10] sm:$0xf]
      %v191 = vld [vmem:[%s173 + $0x14] sm:$0xf]
      %v192 = vld [vmem:[%s173 + $0x18] sm:$0xf]
      %v193 = vld [vmem:[%s173 + $0x1c] sm:$0xf]
      %v194 = vld [vmem:[%s173 + $0x20] sm:$0xf]
      %v195 = vld [vmem:[%s173 + $0x24] sm:$0xf]
      %v196 = vld [vmem:[%s173 + $0x28] sm:$0xf]
      %v197 = vld [vmem:[%s173 + $0x2c] sm:$0xf]
      %v198 = vld [vmem:[%s173 + $0x30] sm:$0xf]
      %v199 = vld [vmem:[%s173 + $0x34] sm:$0xf]
      %v200 = vld [vmem:[%s173 + $0x38] sm:$0xf]
      %v201 = vld [vmem:[%s173 + $0x3c] sm:$0xf]
      %v202 = vld [vmem:[%s173 + $0x40] sm:$0xf]
      %v203 = vld [vmem:[%s173 + $0x44] sm:$0xf]
      %v204 = vld [vmem:[%s173 + $0x48] sm:$0xf]
      %v205 = vld [vmem:[%s173 + $0x4c] sm:$0xf]
      %v206 = vld [vmem:[%s173 + $0x50] sm:$0xf]
      %v207 = vld [vmem:[%s173 + $0x54] sm:$0xf]
      %v208 = vld [vmem:[%s173 + $0x58] sm:$0xf]
      %v209 = vld [vmem:[%s173 + $0x5c] sm:$0xf]
      %v210 = vld [vmem:[%s173 + $0x60] sm:$0xf]
      %v211 = vld [vmem:[%s173 + $0x64] sm:$0xf]
      %v212 = vld [vmem:[%s173 + $0x68] sm:$0xf]
      %v213 = vld [vmem:[%s173 + $0x6c] sm:$0xf]
      %v214 = vld [vmem:[%s173 + $0x70] sm:$0xf]
      %v215 = vld [vmem:[%s173 + $0x74] sm:$0xf]
      %v216 = vld [vmem:[%s173 + $0x78] sm:$0xf]
      %v217 = vld [vmem:[%s173 + $0x7c] sm:$0xf]
      %v218 = vld [vmem:[%s173 + $0x80] sm:$0xf]
      %v219 = vld [vmem:[%s173 + $0x84] sm:$0xf]
      %v220 = vld [vmem:[%s173 + $0x88] sm:$0xf]
      %v221 = vld [vmem:[%s173 + $0x8c] sm:$0xf]
      %v222 = vld [vmem:[%s173 + $0x90] sm:$0xf]
      %v223 = vld [vmem:[%s173 + $0x94] sm:$0xf]
      %v224 = vld [vmem:[%s173 + $0x98] sm:$0xf]
      %v225 = vld [vmem:[%s173 + $0x9c] sm:$0xf]
      %v226 = vld [vmem:[%s173 + $0xa0] sm:$0xf]
      %v227 = vld [vmem:[%s173 + $0xa4] sm:$0xf]
      %v228 = vld [vmem:[%s173 + $0xa8] sm:$0xf]
      %v229 = vld [vmem:[%s173 + $0xac] sm:$0xf]
      %v230 = vld [vmem:[%s173 + $0xb0] sm:$0xf]
      %v231 = vld [vmem:[%s173 + $0xb4] sm:$0xf]
      %v232 = vld [vmem:[%s173 + $0xb8] sm:$0xf]
      %v233 = vld [vmem:[%s173 + $0xbc] sm:$0xf]
      %v234 = vld [vmem:[%s173 + $0xc0] sm:$0xf]
      %v235 = vld [vmem:[%s173 + $0xc4] sm:$0xf]
      %v236 = vld [vmem:[%s173 + $0xc8] sm:$0xf]
      %v237 = vld [vmem:[%s173 + $0xcc] sm:$0xf]
      %v238 = vld [vmem:[%s173 + $0xd0] sm:$0xf]
      %v239 = vld [vmem:[%s173 + $0xd4] sm:$0xf]
      %v240 = vld [vmem:[%s173 + $0xd8] sm:$0xf]
      %v241 = vld [vmem:[%s173 + $0xdc] sm:$0xf]
      %v242 = vld [vmem:[%s173 + $0xe0] sm:$0xf]
      %v243 = vld [vmem:[%s173 + $0xe4] sm:$0xf]
      %v244 = vld [vmem:[%s173 + $0xe8] sm:$0xf]
      %v245 = vld [vmem:[%s173 + $0xec] sm:$0xf]
      %v246 = vld [vmem:[%s173 + $0xf0] sm:$0xf]
      %v247 = vld [vmem:[%s173 + $0xf4] sm:$0xf]
      %v248 = vld [vmem:[%s173 + $0xf8] sm:$0xf]
      %v249 = vld [vmem:[%s173 + $0xfc] sm:$0xf]
      %v250 = vld [vmem:[%s1] sm:$0xff]
      %v251 = vld [vmem:[%s1 + $0x8] sm:$0xff]
      %v252 = vld [vmem:[%s1 + $0x10] sm:$0xff]
      %v253 = vld [vmem:[%s1 + $0x18] sm:$0x7]
      %v254 = vpack.c.bf16 %v251, %v250
      %v255 = vpack.c.bf16 %v253, %v252
      %v320 = vunpack.c.l.b16 %v186
      %v321 = vunpack.c.l.b16 %v187
      %v322 = vunpack.c.l.b16 %v188
      %v323 = vunpack.c.l.b16 %v189
      %v324 = vunpack.c.l.b16 %v190
      %v325 = vunpack.c.l.b16 %v191
      %v326 = vunpack.c.l.b16 %v192
      %v327 = vunpack.c.l.b16 %v193
      %v328 = vunpack.c.l.b16 %v194
      %v329 = vunpack.c.l.b16 %v195
      %v330 = vunpack.c.l.b16 %v196
      %v331 = vunpack.c.l.b16 %v197
      %v332 = vunpack.c.l.b16 %v198
      %v333 = vunpack.c.l.b16 %v199
      %v334 = vunpack.c.l.b16 %v200
      %v335 = vunpack.c.l.b16 %v201
      %v336 = vunpack.c.l.b16 %v202
      %v337 = vunpack.c.l.b16 %v203
      %v338 = vunpack.c.l.b16 %v204
      %v339 = vunpack.c.l.b16 %v205
      %v340 = vunpack.c.l.b16 %v206
      %v341 = vunpack.c.l.b16 %v207
      %v342 = vunpack.c.l.b16 %v208
      %v343 = vunpack.c.l.b16 %v209
      %v344 = vunpack.c.l.b16 %v210
      %v345 = vunpack.c.l.b16 %v211
      %v346 = vunpack.c.l.b16 %v212
      %v347 = vunpack.c.l.b16 %v213
      %v348 = vunpack.c.l.b16 %v214
      %v349 = vunpack.c.l.b16 %v215
      %v350 = vunpack.c.l.b16 %v216
      %v351 = vunpack.c.l.b16 %v217
      %v352 = vunpack.c.l.b16 %v218
      %v353 = vunpack.c.l.b16 %v219
      %v354 = vunpack.c.l.b16 %v220
      %v355 = vunpack.c.l.b16 %v221
      %v356 = vunpack.c.l.b16 %v222
      %v357 = vunpack.c.l.b16 %v223
      %v358 = vunpack.c.l.b16 %v224
      %v359 = vunpack.c.l.b16 %v225
      %v360 = vunpack.c.l.b16 %v226
      %v361 = vunpack.c.l.b16 %v227
      %v362 = vunpack.c.l.b16 %v228
      %v363 = vunpack.c.l.b16 %v229
      %v364 = vunpack.c.l.b16 %v230
      %v365 = vunpack.c.l.b16 %v231
      %v366 = vunpack.c.l.b16 %v232
      %v367 = vunpack.c.l.b16 %v233
      %v368 = vunpack.c.l.b16 %v234
      %v369 = vunpack.c.l.b16 %v235
      %v370 = vunpack.c.l.b16 %v236
      %v371 = vunpack.c.l.b16 %v237
      %v372 = vunpack.c.l.b16 %v238
      %v373 = vunpack.c.l.b16 %v239
      %v374 = vunpack.c.l.b16 %v240
      %v375 = vunpack.c.l.b16 %v241
      %v376 = vunpack.c.l.b16 %v242
      %v377 = vunpack.c.l.b16 %v243
      %v378 = vunpack.c.l.b16 %v244
      %v379 = vunpack.c.l.b16 %v245
      %v380 = vunpack.c.l.b16 %v246
      %v381 = vunpack.c.l.b16 %v247
      %v382 = vunpack.c.l.b16 %v248
      %v383 = vunpack.c.l.b16 %v249
      %v384 = vpack.c.b16 %v321, %v320
      %v385 = vpack.c.b16 %v323, %v322
      %v386 = vpack.c.b16 %v325, %v324
      %v387 = vpack.c.b16 %v327, %v326
      %v388 = vpack.c.b16 %v329, %v328
      %v389 = vpack.c.b16 %v331, %v330
      %v390 = vpack.c.b16 %v333, %v332
      %v391 = vpack.c.b16 %v335, %v334
      %v392 = vpack.c.b16 %v337, %v336
      %v393 = vpack.c.b16 %v339, %v338
      %v394 = vpack.c.b16 %v341, %v340
      %v395 = vpack.c.b16 %v343, %v342
      %v396 = vpack.c.b16 %v345, %v344
      %v397 = vpack.c.b16 %v347, %v346
      %v398 = vpack.c.b16 %v349, %v348
      %v399 = vpack.c.b16 %v351, %v350
      %v400 = vpack.c.b16 %v353, %v352
      %v401 = vpack.c.b16 %v355, %v354
      %v402 = vpack.c.b16 %v357, %v356
      %v403 = vpack.c.b16 %v359, %v358
      %v404 = vpack.c.b16 %v361, %v360
      %v405 = vpack.c.b16 %v363, %v362
      %v406 = vpack.c.b16 %v365, %v364
      %v407 = vpack.c.b16 %v367, %v366
      %v408 = vpack.c.b16 %v369, %v368
      %v409 = vpack.c.b16 %v371, %v370
      %v410 = vpack.c.b16 %v373, %v372
      %v411 = vpack.c.b16 %v375, %v374
      %v412 = vpack.c.b16 %v377, %v376
      %v413 = vpack.c.b16 %v379, %v378
      %v414 = vpack.c.b16 %v381, %v380
      %v415 = vpack.c.b16 %v383, %v382
      %vm416 = vcmask 220160
      %v418 = vsel %vm416, %v384, 0
      %v421 = vsel %vm416, %v385, 0
      %v424 = vsel %vm416, %v386, 0
      %v427 = vsel %vm416, %v387, 0
      %v430 = vsel %vm416, %v388, 0
      %v433 = vsel %vm416, %v389, 0
      %v436 = vsel %vm416, %v390, 0
      %v439 = vsel %vm416, %v391, 0
      %v442 = vsel %vm416, %v392, 0
      %v445 = vsel %vm416, %v393, 0
      %v448 = vsel %vm416, %v394, 0
      %v451 = vsel %vm416, %v395, 0
      %v454 = vsel %vm416, %v396, 0
      %v457 = vsel %vm416, %v397, 0
      %v460 = vsel %vm416, %v398, 0
      %v463 = vsel %vm416, %v399, 0
      %v466 = vsel %vm416, %v400, 0
      %v469 = vsel %vm416, %v401, 0
      %v472 = vsel %vm416, %v402, 0
      %v475 = vsel %vm416, %v403, 0
      %v478 = vsel %vm416, %v404, 0
      %v481 = vsel %vm416, %v405, 0
      %v484 = vsel %vm416, %v406, 0
      %v487 = vsel %vm416, %v407, 0
      %v490 = vsel %vm416, %v408, 0
      %v493 = vsel %vm416, %v409, 0
      %v496 = vsel %vm416, %v410, 0
      %v499 = vsel %vm416, %v411, 0
      %v502 = vsel %vm416, %v412, 0
      %v505 = vsel %vm416, %v413, 0
      %v508 = vsel %vm416, %v414, 0
      %v511 = vsel %vm416, %v415, 0
      %vm513 = vcmask 1044480
      %vm514 = vcmask 1045504
      %v515 = vsel %vm513, 4294967295, 65535
      %v516 = vsel %vm514, %v515, 0
      %v518 = vand.u32 %v255, %v516
      %520 = vmatpush.bf16.msra.mxu0 0
      %521 = vmatpush.bf16.msra.mxu0 0
      %522 = vmatpush.bf16.msra.mxu0 0
      %523 = vmatpush.bf16.msra.mxu0 0
      %524 = vmatpush.bf16.msra.mxu0 0
      %525 = vmatpush.bf16.msra.mxu0 0
      %526 = vmatpush.bf16.msra.mxu0 %v518
      %527 = vmatpush.bf16.msra.mxu0 %v254
      %528 = vmatmul.bf16.gmra.mxu0 %v418
      %v529 = vpop.f32.mrf.mxu0
      %v530 = vadd.f32 0.0, %v529
      %v531 = vpop.f32.mrf.mxu0
      %v532 = vadd.f32 0.0, %v531
      %533 = vmatmul.bf16.gmra.mxu0 %v421
      %v534 = vpop.f32.mrf.mxu0
      %v535 = vadd.f32 0.0, %v534
      %v536 = vpop.f32.mrf.mxu0
      %v537 = vadd.f32 0.0, %v536
      %538 = vmatmul.bf16.gmra.mxu0 %v424
      %v539 = vpop.f32.mrf.mxu0
      %v540 = vadd.f32 0.0, %v539
      %v541 = vpop.f32.mrf.mxu0
      %v542 = vadd.f32 0.0, %v541
      %543 = vmatmul.bf16.gmra.mxu0 %v427
      %v544 = vpop.f32.mrf.mxu0
      %v545 = vadd.f32 0.0, %v544
      %v546 = vpop.f32.mrf.mxu0
      %v547 = vadd.f32 0.0, %v546
      %548 = vmatmul.bf16.gmra.mxu0 %v430
      %v549 = vpop.f32.mrf.mxu0
      %v550 = vadd.f32 0.0, %v549
      %v551 = vpop.f32.mrf.mxu0
      %v552 = vadd.f32 0.0, %v551
      %553 = vmatmul.bf16.gmra.mxu0 %v433
      %v554 = vpop.f32.mrf.mxu0
      %v555 = vadd.f32 0.0, %v554
      %v556 = vpop.f32.mrf.mxu0
      %v557 = vadd.f32 0.0, %v556
      %558 = vmatmul.bf16.gmra.mxu0 %v436
      %v559 = vpop.f32.mrf.mxu0
      %v560 = vadd.f32 0.0, %v559
      %v561 = vpop.f32.mrf.mxu0
      %v562 = vadd.f32 0.0, %v561
      %563 = vmatmul.bf16.gmra.mxu0 %v439
      %v564 = vpop.f32.mrf.mxu0
      %v565 = vadd.f32 0.0, %v564
      %v566 = vpop.f32.mrf.mxu0
      %v567 = vadd.f32 0.0, %v566
      %568 = vmatmul.bf16.gmra.mxu0 %v442
      %v569 = vpop.f32.mrf.mxu0
      %v570 = vadd.f32 0.0, %v569
      %v571 = vpop.f32.mrf.mxu0
      %v572 = vadd.f32 0.0, %v571
      %573 = vmatmul.bf16.gmra.mxu0 %v445
      %v574 = vpop.f32.mrf.mxu0
      %v575 = vadd.f32 0.0, %v574
      %v576 = vpop.f32.mrf.mxu0
      %v577 = vadd.f32 0.0, %v576
      %578 = vmatmul.bf16.gmra.mxu0 %v448
      %v579 = vpop.f32.mrf.mxu0
      %v580 = vadd.f32 0.0, %v579
      %v581 = vpop.f32.mrf.mxu0
      %v582 = vadd.f32 0.0, %v581
      %583 = vmatmul.bf16.gmra.mxu0 %v451
      %v584 = vpop.f32.mrf.mxu0
      %v585 = vadd.f32 0.0, %v584
      %v586 = vpop.f32.mrf.mxu0
      %v587 = vadd.f32 0.0, %v586
      %588 = vmatmul.bf16.gmra.mxu0 %v454
      %v589 = vpop.f32.mrf.mxu0
      %v590 = vadd.f32 0.0, %v589
      %v591 = vpop.f32.mrf.mxu0
      %v592 = vadd.f32 0.0, %v591
      %593 = vmatmul.bf16.gmra.mxu0 %v457
      %v594 = vpop.f32.mrf.mxu0
      %v595 = vadd.f32 0.0, %v594
      %v596 = vpop.f32.mrf.mxu0
      %v597 = vadd.f32 0.0, %v596
      %598 = vmatmul.bf16.gmra.mxu0 %v460
      %v599 = vpop.f32.mrf.mxu0
      %v600 = vadd.f32 0.0, %v599
      %v601 = vpop.f32.mrf.mxu0
      %v602 = vadd.f32 0.0, %v601
      %603 = vmatmul.bf16.gmra.mxu0 %v463
      %v604 = vpop.f32.mrf.mxu0
      %v605 = vadd.f32 0.0, %v604
      %v606 = vpop.f32.mrf.mxu0
      %v607 = vadd.f32 0.0, %v606
      %608 = vmatmul.bf16.gmra.mxu0 %v466
      %v609 = vpop.f32.mrf.mxu0
      %v610 = vadd.f32 0.0, %v609
      %v611 = vpop.f32.mrf.mxu0
      %v612 = vadd.f32 0.0, %v611
      %613 = vmatmul.bf16.gmra.mxu0 %v469
      %v614 = vpop.f32.mrf.mxu0
      %v615 = vadd.f32 0.0, %v614
      %v616 = vpop.f32.mrf.mxu0
      %v617 = vadd.f32 0.0, %v616
      %618 = vmatmul.bf16.gmra.mxu0 %v472
      %v619 = vpop.f32.mrf.mxu0
      %v620 = vadd.f32 0.0, %v619
      %v621 = vpop.f32.mrf.mxu0
      %v622 = vadd.f32 0.0, %v621
      %623 = vmatmul.bf16.gmra.mxu0 %v475
      %v624 = vpop.f32.mrf.mxu0
      %v625 = vadd.f32 0.0, %v624
      %v626 = vpop.f32.mrf.mxu0
      %v627 = vadd.f32 0.0, %v626
      %628 = vmatmul.bf16.gmra.mxu0 %v478
      %v629 = vpop.f32.mrf.mxu0
      %v630 = vadd.f32 0.0, %v629
      %v631 = vpop.f32.mrf.mxu0
      %v632 = vadd.f32 0.0, %v631
      %633 = vmatmul.bf16.gmra.mxu0 %v481
      %v634 = vpop.f32.mrf.mxu0
      %v635 = vadd.f32 0.0, %v634
      %v636 = vpop.f32.mrf.mxu0
      %v637 = vadd.f32 0.0, %v636
      %638 = vmatmul.bf16.gmra.mxu0 %v484
      %v639 = vpop.f32.mrf.mxu0
      %v640 = vadd.f32 0.0, %v639
      %v641 = vpop.f32.mrf.mxu0
      %v642 = vadd.f32 0.0, %v641
      %643 = vmatmul.bf16.gmra.mxu0 %v487
      %v644 = vpop.f32.mrf.mxu0
      %v645 = vadd.f32 0.0, %v644
      %v646 = vpop.f32.mrf.mxu0
      %v647 = vadd.f32 0.0, %v646
      %648 = vmatmul.bf16.gmra.mxu0 %v490
      %v649 = vpop.f32.mrf.mxu0
      %v650 = vadd.f32 0.0, %v649
      %v651 = vpop.f32.mrf.mxu0
      %v652 = vadd.f32 0.0, %v651
      %653 = vmatmul.bf16.gmra.mxu0 %v493
      %v654 = vpop.f32.mrf.mxu0
      %v655 = vadd.f32 0.0, %v654
      %v656 = vpop.f32.mrf.mxu0
      %v657 = vadd.f32 0.0, %v656
      %658 = vmatmul.bf16.gmra.mxu0 %v496
      %v659 = vpop.f32.mrf.mxu0
      %v660 = vadd.f32 0.0, %v659
      %v661 = vpop.f32.mrf.mxu0
      %v662 = vadd.f32 0.0, %v661
      %663 = vmatmul.bf16.gmra.mxu0 %v499
      %v664 = vpop.f32.mrf.mxu0
      %v665 = vadd.f32 0.0, %v664
      %v666 = vpop.f32.mrf.mxu0
      %v667 = vadd.f32 0.0, %v666
      %668 = vmatmul.bf16.gmra.mxu0 %v502
      %v669 = vpop.f32.mrf.mxu0
      %v670 = vadd.f32 0.0, %v669
      %v671 = vpop.f32.mrf.mxu0
      %v672 = vadd.f32 0.0, %v671
      %673 = vmatmul.bf16.gmra.mxu0 %v505
      %v674 = vpop.f32.mrf.mxu0
      %v675 = vadd.f32 0.0, %v674
      %v676 = vpop.f32.mrf.mxu0
      %v677 = vadd.f32 0.0, %v676
      %678 = vmatmul.bf16.gmra.mxu0 %v508
      %v679 = vpop.f32.mrf.mxu0
      %v680 = vadd.f32 0.0, %v679
      %v681 = vpop.f32.mrf.mxu0
      %v682 = vadd.f32 0.0, %v681
      %683 = vmatmul.bf16.gmra.mxu0 %v511
      %v684 = vpop.f32.mrf.mxu0
      %v685 = vadd.f32 0.0, %v684
      %v686 = vpop.f32.mrf.mxu0
      %v687 = vadd.f32 0.0, %v686
      %688 = vdwg.mxu0
      %vm689 = vcmask 130048
      %690 = vst.msk [vmem:[%s179] sm:$0xff] %vm689, %v530
      %691 = vst.msk [vmem:[%s179 + $0x8] sm:$0xff] %vm689, %v532
      %692 = vst.msk [vmem:[%s179 + $0x10] sm:$0xff] %vm689, %v535
      %693 = vst.msk [vmem:[%s179 + $0x18] sm:$0xff] %vm689, %v537
      %694 = vst.msk [vmem:[%s179 + $0x20] sm:$0xff] %vm689, %v540
      %695 = vst.msk [vmem:[%s179 + $0x28] sm:$0xff] %vm689, %v542
      %696 = vst.msk [vmem:[%s179 + $0x30] sm:$0xff] %vm689, %v545
      %697 = vst.msk [vmem:[%s179 + $0x38] sm:$0xff] %vm689, %v547
      %698 = vst.msk [vmem:[%s179 + $0x40] sm:$0xff] %vm689, %v550
      %699 = vst.msk [vmem:[%s179 + $0x48] sm:$0xff] %vm689, %v552
      %700 = vst.msk [vmem:[%s179 + $0x50] sm:$0xff] %vm689, %v555
      %701 = vst.msk [vmem:[%s179 + $0x58] sm:$0xff] %vm689, %v557
      %702 = vst.msk [vmem:[%s179 + $0x60] sm:$0xff] %vm689, %v560
      %703 = vst.msk [vmem:[%s179 + $0x68] sm:$0xff] %vm689, %v562
      %704 = vst.msk [vmem:[%s179 + $0x70] sm:$0xff] %vm689, %v565
      %705 = vst.msk [vmem:[%s179 + $0x78] sm:$0xff] %vm689, %v567
      %706 = vst.msk [vmem:[%s179 + $0x80] sm:$0xff] %vm689, %v570
      %707 = vst.msk [vmem:[%s179 + $0x88] sm:$0xff] %vm689, %v572
      %708 = vst.msk [vmem:[%s179 + $0x90] sm:$0xff] %vm689, %v575
      %709 = vst.msk [vmem:[%s179 + $0x98] sm:$0xff] %vm689, %v577
      %710 = vst.msk [vmem:[%s179 + $0xa0] sm:$0xff] %vm689, %v580
      %711 = vst.msk [vmem:[%s179 + $0xa8] sm:$0xff] %vm689, %v582
      %712 = vst.msk [vmem:[%s179 + $0xb0] sm:$0xff] %vm689, %v585
      %713 = vst.msk [vmem:[%s179 + $0xb8] sm:$0xff] %vm689, %v587
      %714 = vst.msk [vmem:[%s179 + $0xc0] sm:$0xff] %vm689, %v590
      %715 = vst.msk [vmem:[%s179 + $0xc8] sm:$0xff] %vm689, %v592
      %716 = vst.msk [vmem:[%s179 + $0xd0] sm:$0xff] %vm689, %v595
      %717 = vst.msk [vmem:[%s179 + $0xd8] sm:$0xff] %vm689, %v597
      %718 = vst.msk [vmem:[%s179 + $0xe0] sm:$0xff] %vm689, %v600
      %719 = vst.msk [vmem:[%s179 + $0xe8] sm:$0xff] %vm689, %v602
      %720 = vst.msk [vmem:[%s179 + $0xf0] sm:$0xff] %vm689, %v605
      %721 = vst.msk [vmem:[%s179 + $0xf8] sm:$0xff] %vm689, %v607
      %722 = vst.msk [vmem:[%s179 + $0x100] sm:$0xff] %vm689, %v610
      %723 = vst.msk [vmem:[%s179 + $0x108] sm:$0xff] %vm689, %v612
      %724 = vst.msk [vmem:[%s179 + $0x110] sm:$0xff] %vm689, %v615
      %725 = vst.msk [vmem:[%s179 + $0x118] sm:$0xff] %vm689, %v617
      %726 = vst.msk [vmem:[%s179 + $0x120] sm:$0xff] %vm689, %v620
      %727 = vst.msk [vmem:[%s179 + $0x128] sm:$0xff] %vm689, %v622
      %728 = vst.msk [vmem:[%s179 + $0x130] sm:$0xff] %vm689, %v625
      %729 = vst.msk [vmem:[%s179 + $0x138] sm:$0xff] %vm689, %v627
      %730 = vst.msk [vmem:[%s179 + $0x140] sm:$0xff] %vm689, %v630
      %731 = vst.msk [vmem:[%s179 + $0x148] sm:$0xff] %vm689, %v632
      %732 = vst.msk [vmem:[%s179 + $0x150] sm:$0xff] %vm689, %v635
      %733 = vst.msk [vmem:[%s179 + $0x158] sm:$0xff] %vm689, %v637
      %734 = vst.msk [vmem:[%s179 + $0x160] sm:$0xff] %vm689, %v640
      %735 = vst.msk [vmem:[%s179 + $0x168] sm:$0xff] %vm689, %v642
      %736 = vst.msk [vmem:[%s179 + $0x170] sm:$0xff] %vm689, %v645
      %737 = vst.msk [vmem:[%s179 + $0x178] sm:$0xff] %vm689, %v647
      %738 = vst.msk [vmem:[%s179 + $0x180] sm:$0xff] %vm689, %v650
      %739 = vst.msk [vmem:[%s179 + $0x188] sm:$0xff] %vm689, %v652
      %740 = vst.msk [vmem:[%s179 + $0x190] sm:$0xff] %vm689, %v655
      %741 = vst.msk [vmem:[%s179 + $0x198] sm:$0xff] %vm689, %v657
      %742 = vst.msk [vmem:[%s179 + $0x1a0] sm:$0xff] %vm689, %v660
      %743 = vst.msk [vmem:[%s179 + $0x1a8] sm:$0xff] %vm689, %v662
      %744 = vst.msk [vmem:[%s179 + $0x1b0] sm:$0xff] %vm689, %v665
      %745 = vst.msk [vmem:[%s179 + $0x1b8] sm:$0xff] %vm689, %v667
      %746 = vst.msk [vmem:[%s179 + $0x1c0] sm:$0xff] %vm689, %v670
      %747 = vst.msk [vmem:[%s179 + $0x1c8] sm:$0xff] %vm689, %v672
      %748 = vst.msk [vmem:[%s179 + $0x1d0] sm:$0xff] %vm689, %v675
      %749 = vst.msk [vmem:[%s179 + $0x1d8] sm:$0xff] %vm689, %v677
      %750 = vst.msk [vmem:[%s179 + $0x1e0] sm:$0xff] %vm689, %v680
      %751 = vst.msk [vmem:[%s179 + $0x1e8] sm:$0xff] %vm689, %v682
      %752 = vst.msk [vmem:[%s179 + $0x1f0] sm:$0xff] %vm689, %v685
      %753 = vst.msk [vmem:[%s179 + $0x1f8] sm:$0xff] %vm689, %v687
      %v754 = vsel %vm689, %v530, 0.0
      %v755 = vsel %vm689, %v532, 0.0
      %v756 = vadd.f32 %v754, %v755
      %v757 = vsel %vm689, %v535, 0.0
      %v758 = vadd.f32 %v756, %v757
      %v759 = vsel %vm689, %v537, 0.0
      %v760 = vadd.f32 %v758, %v759
      %v761 = vsel %vm689, %v540, 0.0
      %v762 = vadd.f32 %v760, %v761
      %v763 = vsel %vm689, %v542, 0.0
      %v764 = vadd.f32 %v762, %v763
      %v765 = vsel %vm689, %v545, 0.0
      %v766 = vadd.f32 %v764, %v765
      %v767 = vsel %vm689, %v547, 0.0
      %v768 = vadd.f32 %v766, %v767
      %v769 = vsel %vm689, %v550, 0.0
      %v770 = vadd.f32 %v768, %v769
      %v771 = vsel %vm689, %v552, 0.0
      %v772 = vadd.f32 %v770, %v771
      %v773 = vsel %vm689, %v555, 0.0
      %v774 = vadd.f32 %v772, %v773
      %v775 = vsel %vm689, %v557, 0.0
      %v776 = vadd.f32 %v774, %v775
      %v777 = vsel %vm689, %v560, 0.0
      %v778 = vadd.f32 %v776, %v777
      %v779 = vsel %vm689, %v562, 0.0
      %v780 = vadd.f32 %v778, %v779
      %v781 = vsel %vm689, %v565, 0.0
      %v782 = vadd.f32 %v780, %v781
      %v783 = vsel %vm689, %v567, 0.0
      %v784 = vadd.f32 %v782, %v783
      %v785 = vsel %vm689, %v570, 0.0
      %v786 = vadd.f32 %v784, %v785
      %v787 = vsel %vm689, %v572, 0.0
      %v788 = vadd.f32 %v786, %v787
      %v789 = vsel %vm689, %v575, 0.0
      %v790 = vadd.f32 %v788, %v789
      %v791 = vsel %vm689, %v577, 0.0
      %v792 = vadd.f32 %v790, %v791
      %v793 = vsel %vm689, %v580, 0.0
      %v794 = vadd.f32 %v792, %v793
      %v795 = vsel %vm689, %v582, 0.0
      %v796 = vadd.f32 %v794, %v795
      %v797 = vsel %vm689, %v585, 0.0
      %v798 = vadd.f32 %v796, %v797
      %v799 = vsel %vm689, %v587, 0.0
      %v800 = vadd.f32 %v798, %v799
      %v801 = vsel %vm689, %v590, 0.0
      %v802 = vadd.f32 %v800, %v801
      %v803 = vsel %vm689, %v592, 0.0
      %v804 = vadd.f32 %v802, %v803
      %v805 = vsel %vm689, %v595, 0.0
      %v806 = vadd.f32 %v804, %v805
      %v807 = vsel %vm689, %v597, 0.0
      %v808 = vadd.f32 %v806, %v807
      %v809 = vsel %vm689, %v600, 0.0
      %v810 = vadd.f32 %v808, %v809
      %v811 = vsel %vm689, %v602, 0.0
      %v812 = vadd.f32 %v810, %v811
      %v813 = vsel %vm689, %v605, 0.0
      %v814 = vadd.f32 %v812, %v813
      %v815 = vsel %vm689, %v607, 0.0
      %v816 = vadd.f32 %v814, %v815
      %v817 = vsel %vm689, %v610, 0.0
      %v818 = vadd.f32 %v816, %v817
      %v819 = vsel %vm689, %v612, 0.0
      %v820 = vadd.f32 %v818, %v819
      %v821 = vsel %vm689, %v615, 0.0
      %v822 = vadd.f32 %v820, %v821
      %v823 = vsel %vm689, %v617, 0.0
      %v824 = vadd.f32 %v822, %v823
      %v825 = vsel %vm689, %v620, 0.0
      %v826 = vadd.f32 %v824, %v825
      %v827 = vsel %vm689, %v622, 0.0
      %v828 = vadd.f32 %v826, %v827
      %v829 = vsel %vm689, %v625, 0.0
      %v830 = vadd.f32 %v828, %v829
      %v831 = vsel %vm689, %v627, 0.0
      %v832 = vadd.f32 %v830, %v831
      %v833 = vsel %vm689, %v630, 0.0
      %v834 = vadd.f32 %v832, %v833
      %v835 = vsel %vm689, %v632, 0.0
      %v836 = vadd.f32 %v834, %v835
      %v837 = vsel %vm689, %v635, 0.0
      %v838 = vadd.f32 %v836, %v837
      %v839 = vsel %vm689, %v637, 0.0
      %v840 = vadd.f32 %v838, %v839
      %v841 = vsel %vm689, %v640, 0.0
      %v842 = vadd.f32 %v840, %v841
      %v843 = vsel %vm689, %v642, 0.0
      %v844 = vadd.f32 %v842, %v843
      %v845 = vsel %vm689, %v645, 0.0
      %v846 = vadd.f32 %v844, %v845
      %v847 = vsel %vm689, %v647, 0.0
      %v848 = vadd.f32 %v846, %v847
      %v849 = vsel %vm689, %v650, 0.0
      %v850 = vadd.f32 %v848, %v849
      %v851 = vsel %vm689, %v652, 0.0
      %v852 = vadd.f32 %v850, %v851
      %v853 = vsel %vm689, %v655, 0.0
      %v854 = vadd.f32 %v852, %v853
      %v855 = vsel %vm689, %v657, 0.0
      %v856 = vadd.f32 %v854, %v855
      %v857 = vsel %vm689, %v660, 0.0
      %v858 = vadd.f32 %v856, %v857
      %v859 = vsel %vm689, %v662, 0.0
      %v860 = vadd.f32 %v858, %v859
      %v861 = vsel %vm689, %v665, 0.0
      %v862 = vadd.f32 %v860, %v861
      %v863 = vsel %vm689, %v667, 0.0
      %v864 = vadd.f32 %v862, %v863
      %v865 = vsel %vm689, %v670, 0.0
      %v866 = vadd.f32 %v864, %v865
      %v867 = vsel %vm689, %v672, 0.0
      %v868 = vadd.f32 %v866, %v867
      %v869 = vsel %vm689, %v675, 0.0
      %v870 = vadd.f32 %v868, %v869
      %v871 = vsel %vm689, %v677, 0.0
      %v872 = vadd.f32 %v870, %v871
      %v873 = vsel %vm689, %v680, 0.0
      %v874 = vadd.f32 %v872, %v873
      %v875 = vsel %vm689, %v682, 0.0
      %v876 = vadd.f32 %v874, %v875
      %v877 = vsel %vm689, %v685, 0.0
      %v878 = vadd.f32 %v876, %v877
      %v879 = vsel %vm689, %v687, 0.0
      %v880 = vadd.f32 %v878, %v879
      %v881 = vrot.slane %v880, 4
      %v882 = vadd.f32 %v880, %v881
      %v883 = vrot.slane %v882, 2
      %v884 = vadd.f32 %v882, %v883
      %v885 = vrot.slane %v884, 1
      %v886 = vadd.f32 %v884, %v885
      %vm887 = vcmask 122880
      %888 = vst.msk [vmem:[%s184] sm:$0x1] %vm887, %v886
      %v889 = vmul.f32 %v530, %v530
      %v890 = vmul.f32 %v532, %v532
      %v891 = vmul.f32 %v535, %v535
      %v892 = vmul.f32 %v537, %v537
      %v893 = vmul.f32 %v540, %v540
      %v894 = vmul.f32 %v542, %v542
      %v895 = vmul.f32 %v545, %v545
      %v896 = vmul.f32 %v547, %v547
      %v897 = vmul.f32 %v550, %v550
      %v898 = vmul.f32 %v552, %v552
      %v899 = vmul.f32 %v555, %v555
      %v900 = vmul.f32 %v557, %v557
      %v901 = vmul.f32 %v560, %v560
      %v902 = vmul.f32 %v562, %v562
      %v903 = vmul.f32 %v565, %v565
      %v904 = vmul.f32 %v567, %v567
      %v905 = vmul.f32 %v570, %v570
      %v906 = vmul.f32 %v572, %v572
      %v907 = vmul.f32 %v575, %v575
      %v908 = vmul.f32 %v577, %v577
      %v909 = vmul.f32 %v580, %v580
      %v910 = vmul.f32 %v582, %v582
      %v911 = vmul.f32 %v585, %v585
      %v912 = vmul.f32 %v587, %v587
      %v913 = vmul.f32 %v590, %v590
      %v914 = vmul.f32 %v592, %v592
      %v915 = vmul.f32 %v595, %v595
      %v916 = vmul.f32 %v597, %v597
      %v917 = vmul.f32 %v600, %v600
      %v918 = vmul.f32 %v602, %v602
      %v919 = vmul.f32 %v605, %v605
      %v920 = vmul.f32 %v607, %v607
      %v921 = vmul.f32 %v610, %v610
      %v922 = vmul.f32 %v612, %v612
      %v923 = vmul.f32 %v615, %v615
      %v924 = vmul.f32 %v617, %v617
      %v925 = vmul.f32 %v620, %v620
      %v926 = vmul.f32 %v622, %v622
      %v927 = vmul.f32 %v625, %v625
      %v928 = vmul.f32 %v627, %v627
      %v929 = vmul.f32 %v630, %v630
      %v930 = vmul.f32 %v632, %v632
      %v931 = vmul.f32 %v635, %v635
      %v932 = vmul.f32 %v637, %v637
      %v933 = vmul.f32 %v640, %v640
      %v934 = vmul.f32 %v642, %v642
      %v935 = vmul.f32 %v645, %v645
      %v936 = vmul.f32 %v647, %v647
      %v937 = vmul.f32 %v650, %v650
      %v938 = vmul.f32 %v652, %v652
      %v939 = vmul.f32 %v655, %v655
      %v940 = vmul.f32 %v657, %v657
      %v941 = vmul.f32 %v660, %v660
      %v942 = vmul.f32 %v662, %v662
      %v943 = vmul.f32 %v665, %v665
      %v944 = vmul.f32 %v667, %v667
      %v945 = vmul.f32 %v670, %v670
      %v946 = vmul.f32 %v672, %v672
      %v947 = vmul.f32 %v675, %v675
      %v948 = vmul.f32 %v677, %v677
      %v949 = vmul.f32 %v680, %v680
      %v950 = vmul.f32 %v682, %v682
      %v951 = vmul.f32 %v685, %v685
      %v952 = vmul.f32 %v687, %v687
      %v953 = vsel %vm689, %v889, 0.0
      %v954 = vsel %vm689, %v890, 0.0
      %v955 = vadd.f32 %v953, %v954
      %v956 = vsel %vm689, %v891, 0.0
      %v957 = vadd.f32 %v955, %v956
      %v958 = vsel %vm689, %v892, 0.0
      %v959 = vadd.f32 %v957, %v958
      %v960 = vsel %vm689, %v893, 0.0
      %v961 = vadd.f32 %v959, %v960
      %v962 = vsel %vm689, %v894, 0.0
      %v963 = vadd.f32 %v961, %v962
      %v964 = vsel %vm689, %v895, 0.0
      %v965 = vadd.f32 %v963, %v964
      %v966 = vsel %vm689, %v896, 0.0
      %v967 = vadd.f32 %v965, %v966
      %v968 = vsel %vm689, %v897, 0.0
      %v969 = vadd.f32 %v967, %v968
      %v970 = vsel %vm689, %v898, 0.0
      %v971 = vadd.f32 %v969, %v970
      %v972 = vsel %vm689, %v899, 0.0
      %v973 = vadd.f32 %v971, %v972
      %v974 = vsel %vm689, %v900, 0.0
      %v975 = vadd.f32 %v973, %v974
      %v976 = vsel %vm689, %v901, 0.0
      %v977 = vadd.f32 %v975, %v976
      %v978 = vsel %vm689, %v902, 0.0
      %v979 = vadd.f32 %v977, %v978
      %v980 = vsel %vm689, %v903, 0.0
      %v981 = vadd.f32 %v979, %v980
      %v982 = vsel %vm689, %v904, 0.0
      %v983 = vadd.f32 %v981, %v982
      %v984 = vsel %vm689, %v905, 0.0
      %v985 = vadd.f32 %v983, %v984
      %v986 = vsel %vm689, %v906, 0.0
      %v987 = vadd.f32 %v985, %v986
      %v988 = vsel %vm689, %v907, 0.0
      %v989 = vadd.f32 %v987, %v988
      %v990 = vsel %vm689, %v908, 0.0
      %v991 = vadd.f32 %v989, %v990
      %v992 = vsel %vm689, %v909, 0.0
      %v993 = vadd.f32 %v991, %v992
      %v994 = vsel %vm689, %v910, 0.0
      %v995 = vadd.f32 %v993, %v994
      %v996 = vsel %vm689, %v911, 0.0
      %v997 = vadd.f32 %v995, %v996
      %v998 = vsel %vm689, %v912, 0.0
      %v999 = vadd.f32 %v997, %v998
      %v1000 = vsel %vm689, %v913, 0.0
      %v1001 = vadd.f32 %v999, %v1000
      %v1002 = vsel %vm689, %v914, 0.0
      %v1003 = vadd.f32 %v1001, %v1002
      %v1004 = vsel %vm689, %v915, 0.0
      %v1005 = vadd.f32 %v1003, %v1004
      %v1006 = vsel %vm689, %v916, 0.0
      %v1007 = vadd.f32 %v1005, %v1006
      %v1008 = vsel %vm689, %v917, 0.0
      %v1009 = vadd.f32 %v1007, %v1008
      %v1010 = vsel %vm689, %v918, 0.0
      %v1011 = vadd.f32 %v1009, %v1010
      %v1012 = vsel %vm689, %v919, 0.0
      %v1013 = vadd.f32 %v1011, %v1012
      %v1014 = vsel %vm689, %v920, 0.0
      %v1015 = vadd.f32 %v1013, %v1014
      %v1016 = vsel %vm689, %v921, 0.0
      %v1017 = vadd.f32 %v1015, %v1016
      %v1018 = vsel %vm689, %v922, 0.0
      %v1019 = vadd.f32 %v1017, %v1018
      %v1020 = vsel %vm689, %v923, 0.0
      %v1021 = vadd.f32 %v1019, %v1020
      %v1022 = vsel %vm689, %v924, 0.0
      %v1023 = vadd.f32 %v1021, %v1022
      %v1024 = vsel %vm689, %v925, 0.0
      %v1025 = vadd.f32 %v1023, %v1024
      %v1026 = vsel %vm689, %v926, 0.0
      %v1027 = vadd.f32 %v1025, %v1026
      %v1028 = vsel %vm689, %v927, 0.0
      %v1029 = vadd.f32 %v1027, %v1028
      %v1030 = vsel %vm689, %v928, 0.0
      %v1031 = vadd.f32 %v1029, %v1030
      %v1032 = vsel %vm689, %v929, 0.0
      %v1033 = vadd.f32 %v1031, %v1032
      %v1034 = vsel %vm689, %v930, 0.0
      %v1035 = vadd.f32 %v1033, %v1034
      %v1036 = vsel %vm689, %v931, 0.0
      %v1037 = vadd.f32 %v1035, %v1036
      %v1038 = vsel %vm689, %v932, 0.0
      %v1039 = vadd.f32 %v1037, %v1038
      %v1040 = vsel %vm689, %v933, 0.0
      %v1041 = vadd.f32 %v1039, %v1040
      %v1042 = vsel %vm689, %v934, 0.0
      %v1043 = vadd.f32 %v1041, %v1042
      %v1044 = vsel %vm689, %v935, 0.0
      %v1045 = vadd.f32 %v1043, %v1044
      %v1046 = vsel %vm689, %v936, 0.0
      %v1047 = vadd.f32 %v1045, %v1046
      %v1048 = vsel %vm689, %v937, 0.0
      %v1049 = vadd.f32 %v1047, %v1048
      %v1050 = vsel %vm689, %v938, 0.0
      %v1051 = vadd.f32 %v1049, %v1050
      %v1052 = vsel %vm689, %v939, 0.0
      %v1053 = vadd.f32 %v1051, %v1052
      %v1054 = vsel %vm689, %v940, 0.0
      %v1055 = vadd.f32 %v1053, %v1054
      %v1056 = vsel %vm689, %v941, 0.0
      %v1057 = vadd.f32 %v1055, %v1056
      %v1058 = vsel %vm689, %v942, 0.0
      %v1059 = vadd.f32 %v1057, %v1058
      %v1060 = vsel %vm689, %v943, 0.0
      %v1061 = vadd.f32 %v1059, %v1060
      %v1062 = vsel %vm689, %v944, 0.0
      %v1063 = vadd.f32 %v1061, %v1062
      %v1064 = vsel %vm689, %v945, 0.0
      %v1065 = vadd.f32 %v1063, %v1064
      %v1066 = vsel %vm689, %v946, 0.0
      %v1067 = vadd.f32 %v1065, %v1066
      %v1068 = vsel %vm689, %v947, 0.0
      %v1069 = vadd.f32 %v1067, %v1068
      %v1070 = vsel %vm689, %v948, 0.0
      %v1071 = vadd.f32 %v1069, %v1070
      %v1072 = vsel %vm689, %v949, 0.0
      %v1073 = vadd.f32 %v1071, %v1072
      %v1074 = vsel %vm689, %v950, 0.0
      %v1075 = vadd.f32 %v1073, %v1074
      %v1076 = vsel %vm689, %v951, 0.0
      %v1077 = vadd.f32 %v1075, %v1076
      %v1078 = vsel %vm689, %v952, 0.0
      %v1079 = vadd.f32 %v1077, %v1078
      %v1080 = vrot.slane %v1079, 4
      %v1081 = vadd.f32 %v1079, %v1080
      %v1082 = vrot.slane %v1081, 2
      %v1083 = vadd.f32 %v1081, %v1082
      %v1084 = vrot.slane %v1083, 1
      %v1085 = vadd.f32 %v1083, %v1084
      %1086 = vst.msk [vmem:[%s184 + $0x1] sm:$0x1] %vm887, %v1085
      %s1087 = smul.u32 64, %s15
      %p1088 = scmp.lt.s32.totalorder %s1087, 255
      %s1089 = scalar_select %p1088, %s1087, 255
      %s1090 = smul.addr %s1089, 8
      %s1091 = scalar_lea.vmem %s2, %s1090
      %p1092 = scmp.lt.s32.totalorder %s15, 3
      %s1093 = scalar_select %p1092, %s15, 3
      %s1094 = smul.addr %s1093, 2
      %s1095 = scalar_lea.vmem %s3, %s1094
      // Predicated region
      $region29: #{resnet_forward.39} parent=27 // pred_check
        %p1096 = pneg %p80
      $region30: #{resnet_forward.39} parent=27 // pred_check_branch
        %1098 = sbr.rel (%p1096) target = $region32
      $region31: #{resnet_forward.39} parent=27 // pred_region
        %s1099 = smul.u32 64, %s15
      $region32: #{resnet_forward.39} parent=27 // pred_fallthru
        _
      // Predicated region
      $region33: #{resnet_forward.39} parent=27 // pred_check
        %p1100 = pneg %p106
      $region34: #{resnet_forward.39} parent=27 // pred_check_branch
        %1102 = sbr.rel (%p1100) target = $region36
      $region35: #{resnet_forward.39} parent=27 // pred_region
        _
      $region36: #{resnet_forward.39} parent=27 // pred_fallthru
        _
    $region28: #{resnet_forward.39} parent=5 // pred_fallthru
      _
    %p1103 = scmp.le.s32.totalorder 2, %s10
    // Predicated region
    $region37: #{resnet_forward.39} parent=5 // pred_check
      %p1104 = pneg %p1103
    $region38: #{resnet_forward.39} parent=5 // pred_check_branch
      %1106 = sbr.rel (%p1104) target = $region40
    $region39: #{resnet_forward.39} parent=5 // pred_region
      %s1107 = ssub.s32 %s10, 2
      // Predicated region
      $region41: #{resnet_forward.39} parent=39 // pred_check
        %p1108 = pneg %p86
      $region42: #{resnet_forward.39} parent=39 // pred_check_branch
        %1110 = sbr.rel (%p1108) target = $region44
      $region43: #{resnet_forward.39} parent=39 // pred_region
        %s1111 = smul.u32 64, %s16
        %p1112 = scmp.lt.s32.totalorder %s1111, 255
        %s1113 = scalar_select %p1112, %s1111, 255
        %s1114 = smul.addr %s1113, 8
        %s1115 = scalar_lea.vmem %s2, %s1114
      $region44: #{resnet_forward.39} parent=39 // pred_fallthru
        _
      // Predicated region
      $region45: #{resnet_forward.39} parent=39 // pred_check
        %p1116 = pneg %p112
      $region46: #{resnet_forward.39} parent=39 // pred_check_branch
        %1118 = sbr.rel (%p1116) target = $region48
      $region47: #{resnet_forward.39} parent=39 // pred_region
        %p1119 = scmp.lt.s32.totalorder %s16, 3
        %s1120 = scalar_select %p1119, %s16, 3
        %s1121 = smul.addr %s1120, 2
        %s1122 = scalar_lea.vmem %s3, %s1121
      $region48: #{resnet_forward.39} parent=39 // pred_fallthru
        _
    $region40: #{resnet_forward.39} parent=5 // pred_fallthru
      _
  $region6: #{resnet_forward.39} parent=0 // loop_footer
    %s14 = sadd.s32 1, %s10
  $region7: #{resnet_forward.39} parent=0 // loop_footer_branch
    %9 = sbr.rel target = $region3
  $region8: #{resnet_forward.39} parent=0 // loop_exit
    _

// kernel: resnet_forward.41
$region0: #{resnet_forward.41}
  #allocation0 [shape = 'u32[]', space=smem, size = 0x4, offset = 0x4, fixed_abs, tag = 'smem constant byte address 0x4 - core index']
  #allocation1 [shape = 'u32[72,128]{1,0:T(1,128)}', space=vmem, size = 0x9000, scoped, tag = 'internal scratch']
  %s0 = inlined_call_operand.vmem [shape: bf16[2048,144], index: 0, kind: input, shape index: {}]
  %s1 = inlined_call_operand.vmem [shape: f32[144,16], index: 1, kind: input, shape index: {}]
  %s2 = inlined_call_operand.vmem [shape: f32[2048,16], index: 2, kind: output, shape index: {0}]
  %s3 = inlined_call_operand.vmem [shape: f32[4,2,16], index: 3, kind: output, shape index: {1}]
  %4 = xla_tuple %s2, %s3
  %s5 = sld [smem:[#allocation0]]
  $region49: #{resnet_forward.41} parent=0
    _
  %s7 = ssub.s32 1, %s5
  %s8 = scalar_select 0, %s7, %s5
  loop: start=0, step=1, limit=6
  $region2: #{resnet_forward.41} parent=0 // loop_pre_header
    _
  $region3: #{resnet_forward.41} parent=0 // loop_header
    %s10 = sphi 0, %s14
    %p11 = scmp.ge.s32.totalorder %s10, 6
    %s20 = sphi 0, %s22
    %s23 = sphi 0, %s20
    %s24 = sphi 0, %s23
    %s40 = sphi 0, %s24
    %s44 = sphi 0, %s44
    %s46 = sphi 0, %s44
    %s47 = sphi 0, %s46
    %s61 = sphi 0, %s47
    %s67 = sphi 0, %s69
    %s70 = sphi 0, %s67
    %s71 = sphi 0, %s70
    %s87 = sphi 0, %s71
    %s93 = sphi 0, %s95
    %s96 = sphi 0, %s93
    %s97 = sphi 0, %s96
    %s113 = sphi 0, %s97
  $region4: #{resnet_forward.41} parent=0 // loop_header_branch
    %13 = sbr.rel (%p11) target = $region8
  $region5: #{resnet_forward.41} parent=0 // loop_body
    %s15 = ssub.s32 %s10, 1
    %s16 = ssub.s32 %s10, 2
    %s17 = sadd.s32 %s10, 1
    %s18 = ssub.s32 %s10, %s17
    %p19 = scmp.eq.s32.totalorder %s18, 0
    %s21 = sadd.s32 %s20, 1
    %s22 = scalar_select %p19, %s20, %s21
    %p25 = pneg %p19
    %p26 = scmp.eq.s32.totalorder %s10, 3
    %p27 = por %p25, %p26
    %p28 = scmp.ne.s32.totalorder %s20, %s23
    %p29 = scmp.eq.s32.totalorder %s10, 0
    %p30 = por %p28, %p29
    %p31 = scmp.ne.s32.totalorder %s20, %s23
    %p32 = scmp.eq.s32.totalorder %s15, 3
    %p33 = por %p31, %p32
    %p34 = scmp.ne.s32.totalorder %s23, %s24
    %p35 = scmp.eq.s32.totalorder %s15, 0
    %p36 = por %p34, %p35
    %p37 = scmp.ne.s32.totalorder %s23, %s24
    %p38 = scmp.eq.s32.totalorder %s16, 3
    %p39 = por %p37, %p38
    %p41 = scmp.ne.s32.totalorder %s24, %s40
    %p42 = scmp.eq.s32.totalorder %s16, 0
    %p43 = por %p41, %p42
    %s45 = sadd.s32 %s44, 1
    %p48 = scmp.eq.s32.totalorder %s10, 3
    %p49 = scmp.ne.s32.totalorder %s44, %s46
    %p50 = scmp.eq.s32.totalorder %s10, 0
    %p51 = por %p49, %p50
    %p52 = scmp.ne.s32.totalorder %s44, %s46
    %p53 = scmp.eq.s32.totalorder %s15, 3
    %p54 = por %p52, %p53
    %p55 = scmp.ne.s32.totalorder %s46, %s47
    %p56 = scmp.eq.s32.totalorder %s15, 0
    %p57 = por %p55, %p56
    %p58 = scmp.ne.s32.totalorder %s46, %s47
    %p59 = scmp.eq.s32.totalorder %s16, 3
    %p60 = por %p58, %p59
    %p62 = scmp.ne.s32.totalorder %s47, %s61
    %p63 = scmp.eq.s32.totalorder %s16, 0
    %p64 = por %p62, %p63
    %s65 = ssub.s32 %s10, %s17
    %p66 = scmp.eq.s32.totalorder %s65, 0
    %s68 = sadd.s32 %s67, 1
    %s69 = scalar_select %p66, %s67, %s68
    %p72 = pneg %p66
    %p73 = scmp.eq.s32.totalorder %s10, 3
    %p74 = por %p72, %p73
    %p75 = scmp.ne.s32.totalorder %s67, %s70
    %p76 = scmp.eq.s32.totalorder %s10, 0
    %p77 = por %p75, %p76
    %p78 = scmp.ne.s32.totalorder %s67, %s70
    %p79 = scmp.eq.s32.totalorder %s15, 3
    %p80 = por %p78, %p79
    %p81 = scmp.ne.s32.totalorder %s70, %s71
    %p82 = scmp.eq.s32.totalorder %s15, 0
    %p83 = por %p81, %p82
    %p84 = scmp.ne.s32.totalorder %s70, %s71
    %p85 = scmp.eq.s32.totalorder %s16, 3
    %p86 = por %p84, %p85
    %p88 = scmp.ne.s32.totalorder %s71, %s87
    %p89 = scmp.eq.s32.totalorder %s16, 0
    %p90 = por %p88, %p89
    %s91 = ssub.s32 %s10, %s17
    %p92 = scmp.eq.s32.totalorder %s91, 0
    %s94 = sadd.s32 %s93, 1
    %s95 = scalar_select %p92, %s93, %s94
    %p98 = pneg %p92
    %p99 = scmp.eq.s32.totalorder %s10, 3
    %p100 = por %p98, %p99
    %p101 = scmp.ne.s32.totalorder %s93, %s96
    %p102 = scmp.eq.s32.totalorder %s10, 0
    %p103 = por %p101, %p102
    %p104 = scmp.ne.s32.totalorder %s93, %s96
    %p105 = scmp.eq.s32.totalorder %s15, 3
    %p106 = por %p104, %p105
    %p107 = scmp.ne.s32.totalorder %s96, %s97
    %p108 = scmp.eq.s32.totalorder %s15, 0
    %p109 = por %p107, %p108
    %p110 = scmp.ne.s32.totalorder %s96, %s97
    %p111 = scmp.eq.s32.totalorder %s16, 3
    %p112 = por %p110, %p111
    %p114 = scmp.ne.s32.totalorder %s97, %s113
    %p115 = scmp.eq.s32.totalorder %s16, 0
    %p116 = por %p114, %p115
    %p117 = scmp.le.s32.totalorder 1, %s10
    %p118 = scmp.lt.s32.totalorder %s10, 5
    %p119 = pnand %p117, %p118
    %p120 = pneg %p119
    // Predicated region
    $region9: #{resnet_forward.41} parent=5 // pred_check
      _
    $region10: #{resnet_forward.41} parent=5 // pred_check_branch
      %122 = sbr.rel (%p119) target = $region12
    $region11: #{resnet_forward.41} parent=5 // pred_region
      %s123 = ssub.s32 %s10, 1
      // Predicated region
      $region13: #{resnet_forward.41} parent=11 // pred_check
        %p124 = pneg %p57
      $region14: #{resnet_forward.41} parent=11 // pred_check_branch
        %126 = sbr.rel (%p124) target = $region16
      $region15: #{resnet_forward.41} parent=11 // pred_region
        _
      $region16: #{resnet_forward.41} parent=11 // pred_fallthru
        _
    $region12: #{resnet_forward.41} parent=5 // pred_fallthru
      _
    %p127 = scmp.lt.s32.totalorder %s10, 4
    // Predicated region
    $region17: #{resnet_forward.41} parent=5 // pred_check
      %p128 = pneg %p127
    $region18: #{resnet_forward.41} parent=5 // pred_check_branch
      %130 = sbr.rel (%p128) target = $region20
    $region19: #{resnet_forward.41} parent=5 // pred_region
      // Predicated region
      $region21: #{resnet_forward.41} parent=19 // pred_check
        %p131 = pneg %p30
      $region22: #{resnet_forward.41} parent=19 // pred_check_branch
        %133 = sbr.rel (%p131) target = $region24
      $region23: #{resnet_forward.41} parent=19 // pred_region
        %s134 = smul.u32 64, %s10
        %p135 = scmp.lt.s32.totalorder %s134, 255
        %s136 = scalar_select %p135, %s134, 255
        %s137 = smul.addr %s136, 2
        %s138 = smul.addr %s137, 4
        %s139 = scalar_lea.vmem %s0, %s138
        %s140 = smul.u32 64, %s10
      $region24: #{resnet_forward.41} parent=19 // pred_fallthru
        _
    $region20: #{resnet_forward.41} parent=5 // pred_fallthru
      _
    %p141 = scmp.le.s32.totalorder 1, %s10
    %p142 = scmp.lt.s32.totalorder %s10, 5
    %p143 = pnand %p141, %p142
    %p144 = pneg %p143
    // Predicated region
    $region25: #{resnet_forward.41} parent=5 // pred_check
      _
    $region26: #{resnet_forward.41} parent=5 // pred_check_branch
      %146 = sbr.rel (%p143) target = $region28
    $region27: #{resnet_forward.41} parent=5 // pred_region
      %s147 = ssub.s32 %s10, 1
      %s148 = smul.u32 64, %s15
      %p149 = scmp.lt.s32.totalorder %s148, 255
      %s150 = scalar_select %p149, %s148, 255
      %s151 = smul.addr %s150, 2
      %s152 = smul.addr %s151, 4
      %s153 = scalar_lea.vmem %s0, %s152
      %p154 = pneg %p36
      %p155 = pneg %p33
      %p156 = pneg %p57
      %p157 = pneg %p54
      %p158 = pneg %p83
      %p159 = pneg %p80
      %s160 = smul.u32 64, %s15
      %p161 = scmp.lt.s32.totalorder %s160, 255
      %s162 = scalar_select %p161, %s160, 255
      %s163 = smul.addr %s162, 8
      %s164 = scalar_lea.vmem %s2, %s163
      %p165 = pneg %p109
      %p166 = pneg %p106
      %p167 = scmp.lt.s32.totalorder %s15, 3
      %s168 = scalar_select %p167, %s15, 3
      %s169 = smul.addr %s168, 2
      %s170 = scalar_lea.vmem %s3, %s169
      %s171 = smul.u32 64, %s15
      %p172 = scmp.lt.s32.totalorder %s171, 255
      %s173 = scalar_select %p172, %s171, 255
      %s174 = smul.addr %s173, 2
      %s175 = smul.addr %s174, 4
      %s176 = scalar_lea.vmem %s0, %s175
      %s177 = smul.u32 64, %s15
      %s178 = smul.u32 64, %s15
      %p179 = scmp.lt.s32.totalorder %s178, 255
      %s180 = scalar_select %p179, %s178, 255
      %s181 = smul.addr %s180, 8
      %s182 = scalar_lea.vmem %s2, %s181
      %s183 = smul.u32 64, %s15
      %p184 = scmp.lt.s32.totalorder %s15, 3
      %s185 = scalar_select %p184, %s15, 3
      %s186 = smul.addr %s185, 2
      %s187 = scalar_lea.vmem %s3, %s186
      %v189 = vld [vmem:[%s176] sm:$0xff]
      %v190 = vld [vmem:[%s176 + $0x8] sm:$0xff]
      %v191 = vld [vmem:[%s176 + $0x10] sm:$0xff]
      %v192 = vld [vmem:[%s176 + $0x18] sm:$0xff]
      %v193 = vld [vmem:[%s176 + $0x20] sm:$0xff]
      %v194 = vld [vmem:[%s176 + $0x28] sm:$0xff]
      %v195 = vld [vmem:[%s176 + $0x30] sm:$0xff]
      %v196 = vld [vmem:[%s176 + $0x38] sm:$0xff]
      %v197 = vld [vmem:[%s176 + $0x40] sm:$0xff]
      %v198 = vld [vmem:[%s176 + $0x48] sm:$0xff]
      %v199 = vld [vmem:[%s176 + $0x50] sm:$0xff]
      %v200 = vld [vmem:[%s176 + $0x58] sm:$0xff]
      %v201 = vld [vmem:[%s176 + $0x60] sm:$0xff]
      %v202 = vld [vmem:[%s176 + $0x68] sm:$0xff]
      %v203 = vld [vmem:[%s176 + $0x70] sm:$0xff]
      %v204 = vld [vmem:[%s176 + $0x78] sm:$0xff]
      %v205 = vld [vmem:[%s176 + $0x80] sm:$0xff]
      %v206 = vld [vmem:[%s176 + $0x88] sm:$0xff]
      %v207 = vld [vmem:[%s176 + $0x90] sm:$0xff]
      %v208 = vld [vmem:[%s176 + $0x98] sm:$0xff]
      %v209 = vld [vmem:[%s176 + $0xa0] sm:$0xff]
      %v210 = vld [vmem:[%s176 + $0xa8] sm:$0xff]
      %v211 = vld [vmem:[%s176 + $0xb0] sm:$0xff]
      %v212 = vld [vmem:[%s176 + $0xb8] sm:$0xff]
      %v213 = vld [vmem:[%s176 + $0xc0] sm:$0xff]
      %v214 = vld [vmem:[%s176 + $0xc8] sm:$0xff]
      %v215 = vld [vmem:[%s176 + $0xd0] sm:$0xff]
      %v216 = vld [vmem:[%s176 + $0xd8] sm:$0xff]
      %v217 = vld [vmem:[%s176 + $0xe0] sm:$0xff]
      %v218 = vld [vmem:[%s176 + $0xe8] sm:$0xff]
      %v219 = vld [vmem:[%s176 + $0xf0] sm:$0xff]
      %v220 = vld [vmem:[%s176 + $0xf8] sm:$0xff]
      %v221 = vld [vmem:[%s176 + $0x100] sm:$0xff]
      %v222 = vld [vmem:[%s176 + $0x108] sm:$0xff]
      %v223 = vld [vmem:[%s176 + $0x110] sm:$0xff]
      %v224 = vld [vmem:[%s176 + $0x118] sm:$0xff]
      %v225 = vld [vmem:[%s176 + $0x120] sm:$0xff]
      %v226 = vld [vmem:[%s176 + $0x128] sm:$0xff]
      %v227 = vld [vmem:[%s176 + $0x130] sm:$0xff]
      %v228 = vld [vmem:[%s176 + $0x138] sm:$0xff]
      %v229 = vld [vmem:[%s176 + $0x140] sm:$0xff]
      %v230 = vld [vmem:[%s176 + $0x148] sm:$0xff]
      %v231 = vld [vmem:[%s176 + $0x150] sm:$0xff]
      %v232 = vld [vmem:[%s176 + $0x158] sm:$0xff]
      %v233 = vld [vmem:[%s176 + $0x160] sm:$0xff]
      %v234 = vld [vmem:[%s176 + $0x168] sm:$0xff]
      %v235 = vld [vmem:[%s176 + $0x170] sm:$0xff]
      %v236 = vld [vmem:[%s176 + $0x178] sm:$0xff]
      %v237 = vld [vmem:[%s176 + $0x180] sm:$0xff]
      %v238 = vld [vmem:[%s176 + $0x188] sm:$0xff]
      %v239 = vld [vmem:[%s176 + $0x190] sm:$0xff]
      %v240 = vld [vmem:[%s176 + $0x198] sm:$0xff]
      %v241 = vld [vmem:[%s176 + $0x1a0] sm:$0xff]
      %v242 = vld [vmem:[%s176 + $0x1a8] sm:$0xff]
      %v243 = vld [vmem:[%s176 + $0x1b0] sm:$0xff]
      %v244 = vld [vmem:[%s176 + $0x1b8] sm:$0xff]
      %v245 = vld [vmem:[%s176 + $0x1c0] sm:$0xff]
      %v246 = vld [vmem:[%s176 + $0x1c8] sm:$0xff]
      %v247 = vld [vmem:[%s176 + $0x1d0] sm:$0xff]
      %v248 = vld [vmem:[%s176 + $0x1d8] sm:$0xff]
      %v249 = vld [vmem:[%s176 + $0x1e0] sm:$0xff]
      %v250 = vld [vmem:[%s176 + $0x1e8] sm:$0xff]
      %v251 = vld [vmem:[%s176 + $0x1f0] sm:$0xff]
      %v252 = vld [vmem:[%s176 + $0x1f8] sm:$0xff]
      %v253 = vld [vmem:[%s1] sm:$0xff]
      %v254 = vld [vmem:[%s1 + $0x8] sm:$0xff]
      %v255 = vld [vmem:[%s1 + $0x10] sm:$0xff]
      %v256 = vld [vmem:[%s1 + $0x18] sm:$0xff]
      %v257 = vld [vmem:[%s1 + $0x20] sm:$0xff]
      %v258 = vld [vmem:[%s1 + $0x28] sm:$0xff]
      %v259 = vld [vmem:[%s1 + $0x30] sm:$0xff]
      %v260 = vld [vmem:[%s1 + $0x38] sm:$0xff]
      %v261 = vld [vmem:[%s1 + $0x40] sm:$0xff]
      %v262 = vld [vmem:[%s1 + $0x48] sm:$0xff]
      %v263 = vld [vmem:[%s1 + $0x50] sm:$0xff]
      %v264 = vld [vmem:[%s1 + $0x58] sm:$0xff]
      %v265 = vld [vmem:[%s1 + $0x60] sm:$0xff]
      %v266 = vld [vmem:[%s1 + $0x68] sm:$0xff]
      %v267 = vld [vmem:[%s1 + $0x70] sm:$0xff]
      %v268 = vld [vmem:[%s1 + $0x78] sm:$0xff]
      %v269 = vld [vmem:[%s1 + $0x80] sm:$0xff]
      %v270 = vld [vmem:[%s1 + $0x88] sm:$0xff]
      %v271 = vpack.c.bf16 %v254, %v253
      %v272 = vpack.c.bf16 %v256, %v255
      %v273 = vpack.c.bf16 %v258, %v257
      %v274 = vpack.c.bf16 %v260, %v259
      %v275 = vpack.c.bf16 %v262, %v261
      %v276 = vpack.c.bf16 %v264, %v263
      %v277 = vpack.c.bf16 %v266, %v265
      %v278 = vpack.c.bf16 %v268, %v267
      %v279 = vpack.c.bf16 %v270, %v269
      %v344 = vunpack.c.l.b16 %v189
      %v345 = vunpack.c.h.b16 %v189
      %v346 = vunpack.c.l.b16 %v190
      %v347 = vunpack.c.h.b16 %v190
      %v348 = vunpack.c.l.b16 %v191
      %v349 = vunpack.c.h.b16 %v191
      %v350 = vunpack.c.l.b16 %v192
      %v351 = vunpack.c.h.b16 %v192
      %v352 = vunpack.c.l.b16 %v193
      %v353 = vunpack.c.h.b16 %v193
      %v354 = vunpack.c.l.b16 %v194
      %v355 = vunpack.c.h.b16 %v194
      %v356 = vunpack.c.l.b16 %v195
      %v357 = vunpack.c.h.b16 %v195
      %v358 = vunpack.c.l.b16 %v196
      %v359 = vunpack.c.h.b16 %v196
      %v360 = vunpack.c.l.b16 %v197
      %v361 = vunpack.c.h.b16 %v197
      %v362 = vunpack.c.l.b16 %v198
      %v363 = vunpack.c.h.b16 %v198
      %v364 = vunpack.c.l.b16 %v199
      %v365 = vunpack.c.h.b16 %v199
      %v366 = vunpack.c.l.b16 %v200
      %v367 = vunpack.c.h.b16 %v200
      %v368 = vunpack.c.l.b16 %v201
      %v369 = vunpack.c.h.b16 %v201
      %v370 = vunpack.c.l.b16 %v202
      %v371 = vunpack.c.h.b16 %v202
      %v372 = vunpack.c.l.b16 %v203
      %v373 = vunpack.c.h.b16 %v203
      %v374 = vunpack.c.l.b16 %v204
      %v375 = vunpack.c.h.b16 %v204
      %v376 = vunpack.c.l.b16 %v205
      %v377 = vunpack.c.h.b16 %v205
      %v378 = vunpack.c.l.b16 %v206
      %v379 = vunpack.c.h.b16 %v206
      %v380 = vunpack.c.l.b16 %v207
      %v381 = vunpack.c.h.b16 %v207
      %v382 = vunpack.c.l.b16 %v208
      %v383 = vunpack.c.h.b16 %v208
      %v384 = vunpack.c.l.b16 %v209
      %v385 = vunpack.c.h.b16 %v209
      %v386 = vunpack.c.l.b16 %v210
      %v387 = vunpack.c.h.b16 %v210
      %v388 = vunpack.c.l.b16 %v211
      %v389 = vunpack.c.h.b16 %v211
      %v390 = vunpack.c.l.b16 %v212
      %v391 = vunpack.c.h.b16 %v212
      %v392 = vunpack.c.l.b16 %v213
      %v393 = vunpack.c.h.b16 %v213
      %v394 = vunpack.c.l.b16 %v214
      %v395 = vunpack.c.h.b16 %v214
      %v396 = vunpack.c.l.b16 %v215
      %v397 = vunpack.c.h.b16 %v215
      %v398 = vunpack.c.l.b16 %v216
      %v399 = vunpack.c.h.b16 %v216
      %v400 = vunpack.c.l.b16 %v217
      %v401 = vunpack.c.h.b16 %v217
      %v402 = vunpack.c.l.b16 %v218
      %v403 = vunpack.c.h.b16 %v218
      %v404 = vunpack.c.l.b16 %v219
      %v405 = vunpack.c.h.b16 %v219
      %v406 = vunpack.c.l.b16 %v220
      %v407 = vunpack.c.h.b16 %v220
      %v408 = vunpack.c.l.b16 %v221
      %v409 = vunpack.c.h.b16 %v221
      %v410 = vunpack.c.l.b16 %v222
      %v411 = vunpack.c.h.b16 %v222
      %v412 = vunpack.c.l.b16 %v223
      %v413 = vunpack.c.h.b16 %v223
      %v414 = vunpack.c.l.b16 %v224
      %v415 = vunpack.c.h.b16 %v224
      %v416 = vunpack.c.l.b16 %v225
      %v417 = vunpack.c.h.b16 %v225
      %v418 = vunpack.c.l.b16 %v226
      %v419 = vunpack.c.h.b16 %v226
      %v420 = vunpack.c.l.b16 %v227
      %v421 = vunpack.c.h.b16 %v227
      %v422 = vunpack.c.l.b16 %v228
      %v423 = vunpack.c.h.b16 %v228
      %v424 = vunpack.c.l.b16 %v229
      %v425 = vunpack.c.h.b16 %v229
      %v426 = vunpack.c.l.b16 %v230
      %v427 = vunpack.c.h.b16 %v230
      %v428 = vunpack.c.l.b16 %v231
      %v429 = vunpack.c.h.b16 %v231
      %v430 = vunpack.c.l.b16 %v232
      %v431 = vunpack.c.h.b16 %v232
      %v432 = vunpack.c.l.b16 %v233
      %v433 = vunpack.c.h.b16 %v233
      %v434 = vunpack.c.l.b16 %v234
      %v435 = vunpack.c.h.b16 %v234
      %v436 = vunpack.c.l.b16 %v235
      %v437 = vunpack.c.h.b16 %v235
      %v438 = vunpack.c.l.b16 %v236
      %v439 = vunpack.c.h.b16 %v236
      %v440 = vunpack.c.l.b16 %v237
      %v441 = vunpack.c.h.b16 %v237
      %v442 = vunpack.c.l.b16 %v238
      %v443 = vunpack.c.h.b16 %v238
      %v444 = vunpack.c.l.b16 %v239
      %v445 = vunpack.c.h.b16 %v239
      %v446 = vunpack.c.l.b16 %v240
      %v447 = vunpack.c.h.b16 %v240
      %v448 = vunpack.c.l.b16 %v241
      %v449 = vunpack.c.h.b16 %v241
      %v450 = vunpack.c.l.b16 %v242
      %v451 = vunpack.c.h.b16 %v242
      %v452 = vunpack.c.l.b16 %v243
      %v453 = vunpack.c.h.b16 %v243
      %v454 = vunpack.c.l.b16 %v244
      %v455 = vunpack.c.h.b16 %v244
      %v456 = vunpack.c.l.b16 %v245
      %v457 = vunpack.c.h.b16 %v245
      %v458 = vunpack.c.l.b16 %v246
      %v459 = vunpack.c.h.b16 %v246
      %v460 = vunpack.c.l.b16 %v247
      %v461 = vunpack.c.h.b16 %v247
      %v462 = vunpack.c.l.b16 %v248
      %v463 = vunpack.c.h.b16 %v248
      %v464 = vunpack.c.l.b16 %v249
      %v465 = vunpack.c.h.b16 %v249
      %v466 = vunpack.c.l.b16 %v250
      %v467 = vunpack.c.h.b16 %v250
      %v468 = vunpack.c.l.b16 %v251
      %v469 = vunpack.c.h.b16 %v251
      %v470 = vunpack.c.l.b16 %v252
      %v471 = vunpack.c.h.b16 %v252
      %v472 = vpack.c.b16 %v346, %v344
      %v473 = vpack.c.b16 %v347, %v345
      %v474 = vpack.c.b16 %v350, %v348
      %v475 = vpack.c.b16 %v351, %v349
      %v476 = vpack.c.b16 %v354, %v352
      %v477 = vpack.c.b16 %v355, %v353
      %v478 = vpack.c.b16 %v358, %v356
      %v479 = vpack.c.b16 %v359, %v357
      %v480 = vpack.c.b16 %v362, %v360
      %v481 = vpack.c.b16 %v363, %v361
      %v482 = vpack.c.b16 %v366, %v364
      %v483 = vpack.c.b16 %v367, %v365
      %v484 = vpack.c.b16 %v370, %v368
      %v485 = vpack.c.b16 %v371, %v369
      %v486 = vpack.c.b16 %v374, %v372
      %v487 = vpack.c.b16 %v375, %v373
      %v488 = vpack.c.b16 %v378, %v376
      %v489 = vpack.c.b16 %v379, %v377
      %v490 = vpack.c.b16 %v382, %v380
      %v491 = vpack.c.b16 %v383, %v381
      %v492 = vpack.c.b16 %v386, %v384
      %v493 = vpack.c.b16 %v387, %v385
      %v494 = vpack.c.b16 %v390, %v388
      %v495 = vpack.c.b16 %v391, %v389
      %v496 = vpack.c.b16 %v394, %v392
      %v497 = vpack.c.b16 %v395, %v393
      %v498 = vpack.c.b16 %v398, %v396
      %v499 = vpack.c.b16 %v399, %v397
      %v500 = vpack.c.b16 %v402, %v400
      %v501 = vpack.c.b16 %v403, %v401
      %v502 = vpack.c.b16 %v406, %v404
      %v503 = vpack.c.b16 %v407, %v405
      %v504 = vpack.c.b16 %v410, %v408
      %v505 = vpack.c.b16 %v411, %v409
      %v506 = vpack.c.b16 %v414, %v412
      %v507 = vpack.c.b16 %v415, %v413
      %v508 = vpack.c.b16 %v418, %v416
      %v509 = vpack.c.b16 %v419, %v417
      %v510 = vpack.c.b16 %v422, %v420
      %v511 = vpack.c.b16 %v423, %v421
      %v512 = vpack.c.b16 %v426, %v424
      %v513 = vpack.c.b16 %v427, %v425
      %v514 = vpack.c.b16 %v430, %v428
      %v515 = vpack.c.b16 %v431, %v429
      %v516 = vpack.c.b16 %v434, %v432
      %v517 = vpack.c.b16 %v435, %v433
      %v518 = vpack.c.b16 %v438, %v436
      %v519 = vpack.c.b16 %v439, %v437
      %v520 = vpack.c.b16 %v442, %v440
      %v521 = vpack.c.b16 %v443, %v441
      %v522 = vpack.c.b16 %v446, %v444
      %v523 = vpack.c.b16 %v447, %v445
      %v524 = vpack.c.b16 %v450, %v448
      %v525 = vpack.c.b16 %v451, %v449
      %v526 = vpack.c.b16 %v454, %v452
      %v527 = vpack.c.b16 %v455, %v453
      %v528 = vpack.c.b16 %v458, %v456
      %v529 = vpack.c.b16 %v459, %v457
      %v530 = vpack.c.b16 %v462, %v460
      %v531 = vpack.c.b16 %v463, %v461
      %v532 = vpack.c.b16 %v466, %v464
      %v533 = vpack.c.b16 %v467, %v465
      %v534 = vpack.c.b16 %v470, %v468
      %v535 = vpack.c.b16 %v471, %v469
      %vm568 = vcmask 130048
      %v570 = vsel %vm568, %v473, 0
      %v573 = vsel %vm568, %v475, 0
      %v576 = vsel %vm568, %v477, 0
      %v579 = vsel %vm568, %v479, 0
      %v582 = vsel %vm568, %v481, 0
      %v585 = vsel %vm568, %v483, 0
      %v588 = vsel %vm568, %v485, 0
      %v591 = vsel %vm568, %v487, 0
      %v594 = vsel %vm568, %v489, 0
      %v597 = vsel %vm568, %v491, 0
      %v600 = vsel %vm568, %v493, 0
      %v603 = vsel %vm568, %v495, 0
      %v606 = vsel %vm568, %v497, 0
      %v609 = vsel %vm568, %v499, 0
      %v612 = vsel %vm568, %v501, 0
      %v615 = vsel %vm568, %v503, 0
      %v618 = vsel %vm568, %v505, 0
      %v621 = vsel %vm568, %v507, 0
      %v624 = vsel %vm568, %v509, 0
      %v627 = vsel %vm568, %v511, 0
      %v630 = vsel %vm568, %v513, 0
      %v633 = vsel %vm568, %v515, 0
      %v636 = vsel %vm568, %v517, 0
      %v639 = vsel %vm568, %v519, 0
      %v642 = vsel %vm568, %v521, 0
      %v645 = vsel %vm568, %v523, 0
      %v648 = vsel %vm568, %v525, 0
      %v651 = vsel %vm568, %v527, 0
      %v654 = vsel %vm568, %v529, 0
      %v657 = vsel %vm568, %v531, 0
      %v660 = vsel %vm568, %v533, 0
      %v663 = vsel %vm568, %v535, 0
      %665 = vmatpush.bf16.msra.mxu0 %v278
      %666 = vmatpush.bf16.msra.mxu0 %v277
      %667 = vmatpush.bf16.msra.mxu0 %v276
      %668 = vmatpush.bf16.msra.mxu0 %v275
      %669 = vmatpush.bf16.msra.mxu0 %v274
      %670 = vmatpush.bf16.msra.mxu0 %v273
      %671 = vmatpush.bf16.msra.mxu0 %v272
      %672 = vmatpush.bf16.msra.mxu0 %v271
      %673 = vmatmul.bf16.gmra.mxu0 %v472
      %v674 = vpop.f32.mrf.mxu0
      %v675 = vadd.f32 0.0, %v674
      %v676 = vpop.f32.mrf.mxu0
      %v677 = vadd.f32 0.0, %v676
      %678 = vmatmul.bf16.gmra.mxu0 %v474
      %v679 = vpop.f32.mrf.mxu0
      %v680 = vadd.f32 0.0, %v679
      %v681 = vpop.f32.mrf.mxu0
      %v682 = vadd.f32 0.0, %v681
      %683 = vmatmul.bf16.gmra.mxu0 %v476
      %v684 = vpop.f32.mrf.mxu0
      %v685 = vadd.f32 0.0, %v684
      %v686 = vpop.f32.mrf.mxu0
      %v687 = vadd.f32 0.0, %v686
      %688 = vmatmul.bf16.gmra.mxu0 %v478
      %v689 = vpop.f32.mrf.mxu0
      %v690 = vadd.f32 0.0, %v689
      %v691 = vpop.f32.mrf.mxu0
      %v692 = vadd.f32 0.0, %v691
      %693 = vmatmul.bf16.gmra.mxu0 %v480
      %v694 = vpop.f32.mrf.mxu0
      %v695 = vadd.f32 0.0, %v694
      %v696 = vpop.f32.mrf.mxu0
      %v697 = vadd.f32 0.0, %v696
      %698 = vmatmul.bf16.gmra.mxu0 %v482
      %v699 = vpop.f32.mrf.mxu0
      %v700 = vadd.f32 0.0, %v699
      %v701 = vpop.f32.mrf.mxu0
      %v702 = vadd.f32 0.0, %v701
      %703 = vmatmul.bf16.gmra.mxu0 %v484
      %v704 = vpop.f32.mrf.mxu0
      %v705 = vadd.f32 0.0, %v704
      %v706 = vpop.f32.mrf.mxu0
      %v707 = vadd.f32 0.0, %v706
      %708 = vmatmul.bf16.gmra.mxu0 %v486
      %v709 = vpop.f32.mrf.mxu0
      %v710 = vadd.f32 0.0, %v709
      %v711 = vpop.f32.mrf.mxu0
      %v712 = vadd.f32 0.0, %v711
      %713 = vmatmul.bf16.gmra.mxu0 %v488
      %v714 = vpop.f32.mrf.mxu0
      %v715 = vadd.f32 0.0, %v714
      %v716 = vpop.f32.mrf.mxu0
      %v717 = vadd.f32 0.0, %v716
      %718 = vmatmul.bf16.gmra.mxu0 %v490
      %v719 = vpop.f32.mrf.mxu0
      %v720 = vadd.f32 0.0, %v719
      %v721 = vpop.f32.mrf.mxu0
      %v722 = vadd.f32 0.0, %v721
      %723 = vmatmul.bf16.gmra.mxu0 %v492
      %v724 = vpop.f32.mrf.mxu0
      %v725 = vadd.f32 0.0, %v724
      %v726 = vpop.f32.mrf.mxu0
      %v727 = vadd.f32 0.0, %v726
      %728 = vmatmul.bf16.gmra.mxu0 %v494
      %v729 = vpop.f32.mrf.mxu0
      %v730 = vadd.f32 0.0, %v729
      %v731 = vpop.f32.mrf.mxu0
      %v732 = vadd.f32 0.0, %v731
      %733 = vmatmul.bf16.gmra.mxu0 %v496
      %v734 = vpop.f32.mrf.mxu0
      %v735 = vadd.f32 0.0, %v734
      %v736 = vpop.f32.mrf.mxu0
      %v737 = vadd.f32 0.0, %v736
      %738 = vmatmul.bf16.gmra.mxu0 %v498
      %v739 = vpop.f32.mrf.mxu0
      %v740 = vadd.f32 0.0, %v739
      %v741 = vpop.f32.mrf.mxu0
      %v742 = vadd.f32 0.0, %v741
      %743 = vmatmul.bf16.gmra.mxu0 %v500
      %v744 = vpop.f32.mrf.mxu0
      %v745 = vadd.f32 0.0, %v744
      %v746 = vpop.f32.mrf.mxu0
      %v747 = vadd.f32 0.0, %v746
      %748 = vmatmul.bf16.gmra.mxu0 %v502
      %v749 = vpop.f32.mrf.mxu0
      %v750 = vadd.f32 0.0, %v749
      %v751 = vpop.f32.mrf.mxu0
      %v752 = vadd.f32 0.0, %v751
      %753 = vmatmul.bf16.gmra.mxu0 %v504
      %v754 = vpop.f32.mrf.mxu0
      %v755 = vadd.f32 0.0, %v754
      %v756 = vpop.f32.mrf.mxu0
      %v757 = vadd.f32 0.0, %v756
      %758 = vmatmul.bf16.gmra.mxu0 %v506
      %v759 = vpop.f32.mrf.mxu0
      %v760 = vadd.f32 0.0, %v759
      %v761 = vpop.f32.mrf.mxu0
      %v762 = vadd.f32 0.0, %v761
      %763 = vmatmul.bf16.gmra.mxu0 %v508
      %v764 = vpop.f32.mrf.mxu0
      %v765 = vadd.f32 0.0, %v764
      %v766 = vpop.f32.mrf.mxu0
      %v767 = vadd.f32 0.0, %v766
      %768 = vmatmul.bf16.gmra.mxu0 %v510
      %v769 = vpop.f32.mrf.mxu0
      %v770 = vadd.f32 0.0, %v769
      %v771 = vpop.f32.mrf.mxu0
      %v772 = vadd.f32 0.0, %v771
      %773 = vmatmul.bf16.gmra.mxu0 %v512
      %v774 = vpop.f32.mrf.mxu0
      %v775 = vadd.f32 0.0, %v774
      %v776 = vpop.f32.mrf.mxu0
      %v777 = vadd.f32 0.0, %v776
      %778 = vmatmul.bf16.gmra.mxu0 %v514
      %v779 = vpop.f32.mrf.mxu0
      %v780 = vadd.f32 0.0, %v779
      %v781 = vpop.f32.mrf.mxu0
      %v782 = vadd.f32 0.0, %v781
      %783 = vmatmul.bf16.gmra.mxu0 %v516
      %v784 = vpop.f32.mrf.mxu0
      %v785 = vadd.f32 0.0, %v784
      %v786 = vpop.f32.mrf.mxu0
      %v787 = vadd.f32 0.0, %v786
      %788 = vmatmul.bf16.gmra.mxu0 %v518
      %v789 = vpop.f32.mrf.mxu0
      %v790 = vadd.f32 0.0, %v789
      %v791 = vpop.f32.mrf.mxu0
      %v792 = vadd.f32 0.0, %v791
      %793 = vmatmul.bf16.gmra.mxu0 %v520
      %v794 = vpop.f32.mrf.mxu0
      %v795 = vadd.f32 0.0, %v794
      %v796 = vpop.f32.mrf.mxu0
      %v797 = vadd.f32 0.0, %v796
      %798 = vmatmul.bf16.gmra.mxu0 %v522
      %v799 = vpop.f32.mrf.mxu0
      %v800 = vadd.f32 0.0, %v799
      %v801 = vpop.f32.mrf.mxu0
      %v802 = vadd.f32 0.0, %v801
      %803 = vmatmul.bf16.gmra.mxu0 %v524
      %v804 = vpop.f32.mrf.mxu0
      %v805 = vadd.f32 0.0, %v804
      %v806 = vpop.f32.mrf.mxu0
      %v807 = vadd.f32 0.0, %v806
      %808 = vmatmul.bf16.gmra.mxu0 %v526
      %v809 = vpop.f32.mrf.mxu0
      %v810 = vadd.f32 0.0, %v809
      %v811 = vpop.f32.mrf.mxu0
      %v812 = vadd.f32 0.0, %v811
      %813 = vmatmul.bf16.gmra.mxu0 %v528
      %v814 = vpop.f32.mrf.mxu0
      %v815 = vadd.f32 0.0, %v814
      %v816 = vpop.f32.mrf.mxu0
      %v817 = vadd.f32 0.0, %v816
      %818 = vmatmul.bf16.gmra.mxu0 %v530
      %v819 = vpop.f32.mrf.mxu0
      %v820 = vadd.f32 0.0, %v819
      %v821 = vpop.f32.mrf.mxu0
      %v822 = vadd.f32 0.0, %v821
      %823 = vmatmul.bf16.gmra.mxu0 %v532
      %v824 = vpop.f32.mrf.mxu0
      %v825 = vadd.f32 0.0, %v824
      %v826 = vpop.f32.mrf.mxu0
      %v827 = vadd.f32 0.0, %v826
      %828 = vmatmul.bf16.gmra.mxu0 %v534
      %v829 = vpop.f32.mrf.mxu0
      %v830 = vadd.f32 0.0, %v829
      %v831 = vpop.f32.mrf.mxu0
      %v832 = vadd.f32 0.0, %v831
      %833 = vdwg.mxu0
      %834 = vmatpush.bf16.msra.mxu0 0
      %835 = vmatpush.bf16.msra.mxu0 0
      %836 = vmatpush.bf16.msra.mxu0 0
      %837 = vmatpush.bf16.msra.mxu0 0
      %838 = vmatpush.bf16.msra.mxu0 0
      %839 = vmatpush.bf16.msra.mxu0 0
      %840 = vmatpush.bf16.msra.mxu0 0
      %841 = vmatpush.bf16.msra.mxu0 %v279
      %842 = vmatmul.bf16.gmra.mxu0 %v570
      %v843 = vpop.f32.mrf.mxu0
      %v844 = vadd.f32 %v675, %v843
      %v845 = vpop.f32.mrf.mxu0
      %v846 = vadd.f32 %v677, %v845
      %847 = vmatmul.bf16.gmra.mxu0 %v573
      %v848 = vpop.f32.mrf.mxu0
      %v849 = vadd.f32 %v680, %v848
      %v850 = vpop.f32.mrf.mxu0
      %v851 = vadd.f32 %v682, %v850
      %852 = vmatmul.bf16.gmra.mxu0 %v576
      %v853 = vpop.f32.mrf.mxu0
      %v854 = vadd.f32 %v685, %v853
      %v855 = vpop.f32.mrf.mxu0
      %v856 = vadd.f32 %v687, %v855
      %857 = vmatmul.bf16.gmra.mxu0 %v579
      %v858 = vpop.f32.mrf.mxu0
      %v859 = vadd.f32 %v690, %v858
      %v860 = vpop.f32.mrf.mxu0
      %v861 = vadd.f32 %v692, %v860
      %862 = vmatmul.bf16.gmra.mxu0 %v582
      %v863 = vpop.f32.mrf.mxu0
      %v864 = vadd.f32 %v695, %v863
      %v865 = vpop.f32.mrf.mxu0
      %v866 = vadd.f32 %v697, %v865
      %867 = vmatmul.bf16.gmra.mxu0 %v585
      %v868 = vpop.f32.mrf.mxu0
      %v869 = vadd.f32 %v700, %v868
      %v870 = vpop.f32.mrf.mxu0
      %v871 = vadd.f32 %v702, %v870
      %872 = vmatmul.bf16.gmra.mxu0 %v588
      %v873 = vpop.f32.mrf.mxu0
      %v874 = vadd.f32 %v705, %v873
      %v875 = vpop.f32.mrf.mxu0
      %v876 = vadd.f32 %v707, %v875
      %877 = vmatmul.bf16.gmra.mxu0 %v591
      %v878 = vpop.f32.mrf.mxu0
      %v879 = vadd.f32 %v710, %v878
      %v880 = vpop.f32.mrf.mxu0
      %v881 = vadd.f32 %v712, %v880
      %882 = vmatmul.bf16.gmra.mxu0 %v594
      %v883 = vpop.f32.mrf.mxu0
      %v884 = vadd.f32 %v715, %v883
      %v885 = vpop.f32.mrf.mxu0
      %v886 = vadd.f32 %v717, %v885
      %887 = vmatmul.bf16.gmra.mxu0 %v597
      %v888 = vpop.f32.mrf.mxu0
      %v889 = vadd.f32 %v720, %v888
      %v890 = vpop.f32.mrf.mxu0
      %v891 = vadd.f32 %v722, %v890
      %892 = vmatmul.bf16.gmra.mxu0 %v600
      %v893 = vpop.f32.mrf.mxu0
      %v894 = vadd.f32 %v725, %v893
      %v895 = vpop.f32.mrf.mxu0
      %v896 = vadd.f32 %v727, %v895
      %897 = vmatmul.bf16.gmra.mxu0 %v603
      %v898 = vpop.f32.mrf.mxu0
      %v899 = vadd.f32 %v730, %v898
      %v900 = vpop.f32.mrf.mxu0
      %v901 = vadd.f32 %v732, %v900
      %902 = vmatmul.bf16.gmra.mxu0 %v606
      %v903 = vpop.f32.mrf.mxu0
      %v904 = vadd.f32 %v735, %v903
      %v905 = vpop.f32.mrf.mxu0
      %v906 = vadd.f32 %v737, %v905
      %907 = vmatmul.bf16.gmra.mxu0 %v609
      %v908 = vpop.f32.mrf.mxu0
      %v909 = vadd.f32 %v740, %v908
      %v910 = vpop.f32.mrf.mxu0
      %v911 = vadd.f32 %v742, %v910
      %912 = vmatmul.bf16.gmra.mxu0 %v612
      %v913 = vpop.f32.mrf.mxu0
      %v914 = vadd.f32 %v745, %v913
      %v915 = vpop.f32.mrf.mxu0
      %v916 = vadd.f32 %v747, %v915
      %917 = vmatmul.bf16.gmra.mxu0 %v615
      %v918 = vpop.f32.mrf.mxu0
      %v919 = vadd.f32 %v750, %v918
      %v920 = vpop.f32.mrf.mxu0
      %v921 = vadd.f32 %v752, %v920
      %922 = vmatmul.bf16.gmra.mxu0 %v618
      %v923 = vpop.f32.mrf.mxu0
      %v924 = vadd.f32 %v755, %v923
      %v925 = vpop.f32.mrf.mxu0
      %v926 = vadd.f32 %v757, %v925
      %927 = vmatmul.bf16.gmra.mxu0 %v621
      %v928 = vpop.f32.mrf.mxu0
      %v929 = vadd.f32 %v760, %v928
      %v930 = vpop.f32.mrf.mxu0
      %v931 = vadd.f32 %v762, %v930
      %932 = vmatmul.bf16.gmra.mxu0 %v624
      %v933 = vpop.f32.mrf.mxu0
      %v934 = vadd.f32 %v765, %v933
      %v935 = vpop.f32.mrf.mxu0
      %v936 = vadd.f32 %v767, %v935
      %937 = vmatmul.bf16.gmra.mxu0 %v627
      %v938 = vpop.f32.mrf.mxu0
      %v939 = vadd.f32 %v770, %v938
      %v940 = vpop.f32.mrf.mxu0
      %v941 = vadd.f32 %v772, %v940
      %942 = vmatmul.bf16.gmra.mxu0 %v630
      %v943 = vpop.f32.mrf.mxu0
      %v944 = vadd.f32 %v775, %v943
      %v945 = vpop.f32.mrf.mxu0
      %v946 = vadd.f32 %v777, %v945
      %947 = vmatmul.bf16.gmra.mxu0 %v633
      %v948 = vpop.f32.mrf.mxu0
      %v949 = vadd.f32 %v780, %v948
      %v950 = vpop.f32.mrf.mxu0
      %v951 = vadd.f32 %v782, %v950
      %952 = vmatmul.bf16.gmra.mxu0 %v636
      %v953 = vpop.f32.mrf.mxu0
      %v954 = vadd.f32 %v785, %v953
      %v955 = vpop.f32.mrf.mxu0
      %v956 = vadd.f32 %v787, %v955
      %957 = vmatmul.bf16.gmra.mxu0 %v639
      %v958 = vpop.f32.mrf.mxu0
      %v959 = vadd.f32 %v790, %v958
      %v960 = vpop.f32.mrf.mxu0
      %v961 = vadd.f32 %v792, %v960
      %962 = vmatmul.bf16.gmra.mxu0 %v642
      %v963 = vpop.f32.mrf.mxu0
      %v964 = vadd.f32 %v795, %v963
      %v965 = vpop.f32.mrf.mxu0
      %v966 = vadd.f32 %v797, %v965
      %967 = vmatmul.bf16.gmra.mxu0 %v645
      %v968 = vpop.f32.mrf.mxu0
      %v969 = vadd.f32 %v800, %v968
      %v970 = vpop.f32.mrf.mxu0
      %v971 = vadd.f32 %v802, %v970
      %972 = vmatmul.bf16.gmra.mxu0 %v648
      %v973 = vpop.f32.mrf.mxu0
      %v974 = vadd.f32 %v805, %v973
      %v975 = vpop.f32.mrf.mxu0
      %v976 = vadd.f32 %v807, %v975
      %977 = vmatmul.bf16.gmra.mxu0 %v651
      %v978 = vpop.f32.mrf.mxu0
      %v979 = vadd.f32 %v810, %v978
      %v980 = vpop.f32.mrf.mxu0
      %v981 = vadd.f32 %v812, %v980
      %982 = vmatmul.bf16.gmra.mxu0 %v654
      %v983 = vpop.f32.mrf.mxu0
      %v984 = vadd.f32 %v815, %v983
      %v985 = vpop.f32.mrf.mxu0
      %v986 = vadd.f32 %v817, %v985
      %987 = vmatmul.bf16.gmra.mxu0 %v657
      %v988 = vpop.f32.mrf.mxu0
      %v989 = vadd.f32 %v820, %v988
      %v990 = vpop.f32.mrf.mxu0
      %v991 = vadd.f32 %v822, %v990
      %992 = vmatmul.bf16.gmra.mxu0 %v660
      %v993 = vpop.f32.mrf.mxu0
      %v994 = vadd.f32 %v825, %v993
      %v995 = vpop.f32.mrf.mxu0
      %v996 = vadd.f32 %v827, %v995
      %997 = vmatmul.bf16.gmra.mxu0 %v663
      %v998 = vpop.f32.mrf.mxu0
      %v999 = vadd.f32 %v830, %v998
      %v1000 = vpop.f32.mrf.mxu0
      %v1001 = vadd.f32 %v832, %v1000
      %1002 = vdwg.mxu0
      %1003 = vst.msk [vmem:[%s182] sm:$0xff] %vm568, %v844
      %1004 = vst.msk [vmem:[%s182 + $0x8] sm:$0xff] %vm568, %v846
      %1005 = vst.msk [vmem:[%s182 + $0x10] sm:$0xff] %vm568, %v849
      %1006 = vst.msk [vmem:[%s182 + $0x18] sm:$0xff] %vm568, %v851
      %1007 = vst.msk [vmem:[%s182 + $0x20] sm:$0xff] %vm568, %v854
      %1008 = vst.msk [vmem:[%s182 + $0x28] sm:$0xff] %vm568, %v856
      %1009 = vst.msk [vmem:[%s182 + $0x30] sm:$0xff] %vm568, %v859
      %1010 = vst.msk [vmem:[%s182 + $0x38] sm:$0xff] %vm568, %v861
      %1011 = vst.msk [vmem:[%s182 + $0x40] sm:$0xff] %vm568, %v864
      %1012 = vst.msk [vmem:[%s182 + $0x48] sm:$0xff] %vm568, %v866
      %1013 = vst.msk [vmem:[%s182 + $0x50] sm:$0xff] %vm568, %v869
      %1014 = vst.msk [vmem:[%s182 + $0x58] sm:$0xff] %vm568, %v871
      %1015 = vst.msk [vmem:[%s182 + $0x60] sm:$0xff] %vm568, %v874
      %1016 = vst.msk [vmem:[%s182 + $0x68] sm:$0xff] %vm568, %v876
      %1017 = vst.msk [vmem:[%s182 + $0x70] sm:$0xff] %vm568, %v879
      %1018 = vst.msk [vmem:[%s182 + $0x78] sm:$0xff] %vm568, %v881
      %1019 = vst.msk [vmem:[%s182 + $0x80] sm:$0xff] %vm568, %v884
      %1020 = vst.msk [vmem:[%s182 + $0x88] sm:$0xff] %vm568, %v886
      %1021 = vst.msk [vmem:[%s182 + $0x90] sm:$0xff] %vm568, %v889
      %1022 = vst.msk [vmem:[%s182 + $0x98] sm:$0xff] %vm568, %v891
      %1023 = vst.msk [vmem:[%s182 + $0xa0] sm:$0xff] %vm568, %v894
      %1024 = vst.msk [vmem:[%s182 + $0xa8] sm:$0xff] %vm568, %v896
      %1025 = vst.msk [vmem:[%s182 + $0xb0] sm:$0xff] %vm568, %v899
      %1026 = vst.msk [vmem:[%s182 + $0xb8] sm:$0xff] %vm568, %v901
      %1027 = vst.msk [vmem:[%s182 + $0xc0] sm:$0xff] %vm568, %v904
      %1028 = vst.msk [vmem:[%s182 + $0xc8] sm:$0xff] %vm568, %v906
      %1029 = vst.msk [vmem:[%s182 + $0xd0] sm:$0xff] %vm568, %v909
      %1030 = vst.msk [vmem:[%s182 + $0xd8] sm:$0xff] %vm568, %v911
      %1031 = vst.msk [vmem:[%s182 + $0xe0] sm:$0xff] %vm568, %v914
      %1032 = vst.msk [vmem:[%s182 + $0xe8] sm:$0xff] %vm568, %v916
      %1033 = vst.msk [vmem:[%s182 + $0xf0] sm:$0xff] %vm568, %v919
      %1034 = vst.msk [vmem:[%s182 + $0xf8] sm:$0xff] %vm568, %v921
      %1035 = vst.msk [vmem:[%s182 + $0x100] sm:$0xff] %vm568, %v924
      %1036 = vst.msk [vmem:[%s182 + $0x108] sm:$0xff] %vm568, %v926
      %1037 = vst.msk [vmem:[%s182 + $0x110] sm:$0xff] %vm568, %v929
      %1038 = vst.msk [vmem:[%s182 + $0x118] sm:$0xff] %vm568, %v931
      %1039 = vst.msk [vmem:[%s182 + $0x120] sm:$0xff] %vm568, %v934
      %1040 = vst.msk [vmem:[%s182 + $0x128] sm:$0xff] %vm568, %v936
      %1041 = vst.msk [vmem:[%s182 + $0x130] sm:$0xff] %vm568, %v939
      %1042 = vst.msk [vmem:[%s182 + $0x138] sm:$0xff] %vm568, %v941
      %1043 = vst.msk [vmem:[%s182 + $0x140] sm:$0xff] %vm568, %v944
      %1044 = vst.msk [vmem:[%s182 + $0x148] sm:$0xff] %vm568, %v946
      %1045 = vst.msk [vmem:[%s182 + $0x150] sm:$0xff] %vm568, %v949
      %1046 = vst.msk [vmem:[%s182 + $0x158] sm:$0xff] %vm568, %v951
      %1047 = vst.msk [vmem:[%s182 + $0x160] sm:$0xff] %vm568, %v954
      %1048 = vst.msk [vmem:[%s182 + $0x168] sm:$0xff] %vm568, %v956
      %1049 = vst.msk [vmem:[%s182 + $0x170] sm:$0xff] %vm568, %v959
      %1050 = vst.msk [vmem:[%s182 + $0x178] sm:$0xff] %vm568, %v961
      %1051 = vst.msk [vmem:[%s182 + $0x180] sm:$0xff] %vm568, %v964
      %1052 = vst.msk [vmem:[%s182 + $0x188] sm:$0xff] %vm568, %v966
      %1053 = vst.msk [vmem:[%s182 + $0x190] sm:$0xff] %vm568, %v969
      %1054 = vst.msk [vmem:[%s182 + $0x198] sm:$0xff] %vm568, %v971
      %1055 = vst.msk [vmem:[%s182 + $0x1a0] sm:$0xff] %vm568, %v974
      %1056 = vst.msk [vmem:[%s182 + $0x1a8] sm:$0xff] %vm568, %v976
      %1057 = vst.msk [vmem:[%s182 + $0x1b0] sm:$0xff] %vm568, %v979
      %1058 = vst.msk [vmem:[%s182 + $0x1b8] sm:$0xff] %vm568, %v981
      %1059 = vst.msk [vmem:[%s182 + $0x1c0] sm:$0xff] %vm568, %v984
      %1060 = vst.msk [vmem:[%s182 + $0x1c8] sm:$0xff] %vm568, %v986
      %1061 = vst.msk [vmem:[%s182 + $0x1d0] sm:$0xff] %vm568, %v989
      %1062 = vst.msk [vmem:[%s182 + $0x1d8] sm:$0xff] %vm568, %v991
      %1063 = vst.msk [vmem:[%s182 + $0x1e0] sm:$0xff] %vm568, %v994
      %1064 = vst.msk [vmem:[%s182 + $0x1e8] sm:$0xff] %vm568, %v996
      %1065 = vst.msk [vmem:[%s182 + $0x1f0] sm:$0xff] %vm568, %v999
      %1066 = vst.msk [vmem:[%s182 + $0x1f8] sm:$0xff] %vm568, %v1001
      %v1067 = vsel %vm568, %v844, 0.0
      %v1068 = vsel %vm568, %v846, 0.0
      %v1069 = vadd.f32 %v1067, %v1068
      %v1070 = vsel %vm568, %v849, 0.0
      %v1071 = vadd.f32 %v1069, %v1070
      %v1072 = vsel %vm568, %v851, 0.0
      %v1073 = vadd.f32 %v1071, %v1072
      %v1074 = vsel %vm568, %v854, 0.0
      %v1075 = vadd.f32 %v1073, %v1074
      %v1076 = vsel %vm568, %v856, 0.0
      %v1077 = vadd.f32 %v1075, %v1076
      %v1078 = vsel %vm568, %v859, 0.0
      %v1079 = vadd.f32 %v1077, %v1078
      %v1080 = vsel %vm568, %v861, 0.0
      %v1081 = vadd.f32 %v1079, %v1080
      %v1082 = vsel %vm568, %v864, 0.0
      %v1083 = vadd.f32 %v1081, %v1082
      %v1084 = vsel %vm568, %v866, 0.0
      %v1085 = vadd.f32 %v1083, %v1084
      %v1086 = vsel %vm568, %v869, 0.0
      %v1087 = vadd.f32 %v1085, %v1086
      %v1088 = vsel %vm568, %v871, 0.0
      %v1089 = vadd.f32 %v1087, %v1088
      %v1090 = vsel %vm568, %v874, 0.0
      %v1091 = vadd.f32 %v1089, %v1090
      %v1092 = vsel %vm568, %v876, 0.0
      %v1093 = vadd.f32 %v1091, %v1092
      %v1094 = vsel %vm568, %v879, 0.0
      %v1095 = vadd.f32 %v1093, %v1094
      %v1096 = vsel %vm568, %v881, 0.0
      %v1097 = vadd.f32 %v1095, %v1096
      %v1098 = vsel %vm568, %v884, 0.0
      %v1099 = vadd.f32 %v1097, %v1098
      %v1100 = vsel %vm568, %v886, 0.0
      %v1101 = vadd.f32 %v1099, %v1100
      %v1102 = vsel %vm568, %v889, 0.0
      %v1103 = vadd.f32 %v1101, %v1102
      %v1104 = vsel %vm568, %v891, 0.0
      %v1105 = vadd.f32 %v1103, %v1104
      %v1106 = vsel %vm568, %v894, 0.0
      %v1107 = vadd.f32 %v1105, %v1106
      %v1108 = vsel %vm568, %v896, 0.0
      %v1109 = vadd.f32 %v1107, %v1108
      %v1110 = vsel %vm568, %v899, 0.0
      %v1111 = vadd.f32 %v1109, %v1110
      %v1112 = vsel %vm568, %v901, 0.0
      %v1113 = vadd.f32 %v1111, %v1112
      %v1114 = vsel %vm568, %v904, 0.0
      %v1115 = vadd.f32 %v1113, %v1114
      %v1116 = vsel %vm568, %v906, 0.0
      %v1117 = vadd.f32 %v1115, %v1116
      %v1118 = vsel %vm568, %v909, 0.0
      %v1119 = vadd.f32 %v1117, %v1118
      %v1120 = vsel %vm568, %v911, 0.0
      %v1121 = vadd.f32 %v1119, %v1120
      %v1122 = vsel %vm568, %v914, 0.0
      %v1123 = vadd.f32 %v1121, %v1122
      %v1124 = vsel %vm568, %v916, 0.0
      %v1125 = vadd.f32 %v1123, %v1124
      %v1126 = vsel %vm568, %v919, 0.0
      %v1127 = vadd.f32 %v1125, %v1126
      %v1128 = vsel %vm568, %v921, 0.0
      %v1129 = vadd.f32 %v1127, %v1128
      %v1130 = vsel %vm568, %v924, 0.0
      %v1131 = vadd.f32 %v1129, %v1130
      %v1132 = vsel %vm568, %v926, 0.0
      %v1133 = vadd.f32 %v1131, %v1132
      %v1134 = vsel %vm568, %v929, 0.0
      %v1135 = vadd.f32 %v1133, %v1134
      %v1136 = vsel %vm568, %v931, 0.0
      %v1137 = vadd.f32 %v1135, %v1136
      %v1138 = vsel %vm568, %v934, 0.0
      %v1139 = vadd.f32 %v1137, %v1138
      %v1140 = vsel %vm568, %v936, 0.0
      %v1141 = vadd.f32 %v1139, %v1140
      %v1142 = vsel %vm568, %v939, 0.0
      %v1143 = vadd.f32 %v1141, %v1142
      %v1144 = vsel %vm568, %v941, 0.0
      %v1145 = vadd.f32 %v1143, %v1144
      %v1146 = vsel %vm568, %v944, 0.0
      %v1147 = vadd.f32 %v1145, %v1146
      %v1148 = vsel %vm568, %v946, 0.0
      %v1149 = vadd.f32 %v1147, %v1148
      %v1150 = vsel %vm568, %v949, 0.0
      %v1151 = vadd.f32 %v1149, %v1150
      %v1152 = vsel %vm568, %v951, 0.0
      %v1153 = vadd.f32 %v1151, %v1152
      %v1154 = vsel %vm568, %v954, 0.0
      %v1155 = vadd.f32 %v1153, %v1154
      %v1156 = vsel %vm568, %v956, 0.0
      %v1157 = vadd.f32 %v1155, %v1156
      %v1158 = vsel %vm568, %v959, 0.0
      %v1159 = vadd.f32 %v1157, %v1158
      %v1160 = vsel %vm568, %v961, 0.0
      %v1161 = vadd.f32 %v1159, %v1160
      %v1162 = vsel %vm568, %v964, 0.0
      %v1163 = vadd.f32 %v1161, %v1162
      %v1164 = vsel %vm568, %v966, 0.0
      %v1165 = vadd.f32 %v1163, %v1164
      %v1166 = vsel %vm568, %v969, 0.0
      %v1167 = vadd.f32 %v1165, %v1166
      %v1168 = vsel %vm568, %v971, 0.0
      %v1169 = vadd.f32 %v1167, %v1168
      %v1170 = vsel %vm568, %v974, 0.0
      %v1171 = vadd.f32 %v1169, %v1170
      %v1172 = vsel %vm568, %v976, 0.0
      %v1173 = vadd.f32 %v1171, %v1172
      %v1174 = vsel %vm568, %v979, 0.0
      %v1175 = vadd.f32 %v1173, %v1174
      %v1176 = vsel %vm568, %v981, 0.0
      %v1177 = vadd.f32 %v1175, %v1176
      %v1178 = vsel %vm568, %v984, 0.0
      %v1179 = vadd.f32 %v1177, %v1178
      %v1180 = vsel %vm568, %v986, 0.0
      %v1181 = vadd.f32 %v1179, %v1180
      %v1182 = vsel %vm568, %v989, 0.0
      %v1183 = vadd.f32 %v1181, %v1182
      %v1184 = vsel %vm568, %v991, 0.0
      %v1185 = vadd.f32 %v1183, %v1184
      %v1186 = vsel %vm568, %v994, 0.0
      %v1187 = vadd.f32 %v1185, %v1186
      %v1188 = vsel %vm568, %v996, 0.0
      %v1189 = vadd.f32 %v1187, %v1188
      %v1190 = vsel %vm568, %v999, 0.0
      %v1191 = vadd.f32 %v1189, %v1190
      %v1192 = vsel %vm568, %v1001, 0.0
      %v1193 = vadd.f32 %v1191, %v1192
      %v1194 = vrot.slane %v1193, 4
      %v1195 = vadd.f32 %v1193, %v1194
      %v1196 = vrot.slane %v1195, 2
      %v1197 = vadd.f32 %v1195, %v1196
      %v1198 = vrot.slane %v1197, 1
      %v1199 = vadd.f32 %v1197, %v1198
      %vm1200 = vcmask 122880
      %1201 = vst.msk [vmem:[%s187] sm:$0x1] %vm1200, %v1199
      %v1202 = vmul.f32 %v844, %v844
      %v1203 = vmul.f32 %v846, %v846
      %v1204 = vmul.f32 %v849, %v849
      %v1205 = vmul.f32 %v851, %v851
      %v1206 = vmul.f32 %v854, %v854
      %v1207 = vmul.f32 %v856, %v856
      %v1208 = vmul.f32 %v859, %v859
      %v1209 = vmul.f32 %v861, %v861
      %v1210 = vmul.f32 %v864, %v864
      %v1211 = vmul.f32 %v866, %v866
      %v1212 = vmul.f32 %v869, %v869
      %v1213 = vmul.f32 %v871, %v871
      %v1214 = vmul.f32 %v874, %v874
      %v1215 = vmul.f32 %v876, %v876
      %v1216 = vmul.f32 %v879, %v879
      %v1217 = vmul.f32 %v881, %v881
      %v1218 = vmul.f32 %v884, %v884
      %v1219 = vmul.f32 %v886, %v886
      %v1220 = vmul.f32 %v889, %v889
      %v1221 = vmul.f32 %v891, %v891
      %v1222 = vmul.f32 %v894, %v894
      %v1223 = vmul.f32 %v896, %v896
      %v1224 = vmul.f32 %v899, %v899
      %v1225 = vmul.f32 %v901, %v901
      %v1226 = vmul.f32 %v904, %v904
      %v1227 = vmul.f32 %v906, %v906
      %v1228 = vmul.f32 %v909, %v909
      %v1229 = vmul.f32 %v911, %v911
      %v1230 = vmul.f32 %v914, %v914
      %v1231 = vmul.f32 %v916, %v916
      %v1232 = vmul.f32 %v919, %v919
      %v1233 = vmul.f32 %v921, %v921
      %v1234 = vmul.f32 %v924, %v924
      %v1235 = vmul.f32 %v926, %v926
      %v1236 = vmul.f32 %v929, %v929
      %v1237 = vmul.f32 %v931, %v931
      %v1238 = vmul.f32 %v934, %v934
      %v1239 = vmul.f32 %v936, %v936
      %v1240 = vmul.f32 %v939, %v939
      %v1241 = vmul.f32 %v941, %v941
      %v1242 = vmul.f32 %v944, %v944
      %v1243 = vmul.f32 %v946, %v946
      %v1244 = vmul.f32 %v949, %v949
      %v1245 = vmul.f32 %v951, %v951
      %v1246 = vmul.f32 %v954, %v954
      %v1247 = vmul.f32 %v956, %v956
      %v1248 = vmul.f32 %v959, %v959
      %v1249 = vmul.f32 %v961, %v961
      %v1250 = vmul.f32 %v964, %v964
      %v1251 = vmul.f32 %v966, %v966
      %v1252 = vmul.f32 %v969, %v969
      %v1253 = vmul.f32 %v971, %v971
      %v1254 = vmul.f32 %v974, %v974
      %v1255 = vmul.f32 %v976, %v976
      %v1256 = vmul.f32 %v979, %v979
      %v1257 = vmul.f32 %v981, %v981
      %v1258 = vmul.f32 %v984, %v984
      %v1259 = vmul.f32 %v986, %v986
      %v1260 = vmul.f32 %v989, %v989
      %v1261 = vmul.f32 %v991, %v991
      %v1262 = vmul.f32 %v994, %v994
      %v1263 = vmul.f32 %v996, %v996
      %v1264 = vmul.f32 %v999, %v999
      %v1265 = vmul.f32 %v1001, %v1001
      %v1266 = vsel %vm568, %v1202, 0.0
      %v1267 = vsel %vm568, %v1203, 0.0
      %v1268 = vadd.f32 %v1266, %v1267
      %v1269 = vsel %vm568, %v1204, 0.0
      %v1270 = vadd.f32 %v1268, %v1269
      %v1271 = vsel %vm568, %v1205, 0.0
      %v1272 = vadd.f32 %v1270, %v1271
      %v1273 = vsel %vm568, %v1206, 0.0
      %v1274 = vadd.f32 %v1272, %v1273
      %v1275 = vsel %vm568, %v1207, 0.0
      %v1276 = vadd.f32 %v1274, %v1275
      %v1277 = vsel %vm568, %v1208, 0.0
      %v1278 = vadd.f32 %v1276, %v1277
      %v1279 = vsel %vm568, %v1209, 0.0
      %v1280 = vadd.f32 %v1278, %v1279
      %v1281 = vsel %vm568, %v1210, 0.0
      %v1282 = vadd.f32 %v1280, %v1281
      %v1283 = vsel %vm568, %v1211, 0.0
      %v1284 = vadd.f32 %v1282, %v1283
      %v1285 = vsel %vm568, %v1212, 0.0
      %v1286 = vadd.f32 %v1284, %v1285
      %v1287 = vsel %vm568, %v1213, 0.0
      %v1288 = vadd.f32 %v1286, %v1287
      %v1289 = vsel %vm568, %v1214, 0.0
      %v1290 = vadd.f32 %v1288, %v1289
      %v1291 = vsel %vm568, %v1215, 0.0
      %v1292 = vadd.f32 %v1290, %v1291
      %v1293 = vsel %vm568, %v1216, 0.0
      %v1294 = vadd.f32 %v1292, %v1293
      %v1295 = vsel %vm568, %v1217, 0.0
      %v1296 = vadd.f32 %v1294, %v1295
      %v1297 = vsel %vm568, %v1218, 0.0
      %v1298 = vadd.f32 %v1296, %v1297
      %v1299 = vsel %vm568, %v1219, 0.0
      %v1300 = vadd.f32 %v1298, %v1299
      %v1301 = vsel %vm568, %v1220, 0.0
      %v1302 = vadd.f32 %v1300, %v1301
      %v1303 = vsel %vm568, %v1221, 0.0
      %v1304 = vadd.f32 %v1302, %v1303
      %v1305 = vsel %vm568, %v1222, 0.0
      %v1306 = vadd.f32 %v1304, %v1305
      %v1307 = vsel %vm568, %v1223, 0.0
      %v1308 = vadd.f32 %v1306, %v1307
      %v1309 = vsel %vm568, %v1224, 0.0
      %v1310 = vadd.f32 %v1308, %v1309
      %v1311 = vsel %vm568, %v1225, 0.0
      %v1312 = vadd.f32 %v1310, %v1311
      %v1313 = vsel %vm568, %v1226, 0.0
      %v1314 = vadd.f32 %v1312, %v1313
      %v1315 = vsel %vm568, %v1227, 0.0
      %v1316 = vadd.f32 %v1314, %v1315
      %v1317 = vsel %vm568, %v1228, 0.0
      %v1318 = vadd.f32 %v1316, %v1317
      %v1319 = vsel %vm568, %v1229, 0.0
      %v1320 = vadd.f32 %v1318, %v1319
      %v1321 = vsel %vm568, %v1230, 0.0
      %v1322 = vadd.f32 %v1320, %v1321
      %v1323 = vsel %vm568, %v1231, 0.0
      %v1324 = vadd.f32 %v1322, %v1323
      %v1325 = vsel %vm568, %v1232, 0.0
      %v1326 = vadd.f32 %v1324, %v1325
      %v1327 = vsel %vm568, %v1233, 0.0
      %v1328 = vadd.f32 %v1326, %v1327
      %v1329 = vsel %vm568, %v1234, 0.0
      %v1330 = vadd.f32 %v1328, %v1329
      %v1331 = vsel %vm568, %v1235, 0.0
      %v1332 = vadd.f32 %v1330, %v1331
      %v1333 = vsel %vm568, %v1236, 0.0
      %v1334 = vadd.f32 %v1332, %v1333
      %v1335 = vsel %vm568, %v1237, 0.0
      %v1336 = vadd.f32 %v1334, %v1335
      %v1337 = vsel %vm568, %v1238, 0.0
      %v1338 = vadd.f32 %v1336, %v1337
      %v1339 = vsel %vm568, %v1239, 0.0
      %v1340 = vadd.f32 %v1338, %v1339
      %v1341 = vsel %vm568, %v1240, 0.0
      %v1342 = vadd.f32 %v1340, %v1341
      %v1343 = vsel %vm568, %v1241, 0.0
      %v1344 = vadd.f32 %v1342, %v1343
      %v1345 = vsel %vm568, %v1242, 0.0
      %v1346 = vadd.f32 %v1344, %v1345
      %v1347 = vsel %vm568, %v1243, 0.0
      %v1348 = vadd.f32 %v1346, %v1347
      %v1349 = vsel %vm568, %v1244, 0.0
      %v1350 = vadd.f32 %v1348, %v1349
      %v1351 = vsel %vm568, %v1245, 0.0
      %v1352 = vadd.f32 %v1350, %v1351
      %v1353 = vsel %vm568, %v1246, 0.0
      %v1354 = vadd.f32 %v1352, %v1353
      %v1355 = vsel %vm568, %v1247, 0.0
      %v1356 = vadd.f32 %v1354, %v1355
      %v1357 = vsel %vm568, %v1248, 0.0
      %v1358 = vadd.f32 %v1356, %v1357
      %v1359 = vsel %vm568, %v1249, 0.0
      %v1360 = vadd.f32 %v1358, %v1359
      %v1361 = vsel %vm568, %v1250, 0.0
      %v1362 = vadd.f32 %v1360, %v1361
      %v1363 = vsel %vm568, %v1251, 0.0
      %v1364 = vadd.f32 %v1362, %v1363
      %v1365 = vsel %vm568, %v1252, 0.0
      %v1366 = vadd.f32 %v1364, %v1365
      %v1367 = vsel %vm568, %v1253, 0.0
      %v1368 = vadd.f32 %v1366, %v1367
      %v1369 = vsel %vm568, %v1254, 0.0
      %v1370 = vadd.f32 %v1368, %v1369
      %v1371 = vsel %vm568, %v1255, 0.0
      %v1372 = vadd.f32 %v1370, %v1371
      %v1373 = vsel %vm568, %v1256, 0.0
      %v1374 = vadd.f32 %v1372, %v1373
      %v1375 = vsel %vm568, %v1257, 0.0
      %v1376 = vadd.f32 %v1374, %v1375
      %v1377 = vsel %vm568, %v1258, 0.0
      %v1378 = vadd.f32 %v1376, %v1377
      %v1379 = vsel %vm568, %v1259, 0.0
      %v1380 = vadd.f32 %v1378, %v1379
      %v1381 = vsel %vm568, %v1260, 0.0
      %v1382 = vadd.f32 %v1380, %v1381
      %v1383 = vsel %vm568, %v1261, 0.0
      %v1384 = vadd.f32 %v1382, %v1383
      %v1385 = vsel %vm568, %v1262, 0.0
      %v1386 = vadd.f32 %v1384, %v1385
      %v1387 = vsel %vm568, %v1263, 0.0
      %v1388 = vadd.f32 %v1386, %v1387
      %v1389 = vsel %vm568, %v1264, 0.0
      %v1390 = vadd.f32 %v1388, %v1389
      %v1391 = vsel %vm568, %v1265, 0.0
      %v1392 = vadd.f32 %v1390, %v1391
      %v1393 = vrot.slane %v1392, 4
      %v1394 = vadd.f32 %v1392, %v1393
      %v1395 = vrot.slane %v1394, 2
      %v1396 = vadd.f32 %v1394, %v1395
      %v1397 = vrot.slane %v1396, 1
      %v1398 = vadd.f32 %v1396, %v1397
      %1399 = vst.msk [vmem:[%s187 + $0x1] sm:$0x1] %vm1200, %v1398
      %s1400 = smul.u32 64, %s15
      %p1401 = scmp.lt.s32.totalorder %s1400, 255
      %s1402 = scalar_select %p1401, %s1400, 255
      %s1403 = smul.addr %s1402, 8
      %s1404 = scalar_lea.vmem %s2, %s1403
      %p1405 = scmp.lt.s32.totalorder %s15, 3
      %s1406 = scalar_select %p1405, %s15, 3
      %s1407 = smul.addr %s1406, 2
      %s1408 = scalar_lea.vmem %s3, %s1407
      // Predicated region
      $region29: #{resnet_forward.41} parent=27 // pred_check
        %p1409 = pneg %p80
      $region30: #{resnet_forward.41} parent=27 // pred_check_branch
        %1411 = sbr.rel (%p1409) target = $region32
      $region31: #{resnet_forward.41} parent=27 // pred_region
        %s1412 = smul.u32 64, %s15
      $region32: #{resnet_forward.41} parent=27 // pred_fallthru
        _
      // Predicated region
      $region33: #{resnet_forward.41} parent=27 // pred_check
        %p1413 = pneg %p106
      $region34: #{resnet_forward.41} parent=27 // pred_check_branch
        %1415 = sbr.rel (%p1413) target = $region36
      $region35: #{resnet_forward.41} parent=27 // pred_region
        _
      $region36: #{resnet_forward.41} parent=27 // pred_fallthru
        _
    $region28: #{resnet_forward.41} parent=5 // pred_fallthru
      _
    %p1416 = scmp.le.s32.totalorder 2, %s10
    // Predicated region
    $region37: #{resnet_forward.41} parent=5 // pred_check
      %p1417 = pneg %p1416
    $region38: #{resnet_forward.41} parent=5 // pred_check_branch
      %1419 = sbr.rel (%p1417) target = $region40
    $region39: #{resnet_forward.41} parent=5 // pred_region
      %s1420 = ssub.s32 %s10, 2
      // Predicated region
      $region41: #{resnet_forward.41} parent=39 // pred_check
        %p1421 = pneg %p86
      $region42: #{resnet_forward.41} parent=39 // pred_check_branch
        %1423 = sbr.rel (%p1421) target = $region44
      $region43: #{resnet_forward.41} parent=39 // pred_region
        %s1424 = smul.u32 64, %s16
        %p1425 = scmp.lt.s32.totalorder %s1424, 255
        %s1426 = scalar_select %p1425, %s1424, 255
        %s1427 = smul.addr %s1426, 8
        %s1428 = scalar_lea.vmem %s2, %s1427
      $region44: #{resnet_forward.41} parent=39 // pred_fallthru
        _
      // Predicated region
      $region45: #{resnet_forward.41} parent=39 // pred_check
        %p1429 = pneg %p112
      $region46: #{resnet_forward.41} parent=39 // pred_check_branch
        %1431 = sbr.rel (%p1429) target = $region48
      $region47: #{resnet_forward.41} parent=39 // pred_region
        %p1432 = scmp.lt.s32.totalorder %s16, 3
        %s1433 = scalar_select %p1432, %s16, 3
        %s1434 = smul.addr %s1433, 2
        %s1435 = scalar_lea.vmem %s3, %s1434
      $region48: #{resnet_forward.41} parent=39 // pred_fallthru
        _
    $region40: #{resnet_forward.41} parent=5 // pred_fallthru
      _
  $region6: #{resnet_forward.41} parent=0 // loop_footer
    %s14 = sadd.s32 1, %s10
  $region7: #{resnet_forward.41} parent=0 // loop_footer_branch
    %9 = sbr.rel target = $region3
  $region8: #{resnet_forward.41} parent=0 // loop_exit
    _

// kernel: resnet_forward.44
$region0: #{resnet_forward.44}
  #allocation0 [shape = 'u32[]', space=smem, size = 0x4, offset = 0x4, fixed_abs, tag = 'smem constant byte address 0x4 - core index']
  #allocation1 [shape = 'u32[72,128]{1,0:T(1,128)}', space=vmem, size = 0x9000, scoped, tag = 'internal scratch']
  %s0 = inlined_call_operand.vmem [shape: f32[2048,16], index: 0, kind: input, shape index: {}]
  %s1 = inlined_call_operand.vmem [shape: f32[1,16], index: 1, kind: input, shape index: {}]
  %s2 = inlined_call_operand.vmem [shape: f32[1,16], index: 2, kind: input, shape index: {}]
  %s3 = inlined_call_operand.vmem [shape: bf16[2048,16], index: 3, kind: input, shape index: {}]
  %s4 = inlined_call_operand.vmem [shape: bf16[2048,16], index: 4, kind: output, shape index: {}]
  %s5 = sld [smem:[#allocation0]]
  $region49: #{resnet_forward.44} parent=0
    _
  %s7 = ssub.s32 1, %s5
  %s8 = scalar_select 0, %s7, %s5
  loop: start=0, step=1, limit=6
  $region2: #{resnet_forward.44} parent=0 // loop_pre_header
    _
  $region3: #{resnet_forward.44} parent=0 // loop_header
    %s10 = sphi 0, %s14
    %p11 = scmp.ge.s32.totalorder %s10, 6
    %s20 = sphi 0, %s22
    %s23 = sphi 0, %s20
    %s24 = sphi 0, %s23
    %s40 = sphi 0, %s24
    %s44 = sphi 0, %s44
    %s46 = sphi 0, %s44
    %s47 = sphi 0, %s46
    %s61 = sphi 0, %s47
    %s65 = sphi 0, %s65
    %s67 = sphi 0, %s65
    %s68 = sphi 0, %s67
    %s82 = sphi 0, %s68
    %s88 = sphi 0, %s90
    %s91 = sphi 0, %s88
    %s92 = sphi 0, %s91
    %s108 = sphi 0, %s92
    %s114 = sphi 0, %s116
    %s117 = sphi 0, %s114
    %s118 = sphi 0, %s117
    %s134 = sphi 0, %s118
  $region4: #{resnet_forward.44} parent=0 // loop_header_branch
    %13 = sbr.rel (%p11) target = $region8
  $region5: #{resnet_forward.44} parent=0 // loop_body
    %s15 = ssub.s32 %s10, 1
    %s16 = ssub.s32 %s10, 2
    %s17 = sadd.s32 %s10, 1
    %s18 = ssub.s32 %s10, %s17
    %p19 = scmp.eq.s32.totalorder %s18, 0
    %s21 = sadd.s32 %s20, 1
    %s22 = scalar_select %p19, %s20, %s21
    %p25 = pneg %p19
    %p26 = scmp.eq.s32.totalorder %s10, 3
    %p27 = por %p25, %p26
    %p28 = scmp.ne.s32.totalorder %s20, %s23
    %p29 = scmp.eq.s32.totalorder %s10, 0
    %p30 = por %p28, %p29
    %p31 = scmp.ne.s32.totalorder %s20, %s23
    %p32 = scmp.eq.s32.totalorder %s15, 3
    %p33 = por %p31, %p32
    %p34 = scmp.ne.s32.totalorder %s23, %s24
    %p35 = scmp.eq.s32.totalorder %s15, 0
    %p36 = por %p34, %p35
    %p37 = scmp.ne.s32.totalorder %s23, %s24
    %p38 = scmp.eq.s32.totalorder %s16, 3
    %p39 = por %p37, %p38
    %p41 = scmp.ne.s32.totalorder %s24, %s40
    %p42 = scmp.eq.s32.totalorder %s16, 0
    %p43 = por %p41, %p42
    %s45 = sadd.s32 %s44, 1
    %p48 = scmp.eq.s32.totalorder %s10, 3
    %p49 = scmp.ne.s32.totalorder %s44, %s46
    %p50 = scmp.eq.s32.totalorder %s10, 0
    %p51 = por %p49, %p50
    %p52 = scmp.ne.s32.totalorder %s44, %s46
    %p53 = scmp.eq.s32.totalorder %s15, 3
    %p54 = por %p52, %p53
    %p55 = scmp.ne.s32.totalorder %s46, %s47
    %p56 = scmp.eq.s32.totalorder %s15, 0
    %p57 = por %p55, %p56
    %p58 = scmp.ne.s32.totalorder %s46, %s47
    %p59 = scmp.eq.s32.totalorder %s16, 3
    %p60 = por %p58, %p59
    %p62 = scmp.ne.s32.totalorder %s47, %s61
    %p63 = scmp.eq.s32.totalorder %s16, 0
    %p64 = por %p62, %p63
    %s66 = sadd.s32 %s65, 1
    %p69 = scmp.eq.s32.totalorder %s10, 3
    %p70 = scmp.ne.s32.totalorder %s65, %s67
    %p71 = scmp.eq.s32.totalorder %s10, 0
    %p72 = por %p70, %p71
    %p73 = scmp.ne.s32.totalorder %s65, %s67
    %p74 = scmp.eq.s32.totalorder %s15, 3
    %p75 = por %p73, %p74
    %p76 = scmp.ne.s32.totalorder %s67, %s68
    %p77 = scmp.eq.s32.totalorder %s15, 0
    %p78 = por %p76, %p77
    %p79 = scmp.ne.s32.totalorder %s67, %s68
    %p80 = scmp.eq.s32.totalorder %s16, 3
    %p81 = por %p79, %p80
    %p83 = scmp.ne.s32.totalorder %s68, %s82
    %p84 = scmp.eq.s32.totalorder %s16, 0
    %p85 = por %p83, %p84
    %s86 = ssub.s32 %s10, %s17
    %p87 = scmp.eq.s32.totalorder %s86, 0
    %s89 = sadd.s32 %s88, 1
    %s90 = scalar_select %p87, %s88, %s89
    %p93 = pneg %p87
    %p94 = scmp.eq.s32.totalorder %s10, 3
    %p95 = por %p93, %p94
    %p96 = scmp.ne.s32.totalorder %s88, %s91
    %p97 = scmp.eq.s32.totalorder %s10, 0
    %p98 = por %p96, %p97
    %p99 = scmp.ne.s32.totalorder %s88, %s91
    %p100 = scmp.eq.s32.totalorder %s15, 3
    %p101 = por %p99, %p100
    %p102 = scmp.ne.s32.totalorder %s91, %s92
    %p103 = scmp.eq.s32.totalorder %s15, 0
    %p104 = por %p102, %p103
    %p105 = scmp.ne.s32.totalorder %s91, %s92
    %p106 = scmp.eq.s32.totalorder %s16, 3
    %p107 = por %p105, %p106
    %p109 = scmp.ne.s32.totalorder %s92, %s108
    %p110 = scmp.eq.s32.totalorder %s16, 0
    %p111 = por %p109, %p110
    %s112 = ssub.s32 %s10, %s17
    %p113 = scmp.eq.s32.totalorder %s112, 0
    %s115 = sadd.s32 %s114, 1
    %s116 = scalar_select %p113, %s114, %s115
    %p119 = pneg %p113
    %p120 = scmp.eq.s32.totalorder %s10, 3
    %p121 = por %p119, %p120
    %p122 = scmp.ne.s32.totalorder %s114, %s117
    %p123 = scmp.eq.s32.totalorder %s10, 0
    %p124 = por %p122, %p123
    %p125 = scmp.ne.s32.totalorder %s114, %s117
    %p126 = scmp.eq.s32.totalorder %s15, 3
    %p127 = por %p125, %p126
    %p128 = scmp.ne.s32.totalorder %s117, %s118
    %p129 = scmp.eq.s32.totalorder %s15, 0
    %p130 = por %p128, %p129
    %p131 = scmp.ne.s32.totalorder %s117, %s118
    %p132 = scmp.eq.s32.totalorder %s16, 3
    %p133 = por %p131, %p132
    %p135 = scmp.ne.s32.totalorder %s118, %s134
    %p136 = scmp.eq.s32.totalorder %s16, 0
    %p137 = por %p135, %p136
    %p138 = scmp.le.s32.totalorder 1, %s10
    %p139 = scmp.lt.s32.totalorder %s10, 5
    %p140 = pnand %p138, %p139
    %p141 = pneg %p140
    // Predicated region
    $region9: #{resnet_forward.44} parent=5 // pred_check
      _
    $region10: #{resnet_forward.44} parent=5 // pred_check_branch
      %143 = sbr.rel (%p140) target = $region12
    $region11: #{resnet_forward.44} parent=5 // pred_region
      %s144 = ssub.s32 %s10, 1
      // Predicated region
      $region13: #{resnet_forward.44} parent=11 // pred_check
        %p145 = pneg %p57
      $region14: #{resnet_forward.44} parent=11 // pred_check_branch
        %147 = sbr.rel (%p145) target = $region16
      $region15: #{resnet_forward.44} parent=11 // pred_region
        _
      $region16: #{resnet_forward.44} parent=11 // pred_fallthru
        _
      // Predicated region
      $region17: #{resnet_forward.44} parent=11 // pred_check
        %p148 = pneg %p78
      $region18: #{resnet_forward.44} parent=11 // pred_check_branch
        %150 = sbr.rel (%p148) target = $region20
      $region19: #{resnet_forward.44} parent=11 // pred_region
        _
      $region20: #{resnet_forward.44} parent=11 // pred_fallthru
        _
    $region12: #{resnet_forward.44} parent=5 // pred_fallthru
      _
    %p151 = scmp.lt.s32.totalorder %s10, 4
    // Predicated region
    $region21: #{resnet_forward.44} parent=5 // pred_check
      %p152 = pneg %p151
    $region22: #{resnet_forward.44} parent=5 // pred_check_branch
      %154 = sbr.rel (%p152) target = $region24
    $region23: #{resnet_forward.44} parent=5 // pred_region
      // Predicated region
      $region25: #{resnet_forward.44} parent=23 // pred_check
        %p155 = pneg %p30
      $region26: #{resnet_forward.44} parent=23 // pred_check_branch
        %157 = sbr.rel (%p155) target = $region28
      $region27: #{resnet_forward.44} parent=23 // pred_region
        %s158 = smul.u32 64, %s10
        %p159 = scmp.lt.s32.totalorder %s158, 255
        %s160 = scalar_select %p159, %s158, 255
        %s161 = smul.addr %s160, 8
        %s162 = scalar_lea.vmem %s0, %s161
        %s163 = smul.u32 64, %s10
      $region28: #{resnet_forward.44} parent=23 // pred_fallthru
        _
      // Predicated region
      $region29: #{resnet_forward.44} parent=23 // pred_check
        %p164 = pneg %p98
      $region30: #{resnet_forward.44} parent=23 // pred_check_branch
        %166 = sbr.rel (%p164) target = $region32
      $region31: #{resnet_forward.44} parent=23 // pred_region
        %s167 = smul.u32 64, %s10
        %p168 = scmp.lt.s32.totalorder %s167, 255
        %s169 = scalar_select %p168, %s167, 255
        %s170 = smul.addr %s169, 4
        %s171 = scalar_lea.vmem %s3, %s170
        %s172 = smul.u32 64, %s10
      $region32: #{resnet_forward.44} parent=23 // pred_fallthru
        _
    $region24: #{resnet_forward.44} parent=5 // pred_fallthru
      _
    %p173 = scmp.le.s32.totalorder 1, %s10
    %p174 = scmp.lt.s32.totalorder %s10, 5
    %p175 = pnand %p173, %p174
    %p176 = pneg %p175
    // Predicated region
    $region33: #{resnet_forward.44} parent=5 // pred_check
      _
    $region34: #{resnet_forward.44} parent=5 // pred_check_branch
      %178 = sbr.rel (%p175) target = $region36
    $region35: #{resnet_forward.44} parent=5 // pred_region
      %s179 = ssub.s32 %s10, 1
      %s180 = smul.u32 64, %s15
      %p181 = scmp.lt.s32.totalorder %s180, 255
      %s182 = scalar_select %p181, %s180, 255
      %s183 = smul.addr %s182, 8
      %s184 = scalar_lea.vmem %s0, %s183
      %p185 = pneg %p36
      %p186 = pneg %p33
      %p187 = pneg %p57
      %p188 = pneg %p54
      %p189 = pneg %p78
      %p190 = pneg %p75
      %s191 = smul.u32 64, %s15
      %p192 = scmp.lt.s32.totalorder %s191, 255
      %s193 = scalar_select %p192, %s191, 255
      %s194 = smul.addr %s193, 4
      %s195 = scalar_lea.vmem %s3, %s194
      %p196 = pneg %p104
      %p197 = pneg %p101
      %p198 = pneg %p130
      %p199 = pneg %p127
      %s200 = smul.u32 64, %s15
      %p201 = scmp.lt.s32.totalorder %s200, 255
      %s202 = scalar_select %p201, %s200, 255
      %s203 = smul.addr %s202, 4
      %s204 = scalar_lea.vmem %s4, %s203
      %s205 = smul.u32 64, %s15
      %p206 = scmp.lt.s32.totalorder %s205, 255
      %s207 = scalar_select %p206, %s205, 255
      %s208 = smul.addr %s207, 8
      %s209 = scalar_lea.vmem %s0, %s208
      %s210 = smul.u32 64, %s15
      %s211 = smul.u32 64, %s15
      %p212 = scmp.lt.s32.totalorder %s211, 255
      %s213 = scalar_select %p212, %s211, 255
      %s214 = smul.addr %s213, 4
      %s215 = scalar_lea.vmem %s3, %s214
      %s216 = smul.u32 64, %s15
      %s217 = smul.u32 64, %s15
      %p218 = scmp.lt.s32.totalorder %s217, 255
      %s219 = scalar_select %p218, %s217, 255
      %s220 = smul.addr %s219, 4
      %s221 = scalar_lea.vmem %s4, %s220
      %s222 = smul.u32 64, %s15
      %v223 = vld [vmem:[%s209] sm:$0xff]
      %v224 = vld [vmem:[%s209 + $0x8] sm:$0xff]
      %v225 = vld [vmem:[%s209 + $0x10] sm:$0xff]
      %v226 = vld [vmem:[%s209 + $0x18] sm:$0xff]
      %v227 = vld [vmem:[%s209 + $0x20] sm:$0xff]
      %v228 = vld [vmem:[%s209 + $0x28] sm:$0xff]
      %v229 = vld [vmem:[%s209 + $0x30] sm:$0xff]
      %v230 = vld [vmem:[%s209 + $0x38] sm:$0xff]
      %v231 = vld [vmem:[%s209 + $0x40] sm:$0xff]
      %v232 = vld [vmem:[%s209 + $0x48] sm:$0xff]
      %v233 = vld [vmem:[%s209 + $0x50] sm:$0xff]
      %v234 = vld [vmem:[%s209 + $0x58] sm:$0xff]
      %v235 = vld [vmem:[%s209 + $0x60] sm:$0xff]
      %v236 = vld [vmem:[%s209 + $0x68] sm:$0xff]
      %v237 = vld [vmem:[%s209 + $0x70] sm:$0xff]
      %v238 = vld [vmem:[%s209 + $0x78] sm:$0xff]
      %v239 = vld [vmem:[%s209 + $0x80] sm:$0xff]
      %v240 = vld [vmem:[%s209 + $0x88] sm:$0xff]
      %v241 = vld [vmem:[%s209 + $0x90] sm:$0xff]
      %v242 = vld [vmem:[%s209 + $0x98] sm:$0xff]
      %v243 = vld [vmem:[%s209 + $0xa0] sm:$0xff]
      %v244 = vld [vmem:[%s209 + $0xa8] sm:$0xff]
      %v245 = vld [vmem:[%s209 + $0xb0] sm:$0xff]
      %v246 = vld [vmem:[%s209 + $0xb8] sm:$0xff]
      %v247 = vld [vmem:[%s209 + $0xc0] sm:$0xff]
      %v248 = vld [vmem:[%s209 + $0xc8] sm:$0xff]
      %v249 = vld [vmem:[%s209 + $0xd0] sm:$0xff]
      %v250 = vld [vmem:[%s209 + $0xd8] sm:$0xff]
      %v251 = vld [vmem:[%s209 + $0xe0] sm:$0xff]
      %v252 = vld [vmem:[%s209 + $0xe8] sm:$0xff]
      %v253 = vld [vmem:[%s209 + $0xf0] sm:$0xff]
      %v254 = vld [vmem:[%s209 + $0xf8] sm:$0xff]
      %v255 = vld [vmem:[%s209 + $0x100] sm:$0xff]
      %v256 = vld [vmem:[%s209 + $0x108] sm:$0xff]
      %v257 = vld [vmem:[%s209 + $0x110] sm:$0xff]
      %v258 = vld [vmem:[%s209 + $0x118] sm:$0xff]
      %v259 = vld [vmem:[%s209 + $0x120] sm:$0xff]
      %v260 = vld [vmem:[%s209 + $0x128] sm:$0xff]
      %v261 = vld [vmem:[%s209 + $0x130] sm:$0xff]
      %v262 = vld [vmem:[%s209 + $0x138] sm:$0xff]
      %v263 = vld [vmem:[%s209 + $0x140] sm:$0xff]
      %v264 = vld [vmem:[%s209 + $0x148] sm:$0xff]
      %v265 = vld [vmem:[%s209 + $0x150] sm:$0xff]
      %v266 = vld [vmem:[%s209 + $0x158] sm:$0xff]
      %v267 = vld [vmem:[%s209 + $0x160] sm:$0xff]
      %v268 = vld [vmem:[%s209 + $0x168] sm:$0xff]
      %v269 = vld [vmem:[%s209 + $0x170] sm:$0xff]
      %v270 = vld [vmem:[%s209 + $0x178] sm:$0xff]
      %v271 = vld [vmem:[%s209 + $0x180] sm:$0xff]
      %v272 = vld [vmem:[%s209 + $0x188] sm:$0xff]
      %v273 = vld [vmem:[%s209 + $0x190] sm:$0xff]
      %v274 = vld [vmem:[%s209 + $0x198] sm:$0xff]
      %v275 = vld [vmem:[%s209 + $0x1a0] sm:$0xff]
      %v276 = vld [vmem:[%s209 + $0x1a8] sm:$0xff]
      %v277 = vld [vmem:[%s209 + $0x1b0] sm:$0xff]
      %v278 = vld [vmem:[%s209 + $0x1b8] sm:$0xff]
      %v279 = vld [vmem:[%s209 + $0x1c0] sm:$0xff]
      %v280 = vld [vmem:[%s209 + $0x1c8] sm:$0xff]
      %v281 = vld [vmem:[%s209 + $0x1d0] sm:$0xff]
      %v282 = vld [vmem:[%s209 + $0x1d8] sm:$0xff]
      %v283 = vld [vmem:[%s209 + $0x1e0] sm:$0xff]
      %v284 = vld [vmem:[%s209 + $0x1e8] sm:$0xff]
      %v285 = vld [vmem:[%s209 + $0x1f0] sm:$0xff]
      %v286 = vld [vmem:[%s209 + $0x1f8] sm:$0xff]
      %v287 = vld [vmem:[%s1] sm:$0x1]
      %v289 = vperm.slane %v287, 0
      %v291 = vmul.f32 %v223, %v289
      %v292 = vmul.f32 %v224, %v289
      %v293 = vmul.f32 %v225, %v289
      %v294 = vmul.f32 %v226, %v289
      %v295 = vmul.f32 %v227, %v289
      %v296 = vmul.f32 %v228, %v289
      %v297 = vmul.f32 %v229, %v289
      %v298 = vmul.f32 %v230, %v289
      %v299 = vmul.f32 %v231, %v289
      %v300 = vmul.f32 %v232, %v289
      %v301 = vmul.f32 %v233, %v289
      %v302 = vmul.f32 %v234, %v289
      %v303 = vmul.f32 %v235, %v289
      %v304 = vmul.f32 %v236, %v289
      %v305 = vmul.f32 %v237, %v289
      %v306 = vmul.f32 %v238, %v289
      %v307 = vmul.f32 %v239, %v289
      %v308 = vmul.f32 %v240, %v289
      %v309 = vmul.f32 %v241, %v289
      %v310 = vmul.f32 %v242, %v289
      %v311 = vmul.f32 %v243, %v289
      %v312 = vmul.f32 %v244, %v289
      %v313 = vmul.f32 %v245, %v289
      %v314 = vmul.f32 %v246, %v289
      %v315 = vmul.f32 %v247, %v289
      %v316 = vmul.f32 %v248, %v289
      %v317 = vmul.f32 %v249, %v289
      %v318 = vmul.f32 %v250, %v289
      %v319 = vmul.f32 %v251, %v289
      %v320 = vmul.f32 %v252, %v289
      %v321 = vmul.f32 %v253, %v289
      %v322 = vmul.f32 %v254, %v289
      %v323 = vmul.f32 %v255, %v289
      %v324 = vmul.f32 %v256, %v289
      %v325 = vmul.f32 %v257, %v289
      %v326 = vmul.f32 %v258, %v289
      %v327 = vmul.f32 %v259, %v289
      %v328 = vmul.f32 %v260, %v289
      %v329 = vmul.f32 %v261, %v289
      %v330 = vmul.f32 %v262, %v289
      %v331 = vmul.f32 %v263, %v289
      %v332 = vmul.f32 %v264, %v289
      %v333 = vmul.f32 %v265, %v289
      %v334 = vmul.f32 %v266, %v289
      %v335 = vmul.f32 %v267, %v289
      %v336 = vmul.f32 %v268, %v289
      %v337 = vmul.f32 %v269, %v289
      %v338 = vmul.f32 %v270, %v289
      %v339 = vmul.f32 %v271, %v289
      %v340 = vmul.f32 %v272, %v289
      %v341 = vmul.f32 %v273, %v289
      %v342 = vmul.f32 %v274, %v289
      %v343 = vmul.f32 %v275, %v289
      %v344 = vmul.f32 %v276, %v289
      %v345 = vmul.f32 %v277, %v289
      %v346 = vmul.f32 %v278, %v289
      %v347 = vmul.f32 %v279, %v289
      %v348 = vmul.f32 %v280, %v289
      %v349 = vmul.f32 %v281, %v289
      %v350 = vmul.f32 %v282, %v289
      %v351 = vmul.f32 %v283, %v289
      %v352 = vmul.f32 %v284, %v289
      %v353 = vmul.f32 %v285, %v289
      %v354 = vmul.f32 %v286, %v289
      %v355 = vld [vmem:[%s2] sm:$0x1]
      %v357 = vperm.slane %v355, 0
      %v359 = vadd.f32 %v291, %v357
      %v360 = vadd.f32 %v292, %v357
      %v361 = vadd.f32 %v293, %v357
      %v362 = vadd.f32 %v294, %v357
      %v363 = vadd.f32 %v295, %v357
      %v364 = vadd.f32 %v296, %v357
      %v365 = vadd.f32 %v297, %v357
      %v366 = vadd.f32 %v298, %v357
      %v367 = vadd.f32 %v299, %v357
      %v368 = vadd.f32 %v300, %v357
      %v369 = vadd.f32 %v301, %v357
      %v370 = vadd.f32 %v302, %v357
      %v371 = vadd.f32 %v303, %v357
      %v372 = vadd.f32 %v304, %v357
      %v373 = vadd.f32 %v305, %v357
      %v374 = vadd.f32 %v306, %v357
      %v375 = vadd.f32 %v307, %v357
      %v376 = vadd.f32 %v308, %v357
      %v377 = vadd.f32 %v309, %v357
      %v378 = vadd.f32 %v310, %v357
      %v379 = vadd.f32 %v311, %v357
      %v380 = vadd.f32 %v312, %v357
      %v381 = vadd.f32 %v313, %v357
      %v382 = vadd.f32 %v314, %v357
      %v383 = vadd.f32 %v315, %v357
      %v384 = vadd.f32 %v316, %v357
      %v385 = vadd.f32 %v317, %v357
      %v386 = vadd.f32 %v318, %v357
      %v387 = vadd.f32 %v319, %v357
      %v388 = vadd.f32 %v320, %v357
      %v389 = vadd.f32 %v321, %v357
      %v390 = vadd.f32 %v322, %v357
      %v391 = vadd.f32 %v323, %v357
      %v392 = vadd.f32 %v324, %v357
      %v393 = vadd.f32 %v325, %v357
      %v394 = vadd.f32 %v326, %v357
      %v395 = vadd.f32 %v327, %v357
      %v396 = vadd.f32 %v328, %v357
      %v397 = vadd.f32 %v329, %v357
      %v398 = vadd.f32 %v330, %v357
      %v399 = vadd.f32 %v331, %v357
      %v400 = vadd.f32 %v332, %v357
      %v401 = vadd.f32 %v333, %v357
      %v402 = vadd.f32 %v334, %v357
      %v403 = vadd.f32 %v335, %v357
      %v404 = vadd.f32 %v336, %v357
      %v405 = vadd.f32 %v337, %v357
      %v406 = vadd.f32 %v338, %v357
      %v407 = vadd.f32 %v339, %v357
      %v408 = vadd.f32 %v340, %v357
      %v409 = vadd.f32 %v341, %v357
      %v410 = vadd.f32 %v342, %v357
      %v411 = vadd.f32 %v343, %v357
      %v412 = vadd.f32 %v344, %v357
      %v413 = vadd.f32 %v345, %v357
      %v414 = vadd.f32 %v346, %v357
      %v415 = vadd.f32 %v347, %v357
      %v416 = vadd.f32 %v348, %v357
      %v417 = vadd.f32 %v349, %v357
      %v418 = vadd.f32 %v350, %v357
      %v419 = vadd.f32 %v351, %v357
      %v420 = vadd.f32 %v352, %v357
      %v421 = vadd.f32 %v353, %v357
      %v422 = vadd.f32 %v354, %v357
      %v423 = vld [vmem:[%s215] sm:$0xf]
      %v424 = vld [vmem:[%s215 + $0x4] sm:$0xf]
      %v425 = vld [vmem:[%s215 + $0x8] sm:$0xf]
      %v426 = vld [vmem:[%s215 + $0xc] sm:$0xf]
      %v427 = vld [vmem:[%s215 + $0x10] sm:$0xf]
      %v428 = vld [vmem:[%s215 + $0x14] sm:$0xf]
      %v429 = vld [vmem:[%s215 + $0x18] sm:$0xf]
      %v430 = vld [vmem:[%s215 + $0x1c] sm:$0xf]
      %v431 = vld [vmem:[%s215 + $0x20] sm:$0xf]
      %v432 = vld [vmem:[%s215 + $0x24] sm:$0xf]
      %v433 = vld [vmem:[%s215 + $0x28] sm:$0xf]
      %v434 = vld [vmem:[%s215 + $0x2c] sm:$0xf]
      %v435 = vld [vmem:[%s215 + $0x30] sm:$0xf]
      %v436 = vld [vmem:[%s215 + $0x34] sm:$0xf]
      %v437 = vld [vmem:[%s215 + $0x38] sm:$0xf]
      %v438 = vld [vmem:[%s215 + $0x3c] sm:$0xf]
      %v439 = vld [vmem:[%s215 + $0x40] sm:$0xf]
      %v440 = vld [vmem:[%s215 + $0x44] sm:$0xf]
      %v441 = vld [vmem:[%s215 + $0x48] sm:$0xf]
      %v442 = vld [vmem:[%s215 + $0x4c] sm:$0xf]
      %v443 = vld [vmem:[%s215 + $0x50] sm:$0xf]
      %v444 = vld [vmem:[%s215 + $0x54] sm:$0xf]
      %v445 = vld [vmem:[%s215 + $0x58] sm:$0xf]
      %v446 = vld [vmem:[%s215 + $0x5c] sm:$0xf]
      %v447 = vld [vmem:[%s215 + $0x60] sm:$0xf]
      %v448 = vld [vmem:[%s215 + $0x64] sm:$0xf]
      %v449 = vld [vmem:[%s215 + $0x68] sm:$0xf]
      %v450 = vld [vmem:[%s215 + $0x6c] sm:$0xf]
      %v451 = vld [vmem:[%s215 + $0x70] sm:$0xf]
      %v452 = vld [vmem:[%s215 + $0x74] sm:$0xf]
      %v453 = vld [vmem:[%s215 + $0x78] sm:$0xf]
      %v454 = vld [vmem:[%s215 + $0x7c] sm:$0xf]
      %v455 = vld [vmem:[%s215 + $0x80] sm:$0xf]
      %v456 = vld [vmem:[%s215 + $0x84] sm:$0xf]
      %v457 = vld [vmem:[%s215 + $0x88] sm:$0xf]
      %v458 = vld [vmem:[%s215 + $0x8c] sm:$0xf]
      %v459 = vld [vmem:[%s215 + $0x90] sm:$0xf]
      %v460 = vld [vmem:[%s215 + $0x94] sm:$0xf]
      %v461 = vld [vmem:[%s215 + $0x98] sm:$0xf]
      %v462 = vld [vmem:[%s215 + $0x9c] sm:$0xf]
      %v463 = vld [vmem:[%s215 + $0xa0] sm:$0xf]
      %v464 = vld [vmem:[%s215 + $0xa4] sm:$0xf]
      %v465 = vld [vmem:[%s215 + $0xa8] sm:$0xf]
      %v466 = vld [vmem:[%s215 + $0xac] sm:$0xf]
      %v467 = vld [vmem:[%s215 + $0xb0] sm:$0xf]
      %v468 = vld [vmem:[%s215 + $0xb4] sm:$0xf]
      %v469 = vld [vmem:[%s215 + $0xb8] sm:$0xf]
      %v470 = vld [vmem:[%s215 + $0xbc] sm:$0xf]
      %v471 = vld [vmem:[%s215 + $0xc0] sm:$0xf]
      %v472 = vld [vmem:[%s215 + $0xc4] sm:$0xf]
      %v473 = vld [vmem:[%s215 + $0xc8] sm:$0xf]
      %v474 = vld [vmem:[%s215 + $0xcc] sm:$0xf]
      %v475 = vld [vmem:[%s215 + $0xd0] sm:$0xf]
      %v476 = vld [vmem:[%s215 + $0xd4] sm:$0xf]
      %v477 = vld [vmem:[%s215 + $0xd8] sm:$0xf]
      %v478 = vld [vmem:[%s215 + $0xdc] sm:$0xf]
      %v479 = vld [vmem:[%s215 + $0xe0] sm:$0xf]
      %v480 = vld [vmem:[%s215 + $0xe4] sm:$0xf]
      %v481 = vld [vmem:[%s215 + $0xe8] sm:$0xf]
      %v482 = vld [vmem:[%s215 + $0xec] sm:$0xf]
      %v483 = vld [vmem:[%s215 + $0xf0] sm:$0xf]
      %v484 = vld [vmem:[%s215 + $0xf4] sm:$0xf]
      %v485 = vld [vmem:[%s215 + $0xf8] sm:$0xf]
      %v486 = vld [vmem:[%s215 + $0xfc] sm:$0xf]
      %v487 = vunpack.c.l.bf16 %v423
      %v488 = vunpack.c.l.bf16 %v424
      %v489 = vunpack.c.l.bf16 %v425
      %v490 = vunpack.c.l.bf16 %v426
      %v491 = vunpack.c.l.bf16 %v427
      %v492 = vunpack.c.l.bf16 %v428
      %v493 = vunpack.c.l.bf16 %v429
      %v494 = vunpack.c.l.bf16 %v430
      %v495 = vunpack.c.l.bf16 %v431
      %v496 = vunpack.c.l.bf16 %v432
      %v497 = vunpack.c.l.bf16 %v433
      %v498 = vunpack.c.l.bf16 %v434
      %v499 = vunpack.c.l.bf16 %v435
      %v500 = vunpack.c.l.bf16 %v436
      %v501 = vunpack.c.l.bf16 %v437
      %v502 = vunpack.c.l.bf16 %v438
      %v503 = vunpack.c.l.bf16 %v439
      %v504 = vunpack.c.l.bf16 %v440
      %v505 = vunpack.c.l.bf16 %v441
      %v506 = vunpack.c.l.bf16 %v442
      %v507 = vunpack.c.l.bf16 %v443
      %v508 = vunpack.c.l.bf16 %v444
      %v509 = vunpack.c.l.bf16 %v445
      %v510 = vunpack.c.l.bf16 %v446
      %v511 = vunpack.c.l.bf16 %v447
      %v512 = vunpack.c.l.bf16 %v448
      %v513 = vunpack.c.l.bf16 %v449
      %v514 = vunpack.c.l.bf16 %v450
      %v515 = vunpack.c.l.bf16 %v451
      %v516 = vunpack.c.l.bf16 %v452
      %v517 = vunpack.c.l.bf16 %v453
      %v518 = vunpack.c.l.bf16 %v454
      %v519 = vunpack.c.l.bf16 %v455
      %v520 = vunpack.c.l.bf16 %v456
      %v521 = vunpack.c.l.bf16 %v457
      %v522 = vunpack.c.l.bf16 %v458
      %v523 = vunpack.c.l.bf16 %v459
      %v524 = vunpack.c.l.bf16 %v460
      %v525 = vunpack.c.l.bf16 %v461
      %v526 = vunpack.c.l.bf16 %v462
      %v527 = vunpack.c.l.bf16 %v463
      %v528 = vunpack.c.l.bf16 %v464
      %v529 = vunpack.c.l.bf16 %v465
      %v530 = vunpack.c.l.bf16 %v466
      %v531 = vunpack.c.l.bf16 %v467
      %v532 = vunpack.c.l.bf16 %v468
      %v533 = vunpack.c.l.bf16 %v469
      %v534 = vunpack.c.l.bf16 %v470
      %v535 = vunpack.c.l.bf16 %v471
      %v536 = vunpack.c.l.bf16 %v472
      %v537 = vunpack.c.l.bf16 %v473
      %v538 = vunpack.c.l.bf16 %v474
      %v539 = vunpack.c.l.bf16 %v475
      %v540 = vunpack.c.l.bf16 %v476
      %v541 = vunpack.c.l.bf16 %v477
      %v542 = vunpack.c.l.bf16 %v478
      %v543 = vunpack.c.l.bf16 %v479
      %v544 = vunpack.c.l.bf16 %v480
      %v545 = vunpack.c.l.bf16 %v481
      %v546 = vunpack.c.l.bf16 %v482
      %v547 = vunpack.c.l.bf16 %v483
      %v548 = vunpack.c.l.bf16 %v484
      %v549 = vunpack.c.l.bf16 %v485
      %v550 = vunpack.c.l.bf16 %v486
      %v551 = vadd.f32 %v359, %v487
      %v552 = vadd.f32 %v360, %v488
      %v553 = vadd.f32 %v361, %v489
      %v554 = vadd.f32 %v362, %v490
      %v555 = vadd.f32 %v363, %v491
      %v556 = vadd.f32 %v364, %v492
      %v557 = vadd.f32 %v365, %v493
      %v558 = vadd.f32 %v366, %v494
      %v559 = vadd.f32 %v367, %v495
      %v560 = vadd.f32 %v368, %v496
      %v561 = vadd.f32 %v369, %v497
      %v562 = vadd.f32 %v370, %v498
      %v563 = vadd.f32 %v371, %v499
      %v564 = vadd.f32 %v372, %v500
      %v565 = vadd.f32 %v373, %v501
      %v566 = vadd.f32 %v374, %v502
      %v567 = vadd.f32 %v375, %v503
      %v568 = vadd.f32 %v376, %v504
      %v569 = vadd.f32 %v377, %v505
      %v570 = vadd.f32 %v378, %v506
      %v571 = vadd.f32 %v379, %v507
      %v572 = vadd.f32 %v380, %v508
      %v573 = vadd.f32 %v381, %v509
      %v574 = vadd.f32 %v382, %v510
      %v575 = vadd.f32 %v383, %v511
      %v576 = vadd.f32 %v384, %v512
      %v577 = vadd.f32 %v385, %v513
      %v578 = vadd.f32 %v386, %v514
      %v579 = vadd.f32 %v387, %v515
      %v580 = vadd.f32 %v388, %v516
      %v581 = vadd.f32 %v389, %v517
      %v582 = vadd.f32 %v390, %v518
      %v583 = vadd.f32 %v391, %v519
      %v584 = vadd.f32 %v392, %v520
      %v585 = vadd.f32 %v393, %v521
      %v586 = vadd.f32 %v394, %v522
      %v587 = vadd.f32 %v395, %v523
      %v588 = vadd.f32 %v396, %v524
      %v589 = vadd.f32 %v397, %v525
      %v590 = vadd.f32 %v398, %v526
      %v591 = vadd.f32 %v399, %v527
      %v592 = vadd.f32 %v400, %v528
      %v593 = vadd.f32 %v401, %v529
      %v594 = vadd.f32 %v402, %v530
      %v595 = vadd.f32 %v403, %v531
      %v596 = vadd.f32 %v404, %v532
      %v597 = vadd.f32 %v405, %v533
      %v598 = vadd.f32 %v406, %v534
      %v599 = vadd.f32 %v407, %v535
      %v600 = vadd.f32 %v408, %v536
      %v601 = vadd.f32 %v409, %v537
      %v602 = vadd.f32 %v410, %v538
      %v603 = vadd.f32 %v411, %v539
      %v604 = vadd.f32 %v412, %v540
      %v605 = vadd.f32 %v413, %v541
      %v606 = vadd.f32 %v414, %v542
      %v607 = vadd.f32 %v415, %v543
      %v608 = vadd.f32 %v416, %v544
      %v609 = vadd.f32 %v417, %v545
      %v610 = vadd.f32 %v418, %v546
      %v611 = vadd.f32 %v419, %v547
      %v612 = vadd.f32 %v420, %v548
      %v613 = vadd.f32 %v421, %v549
      %v614 = vadd.f32 %v422, %v550
      %v615 = vmax.f32 %v551, 0.0
      %v616 = vmax.f32 %v552, 0.0
      %v617 = vmax.f32 %v553, 0.0
      %v618 = vmax.f32 %v554, 0.0
      %v619 = vmax.f32 %v555, 0.0
      %v620 = vmax.f32 %v556, 0.0
      %v621 = vmax.f32 %v557, 0.0
      %v622 = vmax.f32 %v558, 0.0
      %v623 = vmax.f32 %v559, 0.0
      %v624 = vmax.f32 %v560, 0.0
      %v625 = vmax.f32 %v561, 0.0
      %v626 = vmax.f32 %v562, 0.0
      %v627 = vmax.f32 %v563, 0.0
      %v628 = vmax.f32 %v564, 0.0
      %v629 = vmax.f32 %v565, 0.0
      %v630 = vmax.f32 %v566, 0.0
      %v631 = vmax.f32 %v567, 0.0
      %v632 = vmax.f32 %v568, 0.0
      %v633 = vmax.f32 %v569, 0.0
      %v634 = vmax.f32 %v570, 0.0
      %v635 = vmax.f32 %v571, 0.0
      %v636 = vmax.f32 %v572, 0.0
      %v637 = vmax.f32 %v573, 0.0
      %v638 = vmax.f32 %v574, 0.0
      %v639 = vmax.f32 %v575, 0.0
      %v640 = vmax.f32 %v576, 0.0
      %v641 = vmax.f32 %v577, 0.0
      %v642 = vmax.f32 %v578, 0.0
      %v643 = vmax.f32 %v579, 0.0
      %v644 = vmax.f32 %v580, 0.0
      %v645 = vmax.f32 %v581, 0.0
      %v646 = vmax.f32 %v582, 0.0
      %v647 = vmax.f32 %v583, 0.0
      %v648 = vmax.f32 %v584, 0.0
      %v649 = vmax.f32 %v585, 0.0
      %v650 = vmax.f32 %v586, 0.0
      %v651 = vmax.f32 %v587, 0.0
      %v652 = vmax.f32 %v588, 0.0
      %v653 = vmax.f32 %v589, 0.0
      %v654 = vmax.f32 %v590, 0.0
      %v655 = vmax.f32 %v591, 0.0
      %v656 = vmax.f32 %v592, 0.0
      %v657 = vmax.f32 %v593, 0.0
      %v658 = vmax.f32 %v594, 0.0
      %v659 = vmax.f32 %v595, 0.0
      %v660 = vmax.f32 %v596, 0.0
      %v661 = vmax.f32 %v597, 0.0
      %v662 = vmax.f32 %v598, 0.0
      %v663 = vmax.f32 %v599, 0.0
      %v664 = vmax.f32 %v600, 0.0
      %v665 = vmax.f32 %v601, 0.0
      %v666 = vmax.f32 %v602, 0.0
      %v667 = vmax.f32 %v603, 0.0
      %v668 = vmax.f32 %v604, 0.0
      %v669 = vmax.f32 %v605, 0.0
      %v670 = vmax.f32 %v606, 0.0
      %v671 = vmax.f32 %v607, 0.0
      %v672 = vmax.f32 %v608, 0.0
      %v673 = vmax.f32 %v609, 0.0
      %v674 = vmax.f32 %v610, 0.0
      %v675 = vmax.f32 %v611, 0.0
      %v676 = vmax.f32 %v612, 0.0
      %v677 = vmax.f32 %v613, 0.0
      %v678 = vmax.f32 %v614, 0.0
      %v679 = vpack.c.bf16 %v615, %v615
      %v680 = vpack.c.bf16 %v616, %v616
      %v681 = vpack.c.bf16 %v617, %v617
      %v682 = vpack.c.bf16 %v618, %v618
      %v683 = vpack.c.bf16 %v619, %v619
      %v684 = vpack.c.bf16 %v620, %v620
      %v685 = vpack.c.bf16 %v621, %v621
      %v686 = vpack.c.bf16 %v622, %v622
      %v687 = vpack.c.bf16 %v623, %v623
      %v688 = vpack.c.bf16 %v624, %v624
      %v689 = vpack.c.bf16 %v625, %v625
      %v690 = vpack.c.bf16 %v626, %v626
      %v691 = vpack.c.bf16 %v627, %v627
      %v692 = vpack.c.bf16 %v628, %v628
      %v693 = vpack.c.bf16 %v629, %v629
      %v694 = vpack.c.bf16 %v630, %v630
      %v695 = vpack.c.bf16 %v631, %v631
      %v696 = vpack.c.bf16 %v632, %v632
      %v697 = vpack.c.bf16 %v633, %v633
      %v698 = vpack.c.bf16 %v634, %v634
      %v699 = vpack.c.bf16 %v635, %v635
      %v700 = vpack.c.bf16 %v636, %v636
      %v701 = vpack.c.bf16 %v637, %v637
      %v702 = vpack.c.bf16 %v638, %v638
      %v703 = vpack.c.bf16 %v639, %v639
      %v704 = vpack.c.bf16 %v640, %v640
      %v705 = vpack.c.bf16 %v641, %v641
      %v706 = vpack.c.bf16 %v642, %v642
      %v707 = vpack.c.bf16 %v643, %v643
      %v708 = vpack.c.bf16 %v644, %v644
      %v709 = vpack.c.bf16 %v645, %v645
      %v710 = vpack.c.bf16 %v646, %v646
      %v711 = vpack.c.bf16 %v647, %v647
      %v712 = vpack.c.bf16 %v648, %v648
      %v713 = vpack.c.bf16 %v649, %v649
      %v714 = vpack.c.bf16 %v650, %v650
      %v715 = vpack.c.bf16 %v651, %v651
      %v716 = vpack.c.bf16 %v652, %v652
      %v717 = vpack.c.bf16 %v653, %v653
      %v718 = vpack.c.bf16 %v654, %v654
      %v719 = vpack.c.bf16 %v655, %v655
      %v720 = vpack.c.bf16 %v656, %v656
      %v721 = vpack.c.bf16 %v657, %v657
      %v722 = vpack.c.bf16 %v658, %v658
      %v723 = vpack.c.bf16 %v659, %v659
      %v724 = vpack.c.bf16 %v660, %v660
      %v725 = vpack.c.bf16 %v661, %v661
      %v726 = vpack.c.bf16 %v662, %v662
      %v727 = vpack.c.bf16 %v663, %v663
      %v728 = vpack.c.bf16 %v664, %v664
      %v729 = vpack.c.bf16 %v665, %v665
      %v730 = vpack.c.bf16 %v666, %v666
      %v731 = vpack.c.bf16 %v667, %v667
      %v732 = vpack.c.bf16 %v668, %v668
      %v733 = vpack.c.bf16 %v669, %v669
      %v734 = vpack.c.bf16 %v670, %v670
      %v735 = vpack.c.bf16 %v671, %v671
      %v736 = vpack.c.bf16 %v672, %v672
      %v737 = vpack.c.bf16 %v673, %v673
      %v738 = vpack.c.bf16 %v674, %v674
      %v739 = vpack.c.bf16 %v675, %v675
      %v740 = vpack.c.bf16 %v676, %v676
      %v741 = vpack.c.bf16 %v677, %v677
      %v742 = vpack.c.bf16 %v678, %v678
      %vm743 = vcmask 125952
      %744 = vst.msk [vmem:[%s221] sm:$0xf] %vm743, %v679
      %745 = vst.msk [vmem:[%s221 + $0x4] sm:$0xf] %vm743, %v680
      %746 = vst.msk [vmem:[%s221 + $0x8] sm:$0xf] %vm743, %v681
      %747 = vst.msk [vmem:[%s221 + $0xc] sm:$0xf] %vm743, %v682
      %748 = vst.msk [vmem:[%s221 + $0x10] sm:$0xf] %vm743, %v683
      %749 = vst.msk [vmem:[%s221 + $0x14] sm:$0xf] %vm743, %v684
      %750 = vst.msk [vmem:[%s221 + $0x18] sm:$0xf] %vm743, %v685
      %751 = vst.msk [vmem:[%s221 + $0x1c] sm:$0xf] %vm743, %v686
      %752 = vst.msk [vmem:[%s221 + $0x20] sm:$0xf] %vm743, %v687
      %753 = vst.msk [vmem:[%s221 + $0x24] sm:$0xf] %vm743, %v688
      %754 = vst.msk [vmem:[%s221 + $0x28] sm:$0xf] %vm743, %v689
      %755 = vst.msk [vmem:[%s221 + $0x2c] sm:$0xf] %vm743, %v690
      %756 = vst.msk [vmem:[%s221 + $0x30] sm:$0xf] %vm743, %v691
      %757 = vst.msk [vmem:[%s221 + $0x34] sm:$0xf] %vm743, %v692
      %758 = vst.msk [vmem:[%s221 + $0x38] sm:$0xf] %vm743, %v693
      %759 = vst.msk [vmem:[%s221 + $0x3c] sm:$0xf] %vm743, %v694
      %760 = vst.msk [vmem:[%s221 + $0x40] sm:$0xf] %vm743, %v695
      %761 = vst.msk [vmem:[%s221 + $0x44] sm:$0xf] %vm743, %v696
      %762 = vst.msk [vmem:[%s221 + $0x48] sm:$0xf] %vm743, %v697
      %763 = vst.msk [vmem:[%s221 + $0x4c] sm:$0xf] %vm743, %v698
      %764 = vst.msk [vmem:[%s221 + $0x50] sm:$0xf] %vm743, %v699
      %765 = vst.msk [vmem:[%s221 + $0x54] sm:$0xf] %vm743, %v700
      %766 = vst.msk [vmem:[%s221 + $0x58] sm:$0xf] %vm743, %v701
      %767 = vst.msk [vmem:[%s221 + $0x5c] sm:$0xf] %vm743, %v702
      %768 = vst.msk [vmem:[%s221 + $0x60] sm:$0xf] %vm743, %v703
      %769 = vst.msk [vmem:[%s221 + $0x64] sm:$0xf] %vm743, %v704
      %770 = vst.msk [vmem:[%s221 + $0x68] sm:$0xf] %vm743, %v705
      %771 = vst.msk [vmem:[%s221 + $0x6c] sm:$0xf] %vm743, %v706
      %772 = vst.msk [vmem:[%s221 + $0x70] sm:$0xf] %vm743, %v707
      %773 = vst.msk [vmem:[%s221 + $0x74] sm:$0xf] %vm743, %v708
      %774 = vst.msk [vmem:[%s221 + $0x78] sm:$0xf] %vm743, %v709
      %775 = vst.msk [vmem:[%s221 + $0x7c] sm:$0xf] %vm743, %v710
      %776 = vst.msk [vmem:[%s221 + $0x80] sm:$0xf] %vm743, %v711
      %777 = vst.msk [vmem:[%s221 + $0x84] sm:$0xf] %vm743, %v712
      %778 = vst.msk [vmem:[%s221 + $0x88] sm:$0xf] %vm743, %v713
      %779 = vst.msk [vmem:[%s221 + $0x8c] sm:$0xf] %vm743, %v714
      %780 = vst.msk [vmem:[%s221 + $0x90] sm:$0xf] %vm743, %v715
      %781 = vst.msk [vmem:[%s221 + $0x94] sm:$0xf] %vm743, %v716
      %782 = vst.msk [vmem:[%s221 + $0x98] sm:$0xf] %vm743, %v717
      %783 = vst.msk [vmem:[%s221 + $0x9c] sm:$0xf] %vm743, %v718
      %784 = vst.msk [vmem:[%s221 + $0xa0] sm:$0xf] %vm743, %v719
      %785 = vst.msk [vmem:[%s221 + $0xa4] sm:$0xf] %vm743, %v720
      %786 = vst.msk [vmem:[%s221 + $0xa8] sm:$0xf] %vm743, %v721
      %787 = vst.msk [vmem:[%s221 + $0xac] sm:$0xf] %vm743, %v722
      %788 = vst.msk [vmem:[%s221 + $0xb0] sm:$0xf] %vm743, %v723
      %789 = vst.msk [vmem:[%s221 + $0xb4] sm:$0xf] %vm743, %v724
      %790 = vst.msk [vmem:[%s221 + $0xb8] sm:$0xf] %vm743, %v725
      %791 = vst.msk [vmem:[%s221 + $0xbc] sm:$0xf] %vm743, %v726
      %792 = vst.msk [vmem:[%s221 + $0xc0] sm:$0xf] %vm743, %v727
      %793 = vst.msk [vmem:[%s221 + $0xc4] sm:$0xf] %vm743, %v728
      %794 = vst.msk [vmem:[%s221 + $0xc8] sm:$0xf] %vm743, %v729
      %795 = vst.msk [vmem:[%s221 + $0xcc] sm:$0xf] %vm743, %v730
      %796 = vst.msk [vmem:[%s221 + $0xd0] sm:$0xf] %vm743, %v731
      %797 = vst.msk [vmem:[%s221 + $0xd4] sm:$0xf] %vm743, %v732
      %798 = vst.msk [vmem:[%s221 + $0xd8] sm:$0xf] %vm743, %v733
      %799 = vst.msk [vmem:[%s221 + $0xdc] sm:$0xf] %vm743, %v734
      %800 = vst.msk [vmem:[%s221 + $0xe0] sm:$0xf] %vm743, %v735
      %801 = vst.msk [vmem:[%s221 + $0xe4] sm:$0xf] %vm743, %v736
      %802 = vst.msk [vmem:[%s221 + $0xe8] sm:$0xf] %vm743, %v737
      %803 = vst.msk [vmem:[%s221 + $0xec] sm:$0xf] %vm743, %v738
      %804 = vst.msk [vmem:[%s221 + $0xf0] sm:$0xf] %vm743, %v739
      %805 = vst.msk [vmem:[%s221 + $0xf4] sm:$0xf] %vm743, %v740
      %806 = vst.msk [vmem:[%s221 + $0xf8] sm:$0xf] %vm743, %v741
      %807 = vst.msk [vmem:[%s221 + $0xfc] sm:$0xf] %vm743, %v742
      %s808 = smul.u32 64, %s15
      %p809 = scmp.lt.s32.totalorder %s808, 255
      %s810 = scalar_select %p809, %s808, 255
      %s811 = smul.addr %s810, 4
      %s812 = scalar_lea.vmem %s4, %s811
      // Predicated region
      $region37: #{resnet_forward.44} parent=35 // pred_check
        %p813 = pneg %p127
      $region38: #{resnet_forward.44} parent=35 // pred_check_branch
        %815 = sbr.rel (%p813) target = $region40
      $region39: #{resnet_forward.44} parent=35 // pred_region
        %s816 = smul.u32 64, %s15
      $region40: #{resnet_forward.44} parent=35 // pred_fallthru
        _
    $region36: #{resnet_forward.44} parent=5 // pred_fallthru
      _
    %p817 = scmp.le.s32.totalorder 2, %s10
    // Predicated region
    $region41: #{resnet_forward.44} parent=5 // pred_check
      %p818 = pneg %p817
    $region42: #{resnet_forward.44} parent=5 // pred_check_branch
      %820 = sbr.rel (%p818) target = $region44
    $region43: #{resnet_forward.44} parent=5 // pred_region
      %s821 = ssub.s32 %s10, 2
      // Predicated region
      $region45: #{resnet_forward.44} parent=43 // pred_check
        %p822 = pneg %p133
      $region46: #{resnet_forward.44} parent=43 // pred_check_branch
        %824 = sbr.rel (%p822) target = $region48
      $region47: #{resnet_forward.44} parent=43 // pred_region
        %s825 = smul.u32 64, %s16
        %p826 = scmp.lt.s32.totalorder %s825, 255
        %s827 = scalar_select %p826, %s825, 255
        %s828 = smul.addr %s827, 4
        %s829 = scalar_lea.vmem %s4, %s828
      $region48: #{resnet_forward.44} parent=43 // pred_fallthru
        _
    $region44: #{resnet_forward.44} parent=5 // pred_fallthru
      _
  $region6: #{resnet_forward.44} parent=0 // loop_footer
    %s14 = sadd.s32 1, %s10
  $region7: #{resnet_forward.44} parent=0 // loop_footer_branch
    %9 = sbr.rel target = $region3
  $region8: #{resnet_forward.44} parent=0 // loop_exit
    _

// kernel: resnet_forward.53
$region0: #{resnet_forward.53}
  #allocation0 [shape = 'u32[]', space=smem, size = 0x4, offset = 0x4, fixed_abs, tag = 'smem constant byte address 0x4 - core index']
  #allocation1 [shape = 'u32[72,128]{1,0:T(1,128)}', space=vmem, size = 0x9000, scoped, tag = 'internal scratch']
  %s0 = inlined_call_operand.vmem [shape: bf16[512,144], index: 0, kind: input, shape index: {}]
  %s1 = inlined_call_operand.vmem [shape: f32[144,32], index: 1, kind: input, shape index: {}]
  %s2 = inlined_call_operand.vmem [shape: f32[512,32], index: 2, kind: output, shape index: {0}]
  %s3 = inlined_call_operand.vmem [shape: f32[1,2,32], index: 3, kind: output, shape index: {1}]
  %4 = xla_tuple %s2, %s3
  %s5 = sld [smem:[#allocation0]]
  $region26: #{resnet_forward.53} parent=0
    _
  %s7 = ssub.s32 1, %s5
  %s8 = scalar_select 0, %s7, %s5
  // Predicated region
  $region2: #{resnet_forward.53} parent=0 // pred_check
    _
  $region3: #{resnet_forward.53} parent=0 // pred_check_branch
    %10 = sbr.rel (0) target = $region5
  $region4: #{resnet_forward.53} parent=0 // pred_region
    _
  $region5: #{resnet_forward.53} parent=0 // pred_fallthru
    _
  // Predicated region
  $region6: #{resnet_forward.53} parent=0 // pred_check
    _
  $region7: #{resnet_forward.53} parent=0 // pred_check_branch
    %12 = sbr.rel (0) target = $region9
  $region8: #{resnet_forward.53} parent=0 // pred_region
    _
  $region9: #{resnet_forward.53} parent=0 // pred_fallthru
    _
  %v14 = vld [vmem:[%s0] sm:$0xff]
  %v15 = vld [vmem:[%s0 + $0x8] sm:$0xff]
  %v16 = vld [vmem:[%s0 + $0x10] sm:$0xff]
  %v17 = vld [vmem:[%s0 + $0x18] sm:$0xff]
  %v18 = vld [vmem:[%s0 + $0x20] sm:$0xff]
  %v19 = vld [vmem:[%s0 + $0x28] sm:$0xff]
  %v20 = vld [vmem:[%s0 + $0x30] sm:$0xff]
  %v21 = vld [vmem:[%s0 + $0x38] sm:$0xff]
  %v22 = vld [vmem:[%s0 + $0x40] sm:$0xff]
  %v23 = vld [vmem:[%s0 + $0x48] sm:$0xff]
  %v24 = vld [vmem:[%s0 + $0x50] sm:$0xff]
  %v25 = vld [vmem:[%s0 + $0x58] sm:$0xff]
  %v26 = vld [vmem:[%s0 + $0x60] sm:$0xff]
  %v27 = vld [vmem:[%s0 + $0x68] sm:$0xff]
  %v28 = vld [vmem:[%s0 + $0x70] sm:$0xff]
  %v29 = vld [vmem:[%s0 + $0x78] sm:$0xff]
  %v30 = vld [vmem:[%s0 + $0x80] sm:$0xff]
  %v31 = vld [vmem:[%s0 + $0x88] sm:$0xff]
  %v32 = vld [vmem:[%s0 + $0x90] sm:$0xff]
  %v33 = vld [vmem:[%s0 + $0x98] sm:$0xff]
  %v34 = vld [vmem:[%s0 + $0xa0] sm:$0xff]
  %v35 = vld [vmem:[%s0 + $0xa8] sm:$0xff]
  %v36 = vld [vmem:[%s0 + $0xb0] sm:$0xff]
  %v37 = vld [vmem:[%s0 + $0xb8] sm:$0xff]
  %v38 = vld [vmem:[%s0 + $0xc0] sm:$0xff]
  %v39 = vld [vmem:[%s0 + $0xc8] sm:$0xff]
  %v40 = vld [vmem:[%s0 + $0xd0] sm:$0xff]
  %v41 = vld [vmem:[%s0 + $0xd8] sm:$0xff]
  %v42 = vld [vmem:[%s0 + $0xe0] sm:$0xff]
  %v43 = vld [vmem:[%s0 + $0xe8] sm:$0xff]
  %v44 = vld [vmem:[%s0 + $0xf0] sm:$0xff]
  %v45 = vld [vmem:[%s0 + $0xf8] sm:$0xff]
  %v46 = vld [vmem:[%s0 + $0x100] sm:$0xff]
  %v47 = vld [vmem:[%s0 + $0x108] sm:$0xff]
  %v48 = vld [vmem:[%s0 + $0x110] sm:$0xff]
  %v49 = vld [vmem:[%s0 + $0x118] sm:$0xff]
  %v50 = vld [vmem:[%s0 + $0x120] sm:$0xff]
  %v51 = vld [vmem:[%s0 + $0x128] sm:$0xff]
  %v52 = vld [vmem:[%s0 + $0x130] sm:$0xff]
  %v53 = vld [vmem:[%s0 + $0x138] sm:$0xff]
  %v54 = vld [vmem:[%s0 + $0x140] sm:$0xff]
  %v55 = vld [vmem:[%s0 + $0x148] sm:$0xff]
  %v56 = vld [vmem:[%s0 + $0x150] sm:$0xff]
  %v57 = vld [vmem:[%s0 + $0x158] sm:$0xff]
  %v58 = vld [vmem:[%s0 + $0x160] sm:$0xff]
  %v59 = vld [vmem:[%s0 + $0x168] sm:$0xff]
  %v60 = vld [vmem:[%s0 + $0x170] sm:$0xff]
  %v61 = vld [vmem:[%s0 + $0x178] sm:$0xff]
  %v62 = vld [vmem:[%s0 + $0x180] sm:$0xff]
  %v63 = vld [vmem:[%s0 + $0x188] sm:$0xff]
  %v64 = vld [vmem:[%s0 + $0x190] sm:$0xff]
  %v65 = vld [vmem:[%s0 + $0x198] sm:$0xff]
  %v66 = vld [vmem:[%s0 + $0x1a0] sm:$0xff]
  %v67 = vld [vmem:[%s0 + $0x1a8] sm:$0xff]
  %v68 = vld [vmem:[%s0 + $0x1b0] sm:$0xff]
  %v69 = vld [vmem:[%s0 + $0x1b8] sm:$0xff]
  %v70 = vld [vmem:[%s0 + $0x1c0] sm:$0xff]
  %v71 = vld [vmem:[%s0 + $0x1c8] sm:$0xff]
  %v72 = vld [vmem:[%s0 + $0x1d0] sm:$0xff]
  %v73 = vld [vmem:[%s0 + $0x1d8] sm:$0xff]
  %v74 = vld [vmem:[%s0 + $0x1e0] sm:$0xff]
  %v75 = vld [vmem:[%s0 + $0x1e8] sm:$0xff]
  %v76 = vld [vmem:[%s0 + $0x1f0] sm:$0xff]
  %v77 = vld [vmem:[%s0 + $0x1f8] sm:$0xff]
  %v78 = vld [vmem:[%s1] sm:$0xff]
  %v79 = vld [vmem:[%s1 + $0x8] sm:$0xff]
  %v80 = vld [vmem:[%s1 + $0x10] sm:$0xff]
  %v81 = vld [vmem:[%s1 + $0x18] sm:$0xff]
  %v82 = vld [vmem:[%s1 + $0x20] sm:$0xff]
  %v83 = vld [vmem:[%s1 + $0x28] sm:$0xff]
  %v84 = vld [vmem:[%s1 + $0x30] sm:$0xff]
  %v85 = vld [vmem:[%s1 + $0x38] sm:$0xff]
  %v86 = vld [vmem:[%s1 + $0x40] sm:$0xff]
  %v87 = vld [vmem:[%s1 + $0x48] sm:$0xff]
  %v88 = vld [vmem:[%s1 + $0x50] sm:$0xff]
  %v89 = vld [vmem:[%s1 + $0x58] sm:$0xff]
  %v90 = vld [vmem:[%s1 + $0x60] sm:$0xff]
  %v91 = vld [vmem:[%s1 + $0x68] sm:$0xff]
  %v92 = vld [vmem:[%s1 + $0x70] sm:$0xff]
  %v93 = vld [vmem:[%s1 + $0x78] sm:$0xff]
  %v94 = vld [vmem:[%s1 + $0x80] sm:$0xff]
  %v95 = vld [vmem:[%s1 + $0x88] sm:$0xff]
  %v96 = vpack.c.bf16 %v79, %v78
  %v97 = vpack.c.bf16 %v81, %v80
  %v98 = vpack.c.bf16 %v83, %v82
  %v99 = vpack.c.bf16 %v85, %v84
  %v100 = vpack.c.bf16 %v87, %v86
  %v101 = vpack.c.bf16 %v89, %v88
  %v102 = vpack.c.bf16 %v91, %v90
  %v103 = vpack.c.bf16 %v93, %v92
  %v104 = vpack.c.bf16 %v95, %v94
  %v169 = vunpack.c.l.b16 %v14
  %v170 = vunpack.c.h.b16 %v14
  %v171 = vunpack.c.l.b16 %v15
  %v172 = vunpack.c.h.b16 %v15
  %v173 = vunpack.c.l.b16 %v16
  %v174 = vunpack.c.h.b16 %v16
  %v175 = vunpack.c.l.b16 %v17
  %v176 = vunpack.c.h.b16 %v17
  %v177 = vunpack.c.l.b16 %v18
  %v178 = vunpack.c.h.b16 %v18
  %v179 = vunpack.c.l.b16 %v19
  %v180 = vunpack.c.h.b16 %v19
  %v181 = vunpack.c.l.b16 %v20
  %v182 = vunpack.c.h.b16 %v20
  %v183 = vunpack.c.l.b16 %v21
  %v184 = vunpack.c.h.b16 %v21
  %v185 = vunpack.c.l.b16 %v22
  %v186 = vunpack.c.h.b16 %v22
  %v187 = vunpack.c.l.b16 %v23
  %v188 = vunpack.c.h.b16 %v23
  %v189 = vunpack.c.l.b16 %v24
  %v190 = vunpack.c.h.b16 %v24
  %v191 = vunpack.c.l.b16 %v25
  %v192 = vunpack.c.h.b16 %v25
  %v193 = vunpack.c.l.b16 %v26
  %v194 = vunpack.c.h.b16 %v26
  %v195 = vunpack.c.l.b16 %v27
  %v196 = vunpack.c.h.b16 %v27
  %v197 = vunpack.c.l.b16 %v28
  %v198 = vunpack.c.h.b16 %v28
  %v199 = vunpack.c.l.b16 %v29
  %v200 = vunpack.c.h.b16 %v29
  %v201 = vunpack.c.l.b16 %v30
  %v202 = vunpack.c.h.b16 %v30
  %v203 = vunpack.c.l.b16 %v31
  %v204 = vunpack.c.h.b16 %v31
  %v205 = vunpack.c.l.b16 %v32
  %v206 = vunpack.c.h.b16 %v32
  %v207 = vunpack.c.l.b16 %v33
  %v208 = vunpack.c.h.b16 %v33
  %v209 = vunpack.c.l.b16 %v34
  %v210 = vunpack.c.h.b16 %v34
  %v211 = vunpack.c.l.b16 %v35
  %v212 = vunpack.c.h.b16 %v35
  %v213 = vunpack.c.l.b16 %v36
  %v214 = vunpack.c.h.b16 %v36
  %v215 = vunpack.c.l.b16 %v37
  %v216 = vunpack.c.h.b16 %v37
  %v217 = vunpack.c.l.b16 %v38
  %v218 = vunpack.c.h.b16 %v38
  %v219 = vunpack.c.l.b16 %v39
  %v220 = vunpack.c.h.b16 %v39
  %v221 = vunpack.c.l.b16 %v40
  %v222 = vunpack.c.h.b16 %v40
  %v223 = vunpack.c.l.b16 %v41
  %v224 = vunpack.c.h.b16 %v41
  %v225 = vunpack.c.l.b16 %v42
  %v226 = vunpack.c.h.b16 %v42
  %v227 = vunpack.c.l.b16 %v43
  %v228 = vunpack.c.h.b16 %v43
  %v229 = vunpack.c.l.b16 %v44
  %v230 = vunpack.c.h.b16 %v44
  %v231 = vunpack.c.l.b16 %v45
  %v232 = vunpack.c.h.b16 %v45
  %v233 = vunpack.c.l.b16 %v46
  %v234 = vunpack.c.h.b16 %v46
  %v235 = vunpack.c.l.b16 %v47
  %v236 = vunpack.c.h.b16 %v47
  %v237 = vunpack.c.l.b16 %v48
  %v238 = vunpack.c.h.b16 %v48
  %v239 = vunpack.c.l.b16 %v49
  %v240 = vunpack.c.h.b16 %v49
  %v241 = vunpack.c.l.b16 %v50
  %v242 = vunpack.c.h.b16 %v50
  %v243 = vunpack.c.l.b16 %v51
  %v244 = vunpack.c.h.b16 %v51
  %v245 = vunpack.c.l.b16 %v52
  %v246 = vunpack.c.h.b16 %v52
  %v247 = vunpack.c.l.b16 %v53
  %v248 = vunpack.c.h.b16 %v53
  %v249 = vunpack.c.l.b16 %v54
  %v250 = vunpack.c.h.b16 %v54
  %v251 = vunpack.c.l.b16 %v55
  %v252 = vunpack.c.h.b16 %v55
  %v253 = vunpack.c.l.b16 %v56
  %v254 = vunpack.c.h.b16 %v56
  %v255 = vunpack.c.l.b16 %v57
  %v256 = vunpack.c.h.b16 %v57
  %v257 = vunpack.c.l.b16 %v58
  %v258 = vunpack.c.h.b16 %v58
  %v259 = vunpack.c.l.b16 %v59
  %v260 = vunpack.c.h.b16 %v59
  %v261 = vunpack.c.l.b16 %v60
  %v262 = vunpack.c.h.b16 %v60
  %v263 = vunpack.c.l.b16 %v61
  %v264 = vunpack.c.h.b16 %v61
  %v265 = vunpack.c.l.b16 %v62
  %v266 = vunpack.c.h.b16 %v62
  %v267 = vunpack.c.l.b16 %v63
  %v268 = vunpack.c.h.b16 %v63
  %v269 = vunpack.c.l.b16 %v64
  %v270 = vunpack.c.h.b16 %v64
  %v271 = vunpack.c.l.b16 %v65
  %v272 = vunpack.c.h.b16 %v65
  %v273 = vunpack.c.l.b16 %v66
  %v274 = vunpack.c.h.b16 %v66
  %v275 = vunpack.c.l.b16 %v67
  %v276 = vunpack.c.h.b16 %v67
  %v277 = vunpack.c.l.b16 %v68
  %v278 = vunpack.c.h.b16 %v68
  %v279 = vunpack.c.l.b16 %v69
  %v280 = vunpack.c.h.b16 %v69
  %v281 = vunpack.c.l.b16 %v70
  %v282 = vunpack.c.h.b16 %v70
  %v283 = vunpack.c.l.b16 %v71
  %v284 = vunpack.c.h.b16 %v71
  %v285 = vunpack.c.l.b16 %v72
  %v286 = vunpack.c.h.b16 %v72
  %v287 = vunpack.c.l.b16 %v73
  %v288 = vunpack.c.h.b16 %v73
  %v289 = vunpack.c.l.b16 %v74
  %v290 = vunpack.c.h.b16 %v74
  %v291 = vunpack.c.l.b16 %v75
  %v292 = vunpack.c.h.b16 %v75
  %v293 = vunpack.c.l.b16 %v76
  %v294 = vunpack.c.h.b16 %v76
  %v295 = vunpack.c.l.b16 %v77
  %v296 = vunpack.c.h.b16 %v77
  %v297 = vpack.c.b16 %v171, %v169
  %v298 = vpack.c.b16 %v172, %v170
  %v299 = vpack.c.b16 %v175, %v173
  %v300 = vpack.c.b16 %v176, %v174
  %v301 = vpack.c.b16 %v179, %v177
  %v302 = vpack.c.b16 %v180, %v178
  %v303 = vpack.c.b16 %v183, %v181
  %v304 = vpack.c.b16 %v184, %v182
  %v305 = vpack.c.b16 %v187, %v185
  %v306 = vpack.c.b16 %v188, %v186
  %v307 = vpack.c.b16 %v191, %v189
  %v308 = vpack.c.b16 %v192, %v190
  %v309 = vpack.c.b16 %v195, %v193
  %v310 = vpack.c.b16 %v196, %v194
  %v311 = vpack.c.b16 %v199, %v197
  %v312 = vpack.c.b16 %v200, %v198
  %v313 = vpack.c.b16 %v203, %v201
  %v314 = vpack.c.b16 %v204, %v202
  %v315 = vpack.c.b16 %v207, %v205
  %v316 = vpack.c.b16 %v208, %v206
  %v317 = vpack.c.b16 %v211, %v209
  %v318 = vpack.c.b16 %v212, %v210
  %v319 = vpack.c.b16 %v215, %v213
  %v320 = vpack.c.b16 %v216, %v214
  %v321 = vpack.c.b16 %v219, %v217
  %v322 = vpack.c.b16 %v220, %v218
  %v323 = vpack.c.b16 %v223, %v221
  %v324 = vpack.c.b16 %v224, %v222
  %v325 = vpack.c.b16 %v227, %v225
  %v326 = vpack.c.b16 %v228, %v226
  %v327 = vpack.c.b16 %v231, %v229
  %v328 = vpack.c.b16 %v232, %v230
  %v329 = vpack.c.b16 %v235, %v233
  %v330 = vpack.c.b16 %v236, %v234
  %v331 = vpack.c.b16 %v239, %v237
  %v332 = vpack.c.b16 %v240, %v238
  %v333 = vpack.c.b16 %v243, %v241
  %v334 = vpack.c.b16 %v244, %v242
  %v335 = vpack.c.b16 %v247, %v245
  %v336 = vpack.c.b16 %v248, %v246
  %v337 = vpack.c.b16 %v251, %v249
  %v338 = vpack.c.b16 %v252, %v250
  %v339 = vpack.c.b16 %v255, %v253
  %v340 = vpack.c.b16 %v256, %v254
  %v341 = vpack.c.b16 %v259, %v257
  %v342 = vpack.c.b16 %v260, %v258
  %v343 = vpack.c.b16 %v263, %v261
  %v344 = vpack.c.b16 %v264, %v262
  %v345 = vpack.c.b16 %v267, %v265
  %v346 = vpack.c.b16 %v268, %v266
  %v347 = vpack.c.b16 %v271, %v269
  %v348 = vpack.c.b16 %v272, %v270
  %v349 = vpack.c.b16 %v275, %v273
  %v350 = vpack.c.b16 %v276, %v274
  %v351 = vpack.c.b16 %v279, %v277
  %v352 = vpack.c.b16 %v280, %v278
  %v353 = vpack.c.b16 %v283, %v281
  %v354 = vpack.c.b16 %v284, %v282
  %v355 = vpack.c.b16 %v287, %v285
  %v356 = vpack.c.b16 %v288, %v286
  %v357 = vpack.c.b16 %v291, %v289
  %v358 = vpack.c.b16 %v292, %v290
  %v359 = vpack.c.b16 %v295, %v293
  %v360 = vpack.c.b16 %v296, %v294
  %vm393 = vcmask 130048
  %v395 = vsel %vm393, %v298, 0
  %v398 = vsel %vm393, %v300, 0
  %v401 = vsel %vm393, %v302, 0
  %v404 = vsel %vm393, %v304, 0
  %v407 = vsel %vm393, %v306, 0
  %v410 = vsel %vm393, %v308, 0
  %v413 = vsel %vm393, %v310, 0
  %v416 = vsel %vm393, %v312, 0
  %v419 = vsel %vm393, %v314, 0
  %v422 = vsel %vm393, %v316, 0
  %v425 = vsel %vm393, %v318, 0
  %v428 = vsel %vm393, %v320, 0
  %v431 = vsel %vm393, %v322, 0
  %v434 = vsel %vm393, %v324, 0
  %v437 = vsel %vm393, %v326, 0
  %v440 = vsel %vm393, %v328, 0
  %v443 = vsel %vm393, %v330, 0
  %v446 = vsel %vm393, %v332, 0
  %v449 = vsel %vm393, %v334, 0
  %v452 = vsel %vm393, %v336, 0
  %v455 = vsel %vm393, %v338, 0
  %v458 = vsel %vm393, %v340, 0
  %v461 = vsel %vm393, %v342, 0
  %v464 = vsel %vm393, %v344, 0
  %v467 = vsel %vm393, %v346, 0
  %v470 = vsel %vm393, %v348, 0
  %v473 = vsel %vm393, %v350, 0
  %v476 = vsel %vm393, %v352, 0
  %v479 = vsel %vm393, %v354, 0
  %v482 = vsel %vm393, %v356, 0
  %v485 = vsel %vm393, %v358, 0
  %v488 = vsel %vm393, %v360, 0
  %490 = vmatpush.bf16.msra.mxu0 %v103
  %491 = vmatpush.bf16.msra.mxu0 %v102
  %492 = vmatpush.bf16.msra.mxu0 %v101
  %493 = vmatpush.bf16.msra.mxu0 %v100
  %494 = vmatpush.bf16.msra.mxu0 %v99
  %495 = vmatpush.bf16.msra.mxu0 %v98
  %496 = vmatpush.bf16.msra.mxu0 %v97
  %497 = vmatpush.bf16.msra.mxu0 %v96
  %498 = vmatmul.bf16.gmra.mxu0 %v297
  %v499 = vpop.f32.mrf.mxu0
  %v500 = vadd.f32 0.0, %v499
  %v501 = vpop.f32.mrf.mxu0
  %v502 = vadd.f32 0.0, %v501
  %503 = vmatmul.bf16.gmra.mxu0 %v299
  %v504 = vpop.f32.mrf.mxu0
  %v505 = vadd.f32 0.0, %v504
  %v506 = vpop.f32.mrf.mxu0
  %v507 = vadd.f32 0.0, %v506
  %508 = vmatmul.bf16.gmra.mxu0 %v301
  %v509 = vpop.f32.mrf.mxu0
  %v510 = vadd.f32 0.0, %v509
  %v511 = vpop.f32.mrf.mxu0
  %v512 = vadd.f32 0.0, %v511
  %513 = vmatmul.bf16.gmra.mxu0 %v303
  %v514 = vpop.f32.mrf.mxu0
  %v515 = vadd.f32 0.0, %v514
  %v516 = vpop.f32.mrf.mxu0
  %v517 = vadd.f32 0.0, %v516
  %518 = vmatmul.bf16.gmra.mxu0 %v305
  %v519 = vpop.f32.mrf.mxu0
  %v520 = vadd.f32 0.0, %v519
  %v521 = vpop.f32.mrf.mxu0
  %v522 = vadd.f32 0.0, %v521
  %523 = vmatmul.bf16.gmra.mxu0 %v307
  %v524 = vpop.f32.mrf.mxu0
  %v525 = vadd.f32 0.0, %v524
  %v526 = vpop.f32.mrf.mxu0
  %v527 = vadd.f32 0.0, %v526
  %528 = vmatmul.bf16.gmra.mxu0 %v309
  %v529 = vpop.f32.mrf.mxu0
  %v530 = vadd.f32 0.0, %v529
  %v531 = vpop.f32.mrf.mxu0
  %v532 = vadd.f32 0.0, %v531
  %533 = vmatmul.bf16.gmra.mxu0 %v311
  %v534 = vpop.f32.mrf.mxu0
  %v535 = vadd.f32 0.0, %v534
  %v536 = vpop.f32.mrf.mxu0
  %v537 = vadd.f32 0.0, %v536
  %538 = vmatmul.bf16.gmra.mxu0 %v313
  %v539 = vpop.f32.mrf.mxu0
  %v540 = vadd.f32 0.0, %v539
  %v541 = vpop.f32.mrf.mxu0
  %v542 = vadd.f32 0.0, %v541
  %543 = vmatmul.bf16.gmra.mxu0 %v315
  %v544 = vpop.f32.mrf.mxu0
  %v545 = vadd.f32 0.0, %v544
  %v546 = vpop.f32.mrf.mxu0
  %v547 = vadd.f32 0.0, %v546
  %548 = vmatmul.bf16.gmra.mxu0 %v317
  %v549 = vpop.f32.mrf.mxu0
  %v550 = vadd.f32 0.0, %v549
  %v551 = vpop.f32.mrf.mxu0
  %v552 = vadd.f32 0.0, %v551
  %553 = vmatmul.bf16.gmra.mxu0 %v319
  %v554 = vpop.f32.mrf.mxu0
  %v555 = vadd.f32 0.0, %v554
  %v556 = vpop.f32.mrf.mxu0
  %v557 = vadd.f32 0.0, %v556
  %558 = vmatmul.bf16.gmra.mxu0 %v321
  %v559 = vpop.f32.mrf.mxu0
  %v560 = vadd.f32 0.0, %v559
  %v561 = vpop.f32.mrf.mxu0
  %v562 = vadd.f32 0.0, %v561
  %563 = vmatmul.bf16.gmra.mxu0 %v323
  %v564 = vpop.f32.mrf.mxu0
  %v565 = vadd.f32 0.0, %v564
  %v566 = vpop.f32.mrf.mxu0
  %v567 = vadd.f32 0.0, %v566
  %568 = vmatmul.bf16.gmra.mxu0 %v325
  %v569 = vpop.f32.mrf.mxu0
  %v570 = vadd.f32 0.0, %v569
  %v571 = vpop.f32.mrf.mxu0
  %v572 = vadd.f32 0.0, %v571
  %573 = vmatmul.bf16.gmra.mxu0 %v327
  %v574 = vpop.f32.mrf.mxu0
  %v575 = vadd.f32 0.0, %v574
  %v576 = vpop.f32.mrf.mxu0
  %v577 = vadd.f32 0.0, %v576
  %578 = vmatmul.bf16.gmra.mxu0 %v329
  %v579 = vpop.f32.mrf.mxu0
  %v580 = vadd.f32 0.0, %v579
  %v581 = vpop.f32.mrf.mxu0
  %v582 = vadd.f32 0.0, %v581
  %583 = vmatmul.bf16.gmra.mxu0 %v331
  %v584 = vpop.f32.mrf.mxu0
  %v585 = vadd.f32 0.0, %v584
  %v586 = vpop.f32.mrf.mxu0
  %v587 = vadd.f32 0.0, %v586
  %588 = vmatmul.bf16.gmra.mxu0 %v333
  %v589 = vpop.f32.mrf.mxu0
  %v590 = vadd.f32 0.0, %v589
  %v591 = vpop.f32.mrf.mxu0
  %v592 = vadd.f32 0.0, %v591
  %593 = vmatmul.bf16.gmra.mxu0 %v335
  %v594 = vpop.f32.mrf.mxu0
  %v595 = vadd.f32 0.0, %v594
  %v596 = vpop.f32.mrf.mxu0
  %v597 = vadd.f32 0.0, %v596
  %598 = vmatmul.bf16.gmra.mxu0 %v337
  %v599 = vpop.f32.mrf.mxu0
  %v600 = vadd.f32 0.0, %v599
  %v601 = vpop.f32.mrf.mxu0
  %v602 = vadd.f32 0.0, %v601
  %603 = vmatmul.bf16.gmra.mxu0 %v339
  %v604 = vpop.f32.mrf.mxu0
  %v605 = vadd.f32 0.0, %v604
  %v606 = vpop.f32.mrf.mxu0
  %v607 = vadd.f32 0.0, %v606
  %608 = vmatmul.bf16.gmra.mxu0 %v341
  %v609 = vpop.f32.mrf.mxu0
  %v610 = vadd.f32 0.0, %v609
  %v611 = vpop.f32.mrf.mxu0
  %v612 = vadd.f32 0.0, %v611
  %613 = vmatmul.bf16.gmra.mxu0 %v343
  %v614 = vpop.f32.mrf.mxu0
  %v615 = vadd.f32 0.0, %v614
  %v616 = vpop.f32.mrf.mxu0
  %v617 = vadd.f32 0.0, %v616
  %618 = vmatmul.bf16.gmra.mxu0 %v345
  %v619 = vpop.f32.mrf.mxu0
  %v620 = vadd.f32 0.0, %v619
  %v621 = vpop.f32.mrf.mxu0
  %v622 = vadd.f32 0.0, %v621
  %623 = vmatmul.bf16.gmra.mxu0 %v347
  %v624 = vpop.f32.mrf.mxu0
  %v625 = vadd.f32 0.0, %v624
  %v626 = vpop.f32.mrf.mxu0
  %v627 = vadd.f32 0.0, %v626
  %628 = vmatmul.bf16.gmra.mxu0 %v349
  %v629 = vpop.f32.mrf.mxu0
  %v630 = vadd.f32 0.0, %v629
  %v631 = vpop.f32.mrf.mxu0
  %v632 = vadd.f32 0.0, %v631
  %633 = vmatmul.bf16.gmra.mxu0 %v351
  %v634 = vpop.f32.mrf.mxu0
  %v635 = vadd.f32 0.0, %v634
  %v636 = vpop.f32.mrf.mxu0
  %v637 = vadd.f32 0.0, %v636
  %638 = vmatmul.bf16.gmra.mxu0 %v353
  %v639 = vpop.f32.mrf.mxu0
  %v640 = vadd.f32 0.0, %v639
  %v641 = vpop.f32.mrf.mxu0
  %v642 = vadd.f32 0.0, %v641
  %643 = vmatmul.bf16.gmra.mxu0 %v355
  %v644 = vpop.f32.mrf.mxu0
  %v645 = vadd.f32 0.0, %v644
  %v646 = vpop.f32.mrf.mxu0
  %v647 = vadd.f32 0.0, %v646
  %648 = vmatmul.bf16.gmra.mxu0 %v357
  %v649 = vpop.f32.mrf.mxu0
  %v650 = vadd.f32 0.0, %v649
  %v651 = vpop.f32.mrf.mxu0
  %v652 = vadd.f32 0.0, %v651
  %653 = vmatmul.bf16.gmra.mxu0 %v359
  %v654 = vpop.f32.mrf.mxu0
  %v655 = vadd.f32 0.0, %v654
  %v656 = vpop.f32.mrf.mxu0
  %v657 = vadd.f32 0.0, %v656
  %658 = vdwg.mxu0
  %659 = vmatpush.bf16.msra.mxu0 0
  %660 = vmatpush.bf16.msra.mxu0 0
  %661 = vmatpush.bf16.msra.mxu0 0
  %662 = vmatpush.bf16.msra.mxu0 0
  %663 = vmatpush.bf16.msra.mxu0 0
  %664 = vmatpush.bf16.msra.mxu0 0
  %665 = vmatpush.bf16.msra.mxu0 0
  %666 = vmatpush.bf16.msra.mxu0 %v104
  %667 = vmatmul.bf16.gmra.mxu0 %v395
  %v668 = vpop.f32.mrf.mxu0
  %v669 = vadd.f32 %v500, %v668
  %v670 = vpop.f32.mrf.mxu0
  %v671 = vadd.f32 %v502, %v670
  %672 = vmatmul.bf16.gmra.mxu0 %v398
  %v673 = vpop.f32.mrf.mxu0
  %v674 = vadd.f32 %v505, %v673
  %v675 = vpop.f32.mrf.mxu0
  %v676 = vadd.f32 %v507, %v675
  %677 = vmatmul.bf16.gmra.mxu0 %v401
  %v678 = vpop.f32.mrf.mxu0
  %v679 = vadd.f32 %v510, %v678
  %v680 = vpop.f32.mrf.mxu0
  %v681 = vadd.f32 %v512, %v680
  %682 = vmatmul.bf16.gmra.mxu0 %v404
  %v683 = vpop.f32.mrf.mxu0
  %v684 = vadd.f32 %v515, %v683
  %v685 = vpop.f32.mrf.mxu0
  %v686 = vadd.f32 %v517, %v685
  %687 = vmatmul.bf16.gmra.mxu0 %v407
  %v688 = vpop.f32.mrf.mxu0
  %v689 = vadd.f32 %v520, %v688
  %v690 = vpop.f32.mrf.mxu0
  %v691 = vadd.f32 %v522, %v690
  %692 = vmatmul.bf16.gmra.mxu0 %v410
  %v693 = vpop.f32.mrf.mxu0
  %v694 = vadd.f32 %v525, %v693
  %v695 = vpop.f32.mrf.mxu0
  %v696 = vadd.f32 %v527, %v695
  %697 = vmatmul.bf16.gmra.mxu0 %v413
  %v698 = vpop.f32.mrf.mxu0
  %v699 = vadd.f32 %v530, %v698
  %v700 = vpop.f32.mrf.mxu0
  %v701 = vadd.f32 %v532, %v700
  %702 = vmatmul.bf16.gmra.mxu0 %v416
  %v703 = vpop.f32.mrf.mxu0
  %v704 = vadd.f32 %v535, %v703
  %v705 = vpop.f32.mrf.mxu0
  %v706 = vadd.f32 %v537, %v705
  %707 = vmatmul.bf16.gmra.mxu0 %v419
  %v708 = vpop.f32.mrf.mxu0
  %v709 = vadd.f32 %v540, %v708
  %v710 = vpop.f32.mrf.mxu0
  %v711 = vadd.f32 %v542, %v710
  %712 = vmatmul.bf16.gmra.mxu0 %v422
  %v713 = vpop.f32.mrf.mxu0
  %v714 = vadd.f32 %v545, %v713
  %v715 = vpop.f32.mrf.mxu0
  %v716 = vadd.f32 %v547, %v715
  %717 = vmatmul.bf16.gmra.mxu0 %v425
  %v718 = vpop.f32.mrf.mxu0
  %v719 = vadd.f32 %v550, %v718
  %v720 = vpop.f32.mrf.mxu0
  %v721 = vadd.f32 %v552, %v720
  %722 = vmatmul.bf16.gmra.mxu0 %v428
  %v723 = vpop.f32.mrf.mxu0
  %v724 = vadd.f32 %v555, %v723
  %v725 = vpop.f32.mrf.mxu0
  %v726 = vadd.f32 %v557, %v725
  %727 = vmatmul.bf16.gmra.mxu0 %v431
  %v728 = vpop.f32.mrf.mxu0
  %v729 = vadd.f32 %v560, %v728
  %v730 = vpop.f32.mrf.mxu0
  %v731 = vadd.f32 %v562, %v730
  %732 = vmatmul.bf16.gmra.mxu0 %v434
  %v733 = vpop.f32.mrf.mxu0
  %v734 = vadd.f32 %v565, %v733
  %v735 = vpop.f32.mrf.mxu0
  %v736 = vadd.f32 %v567, %v735
  %737 = vmatmul.bf16.gmra.mxu0 %v437
  %v738 = vpop.f32.mrf.mxu0
  %v739 = vadd.f32 %v570, %v738
  %v740 = vpop.f32.mrf.mxu0
  %v741 = vadd.f32 %v572, %v740
  %742 = vmatmul.bf16.gmra.mxu0 %v440
  %v743 = vpop.f32.mrf.mxu0
  %v744 = vadd.f32 %v575, %v743
  %v745 = vpop.f32.mrf.mxu0
  %v746 = vadd.f32 %v577, %v745
  %747 = vmatmul.bf16.gmra.mxu0 %v443
  %v748 = vpop.f32.mrf.mxu0
  %v749 = vadd.f32 %v580, %v748
  %v750 = vpop.f32.mrf.mxu0
  %v751 = vadd.f32 %v582, %v750
  %752 = vmatmul.bf16.gmra.mxu0 %v446
  %v753 = vpop.f32.mrf.mxu0
  %v754 = vadd.f32 %v585, %v753
  %v755 = vpop.f32.mrf.mxu0
  %v756 = vadd.f32 %v587, %v755
  %757 = vmatmul.bf16.gmra.mxu0 %v449
  %v758 = vpop.f32.mrf.mxu0
  %v759 = vadd.f32 %v590, %v758
  %v760 = vpop.f32.mrf.mxu0
  %v761 = vadd.f32 %v592, %v760
  %762 = vmatmul.bf16.gmra.mxu0 %v452
  %v763 = vpop.f32.mrf.mxu0
  %v764 = vadd.f32 %v595, %v763
  %v765 = vpop.f32.mrf.mxu0
  %v766 = vadd.f32 %v597, %v765
  %767 = vmatmul.bf16.gmra.mxu0 %v455
  %v768 = vpop.f32.mrf.mxu0
  %v769 = vadd.f32 %v600, %v768
  %v770 = vpop.f32.mrf.mxu0
  %v771 = vadd.f32 %v602, %v770
  %772 = vmatmul.bf16.gmra.mxu0 %v458
  %v773 = vpop.f32.mrf.mxu0
  %v774 = vadd.f32 %v605, %v773
  %v775 = vpop.f32.mrf.mxu0
  %v776 = vadd.f32 %v607, %v775
  %777 = vmatmul.bf16.gmra.mxu0 %v461
  %v778 = vpop.f32.mrf.mxu0
  %v779 = vadd.f32 %v610, %v778
  %v780 = vpop.f32.mrf.mxu0
  %v781 = vadd.f32 %v612, %v780
  %782 = vmatmul.bf16.gmra.mxu0 %v464
  %v783 = vpop.f32.mrf.mxu0
  %v784 = vadd.f32 %v615, %v783
  %v785 = vpop.f32.mrf.mxu0
  %v786 = vadd.f32 %v617, %v785
  %787 = vmatmul.bf16.gmra.mxu0 %v467
  %v788 = vpop.f32.mrf.mxu0
  %v789 = vadd.f32 %v620, %v788
  %v790 = vpop.f32.mrf.mxu0
  %v791 = vadd.f32 %v622, %v790
  %792 = vmatmul.bf16.gmra.mxu0 %v470
  %v793 = vpop.f32.mrf.mxu0
  %v794 = vadd.f32 %v625, %v793
  %v795 = vpop.f32.mrf.mxu0
  %v796 = vadd.f32 %v627, %v795
  %797 = vmatmul.bf16.gmra.mxu0 %v473
  %v798 = vpop.f32.mrf.mxu0
  %v799 = vadd.f32 %v630, %v798
  %v800 = vpop.f32.mrf.mxu0
  %v801 = vadd.f32 %v632, %v800
  %802 = vmatmul.bf16.gmra.mxu0 %v476
  %v803 = vpop.f32.mrf.mxu0
  %v804 = vadd.f32 %v635, %v803
  %v805 = vpop.f32.mrf.mxu0
  %v806 = vadd.f32 %v637, %v805
  %807 = vmatmul.bf16.gmra.mxu0 %v479
  %v808 = vpop.f32.mrf.mxu0
  %v809 = vadd.f32 %v640, %v808
  %v810 = vpop.f32.mrf.mxu0
  %v811 = vadd.f32 %v642, %v810
  %812 = vmatmul.bf16.gmra.mxu0 %v482
  %v813 = vpop.f32.mrf.mxu0
  %v814 = vadd.f32 %v645, %v813
  %v815 = vpop.f32.mrf.mxu0
  %v816 = vadd.f32 %v647, %v815
  %817 = vmatmul.bf16.gmra.mxu0 %v485
  %v818 = vpop.f32.mrf.mxu0
  %v819 = vadd.f32 %v650, %v818
  %v820 = vpop.f32.mrf.mxu0
  %v821 = vadd.f32 %v652, %v820
  %822 = vmatmul.bf16.gmra.mxu0 %v488
  %v823 = vpop.f32.mrf.mxu0
  %v824 = vadd.f32 %v655, %v823
  %v825 = vpop.f32.mrf.mxu0
  %v826 = vadd.f32 %v657, %v825
  %827 = vdwg.mxu0
  %vm828 = vcmask 261120
  %829 = vst.msk [vmem:[%s2] sm:$0xff] %vm828, %v669
  %830 = vst.msk [vmem:[%s2 + $0x8] sm:$0xff] %vm828, %v671
  %831 = vst.msk [vmem:[%s2 + $0x10] sm:$0xff] %vm828, %v674
  %832 = vst.msk [vmem:[%s2 + $0x18] sm:$0xff] %vm828, %v676
  %833 = vst.msk [vmem:[%s2 + $0x20] sm:$0xff] %vm828, %v679
  %834 = vst.msk [vmem:[%s2 + $0x28] sm:$0xff] %vm828, %v681
  %835 = vst.msk [vmem:[%s2 + $0x30] sm:$0xff] %vm828, %v684
  %836 = vst.msk [vmem:[%s2 + $0x38] sm:$0xff] %vm828, %v686
  %837 = vst.msk [vmem:[%s2 + $0x40] sm:$0xff] %vm828, %v689
  %838 = vst.msk [vmem:[%s2 + $0x48] sm:$0xff] %vm828, %v691
  %839 = vst.msk [vmem:[%s2 + $0x50] sm:$0xff] %vm828, %v694
  %840 = vst.msk [vmem:[%s2 + $0x58] sm:$0xff] %vm828, %v696
  %841 = vst.msk [vmem:[%s2 + $0x60] sm:$0xff] %vm828, %v699
  %842 = vst.msk [vmem:[%s2 + $0x68] sm:$0xff] %vm828, %v701
  %843 = vst.msk [vmem:[%s2 + $0x70] sm:$0xff] %vm828, %v704
  %844 = vst.msk [vmem:[%s2 + $0x78] sm:$0xff] %vm828, %v706
  %845 = vst.msk [vmem:[%s2 + $0x80] sm:$0xff] %vm828, %v709
  %846 = vst.msk [vmem:[%s2 + $0x88] sm:$0xff] %vm828, %v711
  %847 = vst.msk [vmem:[%s2 + $0x90] sm:$0xff] %vm828, %v714
  %848 = vst.msk [vmem:[%s2 + $0x98] sm:$0xff] %vm828, %v716
  %849 = vst.msk [vmem:[%s2 + $0xa0] sm:$0xff] %vm828, %v719
  %850 = vst.msk [vmem:[%s2 + $0xa8] sm:$0xff] %vm828, %v721
  %851 = vst.msk [vmem:[%s2 + $0xb0] sm:$0xff] %vm828, %v724
  %852 = vst.msk [vmem:[%s2 + $0xb8] sm:$0xff] %vm828, %v726
  %853 = vst.msk [vmem:[%s2 + $0xc0] sm:$0xff] %vm828, %v729
  %854 = vst.msk [vmem:[%s2 + $0xc8] sm:$0xff] %vm828, %v731
  %855 = vst.msk [vmem:[%s2 + $0xd0] sm:$0xff] %vm828, %v734
  %856 = vst.msk [vmem:[%s2 + $0xd8] sm:$0xff] %vm828, %v736
  %857 = vst.msk [vmem:[%s2 + $0xe0] sm:$0xff] %vm828, %v739
  %858 = vst.msk [vmem:[%s2 + $0xe8] sm:$0xff] %vm828, %v741
  %859 = vst.msk [vmem:[%s2 + $0xf0] sm:$0xff] %vm828, %v744
  %860 = vst.msk [vmem:[%s2 + $0xf8] sm:$0xff] %vm828, %v746
  %861 = vst.msk [vmem:[%s2 + $0x100] sm:$0xff] %vm828, %v749
  %862 = vst.msk [vmem:[%s2 + $0x108] sm:$0xff] %vm828, %v751
  %863 = vst.msk [vmem:[%s2 + $0x110] sm:$0xff] %vm828, %v754
  %864 = vst.msk [vmem:[%s2 + $0x118] sm:$0xff] %vm828, %v756
  %865 = vst.msk [vmem:[%s2 + $0x120] sm:$0xff] %vm828, %v759
  %866 = vst.msk [vmem:[%s2 + $0x128] sm:$0xff] %vm828, %v761
  %867 = vst.msk [vmem:[%s2 + $0x130] sm:$0xff] %vm828, %v764
  %868 = vst.msk [vmem:[%s2 + $0x138] sm:$0xff] %vm828, %v766
  %869 = vst.msk [vmem:[%s2 + $0x140] sm:$0xff] %vm828, %v769
  %870 = vst.msk [vmem:[%s2 + $0x148] sm:$0xff] %vm828, %v771
  %871 = vst.msk [vmem:[%s2 + $0x150] sm:$0xff] %vm828, %v774
  %872 = vst.msk [vmem:[%s2 + $0x158] sm:$0xff] %vm828, %v776
  %873 = vst.msk [vmem:[%s2 + $0x160] sm:$0xff] %vm828, %v779
  %874 = vst.msk [vmem:[%s2 + $0x168] sm:$0xff] %vm828, %v781
  %875 = vst.msk [vmem:[%s2 + $0x170] sm:$0xff] %vm828, %v784
  %876 = vst.msk [vmem:[%s2 + $0x178] sm:$0xff] %vm828, %v786
  %877 = vst.msk [vmem:[%s2 + $0x180] sm:$0xff] %vm828, %v789
  %878 = vst.msk [vmem:[%s2 + $0x188] sm:$0xff] %vm828, %v791
  %879 = vst.msk [vmem:[%s2 + $0x190] sm:$0xff] %vm828, %v794
  %880 = vst.msk [vmem:[%s2 + $0x198] sm:$0xff] %vm828, %v796
  %881 = vst.msk [vmem:[%s2 + $0x1a0] sm:$0xff] %vm828, %v799
  %882 = vst.msk [vmem:[%s2 + $0x1a8] sm:$0xff] %vm828, %v801
  %883 = vst.msk [vmem:[%s2 + $0x1b0] sm:$0xff] %vm828, %v804
  %884 = vst.msk [vmem:[%s2 + $0x1b8] sm:$0xff] %vm828, %v806
  %885 = vst.msk [vmem:[%s2 + $0x1c0] sm:$0xff] %vm828, %v809
  %886 = vst.msk [vmem:[%s2 + $0x1c8] sm:$0xff] %vm828, %v811
  %887 = vst.msk [vmem:[%s2 + $0x1d0] sm:$0xff] %vm828, %v814
  %888 = vst.msk [vmem:[%s2 + $0x1d8] sm:$0xff] %vm828, %v816
  %889 = vst.msk [vmem:[%s2 + $0x1e0] sm:$0xff] %vm828, %v819
  %890 = vst.msk [vmem:[%s2 + $0x1e8] sm:$0xff] %vm828, %v821
  %891 = vst.msk [vmem:[%s2 + $0x1f0] sm:$0xff] %vm828, %v824
  %892 = vst.msk [vmem:[%s2 + $0x1f8] sm:$0xff] %vm828, %v826
  %v893 = vsel %vm828, %v669, 0.0
  %v894 = vsel %vm828, %v671, 0.0
  %v895 = vadd.f32 %v893, %v894
  %v896 = vsel %vm828, %v674, 0.0
  %v897 = vadd.f32 %v895, %v896
  %v898 = vsel %vm828, %v676, 0.0
  %v899 = vadd.f32 %v897, %v898
  %v900 = vsel %vm828, %v679, 0.0
  %v901 = vadd.f32 %v899, %v900
  %v902 = vsel %vm828, %v681, 0.0
  %v903 = vadd.f32 %v901, %v902
  %v904 = vsel %vm828, %v684, 0.0
  %v905 = vadd.f32 %v903, %v904
  %v906 = vsel %vm828, %v686, 0.0
  %v907 = vadd.f32 %v905, %v906
  %v908 = vsel %vm828, %v689, 0.0
  %v909 = vadd.f32 %v907, %v908
  %v910 = vsel %vm828, %v691, 0.0
  %v911 = vadd.f32 %v909, %v910
  %v912 = vsel %vm828, %v694, 0.0
  %v913 = vadd.f32 %v911, %v912
  %v914 = vsel %vm828, %v696, 0.0
  %v915 = vadd.f32 %v913, %v914
  %v916 = vsel %vm828, %v699, 0.0
  %v917 = vadd.f32 %v915, %v916
  %v918 = vsel %vm828, %v701, 0.0
  %v919 = vadd.f32 %v917, %v918
  %v920 = vsel %vm828, %v704, 0.0
  %v921 = vadd.f32 %v919, %v920
  %v922 = vsel %vm828, %v706, 0.0
  %v923 = vadd.f32 %v921, %v922
  %v924 = vsel %vm828, %v709, 0.0
  %v925 = vadd.f32 %v923, %v924
  %v926 = vsel %vm828, %v711, 0.0
  %v927 = vadd.f32 %v925, %v926
  %v928 = vsel %vm828, %v714, 0.0
  %v929 = vadd.f32 %v927, %v928
  %v930 = vsel %vm828, %v716, 0.0
  %v931 = vadd.f32 %v929, %v930
  %v932 = vsel %vm828, %v719, 0.0
  %v933 = vadd.f32 %v931, %v932
  %v934 = vsel %vm828, %v721, 0.0
  %v935 = vadd.f32 %v933, %v934
  %v936 = vsel %vm828, %v724, 0.0
  %v937 = vadd.f32 %v935, %v936
  %v938 = vsel %vm828, %v726, 0.0
  %v939 = vadd.f32 %v937, %v938
  %v940 = vsel %vm828, %v729, 0.0
  %v941 = vadd.f32 %v939, %v940
  %v942 = vsel %vm828, %v731, 0.0
  %v943 = vadd.f32 %v941, %v942
  %v944 = vsel %vm828, %v734, 0.0
  %v945 = vadd.f32 %v943, %v944
  %v946 = vsel %vm828, %v736, 0.0
  %v947 = vadd.f32 %v945, %v946
  %v948 = vsel %vm828, %v739, 0.0
  %v949 = vadd.f32 %v947, %v948
  %v950 = vsel %vm828, %v741, 0.0
  %v951 = vadd.f32 %v949, %v950
  %v952 = vsel %vm828, %v744, 0.0
  %v953 = vadd.f32 %v951, %v952
  %v954 = vsel %vm828, %v746, 0.0
  %v955 = vadd.f32 %v953, %v954
  %v956 = vsel %vm828, %v749, 0.0
  %v957 = vadd.f32 %v955, %v956
  %v958 = vsel %vm828, %v751, 0.0
  %v959 = vadd.f32 %v957, %v958
  %v960 = vsel %vm828, %v754, 0.0
  %v961 = vadd.f32 %v959, %v960
  %v962 = vsel %vm828, %v756, 0.0
  %v963 = vadd.f32 %v961, %v962
  %v964 = vsel %vm828, %v759, 0.0
  %v965 = vadd.f32 %v963, %v964
  %v966 = vsel %vm828, %v761, 0.0
  %v967 = vadd.f32 %v965, %v966
  %v968 = vsel %vm828, %v764, 0.0
  %v969 = vadd.f32 %v967, %v968
  %v970 = vsel %vm828, %v766, 0.0
  %v971 = vadd.f32 %v969, %v970
  %v972 = vsel %vm828, %v769, 0.0
  %v973 = vadd.f32 %v971, %v972
  %v974 = vsel %vm828, %v771, 0.0
  %v975 = vadd.f32 %v973, %v974
  %v976 = vsel %vm828, %v774, 0.0
  %v977 = vadd.f32 %v975, %v976
  %v978 = vsel %vm828, %v776, 0.0
  %v979 = vadd.f32 %v977, %v978
  %v980 = vsel %vm828, %v779, 0.0
  %v981 = vadd.f32 %v979, %v980
  %v982 = vsel %vm828, %v781, 0.0
  %v983 = vadd.f32 %v981, %v982
  %v984 = vsel %vm828, %v784, 0.0
  %v985 = vadd.f32 %v983, %v984
  %v986 = vsel %vm828, %v786, 0.0
  %v987 = vadd.f32 %v985, %v986
  %v988 = vsel %vm828, %v789, 0.0
  %v989 = vadd.f32 %v987, %v988
  %v990 = vsel %vm828, %v791, 0.0
  %v991 = vadd.f32 %v989, %v990
  %v992 = vsel %vm828, %v794, 0.0
  %v993 = vadd.f32 %v991, %v992
  %v994 = vsel %vm828, %v796, 0.0
  %v995 = vadd.f32 %v993, %v994
  %v996 = vsel %vm828, %v799, 0.0
  %v997 = vadd.f32 %v995, %v996
  %v998 = vsel %vm828, %v801, 0.0
  %v999 = vadd.f32 %v997, %v998
  %v1000 = vsel %vm828, %v804, 0.0
  %v1001 = vadd.f32 %v999, %v1000
  %v1002 = vsel %vm828, %v806, 0.0
  %v1003 = vadd.f32 %v1001, %v1002
  %v1004 = vsel %vm828, %v809, 0.0
  %v1005 = vadd.f32 %v1003, %v1004
  %v1006 = vsel %vm828, %v811, 0.0
  %v1007 = vadd.f32 %v1005, %v1006
  %v1008 = vsel %vm828, %v814, 0.0
  %v1009 = vadd.f32 %v1007, %v1008
  %v1010 = vsel %vm828, %v816, 0.0
  %v1011 = vadd.f32 %v1009, %v1010
  %v1012 = vsel %vm828, %v819, 0.0
  %v1013 = vadd.f32 %v1011, %v1012
  %v1014 = vsel %vm828, %v821, 0.0
  %v1015 = vadd.f32 %v1013, %v1014
  %v1016 = vsel %vm828, %v824, 0.0
  %v1017 = vadd.f32 %v1015, %v1016
  %v1018 = vsel %vm828, %v826, 0.0
  %v1019 = vadd.f32 %v1017, %v1018
  %v1020 = vrot.slane %v1019, 4
  %v1021 = vadd.f32 %v1019, %v1020
  %v1022 = vrot.slane %v1021, 2
  %v1023 = vadd.f32 %v1021, %v1022
  %v1024 = vrot.slane %v1023, 1
  %v1025 = vadd.f32 %v1023, %v1024
  %vm1026 = vcmask 253952
  %1027 = vst.msk [vmem:[%s3] sm:$0x1] %vm1026, %v1025
  %v1028 = vmul.f32 %v669, %v669
  %v1029 = vmul.f32 %v671, %v671
  %v1030 = vmul.f32 %v674, %v674
  %v1031 = vmul.f32 %v676, %v676
  %v1032 = vmul.f32 %v679, %v679
  %v1033 = vmul.f32 %v681, %v681
  %v1034 = vmul.f32 %v684, %v684
  %v1035 = vmul.f32 %v686, %v686
  %v1036 = vmul.f32 %v689, %v689
  %v1037 = vmul.f32 %v691, %v691
  %v1038 = vmul.f32 %v694, %v694
  %v1039 = vmul.f32 %v696, %v696
  %v1040 = vmul.f32 %v699, %v699
  %v1041 = vmul.f32 %v701, %v701
  %v1042 = vmul.f32 %v704, %v704
  %v1043 = vmul.f32 %v706, %v706
  %v1044 = vmul.f32 %v709, %v709
  %v1045 = vmul.f32 %v711, %v711
  %v1046 = vmul.f32 %v714, %v714
  %v1047 = vmul.f32 %v716, %v716
  %v1048 = vmul.f32 %v719, %v719
  %v1049 = vmul.f32 %v721, %v721
  %v1050 = vmul.f32 %v724, %v724
  %v1051 = vmul.f32 %v726, %v726
  %v1052 = vmul.f32 %v729, %v729
  %v1053 = vmul.f32 %v731, %v731
  %v1054 = vmul.f32 %v734, %v734
  %v1055 = vmul.f32 %v736, %v736
  %v1056 = vmul.f32 %v739, %v739
  %v1057 = vmul.f32 %v741, %v741
  %v1058 = vmul.f32 %v744, %v744
  %v1059 = vmul.f32 %v746, %v746
  %v1060 = vmul.f32 %v749, %v749
  %v1061 = vmul.f32 %v751, %v751
  %v1062 = vmul.f32 %v754, %v754
  %v1063 = vmul.f32 %v756, %v756
  %v1064 = vmul.f32 %v759, %v759
  %v1065 = vmul.f32 %v761, %v761
  %v1066 = vmul.f32 %v764, %v764
  %v1067 = vmul.f32 %v766, %v766
  %v1068 = vmul.f32 %v769, %v769
  %v1069 = vmul.f32 %v771, %v771
  %v1070 = vmul.f32 %v774, %v774
  %v1071 = vmul.f32 %v776, %v776
  %v1072 = vmul.f32 %v779, %v779
  %v1073 = vmul.f32 %v781, %v781
  %v1074 = vmul.f32 %v784, %v784
  %v1075 = vmul.f32 %v786, %v786
  %v1076 = vmul.f32 %v789, %v789
  %v1077 = vmul.f32 %v791, %v791
  %v1078 = vmul.f32 %v794, %v794
  %v1079 = vmul.f32 %v796, %v796
  %v1080 = vmul.f32 %v799, %v799
  %v1081 = vmul.f32 %v801, %v801
  %v1082 = vmul.f32 %v804, %v804
  %v1083 = vmul.f32 %v806, %v806
  %v1084 = vmul.f32 %v809, %v809
  %v1085 = vmul.f32 %v811, %v811
  %v1086 = vmul.f32 %v814, %v814
  %v1087 = vmul.f32 %v816, %v816
  %v1088 = vmul.f32 %v819, %v819
  %v1089 = vmul.f32 %v821, %v821
  %v1090 = vmul.f32 %v824, %v824
  %v1091 = vmul.f32 %v826, %v826
  %v1092 = vsel %vm828, %v1028, 0.0
  %v1093 = vsel %vm828, %v1029, 0.0
  %v1094 = vadd.f32 %v1092, %v1093
  %v1095 = vsel %vm828, %v1030, 0.0
  %v1096 = vadd.f32 %v1094, %v1095
  %v1097 = vsel %vm828, %v1031, 0.0
  %v1098 = vadd.f32 %v1096, %v1097
  %v1099 = vsel %vm828, %v1032, 0.0
  %v1100 = vadd.f32 %v1098, %v1099
  %v1101 = vsel %vm828, %v1033, 0.0
  %v1102 = vadd.f32 %v1100, %v1101
  %v1103 = vsel %vm828, %v1034, 0.0
  %v1104 = vadd.f32 %v1102, %v1103
  %v1105 = vsel %vm828, %v1035, 0.0
  %v1106 = vadd.f32 %v1104, %v1105
  %v1107 = vsel %vm828, %v1036, 0.0
  %v1108 = vadd.f32 %v1106, %v1107
  %v1109 = vsel %vm828, %v1037, 0.0
  %v1110 = vadd.f32 %v1108, %v1109
  %v1111 = vsel %vm828, %v1038, 0.0
  %v1112 = vadd.f32 %v1110, %v1111
  %v1113 = vsel %vm828, %v1039, 0.0
  %v1114 = vadd.f32 %v1112, %v1113
  %v1115 = vsel %vm828, %v1040, 0.0
  %v1116 = vadd.f32 %v1114, %v1115
  %v1117 = vsel %vm828, %v1041, 0.0
  %v1118 = vadd.f32 %v1116, %v1117
  %v1119 = vsel %vm828, %v1042, 0.0
  %v1120 = vadd.f32 %v1118, %v1119
  %v1121 = vsel %vm828, %v1043, 0.0
  %v1122 = vadd.f32 %v1120, %v1121
  %v1123 = vsel %vm828, %v1044, 0.0
  %v1124 = vadd.f32 %v1122, %v1123
  %v1125 = vsel %vm828, %v1045, 0.0
  %v1126 = vadd.f32 %v1124, %v1125
  %v1127 = vsel %vm828, %v1046, 0.0
  %v1128 = vadd.f32 %v1126, %v1127
  %v1129 = vsel %vm828, %v1047, 0.0
  %v1130 = vadd.f32 %v1128, %v1129
  %v1131 = vsel %vm828, %v1048, 0.0
  %v1132 = vadd.f32 %v1130, %v1131
  %v1133 = vsel %vm828, %v1049, 0.0
  %v1134 = vadd.f32 %v1132, %v1133
  %v1135 = vsel %vm828, %v1050, 0.0
  %v1136 = vadd.f32 %v1134, %v1135
  %v1137 = vsel %vm828, %v1051, 0.0
  %v1138 = vadd.f32 %v1136, %v1137
  %v1139 = vsel %vm828, %v1052, 0.0
  %v1140 = vadd.f32 %v1138, %v1139
  %v1141 = vsel %vm828, %v1053, 0.0
  %v1142 = vadd.f32 %v1140, %v1141
  %v1143 = vsel %vm828, %v1054, 0.0
  %v1144 = vadd.f32 %v1142, %v1143
  %v1145 = vsel %vm828, %v1055, 0.0
  %v1146 = vadd.f32 %v1144, %v1145
  %v1147 = vsel %vm828, %v1056, 0.0
  %v1148 = vadd.f32 %v1146, %v1147
  %v1149 = vsel %vm828, %v1057, 0.0
  %v1150 = vadd.f32 %v1148, %v1149
  %v1151 = vsel %vm828, %v1058, 0.0
  %v1152 = vadd.f32 %v1150, %v1151
  %v1153 = vsel %vm828, %v1059, 0.0
  %v1154 = vadd.f32 %v1152, %v1153
  %v1155 = vsel %vm828, %v1060, 0.0
  %v1156 = vadd.f32 %v1154, %v1155
  %v1157 = vsel %vm828, %v1061, 0.0
  %v1158 = vadd.f32 %v1156, %v1157
  %v1159 = vsel %vm828, %v1062, 0.0
  %v1160 = vadd.f32 %v1158, %v1159
  %v1161 = vsel %vm828, %v1063, 0.0
  %v1162 = vadd.f32 %v1160, %v1161
  %v1163 = vsel %vm828, %v1064, 0.0
  %v1164 = vadd.f32 %v1162, %v1163
  %v1165 = vsel %vm828, %v1065, 0.0
  %v1166 = vadd.f32 %v1164, %v1165
  %v1167 = vsel %vm828, %v1066, 0.0
  %v1168 = vadd.f32 %v1166, %v1167
  %v1169 = vsel %vm828, %v1067, 0.0
  %v1170 = vadd.f32 %v1168, %v1169
  %v1171 = vsel %vm828, %v1068, 0.0
  %v1172 = vadd.f32 %v1170, %v1171
  %v1173 = vsel %vm828, %v1069, 0.0
  %v1174 = vadd.f32 %v1172, %v1173
  %v1175 = vsel %vm828, %v1070, 0.0
  %v1176 = vadd.f32 %v1174, %v1175
  %v1177 = vsel %vm828, %v1071, 0.0
  %v1178 = vadd.f32 %v1176, %v1177
  %v1179 = vsel %vm828, %v1072, 0.0
  %v1180 = vadd.f32 %v1178, %v1179
  %v1181 = vsel %vm828, %v1073, 0.0
  %v1182 = vadd.f32 %v1180, %v1181
  %v1183 = vsel %vm828, %v1074, 0.0
  %v1184 = vadd.f32 %v1182, %v1183
  %v1185 = vsel %vm828, %v1075, 0.0
  %v1186 = vadd.f32 %v1184, %v1185
  %v1187 = vsel %vm828, %v1076, 0.0
  %v1188 = vadd.f32 %v1186, %v1187
  %v1189 = vsel %vm828, %v1077, 0.0
  %v1190 = vadd.f32 %v1188, %v1189
  %v1191 = vsel %vm828, %v1078, 0.0
  %v1192 = vadd.f32 %v1190, %v1191
  %v1193 = vsel %vm828, %v1079, 0.0
  %v1194 = vadd.f32 %v1192, %v1193
  %v1195 = vsel %vm828, %v1080, 0.0
  %v1196 = vadd.f32 %v1194, %v1195
  %v1197 = vsel %vm828, %v1081, 0.0
  %v1198 = vadd.f32 %v1196, %v1197
  %v1199 = vsel %vm828, %v1082, 0.0
  %v1200 = vadd.f32 %v1198, %v1199
  %v1201 = vsel %vm828, %v1083, 0.0
  %v1202 = vadd.f32 %v1200, %v1201
  %v1203 = vsel %vm828, %v1084, 0.0
  %v1204 = vadd.f32 %v1202, %v1203
  %v1205 = vsel %vm828, %v1085, 0.0
  %v1206 = vadd.f32 %v1204, %v1205
  %v1207 = vsel %vm828, %v1086, 0.0
  %v1208 = vadd.f32 %v1206, %v1207
  %v1209 = vsel %vm828, %v1087, 0.0
  %v1210 = vadd.f32 %v1208, %v1209
  %v1211 = vsel %vm828, %v1088, 0.0
  %v1212 = vadd.f32 %v1210, %v1211
  %v1213 = vsel %vm828, %v1089, 0.0
  %v1214 = vadd.f32 %v1212, %v1213
  %v1215 = vsel %vm828, %v1090, 0.0
  %v1216 = vadd.f32 %v1214, %v1215
  %v1217 = vsel %vm828, %v1091, 0.0
  %v1218 = vadd.f32 %v1216, %v1217
  %v1219 = vrot.slane %v1218, 4
  %v1220 = vadd.f32 %v1218, %v1219
  %v1221 = vrot.slane %v1220, 2
  %v1222 = vadd.f32 %v1220, %v1221
  %v1223 = vrot.slane %v1222, 1
  %v1224 = vadd.f32 %v1222, %v1223
  %1225 = vst.msk [vmem:[%s3 + $0x1] sm:$0x1] %vm1026, %v1224
  // Predicated region
  $region10: #{resnet_forward.53} parent=0 // pred_check
    _
  $region11: #{resnet_forward.53} parent=0 // pred_check_branch
    %1227 = sbr.rel (0) target = $region13
  $region12: #{resnet_forward.53} parent=0 // pred_region
    _
  $region13: #{resnet_forward.53} parent=0 // pred_fallthru
    _
  // Predicated region
  $region14: #{resnet_forward.53} parent=0 // pred_check
    _
  $region15: #{resnet_forward.53} parent=0 // pred_check_branch
    %1229 = sbr.rel (0) target = $region17
  $region16: #{resnet_forward.53} parent=0 // pred_region
    _
  $region17: #{resnet_forward.53} parent=0 // pred_fallthru
    _
  // Predicated region
  $region18: #{resnet_forward.53} parent=0 // pred_check
    _
  $region19: #{resnet_forward.53} parent=0 // pred_check_branch
    %1231 = sbr.rel (0) target = $region21
  $region20: #{resnet_forward.53} parent=0 // pred_region
    _
  $region21: #{resnet_forward.53} parent=0 // pred_fallthru
    _
  // Predicated region
  $region22: #{resnet_forward.53} parent=0 // pred_check
    _
  $region23: #{resnet_forward.53} parent=0 // pred_check_branch
    %1233 = sbr.rel (0) target = $region25
  $region24: #{resnet_forward.53} parent=0 // pred_region
    _
  $region25: #{resnet_forward.53} parent=0 // pred_fallthru
    _

// kernel: resnet_forward.54
$region0: #{resnet_forward.54}
  #allocation0 [shape = 'u32[]', space=smem, size = 0x4, offset = 0x4, fixed_abs, tag = 'smem constant byte address 0x4 - core index']
  #allocation1 [shape = 'u32[72,128]{1,0:T(1,128)}', space=vmem, size = 0x9000, scoped, tag = 'internal scratch']
  %s0 = inlined_call_operand.vmem [shape: f32[512,32], index: 0, kind: input, shape index: {}]
  %s1 = inlined_call_operand.vmem [shape: f32[1,32], index: 1, kind: input, shape index: {}]
  %s2 = inlined_call_operand.vmem [shape: f32[1,32], index: 2, kind: input, shape index: {}]
  %s3 = inlined_call_operand.vmem [shape: bf16[512,32], index: 3, kind: output, shape index: {}]
  %s4 = sld [smem:[#allocation0]]
  $region22: #{resnet_forward.54} parent=0
    _
  %s6 = ssub.s32 1, %s4
  %s7 = scalar_select 0, %s6, %s4
  // Predicated region
  $region2: #{resnet_forward.54} parent=0 // pred_check
    _
  $region3: #{resnet_forward.54} parent=0 // pred_check_branch
    %9 = sbr.rel (0) target = $region5
  $region4: #{resnet_forward.54} parent=0 // pred_region
    _
  $region5: #{resnet_forward.54} parent=0 // pred_fallthru
    _
  // Predicated region
  $region6: #{resnet_forward.54} parent=0 // pred_check
    _
  $region7: #{resnet_forward.54} parent=0 // pred_check_branch
    %11 = sbr.rel (0) target = $region9
  $region8: #{resnet_forward.54} parent=0 // pred_region
    _
  $region9: #{resnet_forward.54} parent=0 // pred_fallthru
    _
  // Predicated region
  $region10: #{resnet_forward.54} parent=0 // pred_check
    _
  $region11: #{resnet_forward.54} parent=0 // pred_check_branch
    %13 = sbr.rel (0) target = $region13
  $region12: #{resnet_forward.54} parent=0 // pred_region
    _
  $region13: #{resnet_forward.54} parent=0 // pred_fallthru
    _
  %v14 = vld [vmem:[%s0] sm:$0xff]
  %v15 = vld [vmem:[%s0 + $0x8] sm:$0xff]
  %v16 = vld [vmem:[%s0 + $0x10] sm:$0xff]
  %v17 = vld [vmem:[%s0 + $0x18] sm:$0xff]
  %v18 = vld [vmem:[%s0 + $0x20] sm:$0xff]
  %v19 = vld [vmem:[%s0 + $0x28] sm:$0xff]
  %v20 = vld [vmem:[%s0 + $0x30] sm:$0xff]
  %v21 = vld [vmem:[%s0 + $0x38] sm:$0xff]
  %v22 = vld [vmem:[%s0 + $0x40] sm:$0xff]
  %v23 = vld [vmem:[%s0 + $0x48] sm:$0xff]
  %v24 = vld [vmem:[%s0 + $0x50] sm:$0xff]
  %v25 = vld [vmem:[%s0 + $0x58] sm:$0xff]
  %v26 = vld [vmem:[%s0 + $0x60] sm:$0xff]
  %v27 = vld [vmem:[%s0 + $0x68] sm:$0xff]
  %v28 = vld [vmem:[%s0 + $0x70] sm:$0xff]
  %v29 = vld [vmem:[%s0 + $0x78] sm:$0xff]
  %v30 = vld [vmem:[%s0 + $0x80] sm:$0xff]
  %v31 = vld [vmem:[%s0 + $0x88] sm:$0xff]
  %v32 = vld [vmem:[%s0 + $0x90] sm:$0xff]
  %v33 = vld [vmem:[%s0 + $0x98] sm:$0xff]
  %v34 = vld [vmem:[%s0 + $0xa0] sm:$0xff]
  %v35 = vld [vmem:[%s0 + $0xa8] sm:$0xff]
  %v36 = vld [vmem:[%s0 + $0xb0] sm:$0xff]
  %v37 = vld [vmem:[%s0 + $0xb8] sm:$0xff]
  %v38 = vld [vmem:[%s0 + $0xc0] sm:$0xff]
  %v39 = vld [vmem:[%s0 + $0xc8] sm:$0xff]
  %v40 = vld [vmem:[%s0 + $0xd0] sm:$0xff]
  %v41 = vld [vmem:[%s0 + $0xd8] sm:$0xff]
  %v42 = vld [vmem:[%s0 + $0xe0] sm:$0xff]
  %v43 = vld [vmem:[%s0 + $0xe8] sm:$0xff]
  %v44 = vld [vmem:[%s0 + $0xf0] sm:$0xff]
  %v45 = vld [vmem:[%s0 + $0xf8] sm:$0xff]
  %v46 = vld [vmem:[%s0 + $0x100] sm:$0xff]
  %v47 = vld [vmem:[%s0 + $0x108] sm:$0xff]
  %v48 = vld [vmem:[%s0 + $0x110] sm:$0xff]
  %v49 = vld [vmem:[%s0 + $0x118] sm:$0xff]
  %v50 = vld [vmem:[%s0 + $0x120] sm:$0xff]
  %v51 = vld [vmem:[%s0 + $0x128] sm:$0xff]
  %v52 = vld [vmem:[%s0 + $0x130] sm:$0xff]
  %v53 = vld [vmem:[%s0 + $0x138] sm:$0xff]
  %v54 = vld [vmem:[%s0 + $0x140] sm:$0xff]
  %v55 = vld [vmem:[%s0 + $0x148] sm:$0xff]
  %v56 = vld [vmem:[%s0 + $0x150] sm:$0xff]
  %v57 = vld [vmem:[%s0 + $0x158] sm:$0xff]
  %v58 = vld [vmem:[%s0 + $0x160] sm:$0xff]
  %v59 = vld [vmem:[%s0 + $0x168] sm:$0xff]
  %v60 = vld [vmem:[%s0 + $0x170] sm:$0xff]
  %v61 = vld [vmem:[%s0 + $0x178] sm:$0xff]
  %v62 = vld [vmem:[%s0 + $0x180] sm:$0xff]
  %v63 = vld [vmem:[%s0 + $0x188] sm:$0xff]
  %v64 = vld [vmem:[%s0 + $0x190] sm:$0xff]
  %v65 = vld [vmem:[%s0 + $0x198] sm:$0xff]
  %v66 = vld [vmem:[%s0 + $0x1a0] sm:$0xff]
  %v67 = vld [vmem:[%s0 + $0x1a8] sm:$0xff]
  %v68 = vld [vmem:[%s0 + $0x1b0] sm:$0xff]
  %v69 = vld [vmem:[%s0 + $0x1b8] sm:$0xff]
  %v70 = vld [vmem:[%s0 + $0x1c0] sm:$0xff]
  %v71 = vld [vmem:[%s0 + $0x1c8] sm:$0xff]
  %v72 = vld [vmem:[%s0 + $0x1d0] sm:$0xff]
  %v73 = vld [vmem:[%s0 + $0x1d8] sm:$0xff]
  %v74 = vld [vmem:[%s0 + $0x1e0] sm:$0xff]
  %v75 = vld [vmem:[%s0 + $0x1e8] sm:$0xff]
  %v76 = vld [vmem:[%s0 + $0x1f0] sm:$0xff]
  %v77 = vld [vmem:[%s0 + $0x1f8] sm:$0xff]
  %v78 = vld [vmem:[%s1] sm:$0x1]
  %v80 = vperm.slane %v78, 0
  %v82 = vmul.f32 %v14, %v80
  %v83 = vmul.f32 %v15, %v80
  %v84 = vmul.f32 %v16, %v80
  %v85 = vmul.f32 %v17, %v80
  %v86 = vmul.f32 %v18, %v80
  %v87 = vmul.f32 %v19, %v80
  %v88 = vmul.f32 %v20, %v80
  %v89 = vmul.f32 %v21, %v80
  %v90 = vmul.f32 %v22, %v80
  %v91 = vmul.f32 %v23, %v80
  %v92 = vmul.f32 %v24, %v80
  %v93 = vmul.f32 %v25, %v80
  %v94 = vmul.f32 %v26, %v80
  %v95 = vmul.f32 %v27, %v80
  %v96 = vmul.f32 %v28, %v80
  %v97 = vmul.f32 %v29, %v80
  %v98 = vmul.f32 %v30, %v80
  %v99 = vmul.f32 %v31, %v80
  %v100 = vmul.f32 %v32, %v80
  %v101 = vmul.f32 %v33, %v80
  %v102 = vmul.f32 %v34, %v80
  %v103 = vmul.f32 %v35, %v80
  %v104 = vmul.f32 %v36, %v80
  %v105 = vmul.f32 %v37, %v80
  %v106 = vmul.f32 %v38, %v80
  %v107 = vmul.f32 %v39, %v80
  %v108 = vmul.f32 %v40, %v80
  %v109 = vmul.f32 %v41, %v80
  %v110 = vmul.f32 %v42, %v80
  %v111 = vmul.f32 %v43, %v80
  %v112 = vmul.f32 %v44, %v80
  %v113 = vmul.f32 %v45, %v80
  %v114 = vmul.f32 %v46, %v80
  %v115 = vmul.f32 %v47, %v80
  %v116 = vmul.f32 %v48, %v80
  %v117 = vmul.f32 %v49, %v80
  %v118 = vmul.f32 %v50, %v80
  %v119 = vmul.f32 %v51, %v80
  %v120 = vmul.f32 %v52, %v80
  %v121 = vmul.f32 %v53, %v80
  %v122 = vmul.f32 %v54, %v80
  %v123 = vmul.f32 %v55, %v80
  %v124 = vmul.f32 %v56, %v80
  %v125 = vmul.f32 %v57, %v80
  %v126 = vmul.f32 %v58, %v80
  %v127 = vmul.f32 %v59, %v80
  %v128 = vmul.f32 %v60, %v80
  %v129 = vmul.f32 %v61, %v80
  %v130 = vmul.f32 %v62, %v80
  %v131 = vmul.f32 %v63, %v80
  %v132 = vmul.f32 %v64, %v80
  %v133 = vmul.f32 %v65, %v80
  %v134 = vmul.f32 %v66, %v80
  %v135 = vmul.f32 %v67, %v80
  %v136 = vmul.f32 %v68, %v80
  %v137 = vmul.f32 %v69, %v80
  %v138 = vmul.f32 %v70, %v80
  %v139 = vmul.f32 %v71, %v80
  %v140 = vmul.f32 %v72, %v80
  %v141 = vmul.f32 %v73, %v80
  %v142 = vmul.f32 %v74, %v80
  %v143 = vmul.f32 %v75, %v80
  %v144 = vmul.f32 %v76, %v80
  %v145 = vmul.f32 %v77, %v80
  %v146 = vld [vmem:[%s2] sm:$0x1]
  %v148 = vperm.slane %v146, 0
  %v150 = vadd.f32 %v82, %v148
  %v151 = vadd.f32 %v83, %v148
  %v152 = vadd.f32 %v84, %v148
  %v153 = vadd.f32 %v85, %v148
  %v154 = vadd.f32 %v86, %v148
  %v155 = vadd.f32 %v87, %v148
  %v156 = vadd.f32 %v88, %v148
  %v157 = vadd.f32 %v89, %v148
  %v158 = vadd.f32 %v90, %v148
  %v159 = vadd.f32 %v91, %v148
  %v160 = vadd.f32 %v92, %v148
  %v161 = vadd.f32 %v93, %v148
  %v162 = vadd.f32 %v94, %v148
  %v163 = vadd.f32 %v95, %v148
  %v164 = vadd.f32 %v96, %v148
  %v165 = vadd.f32 %v97, %v148
  %v166 = vadd.f32 %v98, %v148
  %v167 = vadd.f32 %v99, %v148
  %v168 = vadd.f32 %v100, %v148
  %v169 = vadd.f32 %v101, %v148
  %v170 = vadd.f32 %v102, %v148
  %v171 = vadd.f32 %v103, %v148
  %v172 = vadd.f32 %v104, %v148
  %v173 = vadd.f32 %v105, %v148
  %v174 = vadd.f32 %v106, %v148
  %v175 = vadd.f32 %v107, %v148
  %v176 = vadd.f32 %v108, %v148
  %v177 = vadd.f32 %v109, %v148
  %v178 = vadd.f32 %v110, %v148
  %v179 = vadd.f32 %v111, %v148
  %v180 = vadd.f32 %v112, %v148
  %v181 = vadd.f32 %v113, %v148
  %v182 = vadd.f32 %v114, %v148
  %v183 = vadd.f32 %v115, %v148
  %v184 = vadd.f32 %v116, %v148
  %v185 = vadd.f32 %v117, %v148
  %v186 = vadd.f32 %v118, %v148
  %v187 = vadd.f32 %v119, %v148
  %v188 = vadd.f32 %v120, %v148
  %v189 = vadd.f32 %v121, %v148
  %v190 = vadd.f32 %v122, %v148
  %v191 = vadd.f32 %v123, %v148
  %v192 = vadd.f32 %v124, %v148
  %v193 = vadd.f32 %v125, %v148
  %v194 = vadd.f32 %v126, %v148
  %v195 = vadd.f32 %v127, %v148
  %v196 = vadd.f32 %v128, %v148
  %v197 = vadd.f32 %v129, %v148
  %v198 = vadd.f32 %v130, %v148
  %v199 = vadd.f32 %v131, %v148
  %v200 = vadd.f32 %v132, %v148
  %v201 = vadd.f32 %v133, %v148
  %v202 = vadd.f32 %v134, %v148
  %v203 = vadd.f32 %v135, %v148
  %v204 = vadd.f32 %v136, %v148
  %v205 = vadd.f32 %v137, %v148
  %v206 = vadd.f32 %v138, %v148
  %v207 = vadd.f32 %v139, %v148
  %v208 = vadd.f32 %v140, %v148
  %v209 = vadd.f32 %v141, %v148
  %v210 = vadd.f32 %v142, %v148
  %v211 = vadd.f32 %v143, %v148
  %v212 = vadd.f32 %v144, %v148
  %v213 = vadd.f32 %v145, %v148
  %v214 = vmax.f32 %v150, 0.0
  %v215 = vmax.f32 %v151, 0.0
  %v216 = vmax.f32 %v152, 0.0
  %v217 = vmax.f32 %v153, 0.0
  %v218 = vmax.f32 %v154, 0.0
  %v219 = vmax.f32 %v155, 0.0
  %v220 = vmax.f32 %v156, 0.0
  %v221 = vmax.f32 %v157, 0.0
  %v222 = vmax.f32 %v158, 0.0
  %v223 = vmax.f32 %v159, 0.0
  %v224 = vmax.f32 %v160, 0.0
  %v225 = vmax.f32 %v161, 0.0
  %v226 = vmax.f32 %v162, 0.0
  %v227 = vmax.f32 %v163, 0.0
  %v228 = vmax.f32 %v164, 0.0
  %v229 = vmax.f32 %v165, 0.0
  %v230 = vmax.f32 %v166, 0.0
  %v231 = vmax.f32 %v167, 0.0
  %v232 = vmax.f32 %v168, 0.0
  %v233 = vmax.f32 %v169, 0.0
  %v234 = vmax.f32 %v170, 0.0
  %v235 = vmax.f32 %v171, 0.0
  %v236 = vmax.f32 %v172, 0.0
  %v237 = vmax.f32 %v173, 0.0
  %v238 = vmax.f32 %v174, 0.0
  %v239 = vmax.f32 %v175, 0.0
  %v240 = vmax.f32 %v176, 0.0
  %v241 = vmax.f32 %v177, 0.0
  %v242 = vmax.f32 %v178, 0.0
  %v243 = vmax.f32 %v179, 0.0
  %v244 = vmax.f32 %v180, 0.0
  %v245 = vmax.f32 %v181, 0.0
  %v246 = vmax.f32 %v182, 0.0
  %v247 = vmax.f32 %v183, 0.0
  %v248 = vmax.f32 %v184, 0.0
  %v249 = vmax.f32 %v185, 0.0
  %v250 = vmax.f32 %v186, 0.0
  %v251 = vmax.f32 %v187, 0.0
  %v252 = vmax.f32 %v188, 0.0
  %v253 = vmax.f32 %v189, 0.0
  %v254 = vmax.f32 %v190, 0.0
  %v255 = vmax.f32 %v191, 0.0
  %v256 = vmax.f32 %v192, 0.0
  %v257 = vmax.f32 %v193, 0.0
  %v258 = vmax.f32 %v194, 0.0
  %v259 = vmax.f32 %v195, 0.0
  %v260 = vmax.f32 %v196, 0.0
  %v261 = vmax.f32 %v197, 0.0
  %v262 = vmax.f32 %v198, 0.0
  %v263 = vmax.f32 %v199, 0.0
  %v264 = vmax.f32 %v200, 0.0
  %v265 = vmax.f32 %v201, 0.0
  %v266 = vmax.f32 %v202, 0.0
  %v267 = vmax.f32 %v203, 0.0
  %v268 = vmax.f32 %v204, 0.0
  %v269 = vmax.f32 %v205, 0.0
  %v270 = vmax.f32 %v206, 0.0
  %v271 = vmax.f32 %v207, 0.0
  %v272 = vmax.f32 %v208, 0.0
  %v273 = vmax.f32 %v209, 0.0
  %v274 = vmax.f32 %v210, 0.0
  %v275 = vmax.f32 %v211, 0.0
  %v276 = vmax.f32 %v212, 0.0
  %v277 = vmax.f32 %v213, 0.0
  %v278 = vpack.c.bf16 %v214, %v214
  %v279 = vpack.c.bf16 %v215, %v215
  %v280 = vpack.c.bf16 %v216, %v216
  %v281 = vpack.c.bf16 %v217, %v217
  %v282 = vpack.c.bf16 %v218, %v218
  %v283 = vpack.c.bf16 %v219, %v219
  %v284 = vpack.c.bf16 %v220, %v220
  %v285 = vpack.c.bf16 %v221, %v221
  %v286 = vpack.c.bf16 %v222, %v222
  %v287 = vpack.c.bf16 %v223, %v223
  %v288 = vpack.c.bf16 %v224, %v224
  %v289 = vpack.c.bf16 %v225, %v225
  %v290 = vpack.c.bf16 %v226, %v226
  %v291 = vpack.c.bf16 %v227, %v227
  %v292 = vpack.c.bf16 %v228, %v228
  %v293 = vpack.c.bf16 %v229, %v229
  %v294 = vpack.c.bf16 %v230, %v230
  %v295 = vpack.c.bf16 %v231, %v231
  %v296 = vpack.c.bf16 %v232, %v232
  %v297 = vpack.c.bf16 %v233, %v233
  %v298 = vpack.c.bf16 %v234, %v234
  %v299 = vpack.c.bf16 %v235, %v235
  %v300 = vpack.c.bf16 %v236, %v236
  %v301 = vpack.c.bf16 %v237, %v237
  %v302 = vpack.c.bf16 %v238, %v238
  %v303 = vpack.c.bf16 %v239, %v239
  %v304 = vpack.c.bf16 %v240, %v240
  %v305 = vpack.c.bf16 %v241, %v241
  %v306 = vpack.c.bf16 %v242, %v242
  %v307 = vpack.c.bf16 %v243, %v243
  %v308 = vpack.c.bf16 %v244, %v244
  %v309 = vpack.c.bf16 %v245, %v245
  %v310 = vpack.c.bf16 %v246, %v246
  %v311 = vpack.c.bf16 %v247, %v247
  %v312 = vpack.c.bf16 %v248, %v248
  %v313 = vpack.c.bf16 %v249, %v249
  %v314 = vpack.c.bf16 %v250, %v250
  %v315 = vpack.c.bf16 %v251, %v251
  %v316 = vpack.c.bf16 %v252, %v252
  %v317 = vpack.c.bf16 %v253, %v253
  %v318 = vpack.c.bf16 %v254, %v254
  %v319 = vpack.c.bf16 %v255, %v255
  %v320 = vpack.c.bf16 %v256, %v256
  %v321 = vpack.c.bf16 %v257, %v257
  %v322 = vpack.c.bf16 %v258, %v258
  %v323 = vpack.c.bf16 %v259, %v259
  %v324 = vpack.c.bf16 %v260, %v260
  %v325 = vpack.c.bf16 %v261, %v261
  %v326 = vpack.c.bf16 %v262, %v262
  %v327 = vpack.c.bf16 %v263, %v263
  %v328 = vpack.c.bf16 %v264, %v264
  %v329 = vpack.c.bf16 %v265, %v265
  %v330 = vpack.c.bf16 %v266, %v266
  %v331 = vpack.c.bf16 %v267, %v267
  %v332 = vpack.c.bf16 %v268, %v268
  %v333 = vpack.c.bf16 %v269, %v269
  %v334 = vpack.c.bf16 %v270, %v270
  %v335 = vpack.c.bf16 %v271, %v271
  %v336 = vpack.c.bf16 %v272, %v272
  %v337 = vpack.c.bf16 %v273, %v273
  %v338 = vpack.c.bf16 %v274, %v274
  %v339 = vpack.c.bf16 %v275, %v275
  %v340 = vpack.c.bf16 %v276, %v276
  %v341 = vpack.c.bf16 %v277, %v277
  %vm342 = vcmask 257024
  %343 = vst.msk [vmem:[%s3] sm:$0xf] %vm342, %v278
  %344 = vst.msk [vmem:[%s3 + $0x4] sm:$0xf] %vm342, %v279
  %345 = vst.msk [vmem:[%s3 + $0x8] sm:$0xf] %vm342, %v280
  %346 = vst.msk [vmem:[%s3 + $0xc] sm:$0xf] %vm342, %v281
  %347 = vst.msk [vmem:[%s3 + $0x10] sm:$0xf] %vm342, %v282
  %348 = vst.msk [vmem:[%s3 + $0x14] sm:$0xf] %vm342, %v283
  %349 = vst.msk [vmem:[%s3 + $0x18] sm:$0xf] %vm342, %v284
  %350 = vst.msk [vmem:[%s3 + $0x1c] sm:$0xf] %vm342, %v285
  %351 = vst.msk [vmem:[%s3 + $0x20] sm:$0xf] %vm342, %v286
  %352 = vst.msk [vmem:[%s3 + $0x24] sm:$0xf] %vm342, %v287
  %353 = vst.msk [vmem:[%s3 + $0x28] sm:$0xf] %vm342, %v288
  %354 = vst.msk [vmem:[%s3 + $0x2c] sm:$0xf] %vm342, %v289
  %355 = vst.msk [vmem:[%s3 + $0x30] sm:$0xf] %vm342, %v290
  %356 = vst.msk [vmem:[%s3 + $0x34] sm:$0xf] %vm342, %v291
  %357 = vst.msk [vmem:[%s3 + $0x38] sm:$0xf] %vm342, %v292
  %358 = vst.msk [vmem:[%s3 + $0x3c] sm:$0xf] %vm342, %v293
  %359 = vst.msk [vmem:[%s3 + $0x40] sm:$0xf] %vm342, %v294
  %360 = vst.msk [vmem:[%s3 + $0x44] sm:$0xf] %vm342, %v295
  %361 = vst.msk [vmem:[%s3 + $0x48] sm:$0xf] %vm342, %v296
  %362 = vst.msk [vmem:[%s3 + $0x4c] sm:$0xf] %vm342, %v297
  %363 = vst.msk [vmem:[%s3 + $0x50] sm:$0xf] %vm342, %v298
  %364 = vst.msk [vmem:[%s3 + $0x54] sm:$0xf] %vm342, %v299
  %365 = vst.msk [vmem:[%s3 + $0x58] sm:$0xf] %vm342, %v300
  %366 = vst.msk [vmem:[%s3 + $0x5c] sm:$0xf] %vm342, %v301
  %367 = vst.msk [vmem:[%s3 + $0x60] sm:$0xf] %vm342, %v302
  %368 = vst.msk [vmem:[%s3 + $0x64] sm:$0xf] %vm342, %v303
  %369 = vst.msk [vmem:[%s3 + $0x68] sm:$0xf] %vm342, %v304
  %370 = vst.msk [vmem:[%s3 + $0x6c] sm:$0xf] %vm342, %v305
  %371 = vst.msk [vmem:[%s3 + $0x70] sm:$0xf] %vm342, %v306
  %372 = vst.msk [vmem:[%s3 + $0x74] sm:$0xf] %vm342, %v307
  %373 = vst.msk [vmem:[%s3 + $0x78] sm:$0xf] %vm342, %v308
  %374 = vst.msk [vmem:[%s3 + $0x7c] sm:$0xf] %vm342, %v309
  %375 = vst.msk [vmem:[%s3 + $0x80] sm:$0xf] %vm342, %v310
  %376 = vst.msk [vmem:[%s3 + $0x84] sm:$0xf] %vm342, %v311
  %377 = vst.msk [vmem:[%s3 + $0x88] sm:$0xf] %vm342, %v312
  %378 = vst.msk [vmem:[%s3 + $0x8c] sm:$0xf] %vm342, %v313
  %379 = vst.msk [vmem:[%s3 + $0x90] sm:$0xf] %vm342, %v314
  %380 = vst.msk [vmem:[%s3 + $0x94] sm:$0xf] %vm342, %v315
  %381 = vst.msk [vmem:[%s3 + $0x98] sm:$0xf] %vm342, %v316
  %382 = vst.msk [vmem:[%s3 + $0x9c] sm:$0xf] %vm342, %v317
  %383 = vst.msk [vmem:[%s3 + $0xa0] sm:$0xf] %vm342, %v318
  %384 = vst.msk [vmem:[%s3 + $0xa4] sm:$0xf] %vm342, %v319
  %385 = vst.msk [vmem:[%s3 + $0xa8] sm:$0xf] %vm342, %v320
  %386 = vst.msk [vmem:[%s3 + $0xac] sm:$0xf] %vm342, %v321
  %387 = vst.msk [vmem:[%s3 + $0xb0] sm:$0xf] %vm342, %v322
  %388 = vst.msk [vmem:[%s3 + $0xb4] sm:$0xf] %vm342, %v323
  %389 = vst.msk [vmem:[%s3 + $0xb8] sm:$0xf] %vm342, %v324
  %390 = vst.msk [vmem:[%s3 + $0xbc] sm:$0xf] %vm342, %v325
  %391 = vst.msk [vmem:[%s3 + $0xc0] sm:$0xf] %vm342, %v326
  %392 = vst.msk [vmem:[%s3 + $0xc4] sm:$0xf] %vm342, %v327
  %393 = vst.msk [vmem:[%s3 + $0xc8] sm:$0xf] %vm342, %v328
  %394 = vst.msk [vmem:[%s3 + $0xcc] sm:$0xf] %vm342, %v329
  %395 = vst.msk [vmem:[%s3 + $0xd0] sm:$0xf] %vm342, %v330
  %396 = vst.msk [vmem:[%s3 + $0xd4] sm:$0xf] %vm342, %v331
  %397 = vst.msk [vmem:[%s3 + $0xd8] sm:$0xf] %vm342, %v332
  %398 = vst.msk [vmem:[%s3 + $0xdc] sm:$0xf] %vm342, %v333
  %399 = vst.msk [vmem:[%s3 + $0xe0] sm:$0xf] %vm342, %v334
  %400 = vst.msk [vmem:[%s3 + $0xe4] sm:$0xf] %vm342, %v335
  %401 = vst.msk [vmem:[%s3 + $0xe8] sm:$0xf] %vm342, %v336
  %402 = vst.msk [vmem:[%s3 + $0xec] sm:$0xf] %vm342, %v337
  %403 = vst.msk [vmem:[%s3 + $0xf0] sm:$0xf] %vm342, %v338
  %404 = vst.msk [vmem:[%s3 + $0xf4] sm:$0xf] %vm342, %v339
  %405 = vst.msk [vmem:[%s3 + $0xf8] sm:$0xf] %vm342, %v340
  %406 = vst.msk [vmem:[%s3 + $0xfc] sm:$0xf] %vm342, %v341
  // Predicated region
  $region14: #{resnet_forward.54} parent=0 // pred_check
    _
  $region15: #{resnet_forward.54} parent=0 // pred_check_branch
    %408 = sbr.rel (0) target = $region17
  $region16: #{resnet_forward.54} parent=0 // pred_region
    _
  $region17: #{resnet_forward.54} parent=0 // pred_fallthru
    _
  // Predicated region
  $region18: #{resnet_forward.54} parent=0 // pred_check
    _
  $region19: #{resnet_forward.54} parent=0 // pred_check_branch
    %410 = sbr.rel (0) target = $region21
  $region20: #{resnet_forward.54} parent=0 // pred_region
    _
  $region21: #{resnet_forward.54} parent=0 // pred_fallthru
    _

// kernel: resnet_forward.55
$region0: #{resnet_forward.55}
  #allocation0 [shape = 'u32[]', space=smem, size = 0x4, offset = 0x4, fixed_abs, tag = 'smem constant byte address 0x4 - core index']
  #allocation1 [shape = 'u32[72,128]{1,0:T(1,128)}', space=vmem, size = 0x9000, scoped, tag = 'internal scratch']
  %s0 = inlined_call_operand.vmem [shape: bf16[512,288], index: 0, kind: input, shape index: {}]
  %s1 = inlined_call_operand.vmem [shape: f32[288,32], index: 1, kind: input, shape index: {}]
  %s2 = inlined_call_operand.vmem [shape: f32[512,32], index: 2, kind: output, shape index: {0}]
  %s3 = inlined_call_operand.vmem [shape: f32[1,2,32], index: 3, kind: output, shape index: {1}]
  %4 = xla_tuple %s2, %s3
  %s5 = sld [smem:[#allocation0]]
  $region26: #{resnet_forward.55} parent=0
    _
  %s7 = ssub.s32 1, %s5
  %s8 = scalar_select 0, %s7, %s5
  // Predicated region
  $region2: #{resnet_forward.55} parent=0 // pred_check
    _
  $region3: #{resnet_forward.55} parent=0 // pred_check_branch
    %10 = sbr.rel (0) target = $region5
  $region4: #{resnet_forward.55} parent=0 // pred_region
    _
  $region5: #{resnet_forward.55} parent=0 // pred_fallthru
    _
  // Predicated region
  $region6: #{resnet_forward.55} parent=0 // pred_check
    _
  $region7: #{resnet_forward.55} parent=0 // pred_check_branch
    %12 = sbr.rel (0) target = $region9
  $region8: #{resnet_forward.55} parent=0 // pred_region
    _
  $region9: #{resnet_forward.55} parent=0 // pred_fallthru
    _
  %v14 = vld [vmem:[%s0] sm:$0xff]
  %v15 = vld [vmem:[%s0 + $0x8] sm:$0xf]
  %v16 = vld [vmem:[%s0 + $0xc] sm:$0xff]
  %v17 = vld [vmem:[%s0 + $0x14] sm:$0xf]
  %v18 = vld [vmem:[%s0 + $0x18] sm:$0xff]
  %v19 = vld [vmem:[%s0 + $0x20] sm:$0xf]
  %v20 = vld [vmem:[%s0 + $0x24] sm:$0xff]
  %v21 = vld [vmem:[%s0 + $0x2c] sm:$0xf]
  %v22 = vld [vmem:[%s0 + $0x30] sm:$0xff]
  %v23 = vld [vmem:[%s0 + $0x38] sm:$0xf]
  %v24 = vld [vmem:[%s0 + $0x3c] sm:$0xff]
  %v25 = vld [vmem:[%s0 + $0x44] sm:$0xf]
  %v26 = vld [vmem:[%s0 + $0x48] sm:$0xff]
  %v27 = vld [vmem:[%s0 + $0x50] sm:$0xf]
  %v28 = vld [vmem:[%s0 + $0x54] sm:$0xff]
  %v29 = vld [vmem:[%s0 + $0x5c] sm:$0xf]
  %v30 = vld [vmem:[%s0 + $0x60] sm:$0xff]
  %v31 = vld [vmem:[%s0 + $0x68] sm:$0xf]
  %v32 = vld [vmem:[%s0 + $0x6c] sm:$0xff]
  %v33 = vld [vmem:[%s0 + $0x74] sm:$0xf]
  %v34 = vld [vmem:[%s0 + $0x78] sm:$0xff]
  %v35 = vld [vmem:[%s0 + $0x80] sm:$0xf]
  %v36 = vld [vmem:[%s0 + $0x84] sm:$0xff]
  %v37 = vld [vmem:[%s0 + $0x8c] sm:$0xf]
  %v38 = vld [vmem:[%s0 + $0x90] sm:$0xff]
  %v39 = vld [vmem:[%s0 + $0x98] sm:$0xf]
  %v40 = vld [vmem:[%s0 + $0x9c] sm:$0xff]
  %v41 = vld [vmem:[%s0 + $0xa4] sm:$0xf]
  %v42 = vld [vmem:[%s0 + $0xa8] sm:$0xff]
  %v43 = vld [vmem:[%s0 + $0xb0] sm:$0xf]
  %v44 = vld [vmem:[%s0 + $0xb4] sm:$0xff]
  %v45 = vld [vmem:[%s0 + $0xbc] sm:$0xf]
  %v46 = vld [vmem:[%s0 + $0xc0] sm:$0xff]
  %v47 = vld [vmem:[%s0 + $0xc8] sm:$0xf]
  %v48 = vld [vmem:[%s0 + $0xcc] sm:$0xff]
  %v49 = vld [vmem:[%s0 + $0xd4] sm:$0xf]
  %v50 = vld [vmem:[%s0 + $0xd8] sm:$0xff]
  %v51 = vld [vmem:[%s0 + $0xe0] sm:$0xf]
  %v52 = vld [vmem:[%s0 + $0xe4] sm:$0xff]
  %v53 = vld [vmem:[%s0 + $0xec] sm:$0xf]
  %v54 = vld [vmem:[%s0 + $0xf0] sm:$0xff]
  %v55 = vld [vmem:[%s0 + $0xf8] sm:$0xf]
  %v56 = vld [vmem:[%s0 + $0xfc] sm:$0xff]
  %v57 = vld [vmem:[%s0 + $0x104] sm:$0xf]
  %v58 = vld [vmem:[%s0 + $0x108] sm:$0xff]
  %v59 = vld [vmem:[%s0 + $0x110] sm:$0xf]
  %v60 = vld [vmem:[%s0 + $0x114] sm:$0xff]
  %v61 = vld [vmem:[%s0 + $0x11c] sm:$0xf]
  %v62 = vld [vmem:[%s0 + $0x120] sm:$0xff]
  %v63 = vld [vmem:[%s0 + $0x128] sm:$0xf]
  %v64 = vld [vmem:[%s0 + $0x12c] sm:$0xff]
  %v65 = vld [vmem:[%s0 + $0x134] sm:$0xf]
  %v66 = vld [vmem:[%s0 + $0x138] sm:$0xff]
  %v67 = vld [vmem:[%s0 + $0x140] sm:$0xf]
  %v68 = vld [vmem:[%s0 + $0x144] sm:$0xff]
  %v69 = vld [vmem:[%s0 + $0x14c] sm:$0xf]
  %v70 = vld [vmem:[%s0 + $0x150] sm:$0xff]
  %v71 = vld [vmem:[%s0 + $0x158] sm:$0xf]
  %v72 = vld [vmem:[%s0 + $0x15c] sm:$0xff]
  %v73 = vld [vmem:[%s0 + $0x164] sm:$0xf]
  %v74 = vld [vmem:[%s0 + $0x168] sm:$0xff]
  %v75 = vld [vmem:[%s0 + $0x170] sm:$0xf]
  %v76 = vld [vmem:[%s0 + $0x174] sm:$0xff]
  %v77 = vld [vmem:[%s0 + $0x17c] sm:$0xf]
  %v78 = vld [vmem:[%s0 + $0x180] sm:$0xff]
  %v79 = vld [vmem:[%s0 + $0x188] sm:$0xf]
  %v80 = vld [vmem:[%s0 + $0x18c] sm:$0xff]
  %v81 = vld [vmem:[%s0 + $0x194] sm:$0xf]
  %v82 = vld [vmem:[%s0 + $0x198] sm:$0xff]
  %v83 = vld [vmem:[%s0 + $0x1a0] sm:$0xf]
  %v84 = vld [vmem:[%s0 + $0x1a4] sm:$0xff]
  %v85 = vld [vmem:[%s0 + $0x1ac] sm:$0xf]
  %v86 = vld [vmem:[%s0 + $0x1b0] sm:$0xff]
  %v87 = vld [vmem:[%s0 + $0x1b8] sm:$0xf]
  %v88 = vld [vmem:[%s0 + $0x1bc] sm:$0xff]
  %v89 = vld [vmem:[%s0 + $0x1c4] sm:$0xf]
  %v90 = vld [vmem:[%s0 + $0x1c8] sm:$0xff]
  %v91 = vld [vmem:[%s0 + $0x1d0] sm:$0xf]
  %v92 = vld [vmem:[%s0 + $0x1d4] sm:$0xff]
  %v93 = vld [vmem:[%s0 + $0x1dc] sm:$0xf]
  %v94 = vld [vmem:[%s0 + $0x1e0] sm:$0xff]
  %v95 = vld [vmem:[%s0 + $0x1e8] sm:$0xf]
  %v96 = vld [vmem:[%s0 + $0x1ec] sm:$0xff]
  %v97 = vld [vmem:[%s0 + $0x1f4] sm:$0xf]
  %v98 = vld [vmem:[%s0 + $0x1f8] sm:$0xff]
  %v99 = vld [vmem:[%s0 + $0x200] sm:$0xf]
  %v100 = vld [vmem:[%s0 + $0x204] sm:$0xff]
  %v101 = vld [vmem:[%s0 + $0x20c] sm:$0xf]
  %v102 = vld [vmem:[%s0 + $0x210] sm:$0xff]
  %v103 = vld [vmem:[%s0 + $0x218] sm:$0xf]
  %v104 = vld [vmem:[%s0 + $0x21c] sm:$0xff]
  %v105 = vld [vmem:[%s0 + $0x224] sm:$0xf]
  %v106 = vld [vmem:[%s0 + $0x228] sm:$0xff]
  %v107 = vld [vmem:[%s0 + $0x230] sm:$0xf]
  %v108 = vld [vmem:[%s0 + $0x234] sm:$0xff]
  %v109 = vld [vmem:[%s0 + $0x23c] sm:$0xf]
  %v110 = vld [vmem:[%s0 + $0x240] sm:$0xff]
  %v111 = vld [vmem:[%s0 + $0x248] sm:$0xf]
  %v112 = vld [vmem:[%s0 + $0x24c] sm:$0xff]
  %v113 = vld [vmem:[%s0 + $0x254] sm:$0xf]
  %v114 = vld [vmem:[%s0 + $0x258] sm:$0xff]
  %v115 = vld [vmem:[%s0 + $0x260] sm:$0xf]
  %v116 = vld [vmem:[%s0 + $0x264] sm:$0xff]
  %v117 = vld [vmem:[%s0 + $0x26c] sm:$0xf]
  %v118 = vld [vmem:[%s0 + $0x270] sm:$0xff]
  %v119 = vld [vmem:[%s0 + $0x278] sm:$0xf]
  %v120 = vld [vmem:[%s0 + $0x27c] sm:$0xff]
  %v121 = vld [vmem:[%s0 + $0x284] sm:$0xf]
  %v122 = vld [vmem:[%s0 + $0x288] sm:$0xff]
  %v123 = vld [vmem:[%s0 + $0x290] sm:$0xf]
  %v124 = vld [vmem:[%s0 + $0x294] sm:$0xff]
  %v125 = vld [vmem:[%s0 + $0x29c] sm:$0xf]
  %v126 = vld [vmem:[%s0 + $0x2a0] sm:$0xff]
  %v127 = vld [vmem:[%s0 + $0x2a8] sm:$0xf]
  %v128 = vld [vmem:[%s0 + $0x2ac] sm:$0xff]
  %v129 = vld [vmem:[%s0 + $0x2b4] sm:$0xf]
  %v130 = vld [vmem:[%s0 + $0x2b8] sm:$0xff]
  %v131 = vld [vmem:[%s0 + $0x2c0] sm:$0xf]
  %v132 = vld [vmem:[%s0 + $0x2c4] sm:$0xff]
  %v133 = vld [vmem:[%s0 + $0x2cc] sm:$0xf]
  %v134 = vld [vmem:[%s0 + $0x2d0] sm:$0xff]
  %v135 = vld [vmem:[%s0 + $0x2d8] sm:$0xf]
  %v136 = vld [vmem:[%s0 + $0x2dc] sm:$0xff]
  %v137 = vld [vmem:[%s0 + $0x2e4] sm:$0xf]
  %v138 = vld [vmem:[%s0 + $0x2e8] sm:$0xff]
  %v139 = vld [vmem:[%s0 + $0x2f0] sm:$0xf]
  %v140 = vld [vmem:[%s0 + $0x2f4] sm:$0xff]
  %v141 = vld [vmem:[%s0 + $0x2fc] sm:$0xf]
  %v142 = vld [vmem:[%s1] sm:$0xff]
  %v143 = vld [vmem:[%s1 + $0x8] sm:$0xff]
  %v144 = vld [vmem:[%s1 + $0x10] sm:$0xff]
  %v145 = vld [vmem:[%s1 + $0x18] sm:$0xff]
  %v146 = vld [vmem:[%s1 + $0x20] sm:$0xff]
  %v147 = vld [vmem:[%s1 + $0x28] sm:$0xff]
  %v148 = vld [vmem:[%s1 + $0x30] sm:$0xff]
  %v149 = vld [vmem:[%s1 + $0x38] sm:$0xff]
  %v150 = vld [vmem:[%s1 + $0x40] sm:$0xff]
  %v151 = vld [vmem:[%s1 + $0x48] sm:$0xff]
  %v152 = vld [vmem:[%s1 + $0x50] sm:$0xff]
  %v153 = vld [vmem:[%s1 + $0x58] sm:$0xff]
  %v154 = vld [vmem:[%s1 + $0x60] sm:$0xff]
  %v155 = vld [vmem:[%s1 + $0x68] sm:$0xff]
  %v156 = vld [vmem:[%s1 + $0x70] sm:$0xff]
  %v157 = vld [vmem:[%s1 + $0x78] sm:$0xff]
  %v158 = vld [vmem:[%s1 + $0x80] sm:$0xff]
  %v159 = vld [vmem:[%s1 + $0x88] sm:$0xff]
  %v160 = vld [vmem:[%s1 + $0x90] sm:$0xff]
  %v161 = vld [vmem:[%s1 + $0x98] sm:$0xff]
  %v162 = vld [vmem:[%s1 + $0xa0] sm:$0xff]
  %v163 = vld [vmem:[%s1 + $0xa8] sm:$0xff]
  %v164 = vld [vmem:[%s1 + $0xb0] sm:$0xff]
  %v165 = vld [vmem:[%s1 + $0xb8] sm:$0xff]
  %v166 = vld [vmem:[%s1 + $0xc0] sm:$0xff]
  %v167 = vld [vmem:[%s1 + $0xc8] sm:$0xff]
  %v168 = vld [vmem:[%s1 + $0xd0] sm:$0xff]
  %v169 = vld [vmem:[%s1 + $0xd8] sm:$0xff]
  %v170 = vld [vmem:[%s1 + $0xe0] sm:$0xff]
  %v171 = vld [vmem:[%s1 + $0xe8] sm:$0xff]
  %v172 = vld [vmem:[%s1 + $0xf0] sm:$0xff]
  %v173 = vld [vmem:[%s1 + $0xf8] sm:$0xff]
  %v174 = vld [vmem:[%s1 + $0x100] sm:$0xff]
  %v175 = vld [vmem:[%s1 + $0x108] sm:$0xff]
  %v176 = vld [vmem:[%s1 + $0x110] sm:$0xff]
  %v177 = vld [vmem:[%s1 + $0x118] sm:$0xff]
  %v178 = vpack.c.bf16 %v143, %v142
  %v179 = vpack.c.bf16 %v145, %v144
  %v180 = vpack.c.bf16 %v147, %v146
  %v181 = vpack.c.bf16 %v149, %v148
  %v182 = vpack.c.bf16 %v151, %v150
  %v183 = vpack.c.bf16 %v153, %v152
  %v184 = vpack.c.bf16 %v155, %v154
  %v185 = vpack.c.bf16 %v157, %v156
  %v186 = vpack.c.bf16 %v159, %v158
  %v187 = vpack.c.bf16 %v161, %v160
  %v188 = vpack.c.bf16 %v163, %v162
  %v189 = vpack.c.bf16 %v165, %v164
  %v190 = vpack.c.bf16 %v167, %v166
  %v191 = vpack.c.bf16 %v169, %v168
  %v192 = vpack.c.bf16 %v171, %v170
  %v193 = vpack.c.bf16 %v173, %v172
  %v194 = vpack.c.bf16 %v175, %v174
  %v195 = vpack.c.bf16 %v177, %v176
  %v324 = vunpack.c.l.b16 %v14
  %v325 = vunpack.c.h.b16 %v14
  %v326 = vunpack.c.l.b16 %v15
  %v327 = vunpack.c.l.b16 %v16
  %v328 = vunpack.c.h.b16 %v16
  %v329 = vunpack.c.l.b16 %v17
  %v330 = vunpack.c.l.b16 %v18
  %v331 = vunpack.c.h.b16 %v18
  %v332 = vunpack.c.l.b16 %v19
  %v333 = vunpack.c.l.b16 %v20
  %v334 = vunpack.c.h.b16 %v20
  %v335 = vunpack.c.l.b16 %v21
  %v336 = vunpack.c.l.b16 %v22
  %v337 = vunpack.c.h.b16 %v22
  %v338 = vunpack.c.l.b16 %v23
  %v339 = vunpack.c.l.b16 %v24
  %v340 = vunpack.c.h.b16 %v24
  %v341 = vunpack.c.l.b16 %v25
  %v342 = vunpack.c.l.b16 %v26
  %v343 = vunpack.c.h.b16 %v26
  %v344 = vunpack.c.l.b16 %v27
  %v345 = vunpack.c.l.b16 %v28
  %v346 = vunpack.c.h.b16 %v28
  %v347 = vunpack.c.l.b16 %v29
  %v348 = vunpack.c.l.b16 %v30
  %v349 = vunpack.c.h.b16 %v30
  %v350 = vunpack.c.l.b16 %v31
  %v351 = vunpack.c.l.b16 %v32
  %v352 = vunpack.c.h.b16 %v32
  %v353 = vunpack.c.l.b16 %v33
  %v354 = vunpack.c.l.b16 %v34
  %v355 = vunpack.c.h.b16 %v34
  %v356 = vunpack.c.l.b16 %v35
  %v357 = vunpack.c.l.b16 %v36
  %v358 = vunpack.c.h.b16 %v36
  %v359 = vunpack.c.l.b16 %v37
  %v360 = vunpack.c.l.b16 %v38
  %v361 = vunpack.c.h.b16 %v38
  %v362 = vunpack.c.l.b16 %v39
  %v363 = vunpack.c.l.b16 %v40
  %v364 = vunpack.c.h.b16 %v40
  %v365 = vunpack.c.l.b16 %v41
  %v366 = vunpack.c.l.b16 %v42
  %v367 = vunpack.c.h.b16 %v42
  %v368 = vunpack.c.l.b16 %v43
  %v369 = vunpack.c.l.b16 %v44
  %v370 = vunpack.c.h.b16 %v44
  %v371 = vunpack.c.l.b16 %v45
  %v372 = vunpack.c.l.b16 %v46
  %v373 = vunpack.c.h.b16 %v46
  %v374 = vunpack.c.l.b16 %v47
  %v375 = vunpack.c.l.b16 %v48
  %v376 = vunpack.c.h.b16 %v48
  %v377 = vunpack.c.l.b16 %v49
  %v378 = vunpack.c.l.b16 %v50
  %v379 = vunpack.c.h.b16 %v50
  %v380 = vunpack.c.l.b16 %v51
  %v381 = vunpack.c.l.b16 %v52
  %v382 = vunpack.c.h.b16 %v52
  %v383 = vunpack.c.l.b16 %v53
  %v384 = vunpack.c.l.b16 %v54
  %v385 = vunpack.c.h.b16 %v54
  %v386 = vunpack.c.l.b16 %v55
  %v387 = vunpack.c.l.b16 %v56
  %v388 = vunpack.c.h.b16 %v56
  %v389 = vunpack.c.l.b16 %v57
  %v390 = vunpack.c.l.b16 %v58
  %v391 = vunpack.c.h.b16 %v58
  %v392 = vunpack.c.l.b16 %v59
  %v393 = vunpack.c.l.b16 %v60
  %v394 = vunpack.c.h.b16 %v60
  %v395 = vunpack.c.l.b16 %v61
  %v396 = vunpack.c.l.b16 %v62
  %v397 = vunpack.c.h.b16 %v62
  %v398 = vunpack.c.l.b16 %v63
  %v399 = vunpack.c.l.b16 %v64
  %v400 = vunpack.c.h.b16 %v64
  %v401 = vunpack.c.l.b16 %v65
  %v402 = vunpack.c.l.b16 %v66
  %v403 = vunpack.c.h.b16 %v66
  %v404 = vunpack.c.l.b16 %v67
  %v405 = vunpack.c.l.b16 %v68
  %v406 = vunpack.c.h.b16 %v68
  %v407 = vunpack.c.l.b16 %v69
  %v408 = vunpack.c.l.b16 %v70
  %v409 = vunpack.c.h.b16 %v70
  %v410 = vunpack.c.l.b16 %v71
  %v411 = vunpack.c.l.b16 %v72
  %v412 = vunpack.c.h.b16 %v72
  %v413 = vunpack.c.l.b16 %v73
  %v414 = vunpack.c.l.b16 %v74
  %v415 = vunpack.c.h.b16 %v74
  %v416 = vunpack.c.l.b16 %v75
  %v417 = vunpack.c.l.b16 %v76
  %v418 = vunpack.c.h.b16 %v76
  %v419 = vunpack.c.l.b16 %v77
  %v420 = vunpack.c.l.b16 %v78
  %v421 = vunpack.c.h.b16 %v78
  %v422 = vunpack.c.l.b16 %v79
  %v423 = vunpack.c.l.b16 %v80
  %v424 = vunpack.c.h.b16 %v80
  %v425 = vunpack.c.l.b16 %v81
  %v426 = vunpack.c.l.b16 %v82
  %v427 = vunpack.c.h.b16 %v82
  %v428 = vunpack.c.l.b16 %v83
  %v429 = vunpack.c.l.b16 %v84
  %v430 = vunpack.c.h.b16 %v84
  %v431 = vunpack.c.l.b16 %v85
  %v432 = vunpack.c.l.b16 %v86
  %v433 = vunpack.c.h.b16 %v86
  %v434 = vunpack.c.l.b16 %v87
  %v435 = vunpack.c.l.b16 %v88
  %v436 = vunpack.c.h.b16 %v88
  %v437 = vunpack.c.l.b16 %v89
  %v438 = vunpack.c.l.b16 %v90
  %v439 = vunpack.c.h.b16 %v90
  %v440 = vunpack.c.l.b16 %v91
  %v441 = vunpack.c.l.b16 %v92
  %v442 = vunpack.c.h.b16 %v92
  %v443 = vunpack.c.l.b16 %v93
  %v444 = vunpack.c.l.b16 %v94
  %v445 = vunpack.c.h.b16 %v94
  %v446 = vunpack.c.l.b16 %v95
  %v447 = vunpack.c.l.b16 %v96
  %v448 = vunpack.c.h.b16 %v96
  %v449 = vunpack.c.l.b16 %v97
  %v450 = vunpack.c.l.b16 %v98
  %v451 = vunpack.c.h.b16 %v98
  %v452 = vunpack.c.l.b16 %v99
  %v453 = vunpack.c.l.b16 %v100
  %v454 = vunpack.c.h.b16 %v100
  %v455 = vunpack.c.l.b16 %v101
  %v456 = vunpack.c.l.b16 %v102
  %v457 = vunpack.c.h.b16 %v102
  %v458 = vunpack.c.l.b16 %v103
  %v459 = vunpack.c.l.b16 %v104
  %v460 = vunpack.c.h.b16 %v104
  %v461 = vunpack.c.l.b16 %v105
  %v462 = vunpack.c.l.b16 %v106
  %v463 = vunpack.c.h.b16 %v106
  %v464 = vunpack.c.l.b16 %v107
  %v465 = vunpack.c.l.b16 %v108
  %v466 = vunpack.c.h.b16 %v108
  %v467 = vunpack.c.l.b16 %v109
  %v468 = vunpack.c.l.b16 %v110
  %v469 = vunpack.c.h.b16 %v110
  %v470 = vunpack.c.l.b16 %v111
  %v471 = vunpack.c.l.b16 %v112
  %v472 = vunpack.c.h.b16 %v112
  %v473 = vunpack.c.l.b16 %v113
  %v474 = vunpack.c.l.b16 %v114
  %v475 = vunpack.c.h.b16 %v114
  %v476 = vunpack.c.l.b16 %v115
  %v477 = vunpack.c.l.b16 %v116
  %v478 = vunpack.c.h.b16 %v116
  %v479 = vunpack.c.l.b16 %v117
  %v480 = vunpack.c.l.b16 %v118
  %v481 = vunpack.c.h.b16 %v118
  %v482 = vunpack.c.l.b16 %v119
  %v483 = vunpack.c.l.b16 %v120
  %v484 = vunpack.c.h.b16 %v120
  %v485 = vunpack.c.l.b16 %v121
  %v486 = vunpack.c.l.b16 %v122
  %v487 = vunpack.c.h.b16 %v122
  %v488 = vunpack.c.l.b16 %v123
  %v489 = vunpack.c.l.b16 %v124
  %v490 = vunpack.c.h.b16 %v124
  %v491 = vunpack.c.l.b16 %v125
  %v492 = vunpack.c.l.b16 %v126
  %v493 = vunpack.c.h.b16 %v126
  %v494 = vunpack.c.l.b16 %v127
  %v495 = vunpack.c.l.b16 %v128
  %v496 = vunpack.c.h.b16 %v128
  %v497 = vunpack.c.l.b16 %v129
  %v498 = vunpack.c.l.b16 %v130
  %v499 = vunpack.c.h.b16 %v130
  %v500 = vunpack.c.l.b16 %v131
  %v501 = vunpack.c.l.b16 %v132
  %v502 = vunpack.c.h.b16 %v132
  %v503 = vunpack.c.l.b16 %v133
  %v504 = vunpack.c.l.b16 %v134
  %v505 = vunpack.c.h.b16 %v134
  %v506 = vunpack.c.l.b16 %v135
  %v507 = vunpack.c.l.b16 %v136
  %v508 = vunpack.c.h.b16 %v136
  %v509 = vunpack.c.l.b16 %v137
  %v510 = vunpack.c.l.b16 %v138
  %v511 = vunpack.c.h.b16 %v138
  %v512 = vunpack.c.l.b16 %v139
  %v513 = vunpack.c.l.b16 %v140
  %v514 = vunpack.c.h.b16 %v140
  %v515 = vunpack.c.l.b16 %v141
  %v516 = vpack.c.b16 %v327, %v324
  %v517 = vpack.c.b16 %v328, %v325
  %v518 = vpack.c.b16 %v329, %v326
  %v519 = vpack.c.b16 %v333, %v330
  %v520 = vpack.c.b16 %v334, %v331
  %v521 = vpack.c.b16 %v335, %v332
  %v522 = vpack.c.b16 %v339, %v336
  %v523 = vpack.c.b16 %v340, %v337
  %v524 = vpack.c.b16 %v341, %v338
  %v525 = vpack.c.b16 %v345, %v342
  %v526 = vpack.c.b16 %v346, %v343
  %v527 = vpack.c.b16 %v347, %v344
  %v528 = vpack.c.b16 %v351, %v348
  %v529 = vpack.c.b16 %v352, %v349
  %v530 = vpack.c.b16 %v353, %v350
  %v531 = vpack.c.b16 %v357, %v354
  %v532 = vpack.c.b16 %v358, %v355
  %v533 = vpack.c.b16 %v359, %v356
  %v534 = vpack.c.b16 %v363, %v360
  %v535 = vpack.c.b16 %v364, %v361
  %v536 = vpack.c.b16 %v365, %v362
  %v537 = vpack.c.b16 %v369, %v366
  %v538 = vpack.c.b16 %v370, %v367
  %v539 = vpack.c.b16 %v371, %v368
  %v540 = vpack.c.b16 %v375, %v372
  %v541 = vpack.c.b16 %v376, %v373
  %v542 = vpack.c.b16 %v377, %v374
  %v543 = vpack.c.b16 %v381, %v378
  %v544 = vpack.c.b16 %v382, %v379
  %v545 = vpack.c.b16 %v383, %v380
  %v546 = vpack.c.b16 %v387, %v384
  %v547 = vpack.c.b16 %v388, %v385
  %v548 = vpack.c.b16 %v389, %v386
  %v549 = vpack.c.b16 %v393, %v390
  %v550 = vpack.c.b16 %v394, %v391
  %v551 = vpack.c.b16 %v395, %v392
  %v552 = vpack.c.b16 %v399, %v396
  %v553 = vpack.c.b16 %v400, %v397
  %v554 = vpack.c.b16 %v401, %v398
  %v555 = vpack.c.b16 %v405, %v402
  %v556 = vpack.c.b16 %v406, %v403
  %v557 = vpack.c.b16 %v407, %v404
  %v558 = vpack.c.b16 %v411, %v408
  %v559 = vpack.c.b16 %v412, %v409
  %v560 = vpack.c.b16 %v413, %v410
  %v561 = vpack.c.b16 %v417, %v414
  %v562 = vpack.c.b16 %v418, %v415
  %v563 = vpack.c.b16 %v419, %v416
  %v564 = vpack.c.b16 %v423, %v420
  %v565 = vpack.c.b16 %v424, %v421
  %v566 = vpack.c.b16 %v425, %v422
  %v567 = vpack.c.b16 %v429, %v426
  %v568 = vpack.c.b16 %v430, %v427
  %v569 = vpack.c.b16 %v431, %v428
  %v570 = vpack.c.b16 %v435, %v432
  %v571 = vpack.c.b16 %v436, %v433
  %v572 = vpack.c.b16 %v437, %v434
  %v573 = vpack.c.b16 %v441, %v438
  %v574 = vpack.c.b16 %v442, %v439
  %v575 = vpack.c.b16 %v443, %v440
  %v576 = vpack.c.b16 %v447, %v444
  %v577 = vpack.c.b16 %v448, %v445
  %v578 = vpack.c.b16 %v449, %v446
  %v579 = vpack.c.b16 %v453, %v450
  %v580 = vpack.c.b16 %v454, %v451
  %v581 = vpack.c.b16 %v455, %v452
  %v582 = vpack.c.b16 %v459, %v456
  %v583 = vpack.c.b16 %v460, %v457
  %v584 = vpack.c.b16 %v461, %v458
  %v585 = vpack.c.b16 %v465, %v462
  %v586 = vpack.c.b16 %v466, %v463
  %v587 = vpack.c.b16 %v467, %v464
  %v588 = vpack.c.b16 %v471, %v468
  %v589 = vpack.c.b16 %v472, %v469
  %v590 = vpack.c.b16 %v473, %v470
  %v591 = vpack.c.b16 %v477, %v474
  %v592 = vpack.c.b16 %v478, %v475
  %v593 = vpack.c.b16 %v479, %v476
  %v594 = vpack.c.b16 %v483, %v480
  %v595 = vpack.c.b16 %v484, %v481
  %v596 = vpack.c.b16 %v485, %v482
  %v597 = vpack.c.b16 %v489, %v486
  %v598 = vpack.c.b16 %v490, %v487
  %v599 = vpack.c.b16 %v491, %v488
  %v600 = vpack.c.b16 %v495, %v492
  %v601 = vpack.c.b16 %v496, %v493
  %v602 = vpack.c.b16 %v497, %v494
  %v603 = vpack.c.b16 %v501, %v498
  %v604 = vpack.c.b16 %v502, %v499
  %v605 = vpack.c.b16 %v503, %v500
  %v606 = vpack.c.b16 %v507, %v504
  %v607 = vpack.c.b16 %v508, %v505
  %v608 = vpack.c.b16 %v509, %v506
  %v609 = vpack.c.b16 %v513, %v510
  %v610 = vpack.c.b16 %v514, %v511
  %v611 = vpack.c.b16 %v515, %v512
  %vm676 = vcmask 261120
  %v678 = vsel %vm676, %v518, 0
  %v681 = vsel %vm676, %v521, 0
  %v684 = vsel %vm676, %v524, 0
  %v687 = vsel %vm676, %v527, 0
  %v690 = vsel %vm676, %v530, 0
  %v693 = vsel %vm676, %v533, 0
  %v696 = vsel %vm676, %v536, 0
  %v699 = vsel %vm676, %v539, 0
  %v702 = vsel %vm676, %v542, 0
  %v705 = vsel %vm676, %v545, 0
  %v708 = vsel %vm676, %v548, 0
  %v711 = vsel %vm676, %v551, 0
  %v714 = vsel %vm676, %v554, 0
  %v717 = vsel %vm676, %v557, 0
  %v720 = vsel %vm676, %v560, 0
  %v723 = vsel %vm676, %v563, 0
  %v726 = vsel %vm676, %v566, 0
  %v729 = vsel %vm676, %v569, 0
  %v732 = vsel %vm676, %v572, 0
  %v735 = vsel %vm676, %v575, 0
  %v738 = vsel %vm676, %v578, 0
  %v741 = vsel %vm676, %v581, 0
  %v744 = vsel %vm676, %v584, 0
  %v747 = vsel %vm676, %v587, 0
  %v750 = vsel %vm676, %v590, 0
  %v753 = vsel %vm676, %v593, 0
  %v756 = vsel %vm676, %v596, 0
  %v759 = vsel %vm676, %v599, 0
  %v762 = vsel %vm676, %v602, 0
  %v765 = vsel %vm676, %v605, 0
  %v768 = vsel %vm676, %v608, 0
  %v771 = vsel %vm676, %v611, 0
  %773 = vmatpush.bf16.msra.mxu0 %v185
  %774 = vmatpush.bf16.msra.mxu0 %v184
  %775 = vmatpush.bf16.msra.mxu0 %v183
  %776 = vmatpush.bf16.msra.mxu0 %v182
  %777 = vmatpush.bf16.msra.mxu0 %v181
  %778 = vmatpush.bf16.msra.mxu0 %v180
  %779 = vmatpush.bf16.msra.mxu0 %v179
  %780 = vmatpush.bf16.msra.mxu0 %v178
  %781 = vmatmul.bf16.gmra.mxu0 %v516
  %v782 = vpop.f32.mrf.mxu0
  %v783 = vadd.f32 0.0, %v782
  %v784 = vpop.f32.mrf.mxu0
  %v785 = vadd.f32 0.0, %v784
  %786 = vmatmul.bf16.gmra.mxu0 %v519
  %v787 = vpop.f32.mrf.mxu0
  %v788 = vadd.f32 0.0, %v787
  %v789 = vpop.f32.mrf.mxu0
  %v790 = vadd.f32 0.0, %v789
  %791 = vmatmul.bf16.gmra.mxu0 %v522
  %v792 = vpop.f32.mrf.mxu0
  %v793 = vadd.f32 0.0, %v792
  %v794 = vpop.f32.mrf.mxu0
  %v795 = vadd.f32 0.0, %v794
  %796 = vmatmul.bf16.gmra.mxu0 %v525
  %v797 = vpop.f32.mrf.mxu0
  %v798 = vadd.f32 0.0, %v797
  %v799 = vpop.f32.mrf.mxu0
  %v800 = vadd.f32 0.0, %v799
  %801 = vmatmul.bf16.gmra.mxu0 %v528
  %v802 = vpop.f32.mrf.mxu0
  %v803 = vadd.f32 0.0, %v802
  %v804 = vpop.f32.mrf.mxu0
  %v805 = vadd.f32 0.0, %v804
  %806 = vmatmul.bf16.gmra.mxu0 %v531
  %v807 = vpop.f32.mrf.mxu0
  %v808 = vadd.f32 0.0, %v807
  %v809 = vpop.f32.mrf.mxu0
  %v810 = vadd.f32 0.0, %v809
  %811 = vmatmul.bf16.gmra.mxu0 %v534
  %v812 = vpop.f32.mrf.mxu0
  %v813 = vadd.f32 0.0, %v812
  %v814 = vpop.f32.mrf.mxu0
  %v815 = vadd.f32 0.0, %v814
  %816 = vmatmul.bf16.gmra.mxu0 %v537
  %v817 = vpop.f32.mrf.mxu0
  %v818 = vadd.f32 0.0, %v817
  %v819 = vpop.f32.mrf.mxu0
  %v820 = vadd.f32 0.0, %v819
  %821 = vmatmul.bf16.gmra.mxu0 %v540
  %v822 = vpop.f32.mrf.mxu0
  %v823 = vadd.f32 0.0, %v822
  %v824 = vpop.f32.mrf.mxu0
  %v825 = vadd.f32 0.0, %v824
  %826 = vmatmul.bf16.gmra.mxu0 %v543
  %v827 = vpop.f32.mrf.mxu0
  %v828 = vadd.f32 0.0, %v827
  %v829 = vpop.f32.mrf.mxu0
  %v830 = vadd.f32 0.0, %v829
  %831 = vmatmul.bf16.gmra.mxu0 %v546
  %v832 = vpop.f32.mrf.mxu0
  %v833 = vadd.f32 0.0, %v832
  %v834 = vpop.f32.mrf.mxu0
  %v835 = vadd.f32 0.0, %v834
  %836 = vmatmul.bf16.gmra.mxu0 %v549
  %v837 = vpop.f32.mrf.mxu0
  %v838 = vadd.f32 0.0, %v837
  %v839 = vpop.f32.mrf.mxu0
  %v840 = vadd.f32 0.0, %v839
  %841 = vmatmul.bf16.gmra.mxu0 %v552
  %v842 = vpop.f32.mrf.mxu0
  %v843 = vadd.f32 0.0, %v842
  %v844 = vpop.f32.mrf.mxu0
  %v845 = vadd.f32 0.0, %v844
  %846 = vmatmul.bf16.gmra.mxu0 %v555
  %v847 = vpop.f32.mrf.mxu0
  %v848 = vadd.f32 0.0, %v847
  %v849 = vpop.f32.mrf.mxu0
  %v850 = vadd.f32 0.0, %v849
  %851 = vmatmul.bf16.gmra.mxu0 %v558
  %v852 = vpop.f32.mrf.mxu0
  %v853 = vadd.f32 0.0, %v852
  %v854 = vpop.f32.mrf.mxu0
  %v855 = vadd.f32 0.0, %v854
  %856 = vmatmul.bf16.gmra.mxu0 %v561
  %v857 = vpop.f32.mrf.mxu0
  %v858 = vadd.f32 0.0, %v857
  %v859 = vpop.f32.mrf.mxu0
  %v860 = vadd.f32 0.0, %v859
  %861 = vmatmul.bf16.gmra.mxu0 %v564
  %v862 = vpop.f32.mrf.mxu0
  %v863 = vadd.f32 0.0, %v862
  %v864 = vpop.f32.mrf.mxu0
  %v865 = vadd.f32 0.0, %v864
  %866 = vmatmul.bf16.gmra.mxu0 %v567
  %v867 = vpop.f32.mrf.mxu0
  %v868 = vadd.f32 0.0, %v867
  %v869 = vpop.f32.mrf.mxu0
  %v870 = vadd.f32 0.0, %v869
  %871 = vmatmul.bf16.gmra.mxu0 %v570
  %v872 = vpop.f32.mrf.mxu0
  %v873 = vadd.f32 0.0, %v872
  %v874 = vpop.f32.mrf.mxu0
  %v875 = vadd.f32 0.0, %v874
  %876 = vmatmul.bf16.gmra.mxu0 %v573
  %v877 = vpop.f32.mrf.mxu0
  %v878 = vadd.f32 0.0, %v877
  %v879 = vpop.f32.mrf.mxu0
  %v880 = vadd.f32 0.0, %v879
  %881 = vmatmul.bf16.gmra.mxu0 %v576
  %v882 = vpop.f32.mrf.mxu0
  %v883 = vadd.f32 0.0, %v882
  %v884 = vpop.f32.mrf.mxu0
  %v885 = vadd.f32 0.0, %v884
  %886 = vmatmul.bf16.gmra.mxu0 %v579
  %v887 = vpop.f32.mrf.mxu0
  %v888 = vadd.f32 0.0, %v887
  %v889 = vpop.f32.mrf.mxu0
  %v890 = vadd.f32 0.0, %v889
  %891 = vmatmul.bf16.gmra.mxu0 %v582
  %v892 = vpop.f32.mrf.mxu0
  %v893 = vadd.f32 0.0, %v892
  %v894 = vpop.f32.mrf.mxu0
  %v895 = vadd.f32 0.0, %v894
  %896 = vmatmul.bf16.gmra.mxu0 %v585
  %v897 = vpop.f32.mrf.mxu0
  %v898 = vadd.f32 0.0, %v897
  %v899 = vpop.f32.mrf.mxu0
  %v900 = vadd.f32 0.0, %v899
  %901 = vmatmul.bf16.gmra.mxu0 %v588
  %v902 = vpop.f32.mrf.mxu0
  %v903 = vadd.f32 0.0, %v902
  %v904 = vpop.f32.mrf.mxu0
  %v905 = vadd.f32 0.0, %v904
  %906 = vmatmul.bf16.gmra.mxu0 %v591
  %v907 = vpop.f32.mrf.mxu0
  %v908 = vadd.f32 0.0, %v907
  %v909 = vpop.f32.mrf.mxu0
  %v910 = vadd.f32 0.0, %v909
  %911 = vmatmul.bf16.gmra.mxu0 %v594
  %v912 = vpop.f32.mrf.mxu0
  %v913 = vadd.f32 0.0, %v912
  %v914 = vpop.f32.mrf.mxu0
  %v915 = vadd.f32 0.0, %v914
  %916 = vmatmul.bf16.gmra.mxu0 %v597
  %v917 = vpop.f32.mrf.mxu0
  %v918 = vadd.f32 0.0, %v917
  %v919 = vpop.f32.mrf.mxu0
  %v920 = vadd.f32 0.0, %v919
  %921 = vmatmul.bf16.gmra.mxu0 %v600
  %v922 = vpop.f32.mrf.mxu0
  %v923 = vadd.f32 0.0, %v922
  %v924 = vpop.f32.mrf.mxu0
  %v925 = vadd.f32 0.0, %v924
  %926 = vmatmul.bf16.gmra.mxu0 %v603
  %v927 = vpop.f32.mrf.mxu0
  %v928 = vadd.f32 0.0, %v927
  %v929 = vpop.f32.mrf.mxu0
  %v930 = vadd.f32 0.0, %v929
  %931 = vmatmul.bf16.gmra.mxu0 %v606
  %v932 = vpop.f32.mrf.mxu0
  %v933 = vadd.f32 0.0, %v932
  %v934 = vpop.f32.mrf.mxu0
  %v935 = vadd.f32 0.0, %v934
  %936 = vmatmul.bf16.gmra.mxu0 %v609
  %v937 = vpop.f32.mrf.mxu0
  %v938 = vadd.f32 0.0, %v937
  %v939 = vpop.f32.mrf.mxu0
  %v940 = vadd.f32 0.0, %v939
  %941 = vdwg.mxu0
  %942 = vmatpush.bf16.msra.mxu0 %v193
  %943 = vmatpush.bf16.msra.mxu0 %v192
  %944 = vmatpush.bf16.msra.mxu0 %v191
  %945 = vmatpush.bf16.msra.mxu0 %v190
  %946 = vmatpush.bf16.msra.mxu0 %v189
  %947 = vmatpush.bf16.msra.mxu0 %v188
  %948 = vmatpush.bf16.msra.mxu0 %v187
  %949 = vmatpush.bf16.msra.mxu0 %v186
  %950 = vmatmul.bf16.gmra.mxu0 %v517
  %v951 = vpop.f32.mrf.mxu0
  %v952 = vadd.f32 %v783, %v951
  %v953 = vpop.f32.mrf.mxu0
  %v954 = vadd.f32 %v785, %v953
  %955 = vmatmul.bf16.gmra.mxu0 %v520
  %v956 = vpop.f32.mrf.mxu0
  %v957 = vadd.f32 %v788, %v956
  %v958 = vpop.f32.mrf.mxu0
  %v959 = vadd.f32 %v790, %v958
  %960 = vmatmul.bf16.gmra.mxu0 %v523
  %v961 = vpop.f32.mrf.mxu0
  %v962 = vadd.f32 %v793, %v961
  %v963 = vpop.f32.mrf.mxu0
  %v964 = vadd.f32 %v795, %v963
  %965 = vmatmul.bf16.gmra.mxu0 %v526
  %v966 = vpop.f32.mrf.mxu0
  %v967 = vadd.f32 %v798, %v966
  %v968 = vpop.f32.mrf.mxu0
  %v969 = vadd.f32 %v800, %v968
  %970 = vmatmul.bf16.gmra.mxu0 %v529
  %v971 = vpop.f32.mrf.mxu0
  %v972 = vadd.f32 %v803, %v971
  %v973 = vpop.f32.mrf.mxu0
  %v974 = vadd.f32 %v805, %v973
  %975 = vmatmul.bf16.gmra.mxu0 %v532
  %v976 = vpop.f32.mrf.mxu0
  %v977 = vadd.f32 %v808, %v976
  %v978 = vpop.f32.mrf.mxu0
  %v979 = vadd.f32 %v810, %v978
  %980 = vmatmul.bf16.gmra.mxu0 %v535
  %v981 = vpop.f32.mrf.mxu0
  %v982 = vadd.f32 %v813, %v981
  %v983 = vpop.f32.mrf.mxu0
  %v984 = vadd.f32 %v815, %v983
  %985 = vmatmul.bf16.gmra.mxu0 %v538
  %v986 = vpop.f32.mrf.mxu0
  %v987 = vadd.f32 %v818, %v986
  %v988 = vpop.f32.mrf.mxu0
  %v989 = vadd.f32 %v820, %v988
  %990 = vmatmul.bf16.gmra.mxu0 %v541
  %v991 = vpop.f32.mrf.mxu0
  %v992 = vadd.f32 %v823, %v991
  %v993 = vpop.f32.mrf.mxu0
  %v994 = vadd.f32 %v825, %v993
  %995 = vmatmul.bf16.gmra.mxu0 %v544
  %v996 = vpop.f32.mrf.mxu0
  %v997 = vadd.f32 %v828, %v996
  %v998 = vpop.f32.mrf.mxu0
  %v999 = vadd.f32 %v830, %v998
  %1000 = vmatmul.bf16.gmra.mxu0 %v547
  %v1001 = vpop.f32.mrf.mxu0
  %v1002 = vadd.f32 %v833, %v1001
  %v1003 = vpop.f32.mrf.mxu0
  %v1004 = vadd.f32 %v835, %v1003
  %1005 = vmatmul.bf16.gmra.mxu0 %v550
  %v1006 = vpop.f32.mrf.mxu0
  %v1007 = vadd.f32 %v838, %v1006
  %v1008 = vpop.f32.mrf.mxu0
  %v1009 = vadd.f32 %v840, %v1008
  %1010 = vmatmul.bf16.gmra.mxu0 %v553
  %v1011 = vpop.f32.mrf.mxu0
  %v1012 = vadd.f32 %v843, %v1011
  %v1013 = vpop.f32.mrf.mxu0
  %v1014 = vadd.f32 %v845, %v1013
  %1015 = vmatmul.bf16.gmra.mxu0 %v556
  %v1016 = vpop.f32.mrf.mxu0
  %v1017 = vadd.f32 %v848, %v1016
  %v1018 = vpop.f32.mrf.mxu0
  %v1019 = vadd.f32 %v850, %v1018
  %1020 = vmatmul.bf16.gmra.mxu0 %v559
  %v1021 = vpop.f32.mrf.mxu0
  %v1022 = vadd.f32 %v853, %v1021
  %v1023 = vpop.f32.mrf.mxu0
  %v1024 = vadd.f32 %v855, %v1023
  %1025 = vmatmul.bf16.gmra.mxu0 %v562
  %v1026 = vpop.f32.mrf.mxu0
  %v1027 = vadd.f32 %v858, %v1026
  %v1028 = vpop.f32.mrf.mxu0
  %v1029 = vadd.f32 %v860, %v1028
  %1030 = vmatmul.bf16.gmra.mxu0 %v565
  %v1031 = vpop.f32.mrf.mxu0
  %v1032 = vadd.f32 %v863, %v1031
  %v1033 = vpop.f32.mrf.mxu0
  %v1034 = vadd.f32 %v865, %v1033
  %1035 = vmatmul.bf16.gmra.mxu0 %v568
  %v1036 = vpop.f32.mrf.mxu0
  %v1037 = vadd.f32 %v868, %v1036
  %v1038 = vpop.f32.mrf.mxu0
  %v1039 = vadd.f32 %v870, %v1038
  %1040 = vmatmul.bf16.gmra.mxu0 %v571
  %v1041 = vpop.f32.mrf.mxu0
  %v1042 = vadd.f32 %v873, %v1041
  %v1043 = vpop.f32.mrf.mxu0
  %v1044 = vadd.f32 %v875, %v1043
  %1045 = vmatmul.bf16.gmra.mxu0 %v574
  %v1046 = vpop.f32.mrf.mxu0
  %v1047 = vadd.f32 %v878, %v1046
  %v1048 = vpop.f32.mrf.mxu0
  %v1049 = vadd.f32 %v880, %v1048
  %1050 = vmatmul.bf16.gmra.mxu0 %v577
  %v1051 = vpop.f32.mrf.mxu0
  %v1052 = vadd.f32 %v883, %v1051
  %v1053 = vpop.f32.mrf.mxu0
  %v1054 = vadd.f32 %v885, %v1053
  %1055 = vmatmul.bf16.gmra.mxu0 %v580
  %v1056 = vpop.f32.mrf.mxu0
  %v1057 = vadd.f32 %v888, %v1056
  %v1058 = vpop.f32.mrf.mxu0
  %v1059 = vadd.f32 %v890, %v1058
  %1060 = vmatmul.bf16.gmra.mxu0 %v583
  %v1061 = vpop.f32.mrf.mxu0
  %v1062 = vadd.f32 %v893, %v1061
  %v1063 = vpop.f32.mrf.mxu0
  %v1064 = vadd.f32 %v895, %v1063
  %1065 = vmatmul.bf16.gmra.mxu0 %v586
  %v1066 = vpop.f32.mrf.mxu0
  %v1067 = vadd.f32 %v898, %v1066
  %v1068 = vpop.f32.mrf.mxu0
  %v1069 = vadd.f32 %v900, %v1068
  %1070 = vmatmul.bf16.gmra.mxu0 %v589
  %v1071 = vpop.f32.mrf.mxu0
  %v1072 = vadd.f32 %v903, %v1071
  %v1073 = vpop.f32.mrf.mxu0
  %v1074 = vadd.f32 %v905, %v1073
  %1075 = vmatmul.bf16.gmra.mxu0 %v592
  %v1076 = vpop.f32.mrf.mxu0
  %v1077 = vadd.f32 %v908, %v1076
  %v1078 = vpop.f32.mrf.mxu0
  %v1079 = vadd.f32 %v910, %v1078
  %1080 = vmatmul.bf16.gmra.mxu0 %v595
  %v1081 = vpop.f32.mrf.mxu0
  %v1082 = vadd.f32 %v913, %v1081
  %v1083 = vpop.f32.mrf.mxu0
  %v1084 = vadd.f32 %v915, %v1083
  %1085 = vmatmul.bf16.gmra.mxu0 %v598
  %v1086 = vpop.f32.mrf.mxu0
  %v1087 = vadd.f32 %v918, %v1086
  %v1088 = vpop.f32.mrf.mxu0
  %v1089 = vadd.f32 %v920, %v1088
  %1090 = vmatmul.bf16.gmra.mxu0 %v601
  %v1091 = vpop.f32.mrf.mxu0
  %v1092 = vadd.f32 %v923, %v1091
  %v1093 = vpop.f32.mrf.mxu0
  %v1094 = vadd.f32 %v925, %v1093
  %1095 = vmatmul.bf16.gmra.mxu0 %v604
  %v1096 = vpop.f32.mrf.mxu0
  %v1097 = vadd.f32 %v928, %v1096
  %v1098 = vpop.f32.mrf.mxu0
  %v1099 = vadd.f32 %v930, %v1098
  %1100 = vmatmul.bf16.gmra.mxu0 %v607
  %v1101 = vpop.f32.mrf.mxu0
  %v1102 = vadd.f32 %v933, %v1101
  %v1103 = vpop.f32.mrf.mxu0
  %v1104 = vadd.f32 %v935, %v1103
  %1105 = vmatmul.bf16.gmra.mxu0 %v610
  %v1106 = vpop.f32.mrf.mxu0
  %v1107 = vadd.f32 %v938, %v1106
  %v1108 = vpop.f32.mrf.mxu0
  %v1109 = vadd.f32 %v940, %v1108
  %1110 = vdwg.mxu0
  %1111 = vmatpush.bf16.msra.mxu0 0
  %1112 = vmatpush.bf16.msra.mxu0 0
  %1113 = vmatpush.bf16.msra.mxu0 0
  %1114 = vmatpush.bf16.msra.mxu0 0
  %1115 = vmatpush.bf16.msra.mxu0 0
  %1116 = vmatpush.bf16.msra.mxu0 0
  %1117 = vmatpush.bf16.msra.mxu0 %v195
  %1118 = vmatpush.bf16.msra.mxu0 %v194
  %1119 = vmatmul.bf16.gmra.mxu0 %v678
  %v1120 = vpop.f32.mrf.mxu0
  %v1121 = vadd.f32 %v952, %v1120
  %v1122 = vpop.f32.mrf.mxu0
  %v1123 = vadd.f32 %v954, %v1122
  %1124 = vmatmul.bf16.gmra.mxu0 %v681
  %v1125 = vpop.f32.mrf.mxu0
  %v1126 = vadd.f32 %v957, %v1125
  %v1127 = vpop.f32.mrf.mxu0
  %v1128 = vadd.f32 %v959, %v1127
  %1129 = vmatmul.bf16.gmra.mxu0 %v684
  %v1130 = vpop.f32.mrf.mxu0
  %v1131 = vadd.f32 %v962, %v1130
  %v1132 = vpop.f32.mrf.mxu0
  %v1133 = vadd.f32 %v964, %v1132
  %1134 = vmatmul.bf16.gmra.mxu0 %v687
  %v1135 = vpop.f32.mrf.mxu0
  %v1136 = vadd.f32 %v967, %v1135
  %v1137 = vpop.f32.mrf.mxu0
  %v1138 = vadd.f32 %v969, %v1137
  %1139 = vmatmul.bf16.gmra.mxu0 %v690
  %v1140 = vpop.f32.mrf.mxu0
  %v1141 = vadd.f32 %v972, %v1140
  %v1142 = vpop.f32.mrf.mxu0
  %v1143 = vadd.f32 %v974, %v1142
  %1144 = vmatmul.bf16.gmra.mxu0 %v693
  %v1145 = vpop.f32.mrf.mxu0
  %v1146 = vadd.f32 %v977, %v1145
  %v1147 = vpop.f32.mrf.mxu0
  %v1148 = vadd.f32 %v979, %v1147
  %1149 = vmatmul.bf16.gmra.mxu0 %v696
  %v1150 = vpop.f32.mrf.mxu0
  %v1151 = vadd.f32 %v982, %v1150
  %v1152 = vpop.f32.mrf.mxu0
  %v1153 = vadd.f32 %v984, %v1152
  %1154 = vmatmul.bf16.gmra.mxu0 %v699
  %v1155 = vpop.f32.mrf.mxu0
  %v1156 = vadd.f32 %v987, %v1155
  %v1157 = vpop.f32.mrf.mxu0
  %v1158 = vadd.f32 %v989, %v1157
  %1159 = vmatmul.bf16.gmra.mxu0 %v702
  %v1160 = vpop.f32.mrf.mxu0
  %v1161 = vadd.f32 %v992, %v1160
  %v1162 = vpop.f32.mrf.mxu0
  %v1163 = vadd.f32 %v994, %v1162
  %1164 = vmatmul.bf16.gmra.mxu0 %v705
  %v1165 = vpop.f32.mrf.mxu0
  %v1166 = vadd.f32 %v997, %v1165
  %v1167 = vpop.f32.mrf.mxu0
  %v1168 = vadd.f32 %v999, %v1167
  %1169 = vmatmul.bf16.gmra.mxu0 %v708
  %v1170 = vpop.f32.mrf.mxu0
  %v1171 = vadd.f32 %v1002, %v1170
  %v1172 = vpop.f32.mrf.mxu0
  %v1173 = vadd.f32 %v1004, %v1172
  %1174 = vmatmul.bf16.gmra.mxu0 %v711
  %v1175 = vpop.f32.mrf.mxu0
  %v1176 = vadd.f32 %v1007, %v1175
  %v1177 = vpop.f32.mrf.mxu0
  %v1178 = vadd.f32 %v1009, %v1177
  %1179 = vmatmul.bf16.gmra.mxu0 %v714
  %v1180 = vpop.f32.mrf.mxu0
  %v1181 = vadd.f32 %v1012, %v1180
  %v1182 = vpop.f32.mrf.mxu0
  %v1183 = vadd.f32 %v1014, %v1182
  %1184 = vmatmul.bf16.gmra.mxu0 %v717
  %v1185 = vpop.f32.mrf.mxu0
  %v1186 = vadd.f32 %v1017, %v1185
  %v1187 = vpop.f32.mrf.mxu0
  %v1188 = vadd.f32 %v1019, %v1187
  %1189 = vmatmul.bf16.gmra.mxu0 %v720
  %v1190 = vpop.f32.mrf.mxu0
  %v1191 = vadd.f32 %v1022, %v1190
  %v1192 = vpop.f32.mrf.mxu0
  %v1193 = vadd.f32 %v1024, %v1192
  %1194 = vmatmul.bf16.gmra.mxu0 %v723
  %v1195 = vpop.f32.mrf.mxu0
  %v1196 = vadd.f32 %v1027, %v1195
  %v1197 = vpop.f32.mrf.mxu0
  %v1198 = vadd.f32 %v1029, %v1197
  %1199 = vmatmul.bf16.gmra.mxu0 %v726
  %v1200 = vpop.f32.mrf.mxu0
  %v1201 = vadd.f32 %v1032, %v1200
  %v1202 = vpop.f32.mrf.mxu0
  %v1203 = vadd.f32 %v1034, %v1202
  %1204 = vmatmul.bf16.gmra.mxu0 %v729
  %v1205 = vpop.f32.mrf.mxu0
  %v1206 = vadd.f32 %v1037, %v1205
  %v1207 = vpop.f32.mrf.mxu0
  %v1208 = vadd.f32 %v1039, %v1207
  %1209 = vmatmul.bf16.gmra.mxu0 %v732
  %v1210 = vpop.f32.mrf.mxu0
  %v1211 = vadd.f32 %v1042, %v1210
  %v1212 = vpop.f32.mrf.mxu0
  %v1213 = vadd.f32 %v1044, %v1212
  %1214 = vmatmul.bf16.gmra.mxu0 %v735
  %v1215 = vpop.f32.mrf.mxu0
  %v1216 = vadd.f32 %v1047, %v1215
  %v1217 = vpop.f32.mrf.mxu0
  %v1218 = vadd.f32 %v1049, %v1217
  %1219 = vmatmul.bf16.gmra.mxu0 %v738
  %v1220 = vpop.f32.mrf.mxu0
  %v1221 = vadd.f32 %v1052, %v1220
  %v1222 = vpop.f32.mrf.mxu0
  %v1223 = vadd.f32 %v1054, %v1222
  %1224 = vmatmul.bf16.gmra.mxu0 %v741
  %v1225 = vpop.f32.mrf.mxu0
  %v1226 = vadd.f32 %v1057, %v1225
  %v1227 = vpop.f32.mrf.mxu0
  %v1228 = vadd.f32 %v1059, %v1227
  %1229 = vmatmul.bf16.gmra.mxu0 %v744
  %v1230 = vpop.f32.mrf.mxu0
  %v1231 = vadd.f32 %v1062, %v1230
  %v1232 = vpop.f32.mrf.mxu0
  %v1233 = vadd.f32 %v1064, %v1232
  %1234 = vmatmul.bf16.gmra.mxu0 %v747
  %v1235 = vpop.f32.mrf.mxu0
  %v1236 = vadd.f32 %v1067, %v1235
  %v1237 = vpop.f32.mrf.mxu0
  %v1238 = vadd.f32 %v1069, %v1237
  %1239 = vmatmul.bf16.gmra.mxu0 %v750
  %v1240 = vpop.f32.mrf.mxu0
  %v1241 = vadd.f32 %v1072, %v1240
  %v1242 = vpop.f32.mrf.mxu0
  %v1243 = vadd.f32 %v1074, %v1242
  %1244 = vmatmul.bf16.gmra.mxu0 %v753
  %v1245 = vpop.f32.mrf.mxu0
  %v1246 = vadd.f32 %v1077, %v1245
  %v1247 = vpop.f32.mrf.mxu0
  %v1248 = vadd.f32 %v1079, %v1247
  %1249 = vmatmul.bf16.gmra.mxu0 %v756
  %v1250 = vpop.f32.mrf.mxu0
  %v1251 = vadd.f32 %v1082, %v1250
  %v1252 = vpop.f32.mrf.mxu0
  %v1253 = vadd.f32 %v1084, %v1252
  %1254 = vmatmul.bf16.gmra.mxu0 %v759
  %v1255 = vpop.f32.mrf.mxu0
  %v1256 = vadd.f32 %v1087, %v1255
  %v1257 = vpop.f32.mrf.mxu0
  %v1258 = vadd.f32 %v1089, %v1257
  %1259 = vmatmul.bf16.gmra.mxu0 %v762
  %v1260 = vpop.f32.mrf.mxu0
  %v1261 = vadd.f32 %v1092, %v1260
  %v1262 = vpop.f32.mrf.mxu0
  %v1263 = vadd.f32 %v1094, %v1262
  %1264 = vmatmul.bf16.gmra.mxu0 %v765
  %v1265 = vpop.f32.mrf.mxu0
  %v1266 = vadd.f32 %v1097, %v1265
  %v1267 = vpop.f32.mrf.mxu0
  %v1268 = vadd.f32 %v1099, %v1267
  %1269 = vmatmul.bf16.gmra.mxu0 %v768
  %v1270 = vpop.f32.mrf.mxu0
  %v1271 = vadd.f32 %v1102, %v1270
  %v1272 = vpop.f32.mrf.mxu0
  %v1273 = vadd.f32 %v1104, %v1272
  %1274 = vmatmul.bf16.gmra.mxu0 %v771
  %v1275 = vpop.f32.mrf.mxu0
  %v1276 = vadd.f32 %v1107, %v1275
  %v1277 = vpop.f32.mrf.mxu0
  %v1278 = vadd.f32 %v1109, %v1277
  %1279 = vdwg.mxu0
  %1280 = vst.msk [vmem:[%s2] sm:$0xff] %vm676, %v1121
  %1281 = vst.msk [vmem:[%s2 + $0x8] sm:$0xff] %vm676, %v1123
  %1282 = vst.msk [vmem:[%s2 + $0x10] sm:$0xff] %vm676, %v1126
  %1283 = vst.msk [vmem:[%s2 + $0x18] sm:$0xff] %vm676, %v1128
  %1284 = vst.msk [vmem:[%s2 + $0x20] sm:$0xff] %vm676, %v1131
  %1285 = vst.msk [vmem:[%s2 + $0x28] sm:$0xff] %vm676, %v1133
  %1286 = vst.msk [vmem:[%s2 + $0x30] sm:$0xff] %vm676, %v1136
  %1287 = vst.msk [vmem:[%s2 + $0x38] sm:$0xff] %vm676, %v1138
  %1288 = vst.msk [vmem:[%s2 + $0x40] sm:$0xff] %vm676, %v1141
  %1289 = vst.msk [vmem:[%s2 + $0x48] sm:$0xff] %vm676, %v1143
  %1290 = vst.msk [vmem:[%s2 + $0x50] sm:$0xff] %vm676, %v1146
  %1291 = vst.msk [vmem:[%s2 + $0x58] sm:$0xff] %vm676, %v1148
  %1292 = vst.msk [vmem:[%s2 + $0x60] sm:$0xff] %vm676, %v1151
  %1293 = vst.msk [vmem:[%s2 + $0x68] sm:$0xff] %vm676, %v1153
  %1294 = vst.msk [vmem:[%s2 + $0x70] sm:$0xff] %vm676, %v1156
  %1295 = vst.msk [vmem:[%s2 + $0x78] sm:$0xff] %vm676, %v1158
  %1296 = vst.msk [vmem:[%s2 + $0x80] sm:$0xff] %vm676, %v1161
  %1297 = vst.msk [vmem:[%s2 + $0x88] sm:$0xff] %vm676, %v1163
  %1298 = vst.msk [vmem:[%s2 + $0x90] sm:$0xff] %vm676, %v1166
  %1299 = vst.msk [vmem:[%s2 + $0x98] sm:$0xff] %vm676, %v1168
  %1300 = vst.msk [vmem:[%s2 + $0xa0] sm:$0xff] %vm676, %v1171
  %1301 = vst.msk [vmem:[%s2 + $0xa8] sm:$0xff] %vm676, %v1173
  %1302 = vst.msk [vmem:[%s2 + $0xb0] sm:$0xff] %vm676, %v1176
  %1303 = vst.msk [vmem:[%s2 + $0xb8] sm:$0xff] %vm676, %v1178
  %1304 = vst.msk [vmem:[%s2 + $0xc0] sm:$0xff] %vm676, %v1181
  %1305 = vst.msk [vmem:[%s2 + $0xc8] sm:$0xff] %vm676, %v1183
  %1306 = vst.msk [vmem:[%s2 + $0xd0] sm:$0xff] %vm676, %v1186
  %1307 = vst.msk [vmem:[%s2 + $0xd8] sm:$0xff] %vm676, %v1188
  %1308 = vst.msk [vmem:[%s2 + $0xe0] sm:$0xff] %vm676, %v1191
  %1309 = vst.msk [vmem:[%s2 + $0xe8] sm:$0xff] %vm676, %v1193
  %1310 = vst.msk [vmem:[%s2 + $0xf0] sm:$0xff] %vm676, %v1196
  %1311 = vst.msk [vmem:[%s2 + $0xf8] sm:$0xff] %vm676, %v1198
  %1312 = vst.msk [vmem:[%s2 + $0x100] sm:$0xff] %vm676, %v1201
  %1313 = vst.msk [vmem:[%s2 + $0x108] sm:$0xff] %vm676, %v1203
  %1314 = vst.msk [vmem:[%s2 + $0x110] sm:$0xff] %vm676, %v1206
  %1315 = vst.msk [vmem:[%s2 + $0x118] sm:$0xff] %vm676, %v1208
  %1316 = vst.msk [vmem:[%s2 + $0x120] sm:$0xff] %vm676, %v1211
  %1317 = vst.msk [vmem:[%s2 + $0x128] sm:$0xff] %vm676, %v1213
  %1318 = vst.msk [vmem:[%s2 + $0x130] sm:$0xff] %vm676, %v1216
  %1319 = vst.msk [vmem:[%s2 + $0x138] sm:$0xff] %vm676, %v1218
  %1320 = vst.msk [vmem:[%s2 + $0x140] sm:$0xff] %vm676, %v1221
  %1321 = vst.msk [vmem:[%s2 + $0x148] sm:$0xff] %vm676, %v1223
  %1322 = vst.msk [vmem:[%s2 + $0x150] sm:$0xff] %vm676, %v1226
  %1323 = vst.msk [vmem:[%s2 + $0x158] sm:$0xff] %vm676, %v1228
  %1324 = vst.msk [vmem:[%s2 + $0x160] sm:$0xff] %vm676, %v1231
  %1325 = vst.msk [vmem:[%s2 + $0x168] sm:$0xff] %vm676, %v1233
  %1326 = vst.msk [vmem:[%s2 + $0x170] sm:$0xff] %vm676, %v1236
  %1327 = vst.msk [vmem:[%s2 + $0x178] sm:$0xff] %vm676, %v1238
  %1328 = vst.msk [vmem:[%s2 + $0x180] sm:$0xff] %vm676, %v1241
  %1329 = vst.msk [vmem:[%s2 + $0x188] sm:$0xff] %vm676, %v1243
  %1330 = vst.msk [vmem:[%s2 + $0x190] sm:$0xff] %vm676, %v1246
  %1331 = vst.msk [vmem:[%s2 + $0x198] sm:$0xff] %vm676, %v1248
  %1332 = vst.msk [vmem:[%s2 + $0x1a0] sm:$0xff] %vm676, %v1251
  %1333 = vst.msk [vmem:[%s2 + $0x1a8] sm:$0xff] %vm676, %v1253
  %1334 = vst.msk [vmem:[%s2 + $0x1b0] sm:$0xff] %vm676, %v1256
  %1335 = vst.msk [vmem:[%s2 + $0x1b8] sm:$0xff] %vm676, %v1258
  %1336 = vst.msk [vmem:[%s2 + $0x1c0] sm:$0xff] %vm676, %v1261
  %1337 = vst.msk [vmem:[%s2 + $0x1c8] sm:$0xff] %vm676, %v1263
  %1338 = vst.msk [vmem:[%s2 + $0x1d0] sm:$0xff] %vm676, %v1266
  %1339 = vst.msk [vmem:[%s2 + $0x1d8] sm:$0xff] %vm676, %v1268
  %1340 = vst.msk [vmem:[%s2 + $0x1e0] sm:$0xff] %vm676, %v1271
  %1341 = vst.msk [vmem:[%s2 + $0x1e8] sm:$0xff] %vm676, %v1273
  %1342 = vst.msk [vmem:[%s2 + $0x1f0] sm:$0xff] %vm676, %v1276
  %1343 = vst.msk [vmem:[%s2 + $0x1f8] sm:$0xff] %vm676, %v1278
  %v1344 = vsel %vm676, %v1121, 0.0
  %v1345 = vsel %vm676, %v1123, 0.0
  %v1346 = vadd.f32 %v1344, %v1345
  %v1347 = vsel %vm676, %v1126, 0.0
  %v1348 = vadd.f32 %v1346, %v1347
  %v1349 = vsel %vm676, %v1128, 0.0
  %v1350 = vadd.f32 %v1348, %v1349
  %v1351 = vsel %vm676, %v1131, 0.0
  %v1352 = vadd.f32 %v1350, %v1351
  %v1353 = vsel %vm676, %v1133, 0.0
  %v1354 = vadd.f32 %v1352, %v1353
  %v1355 = vsel %vm676, %v1136, 0.0
  %v1356 = vadd.f32 %v1354, %v1355
  %v1357 = vsel %vm676, %v1138, 0.0
  %v1358 = vadd.f32 %v1356, %v1357
  %v1359 = vsel %vm676, %v1141, 0.0
  %v1360 = vadd.f32 %v1358, %v1359
  %v1361 = vsel %vm676, %v1143, 0.0
  %v1362 = vadd.f32 %v1360, %v1361
  %v1363 = vsel %vm676, %v1146, 0.0
  %v1364 = vadd.f32 %v1362, %v1363
  %v1365 = vsel %vm676, %v1148, 0.0
  %v1366 = vadd.f32 %v1364, %v1365
  %v1367 = vsel %vm676, %v1151, 0.0
  %v1368 = vadd.f32 %v1366, %v1367
  %v1369 = vsel %vm676, %v1153, 0.0
  %v1370 = vadd.f32 %v1368, %v1369
  %v1371 = vsel %vm676, %v1156, 0.0
  %v1372 = vadd.f32 %v1370, %v1371
  %v1373 = vsel %vm676, %v1158, 0.0
  %v1374 = vadd.f32 %v1372, %v1373
  %v1375 = vsel %vm676, %v1161, 0.0
  %v1376 = vadd.f32 %v1374, %v1375
  %v1377 = vsel %vm676, %v1163, 0.0
  %v1378 = vadd.f32 %v1376, %v1377
  %v1379 = vsel %vm676, %v1166, 0.0
  %v1380 = vadd.f32 %v1378, %v1379
  %v1381 = vsel %vm676, %v1168, 0.0
  %v1382 = vadd.f32 %v1380, %v1381
  %v1383 = vsel %vm676, %v1171, 0.0
  %v1384 = vadd.f32 %v1382, %v1383
  %v1385 = vsel %vm676, %v1173, 0.0
  %v1386 = vadd.f32 %v1384, %v1385
  %v1387 = vsel %vm676, %v1176, 0.0
  %v1388 = vadd.f32 %v1386, %v1387
  %v1389 = vsel %vm676, %v1178, 0.0
  %v1390 = vadd.f32 %v1388, %v1389
  %v1391 = vsel %vm676, %v1181, 0.0
  %v1392 = vadd.f32 %v1390, %v1391
  %v1393 = vsel %vm676, %v1183, 0.0
  %v1394 = vadd.f32 %v1392, %v1393
  %v1395 = vsel %vm676, %v1186, 0.0
  %v1396 = vadd.f32 %v1394, %v1395
  %v1397 = vsel %vm676, %v1188, 0.0
  %v1398 = vadd.f32 %v1396, %v1397
  %v1399 = vsel %vm676, %v1191, 0.0
  %v1400 = vadd.f32 %v1398, %v1399
  %v1401 = vsel %vm676, %v1193, 0.0
  %v1402 = vadd.f32 %v1400, %v1401
  %v1403 = vsel %vm676, %v1196, 0.0
  %v1404 = vadd.f32 %v1402, %v1403
  %v1405 = vsel %vm676, %v1198, 0.0
  %v1406 = vadd.f32 %v1404, %v1405
  %v1407 = vsel %vm676, %v1201, 0.0
  %v1408 = vadd.f32 %v1406, %v1407
  %v1409 = vsel %vm676, %v1203, 0.0
  %v1410 = vadd.f32 %v1408, %v1409
  %v1411 = vsel %vm676, %v1206, 0.0
  %v1412 = vadd.f32 %v1410, %v1411
  %v1413 = vsel %vm676, %v1208, 0.0
  %v1414 = vadd.f32 %v1412, %v1413
  %v1415 = vsel %vm676, %v1211, 0.0
  %v1416 = vadd.f32 %v1414, %v1415
  %v1417 = vsel %vm676, %v1213, 0.0
  %v1418 = vadd.f32 %v1416, %v1417
  %v1419 = vsel %vm676, %v1216, 0.0
  %v1420 = vadd.f32 %v1418, %v1419
  %v1421 = vsel %vm676, %v1218, 0.0
  %v1422 = vadd.f32 %v1420, %v1421
  %v1423 = vsel %vm676, %v1221, 0.0
  %v1424 = vadd.f32 %v1422, %v1423
  %v1425 = vsel %vm676, %v1223, 0.0
  %v1426 = vadd.f32 %v1424, %v1425
  %v1427 = vsel %vm676, %v1226, 0.0
  %v1428 = vadd.f32 %v1426, %v1427
  %v1429 = vsel %vm676, %v1228, 0.0
  %v1430 = vadd.f32 %v1428, %v1429
  %v1431 = vsel %vm676, %v1231, 0.0
  %v1432 = vadd.f32 %v1430, %v1431
  %v1433 = vsel %vm676, %v1233, 0.0
  %v1434 = vadd.f32 %v1432, %v1433
  %v1435 = vsel %vm676, %v1236, 0.0
  %v1436 = vadd.f32 %v1434, %v1435
  %v1437 = vsel %vm676, %v1238, 0.0
  %v1438 = vadd.f32 %v1436, %v1437
  %v1439 = vsel %vm676, %v1241, 0.0
  %v1440 = vadd.f32 %v1438, %v1439
  %v1441 = vsel %vm676, %v1243, 0.0
  %v1442 = vadd.f32 %v1440, %v1441
  %v1443 = vsel %vm676, %v1246, 0.0
  %v1444 = vadd.f32 %v1442, %v1443
  %v1445 = vsel %vm676, %v1248, 0.0
  %v1446 = vadd.f32 %v1444, %v1445
  %v1447 = vsel %vm676, %v1251, 0.0
  %v1448 = vadd.f32 %v1446, %v1447
  %v1449 = vsel %vm676, %v1253, 0.0
  %v1450 = vadd.f32 %v1448, %v1449
  %v1451 = vsel %vm676, %v1256, 0.0
  %v1452 = vadd.f32 %v1450, %v1451
  %v1453 = vsel %vm676, %v1258, 0.0
  %v1454 = vadd.f32 %v1452, %v1453
  %v1455 = vsel %vm676, %v1261, 0.0
  %v1456 = vadd.f32 %v1454, %v1455
  %v1457 = vsel %vm676, %v1263, 0.0
  %v1458 = vadd.f32 %v1456, %v1457
  %v1459 = vsel %vm676, %v1266, 0.0
  %v1460 = vadd.f32 %v1458, %v1459
  %v1461 = vsel %vm676, %v1268, 0.0
  %v1462 = vadd.f32 %v1460, %v1461
  %v1463 = vsel %vm676, %v1271, 0.0
  %v1464 = vadd.f32 %v1462, %v1463
  %v1465 = vsel %vm676, %v1273, 0.0
  %v1466 = vadd.f32 %v1464, %v1465
  %v1467 = vsel %vm676, %v1276, 0.0
  %v1468 = vadd.f32 %v1466, %v1467
  %v1469 = vsel %vm676, %v1278, 0.0
  %v1470 = vadd.f32 %v1468, %v1469
  %v1471 = vrot.slane %v1470, 4
  %v1472 = vadd.f32 %v1470, %v1471
  %v1473 = vrot.slane %v1472, 2
  %v1474 = vadd.f32 %v1472, %v1473
  %v1475 = vrot.slane %v1474, 1
  %v1476 = vadd.f32 %v1474, %v1475
  %vm1477 = vcmask 253952
  %1478 = vst.msk [vmem:[%s3] sm:$0x1] %vm1477, %v1476
  %v1479 = vmul.f32 %v1121, %v1121
  %v1480 = vmul.f32 %v1123, %v1123
  %v1481 = vmul.f32 %v1126, %v1126
  %v1482 = vmul.f32 %v1128, %v1128
  %v1483 = vmul.f32 %v1131, %v1131
  %v1484 = vmul.f32 %v1133, %v1133
  %v1485 = vmul.f32 %v1136, %v1136
  %v1486 = vmul.f32 %v1138, %v1138
  %v1487 = vmul.f32 %v1141, %v1141
  %v1488 = vmul.f32 %v1143, %v1143
  %v1489 = vmul.f32 %v1146, %v1146
  %v1490 = vmul.f32 %v1148, %v1148
  %v1491 = vmul.f32 %v1151, %v1151
  %v1492 = vmul.f32 %v1153, %v1153
  %v1493 = vmul.f32 %v1156, %v1156
  %v1494 = vmul.f32 %v1158, %v1158
  %v1495 = vmul.f32 %v1161, %v1161
  %v1496 = vmul.f32 %v1163, %v1163
  %v1497 = vmul.f32 %v1166, %v1166
  %v1498 = vmul.f32 %v1168, %v1168
  %v1499 = vmul.f32 %v1171, %v1171
  %v1500 = vmul.f32 %v1173, %v1173
  %v1501 = vmul.f32 %v1176, %v1176
  %v1502 = vmul.f32 %v1178, %v1178
  %v1503 = vmul.f32 %v1181, %v1181
  %v1504 = vmul.f32 %v1183, %v1183
  %v1505 = vmul.f32 %v1186, %v1186
  %v1506 = vmul.f32 %v1188, %v1188
  %v1507 = vmul.f32 %v1191, %v1191
  %v1508 = vmul.f32 %v1193, %v1193
  %v1509 = vmul.f32 %v1196, %v1196
  %v1510 = vmul.f32 %v1198, %v1198
  %v1511 = vmul.f32 %v1201, %v1201
  %v1512 = vmul.f32 %v1203, %v1203
  %v1513 = vmul.f32 %v1206, %v1206
  %v1514 = vmul.f32 %v1208, %v1208
  %v1515 = vmul.f32 %v1211, %v1211
  %v1516 = vmul.f32 %v1213, %v1213
  %v1517 = vmul.f32 %v1216, %v1216
  %v1518 = vmul.f32 %v1218, %v1218
  %v1519 = vmul.f32 %v1221, %v1221
  %v1520 = vmul.f32 %v1223, %v1223
  %v1521 = vmul.f32 %v1226, %v1226
  %v1522 = vmul.f32 %v1228, %v1228
  %v1523 = vmul.f32 %v1231, %v1231
  %v1524 = vmul.f32 %v1233, %v1233
  %v1525 = vmul.f32 %v1236, %v1236
  %v1526 = vmul.f32 %v1238, %v1238
  %v1527 = vmul.f32 %v1241, %v1241
  %v1528 = vmul.f32 %v1243, %v1243
  %v1529 = vmul.f32 %v1246, %v1246
  %v1530 = vmul.f32 %v1248, %v1248
  %v1531 = vmul.f32 %v1251, %v1251
  %v1532 = vmul.f32 %v1253, %v1253
  %v1533 = vmul.f32 %v1256, %v1256
  %v1534 = vmul.f32 %v1258, %v1258
  %v1535 = vmul.f32 %v1261, %v1261
  %v1536 = vmul.f32 %v1263, %v1263
  %v1537 = vmul.f32 %v1266, %v1266
  %v1538 = vmul.f32 %v1268, %v1268
  %v1539 = vmul.f32 %v1271, %v1271
  %v1540 = vmul.f32 %v1273, %v1273
  %v1541 = vmul.f32 %v1276, %v1276
  %v1542 = vmul.f32 %v1278, %v1278
  %v1543 = vsel %vm676, %v1479, 0.0
  %v1544 = vsel %vm676, %v1480, 0.0
  %v1545 = vadd.f32 %v1543, %v1544
  %v1546 = vsel %vm676, %v1481, 0.0
  %v1547 = vadd.f32 %v1545, %v1546
  %v1548 = vsel %vm676, %v1482, 0.0
  %v1549 = vadd.f32 %v1547, %v1548
  %v1550 = vsel %vm676, %v1483, 0.0
  %v1551 = vadd.f32 %v1549, %v1550
  %v1552 = vsel %vm676, %v1484, 0.0
  %v1553 = vadd.f32 %v1551, %v1552
  %v1554 = vsel %vm676, %v1485, 0.0
  %v1555 = vadd.f32 %v1553, %v1554
  %v1556 = vsel %vm676, %v1486, 0.0
  %v1557 = vadd.f32 %v1555, %v1556
  %v1558 = vsel %vm676, %v1487, 0.0
  %v1559 = vadd.f32 %v1557, %v1558
  %v1560 = vsel %vm676, %v1488, 0.0
  %v1561 = vadd.f32 %v1559, %v1560
  %v1562 = vsel %vm676, %v1489, 0.0
  %v1563 = vadd.f32 %v1561, %v1562
  %v1564 = vsel %vm676, %v1490, 0.0
  %v1565 = vadd.f32 %v1563, %v1564
  %v1566 = vsel %vm676, %v1491, 0.0
  %v1567 = vadd.f32 %v1565, %v1566
  %v1568 = vsel %vm676, %v1492, 0.0
  %v1569 = vadd.f32 %v1567, %v1568
  %v1570 = vsel %vm676, %v1493, 0.0
  %v1571 = vadd.f32 %v1569, %v1570
  %v1572 = vsel %vm676, %v1494, 0.0
  %v1573 = vadd.f32 %v1571, %v1572
  %v1574 = vsel %vm676, %v1495, 0.0
  %v1575 = vadd.f32 %v1573, %v1574
  %v1576 = vsel %vm676, %v1496, 0.0
  %v1577 = vadd.f32 %v1575, %v1576
  %v1578 = vsel %vm676, %v1497, 0.0
  %v1579 = vadd.f32 %v1577, %v1578
  %v1580 = vsel %vm676, %v1498, 0.0
  %v1581 = vadd.f32 %v1579, %v1580
  %v1582 = vsel %vm676, %v1499, 0.0
  %v1583 = vadd.f32 %v1581, %v1582
  %v1584 = vsel %vm676, %v1500, 0.0
  %v1585 = vadd.f32 %v1583, %v1584
  %v1586 = vsel %vm676, %v1501, 0.0
  %v1587 = vadd.f32 %v1585, %v1586
  %v1588 = vsel %vm676, %v1502, 0.0
  %v1589 = vadd.f32 %v1587, %v1588
  %v1590 = vsel %vm676, %v1503, 0.0
  %v1591 = vadd.f32 %v1589, %v1590
  %v1592 = vsel %vm676, %v1504, 0.0
  %v1593 = vadd.f32 %v1591, %v1592
  %v1594 = vsel %vm676, %v1505, 0.0
  %v1595 = vadd.f32 %v1593, %v1594
  %v1596 = vsel %vm676, %v1506, 0.0
  %v1597 = vadd.f32 %v1595, %v1596
  %v1598 = vsel %vm676, %v1507, 0.0
  %v1599 = vadd.f32 %v1597, %v1598
  %v1600 = vsel %vm676, %v1508, 0.0
  %v1601 = vadd.f32 %v1599, %v1600
  %v1602 = vsel %vm676, %v1509, 0.0
  %v1603 = vadd.f32 %v1601, %v1602
  %v1604 = vsel %vm676, %v1510, 0.0
  %v1605 = vadd.f32 %v1603, %v1604
  %v1606 = vsel %vm676, %v1511, 0.0
  %v1607 = vadd.f32 %v1605, %v1606
  %v1608 = vsel %vm676, %v1512, 0.0
  %v1609 = vadd.f32 %v1607, %v1608
  %v1610 = vsel %vm676, %v1513, 0.0
  %v1611 = vadd.f32 %v1609, %v1610
  %v1612 = vsel %vm676, %v1514, 0.0
  %v1613 = vadd.f32 %v1611, %v1612
  %v1614 = vsel %vm676, %v1515, 0.0
  %v1615 = vadd.f32 %v1613, %v1614
  %v1616 = vsel %vm676, %v1516, 0.0
  %v1617 = vadd.f32 %v1615, %v1616
  %v1618 = vsel %vm676, %v1517, 0.0
  %v1619 = vadd.f32 %v1617, %v1618
  %v1620 = vsel %vm676, %v1518, 0.0
  %v1621 = vadd.f32 %v1619, %v1620
  %v1622 = vsel %vm676, %v1519, 0.0
  %v1623 = vadd.f32 %v1621, %v1622
  %v1624 = vsel %vm676, %v1520, 0.0
  %v1625 = vadd.f32 %v1623, %v1624
  %v1626 = vsel %vm676, %v1521, 0.0
  %v1627 = vadd.f32 %v1625, %v1626
  %v1628 = vsel %vm676, %v1522, 0.0
  %v1629 = vadd.f32 %v1627, %v1628
  %v1630 = vsel %vm676, %v1523, 0.0
  %v1631 = vadd.f32 %v1629, %v1630
  %v1632 = vsel %vm676, %v1524, 0.0
  %v1633 = vadd.f32 %v1631, %v1632
  %v1634 = vsel %vm676, %v1525, 0.0
  %v1635 = vadd.f32 %v1633, %v1634
  %v1636 = vsel %vm676, %v1526, 0.0
  %v1637 = vadd.f32 %v1635, %v1636
  %v1638 = vsel %vm676, %v1527, 0.0
  %v1639 = vadd.f32 %v1637, %v1638
  %v1640 = vsel %vm676, %v1528, 0.0
  %v1641 = vadd.f32 %v1639, %v1640
  %v1642 = vsel %vm676, %v1529, 0.0
  %v1643 = vadd.f32 %v1641, %v1642
  %v1644 = vsel %vm676, %v1530, 0.0
  %v1645 = vadd.f32 %v1643, %v1644
  %v1646 = vsel %vm676, %v1531, 0.0
  %v1647 = vadd.f32 %v1645, %v1646
  %v1648 = vsel %vm676, %v1532, 0.0
  %v1649 = vadd.f32 %v1647, %v1648
  %v1650 = vsel %vm676, %v1533, 0.0
  %v1651 = vadd.f32 %v1649, %v1650
  %v1652 = vsel %vm676, %v1534, 0.0
  %v1653 = vadd.f32 %v1651, %v1652
  %v1654 = vsel %vm676, %v1535, 0.0
  %v1655 = vadd.f32 %v1653, %v1654
  %v1656 = vsel %vm676, %v1536, 0.0
  %v1657 = vadd.f32 %v1655, %v1656
  %v1658 = vsel %vm676, %v1537, 0.0
  %v1659 = vadd.f32 %v1657, %v1658
  %v1660 = vsel %vm676, %v1538, 0.0
  %v1661 = vadd.f32 %v1659, %v1660
  %v1662 = vsel %vm676, %v1539, 0.0
  %v1663 = vadd.f32 %v1661, %v1662
  %v1664 = vsel %vm676, %v1540, 0.0
  %v1665 = vadd.f32 %v1663, %v1664
  %v1666 = vsel %vm676, %v1541, 0.0
  %v1667 = vadd.f32 %v1665, %v1666
  %v1668 = vsel %vm676, %v1542, 0.0
  %v1669 = vadd.f32 %v1667, %v1668
  %v1670 = vrot.slane %v1669, 4
  %v1671 = vadd.f32 %v1669, %v1670
  %v1672 = vrot.slane %v1671, 2
  %v1673 = vadd.f32 %v1671, %v1672
  %v1674 = vrot.slane %v1673, 1
  %v1675 = vadd.f32 %v1673, %v1674
  %1676 = vst.msk [vmem:[%s3 + $0x1] sm:$0x1] %vm1477, %v1675
  // Predicated region
  $region10: #{resnet_forward.55} parent=0 // pred_check
    _
  $region11: #{resnet_forward.55} parent=0 // pred_check_branch
    %1678 = sbr.rel (0) target = $region13
  $region12: #{resnet_forward.55} parent=0 // pred_region
    _
  $region13: #{resnet_forward.55} parent=0 // pred_fallthru
    _
  // Predicated region
  $region14: #{resnet_forward.55} parent=0 // pred_check
    _
  $region15: #{resnet_forward.55} parent=0 // pred_check_branch
    %1680 = sbr.rel (0) target = $region17
  $region16: #{resnet_forward.55} parent=0 // pred_region
    _
  $region17: #{resnet_forward.55} parent=0 // pred_fallthru
    _
  // Predicated region
  $region18: #{resnet_forward.55} parent=0 // pred_check
    _
  $region19: #{resnet_forward.55} parent=0 // pred_check_branch
    %1682 = sbr.rel (0) target = $region21
  $region20: #{resnet_forward.55} parent=0 // pred_region
    _
  $region21: #{resnet_forward.55} parent=0 // pred_fallthru
    _
  // Predicated region
  $region22: #{resnet_forward.55} parent=0 // pred_check
    _
  $region23: #{resnet_forward.55} parent=0 // pred_check_branch
    %1684 = sbr.rel (0) target = $region25
  $region24: #{resnet_forward.55} parent=0 // pred_region
    _
  $region25: #{resnet_forward.55} parent=0 // pred_fallthru
    _

// kernel: resnet_forward.56
$region0: #{resnet_forward.56}
  #allocation0 [shape = 'u32[]', space=smem, size = 0x4, offset = 0x4, fixed_abs, tag = 'smem constant byte address 0x4 - core index']
  #allocation1 [shape = 'u32[72,128]{1,0:T(1,128)}', space=vmem, size = 0x9000, scoped, tag = 'internal scratch']
  %s0 = inlined_call_operand.vmem [shape: f32[512,32], index: 0, kind: input, shape index: {}]
  %s1 = inlined_call_operand.vmem [shape: f32[1,32], index: 1, kind: input, shape index: {}]
  %s2 = inlined_call_operand.vmem [shape: f32[1,32], index: 2, kind: input, shape index: {}]
  %s3 = inlined_call_operand.vmem [shape: bf16[512,32], index: 3, kind: input, shape index: {}]
  %s4 = inlined_call_operand.vmem [shape: bf16[512,32], index: 4, kind: output, shape index: {}]
  %s5 = sld [smem:[#allocation0]]
  $region26: #{resnet_forward.56} parent=0
    _
  %s7 = ssub.s32 1, %s5
  %s8 = scalar_select 0, %s7, %s5
  // Predicated region
  $region2: #{resnet_forward.56} parent=0 // pred_check
    _
  $region3: #{resnet_forward.56} parent=0 // pred_check_branch
    %10 = sbr.rel (0) target = $region5
  $region4: #{resnet_forward.56} parent=0 // pred_region
    _
  $region5: #{resnet_forward.56} parent=0 // pred_fallthru
    _
  // Predicated region
  $region6: #{resnet_forward.56} parent=0 // pred_check
    _
  $region7: #{resnet_forward.56} parent=0 // pred_check_branch
    %12 = sbr.rel (0) target = $region9
  $region8: #{resnet_forward.56} parent=0 // pred_region
    _
  $region9: #{resnet_forward.56} parent=0 // pred_fallthru
    _
  // Predicated region
  $region10: #{resnet_forward.56} parent=0 // pred_check
    _
  $region11: #{resnet_forward.56} parent=0 // pred_check_branch
    %14 = sbr.rel (0) target = $region13
  $region12: #{resnet_forward.56} parent=0 // pred_region
    _
  $region13: #{resnet_forward.56} parent=0 // pred_fallthru
    _
  // Predicated region
  $region14: #{resnet_forward.56} parent=0 // pred_check
    _
  $region15: #{resnet_forward.56} parent=0 // pred_check_branch
    %16 = sbr.rel (0) target = $region17
  $region16: #{resnet_forward.56} parent=0 // pred_region
    _
  $region17: #{resnet_forward.56} parent=0 // pred_fallthru
    _
  %v17 = vld [vmem:[%s0] sm:$0xff]
  %v18 = vld [vmem:[%s0 + $0x8] sm:$0xff]
  %v19 = vld [vmem:[%s0 + $0x10] sm:$0xff]
  %v20 = vld [vmem:[%s0 + $0x18] sm:$0xff]
  %v21 = vld [vmem:[%s0 + $0x20] sm:$0xff]
  %v22 = vld [vmem:[%s0 + $0x28] sm:$0xff]
  %v23 = vld [vmem:[%s0 + $0x30] sm:$0xff]
  %v24 = vld [vmem:[%s0 + $0x38] sm:$0xff]
  %v25 = vld [vmem:[%s0 + $0x40] sm:$0xff]
  %v26 = vld [vmem:[%s0 + $0x48] sm:$0xff]
  %v27 = vld [vmem:[%s0 + $0x50] sm:$0xff]
  %v28 = vld [vmem:[%s0 + $0x58] sm:$0xff]
  %v29 = vld [vmem:[%s0 + $0x60] sm:$0xff]
  %v30 = vld [vmem:[%s0 + $0x68] sm:$0xff]
  %v31 = vld [vmem:[%s0 + $0x70] sm:$0xff]
  %v32 = vld [vmem:[%s0 + $0x78] sm:$0xff]
  %v33 = vld [vmem:[%s0 + $0x80] sm:$0xff]
  %v34 = vld [vmem:[%s0 + $0x88] sm:$0xff]
  %v35 = vld [vmem:[%s0 + $0x90] sm:$0xff]
  %v36 = vld [vmem:[%s0 + $0x98] sm:$0xff]
  %v37 = vld [vmem:[%s0 + $0xa0] sm:$0xff]
  %v38 = vld [vmem:[%s0 + $0xa8] sm:$0xff]
  %v39 = vld [vmem:[%s0 + $0xb0] sm:$0xff]
  %v40 = vld [vmem:[%s0 + $0xb8] sm:$0xff]
  %v41 = vld [vmem:[%s0 + $0xc0] sm:$0xff]
  %v42 = vld [vmem:[%s0 + $0xc8] sm:$0xff]
  %v43 = vld [vmem:[%s0 + $0xd0] sm:$0xff]
  %v44 = vld [vmem:[%s0 + $0xd8] sm:$0xff]
  %v45 = vld [vmem:[%s0 + $0xe0] sm:$0xff]
  %v46 = vld [vmem:[%s0 + $0xe8] sm:$0xff]
  %v47 = vld [vmem:[%s0 + $0xf0] sm:$0xff]
  %v48 = vld [vmem:[%s0 + $0xf8] sm:$0xff]
  %v49 = vld [vmem:[%s0 + $0x100] sm:$0xff]
  %v50 = vld [vmem:[%s0 + $0x108] sm:$0xff]
  %v51 = vld [vmem:[%s0 + $0x110] sm:$0xff]
  %v52 = vld [vmem:[%s0 + $0x118] sm:$0xff]
  %v53 = vld [vmem:[%s0 + $0x120] sm:$0xff]
  %v54 = vld [vmem:[%s0 + $0x128] sm:$0xff]
  %v55 = vld [vmem:[%s0 + $0x130] sm:$0xff]
  %v56 = vld [vmem:[%s0 + $0x138] sm:$0xff]
  %v57 = vld [vmem:[%s0 + $0x140] sm:$0xff]
  %v58 = vld [vmem:[%s0 + $0x148] sm:$0xff]
  %v59 = vld [vmem:[%s0 + $0x150] sm:$0xff]
  %v60 = vld [vmem:[%s0 + $0x158] sm:$0xff]
  %v61 = vld [vmem:[%s0 + $0x160] sm:$0xff]
  %v62 = vld [vmem:[%s0 + $0x168] sm:$0xff]
  %v63 = vld [vmem:[%s0 + $0x170] sm:$0xff]
  %v64 = vld [vmem:[%s0 + $0x178] sm:$0xff]
  %v65 = vld [vmem:[%s0 + $0x180] sm:$0xff]
  %v66 = vld [vmem:[%s0 + $0x188] sm:$0xff]
  %v67 = vld [vmem:[%s0 + $0x190] sm:$0xff]
  %v68 = vld [vmem:[%s0 + $0x198] sm:$0xff]
  %v69 = vld [vmem:[%s0 + $0x1a0] sm:$0xff]
  %v70 = vld [vmem:[%s0 + $0x1a8] sm:$0xff]
  %v71 = vld [vmem:[%s0 + $0x1b0] sm:$0xff]
  %v72 = vld [vmem:[%s0 + $0x1b8] sm:$0xff]
  %v73 = vld [vmem:[%s0 + $0x1c0] sm:$0xff]
  %v74 = vld [vmem:[%s0 + $0x1c8] sm:$0xff]
  %v75 = vld [vmem:[%s0 + $0x1d0] sm:$0xff]
  %v76 = vld [vmem:[%s0 + $0x1d8] sm:$0xff]
  %v77 = vld [vmem:[%s0 + $0x1e0] sm:$0xff]
  %v78 = vld [vmem:[%s0 + $0x1e8] sm:$0xff]
  %v79 = vld [vmem:[%s0 + $0x1f0] sm:$0xff]
  %v80 = vld [vmem:[%s0 + $0x1f8] sm:$0xff]
  %v81 = vld [vmem:[%s1] sm:$0x1]
  %v83 = vperm.slane %v81, 0
  %v85 = vmul.f32 %v17, %v83
  %v86 = vmul.f32 %v18, %v83
  %v87 = vmul.f32 %v19, %v83
  %v88 = vmul.f32 %v20, %v83
  %v89 = vmul.f32 %v21, %v83
  %v90 = vmul.f32 %v22, %v83
  %v91 = vmul.f32 %v23, %v83
  %v92 = vmul.f32 %v24, %v83
  %v93 = vmul.f32 %v25, %v83
  %v94 = vmul.f32 %v26, %v83
  %v95 = vmul.f32 %v27, %v83
  %v96 = vmul.f32 %v28, %v83
  %v97 = vmul.f32 %v29, %v83
  %v98 = vmul.f32 %v30, %v83
  %v99 = vmul.f32 %v31, %v83
  %v100 = vmul.f32 %v32, %v83
  %v101 = vmul.f32 %v33, %v83
  %v102 = vmul.f32 %v34, %v83
  %v103 = vmul.f32 %v35, %v83
  %v104 = vmul.f32 %v36, %v83
  %v105 = vmul.f32 %v37, %v83
  %v106 = vmul.f32 %v38, %v83
  %v107 = vmul.f32 %v39, %v83
  %v108 = vmul.f32 %v40, %v83
  %v109 = vmul.f32 %v41, %v83
  %v110 = vmul.f32 %v42, %v83
  %v111 = vmul.f32 %v43, %v83
  %v112 = vmul.f32 %v44, %v83
  %v113 = vmul.f32 %v45, %v83
  %v114 = vmul.f32 %v46, %v83
  %v115 = vmul.f32 %v47, %v83
  %v116 = vmul.f32 %v48, %v83
  %v117 = vmul.f32 %v49, %v83
  %v118 = vmul.f32 %v50, %v83
  %v119 = vmul.f32 %v51, %v83
  %v120 = vmul.f32 %v52, %v83
  %v121 = vmul.f32 %v53, %v83
  %v122 = vmul.f32 %v54, %v83
  %v123 = vmul.f32 %v55, %v83
  %v124 = vmul.f32 %v56, %v83
  %v125 = vmul.f32 %v57, %v83
  %v126 = vmul.f32 %v58, %v83
  %v127 = vmul.f32 %v59, %v83
  %v128 = vmul.f32 %v60, %v83
  %v129 = vmul.f32 %v61, %v83
  %v130 = vmul.f32 %v62, %v83
  %v131 = vmul.f32 %v63, %v83
  %v132 = vmul.f32 %v64, %v83
  %v133 = vmul.f32 %v65, %v83
  %v134 = vmul.f32 %v66, %v83
  %v135 = vmul.f32 %v67, %v83
  %v136 = vmul.f32 %v68, %v83
  %v137 = vmul.f32 %v69, %v83
  %v138 = vmul.f32 %v70, %v83
  %v139 = vmul.f32 %v71, %v83
  %v140 = vmul.f32 %v72, %v83
  %v141 = vmul.f32 %v73, %v83
  %v142 = vmul.f32 %v74, %v83
  %v143 = vmul.f32 %v75, %v83
  %v144 = vmul.f32 %v76, %v83
  %v145 = vmul.f32 %v77, %v83
  %v146 = vmul.f32 %v78, %v83
  %v147 = vmul.f32 %v79, %v83
  %v148 = vmul.f32 %v80, %v83
  %v149 = vld [vmem:[%s2] sm:$0x1]
  %v151 = vperm.slane %v149, 0
  %v153 = vadd.f32 %v85, %v151
  %v154 = vadd.f32 %v86, %v151
  %v155 = vadd.f32 %v87, %v151
  %v156 = vadd.f32 %v88, %v151
  %v157 = vadd.f32 %v89, %v151
  %v158 = vadd.f32 %v90, %v151
  %v159 = vadd.f32 %v91, %v151
  %v160 = vadd.f32 %v92, %v151
  %v161 = vadd.f32 %v93, %v151
  %v162 = vadd.f32 %v94, %v151
  %v163 = vadd.f32 %v95, %v151
  %v164 = vadd.f32 %v96, %v151
  %v165 = vadd.f32 %v97, %v151
  %v166 = vadd.f32 %v98, %v151
  %v167 = vadd.f32 %v99, %v151
  %v168 = vadd.f32 %v100, %v151
  %v169 = vadd.f32 %v101, %v151
  %v170 = vadd.f32 %v102, %v151
  %v171 = vadd.f32 %v103, %v151
  %v172 = vadd.f32 %v104, %v151
  %v173 = vadd.f32 %v105, %v151
  %v174 = vadd.f32 %v106, %v151
  %v175 = vadd.f32 %v107, %v151
  %v176 = vadd.f32 %v108, %v151
  %v177 = vadd.f32 %v109, %v151
  %v178 = vadd.f32 %v110, %v151
  %v179 = vadd.f32 %v111, %v151
  %v180 = vadd.f32 %v112, %v151
  %v181 = vadd.f32 %v113, %v151
  %v182 = vadd.f32 %v114, %v151
  %v183 = vadd.f32 %v115, %v151
  %v184 = vadd.f32 %v116, %v151
  %v185 = vadd.f32 %v117, %v151
  %v186 = vadd.f32 %v118, %v151
  %v187 = vadd.f32 %v119, %v151
  %v188 = vadd.f32 %v120, %v151
  %v189 = vadd.f32 %v121, %v151
  %v190 = vadd.f32 %v122, %v151
  %v191 = vadd.f32 %v123, %v151
  %v192 = vadd.f32 %v124, %v151
  %v193 = vadd.f32 %v125, %v151
  %v194 = vadd.f32 %v126, %v151
  %v195 = vadd.f32 %v127, %v151
  %v196 = vadd.f32 %v128, %v151
  %v197 = vadd.f32 %v129, %v151
  %v198 = vadd.f32 %v130, %v151
  %v199 = vadd.f32 %v131, %v151
  %v200 = vadd.f32 %v132, %v151
  %v201 = vadd.f32 %v133, %v151
  %v202 = vadd.f32 %v134, %v151
  %v203 = vadd.f32 %v135, %v151
  %v204 = vadd.f32 %v136, %v151
  %v205 = vadd.f32 %v137, %v151
  %v206 = vadd.f32 %v138, %v151
  %v207 = vadd.f32 %v139, %v151
  %v208 = vadd.f32 %v140, %v151
  %v209 = vadd.f32 %v141, %v151
  %v210 = vadd.f32 %v142, %v151
  %v211 = vadd.f32 %v143, %v151
  %v212 = vadd.f32 %v144, %v151
  %v213 = vadd.f32 %v145, %v151
  %v214 = vadd.f32 %v146, %v151
  %v215 = vadd.f32 %v147, %v151
  %v216 = vadd.f32 %v148, %v151
  %v217 = vld [vmem:[%s3] sm:$0xf]
  %v218 = vld [vmem:[%s3 + $0x4] sm:$0xf]
  %v219 = vld [vmem:[%s3 + $0x8] sm:$0xf]
  %v220 = vld [vmem:[%s3 + $0xc] sm:$0xf]
  %v221 = vld [vmem:[%s3 + $0x10] sm:$0xf]
  %v222 = vld [vmem:[%s3 + $0x14] sm:$0xf]
  %v223 = vld [vmem:[%s3 + $0x18] sm:$0xf]
  %v224 = vld [vmem:[%s3 + $0x1c] sm:$0xf]
  %v225 = vld [vmem:[%s3 + $0x20] sm:$0xf]
  %v226 = vld [vmem:[%s3 + $0x24] sm:$0xf]
  %v227 = vld [vmem:[%s3 + $0x28] sm:$0xf]
  %v228 = vld [vmem:[%s3 + $0x2c] sm:$0xf]
  %v229 = vld [vmem:[%s3 + $0x30] sm:$0xf]
  %v230 = vld [vmem:[%s3 + $0x34] sm:$0xf]
  %v231 = vld [vmem:[%s3 + $0x38] sm:$0xf]
  %v232 = vld [vmem:[%s3 + $0x3c] sm:$0xf]
  %v233 = vld [vmem:[%s3 + $0x40] sm:$0xf]
  %v234 = vld [vmem:[%s3 + $0x44] sm:$0xf]
  %v235 = vld [vmem:[%s3 + $0x48] sm:$0xf]
  %v236 = vld [vmem:[%s3 + $0x4c] sm:$0xf]
  %v237 = vld [vmem:[%s3 + $0x50] sm:$0xf]
  %v238 = vld [vmem:[%s3 + $0x54] sm:$0xf]
  %v239 = vld [vmem:[%s3 + $0x58] sm:$0xf]
  %v240 = vld [vmem:[%s3 + $0x5c] sm:$0xf]
  %v241 = vld [vmem:[%s3 + $0x60] sm:$0xf]
  %v242 = vld [vmem:[%s3 + $0x64] sm:$0xf]
  %v243 = vld [vmem:[%s3 + $0x68] sm:$0xf]
  %v244 = vld [vmem:[%s3 + $0x6c] sm:$0xf]
  %v245 = vld [vmem:[%s3 + $0x70] sm:$0xf]
  %v246 = vld [vmem:[%s3 + $0x74] sm:$0xf]
  %v247 = vld [vmem:[%s3 + $0x78] sm:$0xf]
  %v248 = vld [vmem:[%s3 + $0x7c] sm:$0xf]
  %v249 = vld [vmem:[%s3 + $0x80] sm:$0xf]
  %v250 = vld [vmem:[%s3 + $0x84] sm:$0xf]
  %v251 = vld [vmem:[%s3 + $0x88] sm:$0xf]
  %v252 = vld [vmem:[%s3 + $0x8c] sm:$0xf]
  %v253 = vld [vmem:[%s3 + $0x90] sm:$0xf]
  %v254 = vld [vmem:[%s3 + $0x94] sm:$0xf]
  %v255 = vld [vmem:[%s3 + $0x98] sm:$0xf]
  %v256 = vld [vmem:[%s3 + $0x9c] sm:$0xf]
  %v257 = vld [vmem:[%s3 + $0xa0] sm:$0xf]
  %v258 = vld [vmem:[%s3 + $0xa4] sm:$0xf]
  %v259 = vld [vmem:[%s3 + $0xa8] sm:$0xf]
  %v260 = vld [vmem:[%s3 + $0xac] sm:$0xf]
  %v261 = vld [vmem:[%s3 + $0xb0] sm:$0xf]
  %v262 = vld [vmem:[%s3 + $0xb4] sm:$0xf]
  %v263 = vld [vmem:[%s3 + $0xb8] sm:$0xf]
  %v264 = vld [vmem:[%s3 + $0xbc] sm:$0xf]
  %v265 = vld [vmem:[%s3 + $0xc0] sm:$0xf]
  %v266 = vld [vmem:[%s3 + $0xc4] sm:$0xf]
  %v267 = vld [vmem:[%s3 + $0xc8] sm:$0xf]
  %v268 = vld [vmem:[%s3 + $0xcc] sm:$0xf]
  %v269 = vld [vmem:[%s3 + $0xd0] sm:$0xf]
  %v270 = vld [vmem:[%s3 + $0xd4] sm:$0xf]
  %v271 = vld [vmem:[%s3 + $0xd8] sm:$0xf]
  %v272 = vld [vmem:[%s3 + $0xdc] sm:$0xf]
  %v273 = vld [vmem:[%s3 + $0xe0] sm:$0xf]
  %v274 = vld [vmem:[%s3 + $0xe4] sm:$0xf]
  %v275 = vld [vmem:[%s3 + $0xe8] sm:$0xf]
  %v276 = vld [vmem:[%s3 + $0xec] sm:$0xf]
  %v277 = vld [vmem:[%s3 + $0xf0] sm:$0xf]
  %v278 = vld [vmem:[%s3 + $0xf4] sm:$0xf]
  %v279 = vld [vmem:[%s3 + $0xf8] sm:$0xf]
  %v280 = vld [vmem:[%s3 + $0xfc] sm:$0xf]
  %v281 = vunpack.c.l.bf16 %v217
  %v282 = vunpack.c.l.bf16 %v218
  %v283 = vunpack.c.l.bf16 %v219
  %v284 = vunpack.c.l.bf16 %v220
  %v285 = vunpack.c.l.bf16 %v221
  %v286 = vunpack.c.l.bf16 %v222
  %v287 = vunpack.c.l.bf16 %v223
  %v288 = vunpack.c.l.bf16 %v224
  %v289 = vunpack.c.l.bf16 %v225
  %v290 = vunpack.c.l.bf16 %v226
  %v291 = vunpack.c.l.bf16 %v227
  %v292 = vunpack.c.l.bf16 %v228
  %v293 = vunpack.c.l.bf16 %v229
  %v294 = vunpack.c.l.bf16 %v230
  %v295 = vunpack.c.l.bf16 %v231
  %v296 = vunpack.c.l.bf16 %v232
  %v297 = vunpack.c.l.bf16 %v233
  %v298 = vunpack.c.l.bf16 %v234
  %v299 = vunpack.c.l.bf16 %v235
  %v300 = vunpack.c.l.bf16 %v236
  %v301 = vunpack.c.l.bf16 %v237
  %v302 = vunpack.c.l.bf16 %v238
  %v303 = vunpack.c.l.bf16 %v239
  %v304 = vunpack.c.l.bf16 %v240
  %v305 = vunpack.c.l.bf16 %v241
  %v306 = vunpack.c.l.bf16 %v242
  %v307 = vunpack.c.l.bf16 %v243
  %v308 = vunpack.c.l.bf16 %v244
  %v309 = vunpack.c.l.bf16 %v245
  %v310 = vunpack.c.l.bf16 %v246
  %v311 = vunpack.c.l.bf16 %v247
  %v312 = vunpack.c.l.bf16 %v248
  %v313 = vunpack.c.l.bf16 %v249
  %v314 = vunpack.c.l.bf16 %v250
  %v315 = vunpack.c.l.bf16 %v251
  %v316 = vunpack.c.l.bf16 %v252
  %v317 = vunpack.c.l.bf16 %v253
  %v318 = vunpack.c.l.bf16 %v254
  %v319 = vunpack.c.l.bf16 %v255
  %v320 = vunpack.c.l.bf16 %v256
  %v321 = vunpack.c.l.bf16 %v257
  %v322 = vunpack.c.l.bf16 %v258
  %v323 = vunpack.c.l.bf16 %v259
  %v324 = vunpack.c.l.bf16 %v260
  %v325 = vunpack.c.l.bf16 %v261
  %v326 = vunpack.c.l.bf16 %v262
  %v327 = vunpack.c.l.bf16 %v263
  %v328 = vunpack.c.l.bf16 %v264
  %v329 = vunpack.c.l.bf16 %v265
  %v330 = vunpack.c.l.bf16 %v266
  %v331 = vunpack.c.l.bf16 %v267
  %v332 = vunpack.c.l.bf16 %v268
  %v333 = vunpack.c.l.bf16 %v269
  %v334 = vunpack.c.l.bf16 %v270
  %v335 = vunpack.c.l.bf16 %v271
  %v336 = vunpack.c.l.bf16 %v272
  %v337 = vunpack.c.l.bf16 %v273
  %v338 = vunpack.c.l.bf16 %v274
  %v339 = vunpack.c.l.bf16 %v275
  %v340 = vunpack.c.l.bf16 %v276
  %v341 = vunpack.c.l.bf16 %v277
  %v342 = vunpack.c.l.bf16 %v278
  %v343 = vunpack.c.l.bf16 %v279
  %v344 = vunpack.c.l.bf16 %v280
  %v345 = vadd.f32 %v153, %v281
  %v346 = vadd.f32 %v154, %v282
  %v347 = vadd.f32 %v155, %v283
  %v348 = vadd.f32 %v156, %v284
  %v349 = vadd.f32 %v157, %v285
  %v350 = vadd.f32 %v158, %v286
  %v351 = vadd.f32 %v159, %v287
  %v352 = vadd.f32 %v160, %v288
  %v353 = vadd.f32 %v161, %v289
  %v354 = vadd.f32 %v162, %v290
  %v355 = vadd.f32 %v163, %v291
  %v356 = vadd.f32 %v164, %v292
  %v357 = vadd.f32 %v165, %v293
  %v358 = vadd.f32 %v166, %v294
  %v359 = vadd.f32 %v167, %v295
  %v360 = vadd.f32 %v168, %v296
  %v361 = vadd.f32 %v169, %v297
  %v362 = vadd.f32 %v170, %v298
  %v363 = vadd.f32 %v171, %v299
  %v364 = vadd.f32 %v172, %v300
  %v365 = vadd.f32 %v173, %v301
  %v366 = vadd.f32 %v174, %v302
  %v367 = vadd.f32 %v175, %v303
  %v368 = vadd.f32 %v176, %v304
  %v369 = vadd.f32 %v177, %v305
  %v370 = vadd.f32 %v178, %v306
  %v371 = vadd.f32 %v179, %v307
  %v372 = vadd.f32 %v180, %v308
  %v373 = vadd.f32 %v181, %v309
  %v374 = vadd.f32 %v182, %v310
  %v375 = vadd.f32 %v183, %v311
  %v376 = vadd.f32 %v184, %v312
  %v377 = vadd.f32 %v185, %v313
  %v378 = vadd.f32 %v186, %v314
  %v379 = vadd.f32 %v187, %v315
  %v380 = vadd.f32 %v188, %v316
  %v381 = vadd.f32 %v189, %v317
  %v382 = vadd.f32 %v190, %v318
  %v383 = vadd.f32 %v191, %v319
  %v384 = vadd.f32 %v192, %v320
  %v385 = vadd.f32 %v193, %v321
  %v386 = vadd.f32 %v194, %v322
  %v387 = vadd.f32 %v195, %v323
  %v388 = vadd.f32 %v196, %v324
  %v389 = vadd.f32 %v197, %v325
  %v390 = vadd.f32 %v198, %v326
  %v391 = vadd.f32 %v199, %v327
  %v392 = vadd.f32 %v200, %v328
  %v393 = vadd.f32 %v201, %v329
  %v394 = vadd.f32 %v202, %v330
  %v395 = vadd.f32 %v203, %v331
  %v396 = vadd.f32 %v204, %v332
  %v397 = vadd.f32 %v205, %v333
  %v398 = vadd.f32 %v206, %v334
  %v399 = vadd.f32 %v207, %v335
  %v400 = vadd.f32 %v208, %v336
  %v401 = vadd.f32 %v209, %v337
  %v402 = vadd.f32 %v210, %v338
  %v403 = vadd.f32 %v211, %v339
  %v404 = vadd.f32 %v212, %v340
  %v405 = vadd.f32 %v213, %v341
  %v406 = vadd.f32 %v214, %v342
  %v407 = vadd.f32 %v215, %v343
  %v408 = vadd.f32 %v216, %v344
  %v409 = vmax.f32 %v345, 0.0
  %v410 = vmax.f32 %v346, 0.0
  %v411 = vmax.f32 %v347, 0.0
  %v412 = vmax.f32 %v348, 0.0
  %v413 = vmax.f32 %v349, 0.0
  %v414 = vmax.f32 %v350, 0.0
  %v415 = vmax.f32 %v351, 0.0
  %v416 = vmax.f32 %v352, 0.0
  %v417 = vmax.f32 %v353, 0.0
  %v418 = vmax.f32 %v354, 0.0
  %v419 = vmax.f32 %v355, 0.0
  %v420 = vmax.f32 %v356, 0.0
  %v421 = vmax.f32 %v357, 0.0
  %v422 = vmax.f32 %v358, 0.0
  %v423 = vmax.f32 %v359, 0.0
  %v424 = vmax.f32 %v360, 0.0
  %v425 = vmax.f32 %v361, 0.0
  %v426 = vmax.f32 %v362, 0.0
  %v427 = vmax.f32 %v363, 0.0
  %v428 = vmax.f32 %v364, 0.0
  %v429 = vmax.f32 %v365, 0.0
  %v430 = vmax.f32 %v366, 0.0
  %v431 = vmax.f32 %v367, 0.0
  %v432 = vmax.f32 %v368, 0.0
  %v433 = vmax.f32 %v369, 0.0
  %v434 = vmax.f32 %v370, 0.0
  %v435 = vmax.f32 %v371, 0.0
  %v436 = vmax.f32 %v372, 0.0
  %v437 = vmax.f32 %v373, 0.0
  %v438 = vmax.f32 %v374, 0.0
  %v439 = vmax.f32 %v375, 0.0
  %v440 = vmax.f32 %v376, 0.0
  %v441 = vmax.f32 %v377, 0.0
  %v442 = vmax.f32 %v378, 0.0
  %v443 = vmax.f32 %v379, 0.0
  %v444 = vmax.f32 %v380, 0.0
  %v445 = vmax.f32 %v381, 0.0
  %v446 = vmax.f32 %v382, 0.0
  %v447 = vmax.f32 %v383, 0.0
  %v448 = vmax.f32 %v384, 0.0
  %v449 = vmax.f32 %v385, 0.0
  %v450 = vmax.f32 %v386, 0.0
  %v451 = vmax.f32 %v387, 0.0
  %v452 = vmax.f32 %v388, 0.0
  %v453 = vmax.f32 %v389, 0.0
  %v454 = vmax.f32 %v390, 0.0
  %v455 = vmax.f32 %v391, 0.0
  %v456 = vmax.f32 %v392, 0.0
  %v457 = vmax.f32 %v393, 0.0
  %v458 = vmax.f32 %v394, 0.0
  %v459 = vmax.f32 %v395, 0.0
  %v460 = vmax.f32 %v396, 0.0
  %v461 = vmax.f32 %v397, 0.0
  %v462 = vmax.f32 %v398, 0.0
  %v463 = vmax.f32 %v399, 0.0
  %v464 = vmax.f32 %v400, 0.0
  %v465 = vmax.f32 %v401, 0.0
  %v466 = vmax.f32 %v402, 0.0
  %v467 = vmax.f32 %v403, 0.0
  %v468 = vmax.f32 %v404, 0.0
  %v469 = vmax.f32 %v405, 0.0
  %v470 = vmax.f32 %v406, 0.0
  %v471 = vmax.f32 %v407, 0.0
  %v472 = vmax.f32 %v408, 0.0
  %v473 = vpack.c.bf16 %v409, %v409
  %v474 = vpack.c.bf16 %v410, %v410
  %v475 = vpack.c.bf16 %v411, %v411
  %v476 = vpack.c.bf16 %v412, %v412
  %v477 = vpack.c.bf16 %v413, %v413
  %v478 = vpack.c.bf16 %v414, %v414
  %v479 = vpack.c.bf16 %v415, %v415
  %v480 = vpack.c.bf16 %v416, %v416
  %v481 = vpack.c.bf16 %v417, %v417
  %v482 = vpack.c.bf16 %v418, %v418
  %v483 = vpack.c.bf16 %v419, %v419
  %v484 = vpack.c.bf16 %v420, %v420
  %v485 = vpack.c.bf16 %v421, %v421
  %v486 = vpack.c.bf16 %v422, %v422
  %v487 = vpack.c.bf16 %v423, %v423
  %v488 = vpack.c.bf16 %v424, %v424
  %v489 = vpack.c.bf16 %v425, %v425
  %v490 = vpack.c.bf16 %v426, %v426
  %v491 = vpack.c.bf16 %v427, %v427
  %v492 = vpack.c.bf16 %v428, %v428
  %v493 = vpack.c.bf16 %v429, %v429
  %v494 = vpack.c.bf16 %v430, %v430
  %v495 = vpack.c.bf16 %v431, %v431
  %v496 = vpack.c.bf16 %v432, %v432
  %v497 = vpack.c.bf16 %v433, %v433
  %v498 = vpack.c.bf16 %v434, %v434
  %v499 = vpack.c.bf16 %v435, %v435
  %v500 = vpack.c.bf16 %v436, %v436
  %v501 = vpack.c.bf16 %v437, %v437
  %v502 = vpack.c.bf16 %v438, %v438
  %v503 = vpack.c.bf16 %v439, %v439
  %v504 = vpack.c.bf16 %v440, %v440
  %v505 = vpack.c.bf16 %v441, %v441
  %v506 = vpack.c.bf16 %v442, %v442
  %v507 = vpack.c.bf16 %v443, %v443
  %v508 = vpack.c.bf16 %v444, %v444
  %v509 = vpack.c.bf16 %v445, %v445
  %v510 = vpack.c.bf16 %v446, %v446
  %v511 = vpack.c.bf16 %v447, %v447
  %v512 = vpack.c.bf16 %v448, %v448
  %v513 = vpack.c.bf16 %v449, %v449
  %v514 = vpack.c.bf16 %v450, %v450
  %v515 = vpack.c.bf16 %v451, %v451
  %v516 = vpack.c.bf16 %v452, %v452
  %v517 = vpack.c.bf16 %v453, %v453
  %v518 = vpack.c.bf16 %v454, %v454
  %v519 = vpack.c.bf16 %v455, %v455
  %v520 = vpack.c.bf16 %v456, %v456
  %v521 = vpack.c.bf16 %v457, %v457
  %v522 = vpack.c.bf16 %v458, %v458
  %v523 = vpack.c.bf16 %v459, %v459
  %v524 = vpack.c.bf16 %v460, %v460
  %v525 = vpack.c.bf16 %v461, %v461
  %v526 = vpack.c.bf16 %v462, %v462
  %v527 = vpack.c.bf16 %v463, %v463
  %v528 = vpack.c.bf16 %v464, %v464
  %v529 = vpack.c.bf16 %v465, %v465
  %v530 = vpack.c.bf16 %v466, %v466
  %v531 = vpack.c.bf16 %v467, %v467
  %v532 = vpack.c.bf16 %v468, %v468
  %v533 = vpack.c.bf16 %v469, %v469
  %v534 = vpack.c.bf16 %v470, %v470
  %v535 = vpack.c.bf16 %v471, %v471
  %v536 = vpack.c.bf16 %v472, %v472
  %vm537 = vcmask 257024
  %538 = vst.msk [vmem:[%s4] sm:$0xf] %vm537, %v473
  %539 = vst.msk [vmem:[%s4 + $0x4] sm:$0xf] %vm537, %v474
  %540 = vst.msk [vmem:[%s4 + $0x8] sm:$0xf] %vm537, %v475
  %541 = vst.msk [vmem:[%s4 + $0xc] sm:$0xf] %vm537, %v476
  %542 = vst.msk [vmem:[%s4 + $0x10] sm:$0xf] %vm537, %v477
  %543 = vst.msk [vmem:[%s4 + $0x14] sm:$0xf] %vm537, %v478
  %544 = vst.msk [vmem:[%s4 + $0x18] sm:$0xf] %vm537, %v479
  %545 = vst.msk [vmem:[%s4 + $0x1c] sm:$0xf] %vm537, %v480
  %546 = vst.msk [vmem:[%s4 + $0x20] sm:$0xf] %vm537, %v481
  %547 = vst.msk [vmem:[%s4 + $0x24] sm:$0xf] %vm537, %v482
  %548 = vst.msk [vmem:[%s4 + $0x28] sm:$0xf] %vm537, %v483
  %549 = vst.msk [vmem:[%s4 + $0x2c] sm:$0xf] %vm537, %v484
  %550 = vst.msk [vmem:[%s4 + $0x30] sm:$0xf] %vm537, %v485
  %551 = vst.msk [vmem:[%s4 + $0x34] sm:$0xf] %vm537, %v486
  %552 = vst.msk [vmem:[%s4 + $0x38] sm:$0xf] %vm537, %v487
  %553 = vst.msk [vmem:[%s4 + $0x3c] sm:$0xf] %vm537, %v488
  %554 = vst.msk [vmem:[%s4 + $0x40] sm:$0xf] %vm537, %v489
  %555 = vst.msk [vmem:[%s4 + $0x44] sm:$0xf] %vm537, %v490
  %556 = vst.msk [vmem:[%s4 + $0x48] sm:$0xf] %vm537, %v491
  %557 = vst.msk [vmem:[%s4 + $0x4c] sm:$0xf] %vm537, %v492
  %558 = vst.msk [vmem:[%s4 + $0x50] sm:$0xf] %vm537, %v493
  %559 = vst.msk [vmem:[%s4 + $0x54] sm:$0xf] %vm537, %v494
  %560 = vst.msk [vmem:[%s4 + $0x58] sm:$0xf] %vm537, %v495
  %561 = vst.msk [vmem:[%s4 + $0x5c] sm:$0xf] %vm537, %v496
  %562 = vst.msk [vmem:[%s4 + $0x60] sm:$0xf] %vm537, %v497
  %563 = vst.msk [vmem:[%s4 + $0x64] sm:$0xf] %vm537, %v498
  %564 = vst.msk [vmem:[%s4 + $0x68] sm:$0xf] %vm537, %v499
  %565 = vst.msk [vmem:[%s4 + $0x6c] sm:$0xf] %vm537, %v500
  %566 = vst.msk [vmem:[%s4 + $0x70] sm:$0xf] %vm537, %v501
  %567 = vst.msk [vmem:[%s4 + $0x74] sm:$0xf] %vm537, %v502
  %568 = vst.msk [vmem:[%s4 + $0x78] sm:$0xf] %vm537, %v503
  %569 = vst.msk [vmem:[%s4 + $0x7c] sm:$0xf] %vm537, %v504
  %570 = vst.msk [vmem:[%s4 + $0x80] sm:$0xf] %vm537, %v505
  %571 = vst.msk [vmem:[%s4 + $0x84] sm:$0xf] %vm537, %v506
  %572 = vst.msk [vmem:[%s4 + $0x88] sm:$0xf] %vm537, %v507
  %573 = vst.msk [vmem:[%s4 + $0x8c] sm:$0xf] %vm537, %v508
  %574 = vst.msk [vmem:[%s4 + $0x90] sm:$0xf] %vm537, %v509
  %575 = vst.msk [vmem:[%s4 + $0x94] sm:$0xf] %vm537, %v510
  %576 = vst.msk [vmem:[%s4 + $0x98] sm:$0xf] %vm537, %v511
  %577 = vst.msk [vmem:[%s4 + $0x9c] sm:$0xf] %vm537, %v512
  %578 = vst.msk [vmem:[%s4 + $0xa0] sm:$0xf] %vm537, %v513
  %579 = vst.msk [vmem:[%s4 + $0xa4] sm:$0xf] %vm537, %v514
  %580 = vst.msk [vmem:[%s4 + $0xa8] sm:$0xf] %vm537, %v515
  %581 = vst.msk [vmem:[%s4 + $0xac] sm:$0xf] %vm537, %v516
  %582 = vst.msk [vmem:[%s4 + $0xb0] sm:$0xf] %vm537, %v517
  %583 = vst.msk [vmem:[%s4 + $0xb4] sm:$0xf] %vm537, %v518
  %584 = vst.msk [vmem:[%s4 + $0xb8] sm:$0xf] %vm537, %v519
  %585 = vst.msk [vmem:[%s4 + $0xbc] sm:$0xf] %vm537, %v520
  %586 = vst.msk [vmem:[%s4 + $0xc0] sm:$0xf] %vm537, %v521
  %587 = vst.msk [vmem:[%s4 + $0xc4] sm:$0xf] %vm537, %v522
  %588 = vst.msk [vmem:[%s4 + $0xc8] sm:$0xf] %vm537, %v523
  %589 = vst.msk [vmem:[%s4 + $0xcc] sm:$0xf] %vm537, %v524
  %590 = vst.msk [vmem:[%s4 + $0xd0] sm:$0xf] %vm537, %v525
  %591 = vst.msk [vmem:[%s4 + $0xd4] sm:$0xf] %vm537, %v526
  %592 = vst.msk [vmem:[%s4 + $0xd8] sm:$0xf] %vm537, %v527
  %593 = vst.msk [vmem:[%s4 + $0xdc] sm:$0xf] %vm537, %v528
  %594 = vst.msk [vmem:[%s4 + $0xe0] sm:$0xf] %vm537, %v529
  %595 = vst.msk [vmem:[%s4 + $0xe4] sm:$0xf] %vm537, %v530
  %596 = vst.msk [vmem:[%s4 + $0xe8] sm:$0xf] %vm537, %v531
  %597 = vst.msk [vmem:[%s4 + $0xec] sm:$0xf] %vm537, %v532
  %598 = vst.msk [vmem:[%s4 + $0xf0] sm:$0xf] %vm537, %v533
  %599 = vst.msk [vmem:[%s4 + $0xf4] sm:$0xf] %vm537, %v534
  %600 = vst.msk [vmem:[%s4 + $0xf8] sm:$0xf] %vm537, %v535
  %601 = vst.msk [vmem:[%s4 + $0xfc] sm:$0xf] %vm537, %v536
  // Predicated region
  $region18: #{resnet_forward.56} parent=0 // pred_check
    _
  $region19: #{resnet_forward.56} parent=0 // pred_check_branch
    %603 = sbr.rel (0) target = $region21
  $region20: #{resnet_forward.56} parent=0 // pred_region
    _
  $region21: #{resnet_forward.56} parent=0 // pred_fallthru
    _
  // Predicated region
  $region22: #{resnet_forward.56} parent=0 // pred_check
    _
  $region23: #{resnet_forward.56} parent=0 // pred_check_branch
    %605 = sbr.rel (0) target = $region25
  $region24: #{resnet_forward.56} parent=0 // pred_region
    _
  $region25: #{resnet_forward.56} parent=0 // pred_fallthru
    _

// kernel: resnet_forward.65
$region0: #{resnet_forward.65}
  #allocation0 [shape = 'u32[]', space=smem, size = 0x4, offset = 0x4, fixed_abs, tag = 'smem constant byte address 0x4 - core index']
  #allocation1 [shape = 'u32[72,128]{1,0:T(1,128)}', space=vmem, size = 0x9000, scoped, tag = 'internal scratch']
  %s0 = inlined_call_operand.vmem [shape: bf16[128,288], index: 0, kind: input, shape index: {}]
  %s1 = inlined_call_operand.vmem [shape: f32[288,64], index: 1, kind: input, shape index: {}]
  %s2 = inlined_call_operand.vmem [shape: f32[128,64], index: 2, kind: output, shape index: {0}]
  %s3 = inlined_call_operand.vmem [shape: f32[1,2,64], index: 3, kind: output, shape index: {1}]
  %4 = xla_tuple %s2, %s3
  %s5 = sld [smem:[#allocation0]]
  $region26: #{resnet_forward.65} parent=0
    _
  %s7 = ssub.s32 1, %s5
  %s8 = scalar_select 0, %s7, %s5
  // Predicated region
  $region2: #{resnet_forward.65} parent=0 // pred_check
    _
  $region3: #{resnet_forward.65} parent=0 // pred_check_branch
    %10 = sbr.rel (0) target = $region5
  $region4: #{resnet_forward.65} parent=0 // pred_region
    _
  $region5: #{resnet_forward.65} parent=0 // pred_fallthru
    _
  // Predicated region
  $region6: #{resnet_forward.65} parent=0 // pred_check
    _
  $region7: #{resnet_forward.65} parent=0 // pred_check_branch
    %12 = sbr.rel (0) target = $region9
  $region8: #{resnet_forward.65} parent=0 // pred_region
    _
  $region9: #{resnet_forward.65} parent=0 // pred_fallthru
    _
  %v14 = vld [vmem:[%s0] sm:$0xff]
  %v15 = vld [vmem:[%s0 + $0x8] sm:$0xf]
  %v16 = vld [vmem:[%s0 + $0xc] sm:$0xff]
  %v17 = vld [vmem:[%s0 + $0x14] sm:$0xf]
  %v18 = vld [vmem:[%s0 + $0x18] sm:$0xff]
  %v19 = vld [vmem:[%s0 + $0x20] sm:$0xf]
  %v20 = vld [vmem:[%s0 + $0x24] sm:$0xff]
  %v21 = vld [vmem:[%s0 + $0x2c] sm:$0xf]
  %v22 = vld [vmem:[%s0 + $0x30] sm:$0xff]
  %v23 = vld [vmem:[%s0 + $0x38] sm:$0xf]
  %v24 = vld [vmem:[%s0 + $0x3c] sm:$0xff]
  %v25 = vld [vmem:[%s0 + $0x44] sm:$0xf]
  %v26 = vld [vmem:[%s0 + $0x48] sm:$0xff]
  %v27 = vld [vmem:[%s0 + $0x50] sm:$0xf]
  %v28 = vld [vmem:[%s0 + $0x54] sm:$0xff]
  %v29 = vld [vmem:[%s0 + $0x5c] sm:$0xf]
  %v30 = vld [vmem:[%s0 + $0x60] sm:$0xff]
  %v31 = vld [vmem:[%s0 + $0x68] sm:$0xf]
  %v32 = vld [vmem:[%s0 + $0x6c] sm:$0xff]
  %v33 = vld [vmem:[%s0 + $0x74] sm:$0xf]
  %v34 = vld [vmem:[%s0 + $0x78] sm:$0xff]
  %v35 = vld [vmem:[%s0 + $0x80] sm:$0xf]
  %v36 = vld [vmem:[%s0 + $0x84] sm:$0xff]
  %v37 = vld [vmem:[%s0 + $0x8c] sm:$0xf]
  %v38 = vld [vmem:[%s0 + $0x90] sm:$0xff]
  %v39 = vld [vmem:[%s0 + $0x98] sm:$0xf]
  %v40 = vld [vmem:[%s0 + $0x9c] sm:$0xff]
  %v41 = vld [vmem:[%s0 + $0xa4] sm:$0xf]
  %v42 = vld [vmem:[%s0 + $0xa8] sm:$0xff]
  %v43 = vld [vmem:[%s0 + $0xb0] sm:$0xf]
  %v44 = vld [vmem:[%s0 + $0xb4] sm:$0xff]
  %v45 = vld [vmem:[%s0 + $0xbc] sm:$0xf]
  %v46 = vld [vmem:[%s1] sm:$0xff]
  %v47 = vld [vmem:[%s1 + $0x8] sm:$0xff]
  %v48 = vld [vmem:[%s1 + $0x10] sm:$0xff]
  %v49 = vld [vmem:[%s1 + $0x18] sm:$0xff]
  %v50 = vld [vmem:[%s1 + $0x20] sm:$0xff]
  %v51 = vld [vmem:[%s1 + $0x28] sm:$0xff]
  %v52 = vld [vmem:[%s1 + $0x30] sm:$0xff]
  %v53 = vld [vmem:[%s1 + $0x38] sm:$0xff]
  %v54 = vld [vmem:[%s1 + $0x40] sm:$0xff]
  %v55 = vld [vmem:[%s1 + $0x48] sm:$0xff]
  %v56 = vld [vmem:[%s1 + $0x50] sm:$0xff]
  %v57 = vld [vmem:[%s1 + $0x58] sm:$0xff]
  %v58 = vld [vmem:[%s1 + $0x60] sm:$0xff]
  %v59 = vld [vmem:[%s1 + $0x68] sm:$0xff]
  %v60 = vld [vmem:[%s1 + $0x70] sm:$0xff]
  %v61 = vld [vmem:[%s1 + $0x78] sm:$0xff]
  %v62 = vld [vmem:[%s1 + $0x80] sm:$0xff]
  %v63 = vld [vmem:[%s1 + $0x88] sm:$0xff]
  %v64 = vld [vmem:[%s1 + $0x90] sm:$0xff]
  %v65 = vld [vmem:[%s1 + $0x98] sm:$0xff]
  %v66 = vld [vmem:[%s1 + $0xa0] sm:$0xff]
  %v67 = vld [vmem:[%s1 + $0xa8] sm:$0xff]
  %v68 = vld [vmem:[%s1 + $0xb0] sm:$0xff]
  %v69 = vld [vmem:[%s1 + $0xb8] sm:$0xff]
  %v70 = vld [vmem:[%s1 + $0xc0] sm:$0xff]
  %v71 = vld [vmem:[%s1 + $0xc8] sm:$0xff]
  %v72 = vld [vmem:[%s1 + $0xd0] sm:$0xff]
  %v73 = vld [vmem:[%s1 + $0xd8] sm:$0xff]
  %v74 = vld [vmem:[%s1 + $0xe0] sm:$0xff]
  %v75 = vld [vmem:[%s1 + $0xe8] sm:$0xff]
  %v76 = vld [vmem:[%s1 + $0xf0] sm:$0xff]
  %v77 = vld [vmem:[%s1 + $0xf8] sm:$0xff]
  %v78 = vld [vmem:[%s1 + $0x100] sm:$0xff]
  %v79 = vld [vmem:[%s1 + $0x108] sm:$0xff]
  %v80 = vld [vmem:[%s1 + $0x110] sm:$0xff]
  %v81 = vld [vmem:[%s1 + $0x118] sm:$0xff]
  %v82 = vpack.c.bf16 %v47, %v46
  %v83 = vpack.c.bf16 %v49, %v48
  %v84 = vpack.c.bf16 %v51, %v50
  %v85 = vpack.c.bf16 %v53, %v52
  %v86 = vpack.c.bf16 %v55, %v54
  %v87 = vpack.c.bf16 %v57, %v56
  %v88 = vpack.c.bf16 %v59, %v58
  %v89 = vpack.c.bf16 %v61, %v60
  %v90 = vpack.c.bf16 %v63, %v62
  %v91 = vpack.c.bf16 %v65, %v64
  %v92 = vpack.c.bf16 %v67, %v66
  %v93 = vpack.c.bf16 %v69, %v68
  %v94 = vpack.c.bf16 %v71, %v70
  %v95 = vpack.c.bf16 %v73, %v72
  %v96 = vpack.c.bf16 %v75, %v74
  %v97 = vpack.c.bf16 %v77, %v76
  %v98 = vpack.c.bf16 %v79, %v78
  %v99 = vpack.c.bf16 %v81, %v80
  %v132 = vunpack.c.l.b16 %v14
  %v133 = vunpack.c.h.b16 %v14
  %v134 = vunpack.c.l.b16 %v15
  %v135 = vunpack.c.l.b16 %v16
  %v136 = vunpack.c.h.b16 %v16
  %v137 = vunpack.c.l.b16 %v17
  %v138 = vunpack.c.l.b16 %v18
  %v139 = vunpack.c.h.b16 %v18
  %v140 = vunpack.c.l.b16 %v19
  %v141 = vunpack.c.l.b16 %v20
  %v142 = vunpack.c.h.b16 %v20
  %v143 = vunpack.c.l.b16 %v21
  %v144 = vunpack.c.l.b16 %v22
  %v145 = vunpack.c.h.b16 %v22
  %v146 = vunpack.c.l.b16 %v23
  %v147 = vunpack.c.l.b16 %v24
  %v148 = vunpack.c.h.b16 %v24
  %v149 = vunpack.c.l.b16 %v25
  %v150 = vunpack.c.l.b16 %v26
  %v151 = vunpack.c.h.b16 %v26
  %v152 = vunpack.c.l.b16 %v27
  %v153 = vunpack.c.l.b16 %v28
  %v154 = vunpack.c.h.b16 %v28
  %v155 = vunpack.c.l.b16 %v29
  %v156 = vunpack.c.l.b16 %v30
  %v157 = vunpack.c.h.b16 %v30
  %v158 = vunpack.c.l.b16 %v31
  %v159 = vunpack.c.l.b16 %v32
  %v160 = vunpack.c.h.b16 %v32
  %v161 = vunpack.c.l.b16 %v33
  %v162 = vunpack.c.l.b16 %v34
  %v163 = vunpack.c.h.b16 %v34
  %v164 = vunpack.c.l.b16 %v35
  %v165 = vunpack.c.l.b16 %v36
  %v166 = vunpack.c.h.b16 %v36
  %v167 = vunpack.c.l.b16 %v37
  %v168 = vunpack.c.l.b16 %v38
  %v169 = vunpack.c.h.b16 %v38
  %v170 = vunpack.c.l.b16 %v39
  %v171 = vunpack.c.l.b16 %v40
  %v172 = vunpack.c.h.b16 %v40
  %v173 = vunpack.c.l.b16 %v41
  %v174 = vunpack.c.l.b16 %v42
  %v175 = vunpack.c.h.b16 %v42
  %v176 = vunpack.c.l.b16 %v43
  %v177 = vunpack.c.l.b16 %v44
  %v178 = vunpack.c.h.b16 %v44
  %v179 = vunpack.c.l.b16 %v45
  %v180 = vpack.c.b16 %v135, %v132
  %v181 = vpack.c.b16 %v136, %v133
  %v182 = vpack.c.b16 %v137, %v134
  %v183 = vpack.c.b16 %v141, %v138
  %v184 = vpack.c.b16 %v142, %v139
  %v185 = vpack.c.b16 %v143, %v140
  %v186 = vpack.c.b16 %v147, %v144
  %v187 = vpack.c.b16 %v148, %v145
  %v188 = vpack.c.b16 %v149, %v146
  %v189 = vpack.c.b16 %v153, %v150
  %v190 = vpack.c.b16 %v154, %v151
  %v191 = vpack.c.b16 %v155, %v152
  %v192 = vpack.c.b16 %v159, %v156
  %v193 = vpack.c.b16 %v160, %v157
  %v194 = vpack.c.b16 %v161, %v158
  %v195 = vpack.c.b16 %v165, %v162
  %v196 = vpack.c.b16 %v166, %v163
  %v197 = vpack.c.b16 %v167, %v164
  %v198 = vpack.c.b16 %v171, %v168
  %v199 = vpack.c.b16 %v172, %v169
  %v200 = vpack.c.b16 %v173, %v170
  %v201 = vpack.c.b16 %v177, %v174
  %v202 = vpack.c.b16 %v178, %v175
  %v203 = vpack.c.b16 %v179, %v176
  %vm220 = vcmask 261120
  %v222 = vsel %vm220, %v182, 0
  %v225 = vsel %vm220, %v185, 0
  %v228 = vsel %vm220, %v188, 0
  %v231 = vsel %vm220, %v191, 0
  %v234 = vsel %vm220, %v194, 0
  %v237 = vsel %vm220, %v197, 0
  %v240 = vsel %vm220, %v200, 0
  %v243 = vsel %vm220, %v203, 0
  %245 = vmatpush.bf16.msra.mxu0 %v89
  %246 = vmatpush.bf16.msra.mxu0 %v88
  %247 = vmatpush.bf16.msra.mxu0 %v87
  %248 = vmatpush.bf16.msra.mxu0 %v86
  %249 = vmatpush.bf16.msra.mxu0 %v85
  %250 = vmatpush.bf16.msra.mxu0 %v84
  %251 = vmatpush.bf16.msra.mxu0 %v83
  %252 = vmatpush.bf16.msra.mxu0 %v82
  %253 = vmatmul.bf16.gmra.mxu0 %v180
  %v254 = vpop.f32.mrf.mxu0
  %v255 = vadd.f32 0.0, %v254
  %v256 = vpop.f32.mrf.mxu0
  %v257 = vadd.f32 0.0, %v256
  %258 = vmatmul.bf16.gmra.mxu0 %v183
  %v259 = vpop.f32.mrf.mxu0
  %v260 = vadd.f32 0.0, %v259
  %v261 = vpop.f32.mrf.mxu0
  %v262 = vadd.f32 0.0, %v261
  %263 = vmatmul.bf16.gmra.mxu0 %v186
  %v264 = vpop.f32.mrf.mxu0
  %v265 = vadd.f32 0.0, %v264
  %v266 = vpop.f32.mrf.mxu0
  %v267 = vadd.f32 0.0, %v266
  %268 = vmatmul.bf16.gmra.mxu0 %v189
  %v269 = vpop.f32.mrf.mxu0
  %v270 = vadd.f32 0.0, %v269
  %v271 = vpop.f32.mrf.mxu0
  %v272 = vadd.f32 0.0, %v271
  %273 = vmatmul.bf16.gmra.mxu0 %v192
  %v274 = vpop.f32.mrf.mxu0
  %v275 = vadd.f32 0.0, %v274
  %v276 = vpop.f32.mrf.mxu0
  %v277 = vadd.f32 0.0, %v276
  %278 = vmatmul.bf16.gmra.mxu0 %v195
  %v279 = vpop.f32.mrf.mxu0
  %v280 = vadd.f32 0.0, %v279
  %v281 = vpop.f32.mrf.mxu0
  %v282 = vadd.f32 0.0, %v281
  %283 = vmatmul.bf16.gmra.mxu0 %v198
  %v284 = vpop.f32.mrf.mxu0
  %v285 = vadd.f32 0.0, %v284
  %v286 = vpop.f32.mrf.mxu0
  %v287 = vadd.f32 0.0, %v286
  %288 = vmatmul.bf16.gmra.mxu0 %v201
  %v289 = vpop.f32.mrf.mxu0
  %v290 = vadd.f32 0.0, %v289
  %v291 = vpop.f32.mrf.mxu0
  %v292 = vadd.f32 0.0, %v291
  %293 = vdwg.mxu0
  %294 = vmatpush.bf16.msra.mxu0 %v97
  %295 = vmatpush.bf16.msra.mxu0 %v96
  %296 = vmatpush.bf16.msra.mxu0 %v95
  %297 = vmatpush.bf16.msra.mxu0 %v94
  %298 = vmatpush.bf16.msra.mxu0 %v93
  %299 = vmatpush.bf16.msra.mxu0 %v92
  %300 = vmatpush.bf16.msra.mxu0 %v91
  %301 = vmatpush.bf16.msra.mxu0 %v90
  %302 = vmatmul.bf16.gmra.mxu0 %v181
  %v303 = vpop.f32.mrf.mxu0
  %v304 = vadd.f32 %v255, %v303
  %v305 = vpop.f32.mrf.mxu0
  %v306 = vadd.f32 %v257, %v305
  %307 = vmatmul.bf16.gmra.mxu0 %v184
  %v308 = vpop.f32.mrf.mxu0
  %v309 = vadd.f32 %v260, %v308
  %v310 = vpop.f32.mrf.mxu0
  %v311 = vadd.f32 %v262, %v310
  %312 = vmatmul.bf16.gmra.mxu0 %v187
  %v313 = vpop.f32.mrf.mxu0
  %v314 = vadd.f32 %v265, %v313
  %v315 = vpop.f32.mrf.mxu0
  %v316 = vadd.f32 %v267, %v315
  %317 = vmatmul.bf16.gmra.mxu0 %v190
  %v318 = vpop.f32.mrf.mxu0
  %v319 = vadd.f32 %v270, %v318
  %v320 = vpop.f32.mrf.mxu0
  %v321 = vadd.f32 %v272, %v320
  %322 = vmatmul.bf16.gmra.mxu0 %v193
  %v323 = vpop.f32.mrf.mxu0
  %v324 = vadd.f32 %v275, %v323
  %v325 = vpop.f32.mrf.mxu0
  %v326 = vadd.f32 %v277, %v325
  %327 = vmatmul.bf16.gmra.mxu0 %v196
  %v328 = vpop.f32.mrf.mxu0
  %v329 = vadd.f32 %v280, %v328
  %v330 = vpop.f32.mrf.mxu0
  %v331 = vadd.f32 %v282, %v330
  %332 = vmatmul.bf16.gmra.mxu0 %v199
  %v333 = vpop.f32.mrf.mxu0
  %v334 = vadd.f32 %v285, %v333
  %v335 = vpop.f32.mrf.mxu0
  %v336 = vadd.f32 %v287, %v335
  %337 = vmatmul.bf16.gmra.mxu0 %v202
  %v338 = vpop.f32.mrf.mxu0
  %v339 = vadd.f32 %v290, %v338
  %v340 = vpop.f32.mrf.mxu0
  %v341 = vadd.f32 %v292, %v340
  %342 = vdwg.mxu0
  %343 = vmatpush.bf16.msra.mxu0 0
  %344 = vmatpush.bf16.msra.mxu0 0
  %345 = vmatpush.bf16.msra.mxu0 0
  %346 = vmatpush.bf16.msra.mxu0 0
  %347 = vmatpush.bf16.msra.mxu0 0
  %348 = vmatpush.bf16.msra.mxu0 0
  %349 = vmatpush.bf16.msra.mxu0 %v99
  %350 = vmatpush.bf16.msra.mxu0 %v98
  %351 = vmatmul.bf16.gmra.mxu0 %v222
  %v352 = vpop.f32.mrf.mxu0
  %v353 = vadd.f32 %v304, %v352
  %v354 = vpop.f32.mrf.mxu0
  %v355 = vadd.f32 %v306, %v354
  %356 = vmatmul.bf16.gmra.mxu0 %v225
  %v357 = vpop.f32.mrf.mxu0
  %v358 = vadd.f32 %v309, %v357
  %v359 = vpop.f32.mrf.mxu0
  %v360 = vadd.f32 %v311, %v359
  %361 = vmatmul.bf16.gmra.mxu0 %v228
  %v362 = vpop.f32.mrf.mxu0
  %v363 = vadd.f32 %v314, %v362
  %v364 = vpop.f32.mrf.mxu0
  %v365 = vadd.f32 %v316, %v364
  %366 = vmatmul.bf16.gmra.mxu0 %v231
  %v367 = vpop.f32.mrf.mxu0
  %v368 = vadd.f32 %v319, %v367
  %v369 = vpop.f32.mrf.mxu0
  %v370 = vadd.f32 %v321, %v369
  %371 = vmatmul.bf16.gmra.mxu0 %v234
  %v372 = vpop.f32.mrf.mxu0
  %v373 = vadd.f32 %v324, %v372
  %v374 = vpop.f32.mrf.mxu0
  %v375 = vadd.f32 %v326, %v374
  %376 = vmatmul.bf16.gmra.mxu0 %v237
  %v377 = vpop.f32.mrf.mxu0
  %v378 = vadd.f32 %v329, %v377
  %v379 = vpop.f32.mrf.mxu0
  %v380 = vadd.f32 %v331, %v379
  %381 = vmatmul.bf16.gmra.mxu0 %v240
  %v382 = vpop.f32.mrf.mxu0
  %v383 = vadd.f32 %v334, %v382
  %v384 = vpop.f32.mrf.mxu0
  %v385 = vadd.f32 %v336, %v384
  %386 = vmatmul.bf16.gmra.mxu0 %v243
  %v387 = vpop.f32.mrf.mxu0
  %v388 = vadd.f32 %v339, %v387
  %v389 = vpop.f32.mrf.mxu0
  %v390 = vadd.f32 %v341, %v389
  %391 = vdwg.mxu0
  %vm392 = vcmask 523264
  %393 = vst.msk [vmem:[%s2] sm:$0xff] %vm392, %v353
  %394 = vst.msk [vmem:[%s2 + $0x8] sm:$0xff] %vm392, %v355
  %395 = vst.msk [vmem:[%s2 + $0x10] sm:$0xff] %vm392, %v358
  %396 = vst.msk [vmem:[%s2 + $0x18] sm:$0xff] %vm392, %v360
  %397 = vst.msk [vmem:[%s2 + $0x20] sm:$0xff] %vm392, %v363
  %398 = vst.msk [vmem:[%s2 + $0x28] sm:$0xff] %vm392, %v365
  %399 = vst.msk [vmem:[%s2 + $0x30] sm:$0xff] %vm392, %v368
  %400 = vst.msk [vmem:[%s2 + $0x38] sm:$0xff] %vm392, %v370
  %401 = vst.msk [vmem:[%s2 + $0x40] sm:$0xff] %vm392, %v373
  %402 = vst.msk [vmem:[%s2 + $0x48] sm:$0xff] %vm392, %v375
  %403 = vst.msk [vmem:[%s2 + $0x50] sm:$0xff] %vm392, %v378
  %404 = vst.msk [vmem:[%s2 + $0x58] sm:$0xff] %vm392, %v380
  %405 = vst.msk [vmem:[%s2 + $0x60] sm:$0xff] %vm392, %v383
  %406 = vst.msk [vmem:[%s2 + $0x68] sm:$0xff] %vm392, %v385
  %407 = vst.msk [vmem:[%s2 + $0x70] sm:$0xff] %vm392, %v388
  %408 = vst.msk [vmem:[%s2 + $0x78] sm:$0xff] %vm392, %v390
  %v409 = vsel %vm392, %v353, 0.0
  %v410 = vsel %vm392, %v355, 0.0
  %v411 = vadd.f32 %v409, %v410
  %v412 = vsel %vm392, %v358, 0.0
  %v413 = vadd.f32 %v411, %v412
  %v414 = vsel %vm392, %v360, 0.0
  %v415 = vadd.f32 %v413, %v414
  %v416 = vsel %vm392, %v363, 0.0
  %v417 = vadd.f32 %v415, %v416
  %v418 = vsel %vm392, %v365, 0.0
  %v419 = vadd.f32 %v417, %v418
  %v420 = vsel %vm392, %v368, 0.0
  %v421 = vadd.f32 %v419, %v420
  %v422 = vsel %vm392, %v370, 0.0
  %v423 = vadd.f32 %v421, %v422
  %v424 = vsel %vm392, %v373, 0.0
  %v425 = vadd.f32 %v423, %v424
  %v426 = vsel %vm392, %v375, 0.0
  %v427 = vadd.f32 %v425, %v426
  %v428 = vsel %vm392, %v378, 0.0
  %v429 = vadd.f32 %v427, %v428
  %v430 = vsel %vm392, %v380, 0.0
  %v431 = vadd.f32 %v429, %v430
  %v432 = vsel %vm392, %v383, 0.0
  %v433 = vadd.f32 %v431, %v432
  %v434 = vsel %vm392, %v385, 0.0
  %v435 = vadd.f32 %v433, %v434
  %v436 = vsel %vm392, %v388, 0.0
  %v437 = vadd.f32 %v435, %v436
  %v438 = vsel %vm392, %v390, 0.0
  %v439 = vadd.f32 %v437, %v438
  %v440 = vrot.slane %v439, 4
  %v441 = vadd.f32 %v439, %v440
  %v442 = vrot.slane %v441, 2
  %v443 = vadd.f32 %v441, %v442
  %v444 = vrot.slane %v443, 1
  %v445 = vadd.f32 %v443, %v444
  %vm446 = vcmask 516096
  %447 = vst.msk [vmem:[%s3] sm:$0x1] %vm446, %v445
  %v448 = vmul.f32 %v353, %v353
  %v449 = vmul.f32 %v355, %v355
  %v450 = vmul.f32 %v358, %v358
  %v451 = vmul.f32 %v360, %v360
  %v452 = vmul.f32 %v363, %v363
  %v453 = vmul.f32 %v365, %v365
  %v454 = vmul.f32 %v368, %v368
  %v455 = vmul.f32 %v370, %v370
  %v456 = vmul.f32 %v373, %v373
  %v457 = vmul.f32 %v375, %v375
  %v458 = vmul.f32 %v378, %v378
  %v459 = vmul.f32 %v380, %v380
  %v460 = vmul.f32 %v383, %v383
  %v461 = vmul.f32 %v385, %v385
  %v462 = vmul.f32 %v388, %v388
  %v463 = vmul.f32 %v390, %v390
  %v464 = vsel %vm392, %v448, 0.0
  %v465 = vsel %vm392, %v449, 0.0
  %v466 = vadd.f32 %v464, %v465
  %v467 = vsel %vm392, %v450, 0.0
  %v468 = vadd.f32 %v466, %v467
  %v469 = vsel %vm392, %v451, 0.0
  %v470 = vadd.f32 %v468, %v469
  %v471 = vsel %vm392, %v452, 0.0
  %v472 = vadd.f32 %v470, %v471
  %v473 = vsel %vm392, %v453, 0.0
  %v474 = vadd.f32 %v472, %v473
  %v475 = vsel %vm392, %v454, 0.0
  %v476 = vadd.f32 %v474, %v475
  %v477 = vsel %vm392, %v455, 0.0
  %v478 = vadd.f32 %v476, %v477
  %v479 = vsel %vm392, %v456, 0.0
  %v480 = vadd.f32 %v478, %v479
  %v481 = vsel %vm392, %v457, 0.0
  %v482 = vadd.f32 %v480, %v481
  %v483 = vsel %vm392, %v458, 0.0
  %v484 = vadd.f32 %v482, %v483
  %v485 = vsel %vm392, %v459, 0.0
  %v486 = vadd.f32 %v484, %v485
  %v487 = vsel %vm392, %v460, 0.0
  %v488 = vadd.f32 %v486, %v487
  %v489 = vsel %vm392, %v461, 0.0
  %v490 = vadd.f32 %v488, %v489
  %v491 = vsel %vm392, %v462, 0.0
  %v492 = vadd.f32 %v490, %v491
  %v493 = vsel %vm392, %v463, 0.0
  %v494 = vadd.f32 %v492, %v493
  %v495 = vrot.slane %v494, 4
  %v496 = vadd.f32 %v494, %v495
  %v497 = vrot.slane %v496, 2
  %v498 = vadd.f32 %v496, %v497
  %v499 = vrot.slane %v498, 1
  %v500 = vadd.f32 %v498, %v499
  %501 = vst.msk [vmem:[%s3 + $0x1] sm:$0x1] %vm446, %v500
  // Predicated region
  $region10: #{resnet_forward.65} parent=0 // pred_check
    _
  $region11: #{resnet_forward.65} parent=0 // pred_check_branch
    %503 = sbr.rel (0) target = $region13
  $region12: #{resnet_forward.65} parent=0 // pred_region
    _
  $region13: #{resnet_forward.65} parent=0 // pred_fallthru
    _
  // Predicated region
  $region14: #{resnet_forward.65} parent=0 // pred_check
    _
  $region15: #{resnet_forward.65} parent=0 // pred_check_branch
    %505 = sbr.rel (0) target = $region17
  $region16: #{resnet_forward.65} parent=0 // pred_region
    _
  $region17: #{resnet_forward.65} parent=0 // pred_fallthru
    _
  // Predicated region
  $region18: #{resnet_forward.65} parent=0 // pred_check
    _
  $region19: #{resnet_forward.65} parent=0 // pred_check_branch
    %507 = sbr.rel (0) target = $region21
  $region20: #{resnet_forward.65} parent=0 // pred_region
    _
  $region21: #{resnet_forward.65} parent=0 // pred_fallthru
    _
  // Predicated region
  $region22: #{resnet_forward.65} parent=0 // pred_check
    _
  $region23: #{resnet_forward.65} parent=0 // pred_check_branch
    %509 = sbr.rel (0) target = $region25
  $region24: #{resnet_forward.65} parent=0 // pred_region
    _
  $region25: #{resnet_forward.65} parent=0 // pred_fallthru
    _

// kernel: resnet_forward.66
$region0: #{resnet_forward.66}
  #allocation0 [shape = 'u32[]', space=smem, size = 0x4, offset = 0x4, fixed_abs, tag = 'smem constant byte address 0x4 - core index']
  #allocation1 [shape = 'u32[72,128]{1,0:T(1,128)}', space=vmem, size = 0x9000, scoped, tag = 'internal scratch']
  %s0 = inlined_call_operand.vmem [shape: f32[128,64], index: 0, kind: input, shape index: {}]
  %s1 = inlined_call_operand.vmem [shape: f32[1,64], index: 1, kind: input, shape index: {}]
  %s2 = inlined_call_operand.vmem [shape: f32[1,64], index: 2, kind: input, shape index: {}]
  %s3 = inlined_call_operand.vmem [shape: bf16[128,64], index: 3, kind: output, shape index: {}]
  %s4 = sld [smem:[#allocation0]]
  $region22: #{resnet_forward.66} parent=0
    _
  %s6 = ssub.s32 1, %s4
  %s7 = scalar_select 0, %s6, %s4
  // Predicated region
  $region2: #{resnet_forward.66} parent=0 // pred_check
    _
  $region3: #{resnet_forward.66} parent=0 // pred_check_branch
    %9 = sbr.rel (0) target = $region5
  $region4: #{resnet_forward.66} parent=0 // pred_region
    _
  $region5: #{resnet_forward.66} parent=0 // pred_fallthru
    _
  // Predicated region
  $region6: #{resnet_forward.66} parent=0 // pred_check
    _
  $region7: #{resnet_forward.66} parent=0 // pred_check_branch
    %11 = sbr.rel (0) target = $region9
  $region8: #{resnet_forward.66} parent=0 // pred_region
    _
  $region9: #{resnet_forward.66} parent=0 // pred_fallthru
    _
  // Predicated region
  $region10: #{resnet_forward.66} parent=0 // pred_check
    _
  $region11: #{resnet_forward.66} parent=0 // pred_check_branch
    %13 = sbr.rel (0) target = $region13
  $region12: #{resnet_forward.66} parent=0 // pred_region
    _
  $region13: #{resnet_forward.66} parent=0 // pred_fallthru
    _
  %v14 = vld [vmem:[%s0] sm:$0xff]
  %v15 = vld [vmem:[%s0 + $0x8] sm:$0xff]
  %v16 = vld [vmem:[%s0 + $0x10] sm:$0xff]
  %v17 = vld [vmem:[%s0 + $0x18] sm:$0xff]
  %v18 = vld [vmem:[%s0 + $0x20] sm:$0xff]
  %v19 = vld [vmem:[%s0 + $0x28] sm:$0xff]
  %v20 = vld [vmem:[%s0 + $0x30] sm:$0xff]
  %v21 = vld [vmem:[%s0 + $0x38] sm:$0xff]
  %v22 = vld [vmem:[%s0 + $0x40] sm:$0xff]
  %v23 = vld [vmem:[%s0 + $0x48] sm:$0xff]
  %v24 = vld [vmem:[%s0 + $0x50] sm:$0xff]
  %v25 = vld [vmem:[%s0 + $0x58] sm:$0xff]
  %v26 = vld [vmem:[%s0 + $0x60] sm:$0xff]
  %v27 = vld [vmem:[%s0 + $0x68] sm:$0xff]
  %v28 = vld [vmem:[%s0 + $0x70] sm:$0xff]
  %v29 = vld [vmem:[%s0 + $0x78] sm:$0xff]
  %v30 = vld [vmem:[%s1] sm:$0x1]
  %v32 = vperm.slane %v30, 0
  %v34 = vmul.f32 %v14, %v32
  %v35 = vmul.f32 %v15, %v32
  %v36 = vmul.f32 %v16, %v32
  %v37 = vmul.f32 %v17, %v32
  %v38 = vmul.f32 %v18, %v32
  %v39 = vmul.f32 %v19, %v32
  %v40 = vmul.f32 %v20, %v32
  %v41 = vmul.f32 %v21, %v32
  %v42 = vmul.f32 %v22, %v32
  %v43 = vmul.f32 %v23, %v32
  %v44 = vmul.f32 %v24, %v32
  %v45 = vmul.f32 %v25, %v32
  %v46 = vmul.f32 %v26, %v32
  %v47 = vmul.f32 %v27, %v32
  %v48 = vmul.f32 %v28, %v32
  %v49 = vmul.f32 %v29, %v32
  %v50 = vld [vmem:[%s2] sm:$0x1]
  %v52 = vperm.slane %v50, 0
  %v54 = vadd.f32 %v34, %v52
  %v55 = vadd.f32 %v35, %v52
  %v56 = vadd.f32 %v36, %v52
  %v57 = vadd.f32 %v37, %v52
  %v58 = vadd.f32 %v38, %v52
  %v59 = vadd.f32 %v39, %v52
  %v60 = vadd.f32 %v40, %v52
  %v61 = vadd.f32 %v41, %v52
  %v62 = vadd.f32 %v42, %v52
  %v63 = vadd.f32 %v43, %v52
  %v64 = vadd.f32 %v44, %v52
  %v65 = vadd.f32 %v45, %v52
  %v66 = vadd.f32 %v46, %v52
  %v67 = vadd.f32 %v47, %v52
  %v68 = vadd.f32 %v48, %v52
  %v69 = vadd.f32 %v49, %v52
  %v70 = vmax.f32 %v54, 0.0
  %v71 = vmax.f32 %v55, 0.0
  %v72 = vmax.f32 %v56, 0.0
  %v73 = vmax.f32 %v57, 0.0
  %v74 = vmax.f32 %v58, 0.0
  %v75 = vmax.f32 %v59, 0.0
  %v76 = vmax.f32 %v60, 0.0
  %v77 = vmax.f32 %v61, 0.0
  %v78 = vmax.f32 %v62, 0.0
  %v79 = vmax.f32 %v63, 0.0
  %v80 = vmax.f32 %v64, 0.0
  %v81 = vmax.f32 %v65, 0.0
  %v82 = vmax.f32 %v66, 0.0
  %v83 = vmax.f32 %v67, 0.0
  %v84 = vmax.f32 %v68, 0.0
  %v85 = vmax.f32 %v69, 0.0
  %v86 = vpack.c.bf16 %v70, %v70
  %v87 = vpack.c.bf16 %v71, %v71
  %v88 = vpack.c.bf16 %v72, %v72
  %v89 = vpack.c.bf16 %v73, %v73
  %v90 = vpack.c.bf16 %v74, %v74
  %v91 = vpack.c.bf16 %v75, %v75
  %v92 = vpack.c.bf16 %v76, %v76
  %v93 = vpack.c.bf16 %v77, %v77
  %v94 = vpack.c.bf16 %v78, %v78
  %v95 = vpack.c.bf16 %v79, %v79
  %v96 = vpack.c.bf16 %v80, %v80
  %v97 = vpack.c.bf16 %v81, %v81
  %v98 = vpack.c.bf16 %v82, %v82
  %v99 = vpack.c.bf16 %v83, %v83
  %v100 = vpack.c.bf16 %v84, %v84
  %v101 = vpack.c.bf16 %v85, %v85
  %vm102 = vcmask 519168
  %103 = vst.msk [vmem:[%s3] sm:$0xf] %vm102, %v86
  %104 = vst.msk [vmem:[%s3 + $0x4] sm:$0xf] %vm102, %v87
  %105 = vst.msk [vmem:[%s3 + $0x8] sm:$0xf] %vm102, %v88
  %106 = vst.msk [vmem:[%s3 + $0xc] sm:$0xf] %vm102, %v89
  %107 = vst.msk [vmem:[%s3 + $0x10] sm:$0xf] %vm102, %v90
  %108 = vst.msk [vmem:[%s3 + $0x14] sm:$0xf] %vm102, %v91
  %109 = vst.msk [vmem:[%s3 + $0x18] sm:$0xf] %vm102, %v92
  %110 = vst.msk [vmem:[%s3 + $0x1c] sm:$0xf] %vm102, %v93
  %111 = vst.msk [vmem:[%s3 + $0x20] sm:$0xf] %vm102, %v94
  %112 = vst.msk [vmem:[%s3 + $0x24] sm:$0xf] %vm102, %v95
  %113 = vst.msk [vmem:[%s3 + $0x28] sm:$0xf] %vm102, %v96
  %114 = vst.msk [vmem:[%s3 + $0x2c] sm:$0xf] %vm102, %v97
  %115 = vst.msk [vmem:[%s3 + $0x30] sm:$0xf] %vm102, %v98
  %116 = vst.msk [vmem:[%s3 + $0x34] sm:$0xf] %vm102, %v99
  %117 = vst.msk [vmem:[%s3 + $0x38] sm:$0xf] %vm102, %v100
  %118 = vst.msk [vmem:[%s3 + $0x3c] sm:$0xf] %vm102, %v101
  // Predicated region
  $region14: #{resnet_forward.66} parent=0 // pred_check
    _
  $region15: #{resnet_forward.66} parent=0 // pred_check_branch
    %120 = sbr.rel (0) target = $region17
  $region16: #{resnet_forward.66} parent=0 // pred_region
    _
  $region17: #{resnet_forward.66} parent=0 // pred_fallthru
    _
  // Predicated region
  $region18: #{resnet_forward.66} parent=0 // pred_check
    _
  $region19: #{resnet_forward.66} parent=0 // pred_check_branch
    %122 = sbr.rel (0) target = $region21
  $region20: #{resnet_forward.66} parent=0 // pred_region
    _
  $region21: #{resnet_forward.66} parent=0 // pred_fallthru
    _

// kernel: resnet_forward.67
$region0: #{resnet_forward.67}
  #allocation0 [shape = 'u32[]', space=smem, size = 0x4, offset = 0x4, fixed_abs, tag = 'smem constant byte address 0x4 - core index']
  #allocation1 [shape = 'u32[72,128]{1,0:T(1,128)}', space=vmem, size = 0x9000, scoped, tag = 'internal scratch']
  %s0 = inlined_call_operand.vmem [shape: bf16[128,576], index: 0, kind: input, shape index: {}]
  %s1 = inlined_call_operand.vmem [shape: f32[576,64], index: 1, kind: input, shape index: {}]
  %s2 = inlined_call_operand.vmem [shape: f32[128,64], index: 2, kind: output, shape index: {0}]
  %s3 = inlined_call_operand.vmem [shape: f32[1,2,64], index: 3, kind: output, shape index: {1}]
  %4 = xla_tuple %s2, %s3
  %s5 = sld [smem:[#allocation0]]
  $region26: #{resnet_forward.67} parent=0
    _
  %s7 = ssub.s32 1, %s5
  %s8 = scalar_select 0, %s7, %s5
  // Predicated region
  $region2: #{resnet_forward.67} parent=0 // pred_check
    _
  $region3: #{resnet_forward.67} parent=0 // pred_check_branch
    %10 = sbr.rel (0) target = $region5
  $region4: #{resnet_forward.67} parent=0 // pred_region
    _
  $region5: #{resnet_forward.67} parent=0 // pred_fallthru
    _
  // Predicated region
  $region6: #{resnet_forward.67} parent=0 // pred_check
    _
  $region7: #{resnet_forward.67} parent=0 // pred_check_branch
    %12 = sbr.rel (0) target = $region9
  $region8: #{resnet_forward.67} parent=0 // pred_region
    _
  $region9: #{resnet_forward.67} parent=0 // pred_fallthru
    _
  %v14 = vld [vmem:[%s0] sm:$0xff]
  %v15 = vld [vmem:[%s0 + $0x8] sm:$0xff]
  %v16 = vld [vmem:[%s0 + $0x10] sm:$0xf]
  %v17 = vld [vmem:[%s0 + $0x14] sm:$0xff]
  %v18 = vld [vmem:[%s0 + $0x1c] sm:$0xff]
  %v19 = vld [vmem:[%s0 + $0x24] sm:$0xf]
  %v20 = vld [vmem:[%s0 + $0x28] sm:$0xff]
  %v21 = vld [vmem:[%s0 + $0x30] sm:$0xff]
  %v22 = vld [vmem:[%s0 + $0x38] sm:$0xf]
  %v23 = vld [vmem:[%s0 + $0x3c] sm:$0xff]
  %v24 = vld [vmem:[%s0 + $0x44] sm:$0xff]
  %v25 = vld [vmem:[%s0 + $0x4c] sm:$0xf]
  %v26 = vld [vmem:[%s0 + $0x50] sm:$0xff]
  %v27 = vld [vmem:[%s0 + $0x58] sm:$0xff]
  %v28 = vld [vmem:[%s0 + $0x60] sm:$0xf]
  %v29 = vld [vmem:[%s0 + $0x64] sm:$0xff]
  %v30 = vld [vmem:[%s0 + $0x6c] sm:$0xff]
  %v31 = vld [vmem:[%s0 + $0x74] sm:$0xf]
  %v32 = vld [vmem:[%s0 + $0x78] sm:$0xff]
  %v33 = vld [vmem:[%s0 + $0x80] sm:$0xff]
  %v34 = vld [vmem:[%s0 + $0x88] sm:$0xf]
  %v35 = vld [vmem:[%s0 + $0x8c] sm:$0xff]
  %v36 = vld [vmem:[%s0 + $0x94] sm:$0xff]
  %v37 = vld [vmem:[%s0 + $0x9c] sm:$0xf]
  %v38 = vld [vmem:[%s0 + $0xa0] sm:$0xff]
  %v39 = vld [vmem:[%s0 + $0xa8] sm:$0xff]
  %v40 = vld [vmem:[%s0 + $0xb0] sm:$0xf]
  %v41 = vld [vmem:[%s0 + $0xb4] sm:$0xff]
  %v42 = vld [vmem:[%s0 + $0xbc] sm:$0xff]
  %v43 = vld [vmem:[%s0 + $0xc4] sm:$0xf]
  %v44 = vld [vmem:[%s0 + $0xc8] sm:$0xff]
  %v45 = vld [vmem:[%s0 + $0xd0] sm:$0xff]
  %v46 = vld [vmem:[%s0 + $0xd8] sm:$0xf]
  %v47 = vld [vmem:[%s0 + $0xdc] sm:$0xff]
  %v48 = vld [vmem:[%s0 + $0xe4] sm:$0xff]
  %v49 = vld [vmem:[%s0 + $0xec] sm:$0xf]
  %v50 = vld [vmem:[%s0 + $0xf0] sm:$0xff]
  %v51 = vld [vmem:[%s0 + $0xf8] sm:$0xff]
  %v52 = vld [vmem:[%s0 + $0x100] sm:$0xf]
  %v53 = vld [vmem:[%s0 + $0x104] sm:$0xff]
  %v54 = vld [vmem:[%s0 + $0x10c] sm:$0xff]
  %v55 = vld [vmem:[%s0 + $0x114] sm:$0xf]
  %v56 = vld [vmem:[%s0 + $0x118] sm:$0xff]
  %v57 = vld [vmem:[%s0 + $0x120] sm:$0xff]
  %v58 = vld [vmem:[%s0 + $0x128] sm:$0xf]
  %v59 = vld [vmem:[%s0 + $0x12c] sm:$0xff]
  %v60 = vld [vmem:[%s0 + $0x134] sm:$0xff]
  %v61 = vld [vmem:[%s0 + $0x13c] sm:$0xf]
  %v62 = vld [vmem:[%s1] sm:$0xff]
  %v63 = vld [vmem:[%s1 + $0x8] sm:$0xff]
  %v64 = vld [vmem:[%s1 + $0x10] sm:$0xff]
  %v65 = vld [vmem:[%s1 + $0x18] sm:$0xff]
  %v66 = vld [vmem:[%s1 + $0x20] sm:$0xff]
  %v67 = vld [vmem:[%s1 + $0x28] sm:$0xff]
  %v68 = vld [vmem:[%s1 + $0x30] sm:$0xff]
  %v69 = vld [vmem:[%s1 + $0x38] sm:$0xff]
  %v70 = vld [vmem:[%s1 + $0x40] sm:$0xff]
  %v71 = vld [vmem:[%s1 + $0x48] sm:$0xff]
  %v72 = vld [vmem:[%s1 + $0x50] sm:$0xff]
  %v73 = vld [vmem:[%s1 + $0x58] sm:$0xff]
  %v74 = vld [vmem:[%s1 + $0x60] sm:$0xff]
  %v75 = vld [vmem:[%s1 + $0x68] sm:$0xff]
  %v76 = vld [vmem:[%s1 + $0x70] sm:$0xff]
  %v77 = vld [vmem:[%s1 + $0x78] sm:$0xff]
  %v78 = vld [vmem:[%s1 + $0x80] sm:$0xff]
  %v79 = vld [vmem:[%s1 + $0x88] sm:$0xff]
  %v80 = vld [vmem:[%s1 + $0x90] sm:$0xff]
  %v81 = vld [vmem:[%s1 + $0x98] sm:$0xff]
  %v82 = vld [vmem:[%s1 + $0xa0] sm:$0xff]
  %v83 = vld [vmem:[%s1 + $0xa8] sm:$0xff]
  %v84 = vld [vmem:[%s1 + $0xb0] sm:$0xff]
  %v85 = vld [vmem:[%s1 + $0xb8] sm:$0xff]
  %v86 = vld [vmem:[%s1 + $0xc0] sm:$0xff]
  %v87 = vld [vmem:[%s1 + $0xc8] sm:$0xff]
  %v88 = vld [vmem:[%s1 + $0xd0] sm:$0xff]
  %v89 = vld [vmem:[%s1 + $0xd8] sm:$0xff]
  %v90 = vld [vmem:[%s1 + $0xe0] sm:$0xff]
  %v91 = vld [vmem:[%s1 + $0xe8] sm:$0xff]
  %v92 = vld [vmem:[%s1 + $0xf0] sm:$0xff]
  %v93 = vld [vmem:[%s1 + $0xf8] sm:$0xff]
  %v94 = vld [vmem:[%s1 + $0x100] sm:$0xff]
  %v95 = vld [vmem:[%s1 + $0x108] sm:$0xff]
  %v96 = vld [vmem:[%s1 + $0x110] sm:$0xff]
  %v97 = vld [vmem:[%s1 + $0x118] sm:$0xff]
  %v98 = vld [vmem:[%s1 + $0x120] sm:$0xff]
  %v99 = vld [vmem:[%s1 + $0x128] sm:$0xff]
  %v100 = vld [vmem:[%s1 + $0x130] sm:$0xff]
  %v101 = vld [vmem:[%s1 + $0x138] sm:$0xff]
  %v102 = vld [vmem:[%s1 + $0x140] sm:$0xff]
  %v103 = vld [vmem:[%s1 + $0x148] sm:$0xff]
  %v104 = vld [vmem:[%s1 + $0x150] sm:$0xff]
  %v105 = vld [vmem:[%s1 + $0x158] sm:$0xff]
  %v106 = vld [vmem:[%s1 + $0x160] sm:$0xff]
  %v107 = vld [vmem:[%s1 + $0x168] sm:$0xff]
  %v108 = vld [vmem:[%s1 + $0x170] sm:$0xff]
  %v109 = vld [vmem:[%s1 + $0x178] sm:$0xff]
  %v110 = vld [vmem:[%s1 + $0x180] sm:$0xff]
  %v111 = vld [vmem:[%s1 + $0x188] sm:$0xff]
  %v112 = vld [vmem:[%s1 + $0x190] sm:$0xff]
  %v113 = vld [vmem:[%s1 + $0x198] sm:$0xff]
  %v114 = vld [vmem:[%s1 + $0x1a0] sm:$0xff]
  %v115 = vld [vmem:[%s1 + $0x1a8] sm:$0xff]
  %v116 = vld [vmem:[%s1 + $0x1b0] sm:$0xff]
  %v117 = vld [vmem:[%s1 + $0x1b8] sm:$0xff]
  %v118 = vld [vmem:[%s1 + $0x1c0] sm:$0xff]
  %v119 = vld [vmem:[%s1 + $0x1c8] sm:$0xff]
  %v120 = vld [vmem:[%s1 + $0x1d0] sm:$0xff]
  %v121 = vld [vmem:[%s1 + $0x1d8] sm:$0xff]
  %v122 = vld [vmem:[%s1 + $0x1e0] sm:$0xff]
  %v123 = vld [vmem:[%s1 + $0x1e8] sm:$0xff]
  %v124 = vld [vmem:[%s1 + $0x1f0] sm:$0xff]
  %v125 = vld [vmem:[%s1 + $0x1f8] sm:$0xff]
  %v126 = vld [vmem:[%s1 + $0x200] sm:$0xff]
  %v127 = vld [vmem:[%s1 + $0x208] sm:$0xff]
  %v128 = vld [vmem:[%s1 + $0x210] sm:$0xff]
  %v129 = vld [vmem:[%s1 + $0x218] sm:$0xff]
  %v130 = vld [vmem:[%s1 + $0x220] sm:$0xff]
  %v131 = vld [vmem:[%s1 + $0x228] sm:$0xff]
  %v132 = vld [vmem:[%s1 + $0x230] sm:$0xff]
  %v133 = vld [vmem:[%s1 + $0x238] sm:$0xff]
  %v134 = vpack.c.bf16 %v63, %v62
  %v135 = vpack.c.bf16 %v65, %v64
  %v136 = vpack.c.bf16 %v67, %v66
  %v137 = vpack.c.bf16 %v69, %v68
  %v138 = vpack.c.bf16 %v71, %v70
  %v139 = vpack.c.bf16 %v73, %v72
  %v140 = vpack.c.bf16 %v75, %v74
  %v141 = vpack.c.bf16 %v77, %v76
  %v142 = vpack.c.bf16 %v79, %v78
  %v143 = vpack.c.bf16 %v81, %v80
  %v144 = vpack.c.bf16 %v83, %v82
  %v145 = vpack.c.bf16 %v85, %v84
  %v146 = vpack.c.bf16 %v87, %v86
  %v147 = vpack.c.bf16 %v89, %v88
  %v148 = vpack.c.bf16 %v91, %v90
  %v149 = vpack.c.bf16 %v93, %v92
  %v150 = vpack.c.bf16 %v95, %v94
  %v151 = vpack.c.bf16 %v97, %v96
  %v152 = vpack.c.bf16 %v99, %v98
  %v153 = vpack.c.bf16 %v101, %v100
  %v154 = vpack.c.bf16 %v103, %v102
  %v155 = vpack.c.bf16 %v105, %v104
  %v156 = vpack.c.bf16 %v107, %v106
  %v157 = vpack.c.bf16 %v109, %v108
  %v158 = vpack.c.bf16 %v111, %v110
  %v159 = vpack.c.bf16 %v113, %v112
  %v160 = vpack.c.bf16 %v115, %v114
  %v161 = vpack.c.bf16 %v117, %v116
  %v162 = vpack.c.bf16 %v119, %v118
  %v163 = vpack.c.bf16 %v121, %v120
  %v164 = vpack.c.bf16 %v123, %v122
  %v165 = vpack.c.bf16 %v125, %v124
  %v166 = vpack.c.bf16 %v127, %v126
  %v167 = vpack.c.bf16 %v129, %v128
  %v168 = vpack.c.bf16 %v131, %v130
  %v169 = vpack.c.bf16 %v133, %v132
  %v218 = vunpack.c.l.b16 %v14
  %v219 = vunpack.c.h.b16 %v14
  %v220 = vunpack.c.l.b16 %v15
  %v221 = vunpack.c.h.b16 %v15
  %v222 = vunpack.c.l.b16 %v16
  %v223 = vunpack.c.l.b16 %v17
  %v224 = vunpack.c.h.b16 %v17
  %v225 = vunpack.c.l.b16 %v18
  %v226 = vunpack.c.h.b16 %v18
  %v227 = vunpack.c.l.b16 %v19
  %v228 = vunpack.c.l.b16 %v20
  %v229 = vunpack.c.h.b16 %v20
  %v230 = vunpack.c.l.b16 %v21
  %v231 = vunpack.c.h.b16 %v21
  %v232 = vunpack.c.l.b16 %v22
  %v233 = vunpack.c.l.b16 %v23
  %v234 = vunpack.c.h.b16 %v23
  %v235 = vunpack.c.l.b16 %v24
  %v236 = vunpack.c.h.b16 %v24
  %v237 = vunpack.c.l.b16 %v25
  %v238 = vunpack.c.l.b16 %v26
  %v239 = vunpack.c.h.b16 %v26
  %v240 = vunpack.c.l.b16 %v27
  %v241 = vunpack.c.h.b16 %v27
  %v242 = vunpack.c.l.b16 %v28
  %v243 = vunpack.c.l.b16 %v29
  %v244 = vunpack.c.h.b16 %v29
  %v245 = vunpack.c.l.b16 %v30
  %v246 = vunpack.c.h.b16 %v30
  %v247 = vunpack.c.l.b16 %v31
  %v248 = vunpack.c.l.b16 %v32
  %v249 = vunpack.c.h.b16 %v32
  %v250 = vunpack.c.l.b16 %v33
  %v251 = vunpack.c.h.b16 %v33
  %v252 = vunpack.c.l.b16 %v34
  %v253 = vunpack.c.l.b16 %v35
  %v254 = vunpack.c.h.b16 %v35
  %v255 = vunpack.c.l.b16 %v36
  %v256 = vunpack.c.h.b16 %v36
  %v257 = vunpack.c.l.b16 %v37
  %v258 = vunpack.c.l.b16 %v38
  %v259 = vunpack.c.h.b16 %v38
  %v260 = vunpack.c.l.b16 %v39
  %v261 = vunpack.c.h.b16 %v39
  %v262 = vunpack.c.l.b16 %v40
  %v263 = vunpack.c.l.b16 %v41
  %v264 = vunpack.c.h.b16 %v41
  %v265 = vunpack.c.l.b16 %v42
  %v266 = vunpack.c.h.b16 %v42
  %v267 = vunpack.c.l.b16 %v43
  %v268 = vunpack.c.l.b16 %v44
  %v269 = vunpack.c.h.b16 %v44
  %v270 = vunpack.c.l.b16 %v45
  %v271 = vunpack.c.h.b16 %v45
  %v272 = vunpack.c.l.b16 %v46
  %v273 = vunpack.c.l.b16 %v47
  %v274 = vunpack.c.h.b16 %v47
  %v275 = vunpack.c.l.b16 %v48
  %v276 = vunpack.c.h.b16 %v48
  %v277 = vunpack.c.l.b16 %v49
  %v278 = vunpack.c.l.b16 %v50
  %v279 = vunpack.c.h.b16 %v50
  %v280 = vunpack.c.l.b16 %v51
  %v281 = vunpack.c.h.b16 %v51
  %v282 = vunpack.c.l.b16 %v52
  %v283 = vunpack.c.l.b16 %v53
  %v284 = vunpack.c.h.b16 %v53
  %v285 = vunpack.c.l.b16 %v54
  %v286 = vunpack.c.h.b16 %v54
  %v287 = vunpack.c.l.b16 %v55
  %v288 = vunpack.c.l.b16 %v56
  %v289 = vunpack.c.h.b16 %v56
  %v290 = vunpack.c.l.b16 %v57
  %v291 = vunpack.c.h.b16 %v57
  %v292 = vunpack.c.l.b16 %v58
  %v293 = vunpack.c.l.b16 %v59
  %v294 = vunpack.c.h.b16 %v59
  %v295 = vunpack.c.l.b16 %v60
  %v296 = vunpack.c.h.b16 %v60
  %v297 = vunpack.c.l.b16 %v61
  %v298 = vpack.c.b16 %v223, %v218
  %v299 = vpack.c.b16 %v224, %v219
  %v300 = vpack.c.b16 %v225, %v220
  %v301 = vpack.c.b16 %v226, %v221
  %v302 = vpack.c.b16 %v227, %v222
  %v303 = vpack.c.b16 %v233, %v228
  %v304 = vpack.c.b16 %v234, %v229
  %v305 = vpack.c.b16 %v235, %v230
  %v306 = vpack.c.b16 %v236, %v231
  %v307 = vpack.c.b16 %v237, %v232
  %v308 = vpack.c.b16 %v243, %v238
  %v309 = vpack.c.b16 %v244, %v239
  %v310 = vpack.c.b16 %v245, %v240
  %v311 = vpack.c.b16 %v246, %v241
  %v312 = vpack.c.b16 %v247, %v242
  %v313 = vpack.c.b16 %v253, %v248
  %v314 = vpack.c.b16 %v254, %v249
  %v315 = vpack.c.b16 %v255, %v250
  %v316 = vpack.c.b16 %v256, %v251
  %v317 = vpack.c.b16 %v257, %v252
  %v318 = vpack.c.b16 %v263, %v258
  %v319 = vpack.c.b16 %v264, %v259
  %v320 = vpack.c.b16 %v265, %v260
  %v321 = vpack.c.b16 %v266, %v261
  %v322 = vpack.c.b16 %v267, %v262
  %v323 = vpack.c.b16 %v273, %v268
  %v324 = vpack.c.b16 %v274, %v269
  %v325 = vpack.c.b16 %v275, %v270
  %v326 = vpack.c.b16 %v276, %v271
  %v327 = vpack.c.b16 %v277, %v272
  %v328 = vpack.c.b16 %v283, %v278
  %v329 = vpack.c.b16 %v284, %v279
  %v330 = vpack.c.b16 %v285, %v280
  %v331 = vpack.c.b16 %v286, %v281
  %v332 = vpack.c.b16 %v287, %v282
  %v333 = vpack.c.b16 %v293, %v288
  %v334 = vpack.c.b16 %v294, %v289
  %v335 = vpack.c.b16 %v295, %v290
  %v336 = vpack.c.b16 %v296, %v291
  %v337 = vpack.c.b16 %v297, %v292
  %vm370 = vcmask 523264
  %v372 = vsel %vm370, %v302, 0
  %v375 = vsel %vm370, %v307, 0
  %v378 = vsel %vm370, %v312, 0
  %v381 = vsel %vm370, %v317, 0
  %v384 = vsel %vm370, %v322, 0
  %v387 = vsel %vm370, %v327, 0
  %v390 = vsel %vm370, %v332, 0
  %v393 = vsel %vm370, %v337, 0
  %395 = vmatpush.bf16.msra.mxu0 %v141
  %396 = vmatpush.bf16.msra.mxu0 %v140
  %397 = vmatpush.bf16.msra.mxu0 %v139
  %398 = vmatpush.bf16.msra.mxu0 %v138
  %399 = vmatpush.bf16.msra.mxu0 %v137
  %400 = vmatpush.bf16.msra.mxu0 %v136
  %401 = vmatpush.bf16.msra.mxu0 %v135
  %402 = vmatpush.bf16.msra.mxu0 %v134
  %403 = vmatmul.bf16.gmra.mxu0 %v298
  %v404 = vpop.f32.mrf.mxu0
  %v405 = vadd.f32 0.0, %v404
  %v406 = vpop.f32.mrf.mxu0
  %v407 = vadd.f32 0.0, %v406
  %408 = vmatmul.bf16.gmra.mxu0 %v303
  %v409 = vpop.f32.mrf.mxu0
  %v410 = vadd.f32 0.0, %v409
  %v411 = vpop.f32.mrf.mxu0
  %v412 = vadd.f32 0.0, %v411
  %413 = vmatmul.bf16.gmra.mxu0 %v308
  %v414 = vpop.f32.mrf.mxu0
  %v415 = vadd.f32 0.0, %v414
  %v416 = vpop.f32.mrf.mxu0
  %v417 = vadd.f32 0.0, %v416
  %418 = vmatmul.bf16.gmra.mxu0 %v313
  %v419 = vpop.f32.mrf.mxu0
  %v420 = vadd.f32 0.0, %v419
  %v421 = vpop.f32.mrf.mxu0
  %v422 = vadd.f32 0.0, %v421
  %423 = vmatmul.bf16.gmra.mxu0 %v318
  %v424 = vpop.f32.mrf.mxu0
  %v425 = vadd.f32 0.0, %v424
  %v426 = vpop.f32.mrf.mxu0
  %v427 = vadd.f32 0.0, %v426
  %428 = vmatmul.bf16.gmra.mxu0 %v323
  %v429 = vpop.f32.mrf.mxu0
  %v430 = vadd.f32 0.0, %v429
  %v431 = vpop.f32.mrf.mxu0
  %v432 = vadd.f32 0.0, %v431
  %433 = vmatmul.bf16.gmra.mxu0 %v328
  %v434 = vpop.f32.mrf.mxu0
  %v435 = vadd.f32 0.0, %v434
  %v436 = vpop.f32.mrf.mxu0
  %v437 = vadd.f32 0.0, %v436
  %438 = vmatmul.bf16.gmra.mxu0 %v333
  %v439 = vpop.f32.mrf.mxu0
  %v440 = vadd.f32 0.0, %v439
  %v441 = vpop.f32.mrf.mxu0
  %v442 = vadd.f32 0.0, %v441
  %443 = vdwg.mxu0
  %444 = vmatpush.bf16.msra.mxu0 %v149
  %445 = vmatpush.bf16.msra.mxu0 %v148
  %446 = vmatpush.bf16.msra.mxu0 %v147
  %447 = vmatpush.bf16.msra.mxu0 %v146
  %448 = vmatpush.bf16.msra.mxu0 %v145
  %449 = vmatpush.bf16.msra.mxu0 %v144
  %450 = vmatpush.bf16.msra.mxu0 %v143
  %451 = vmatpush.bf16.msra.mxu0 %v142
  %452 = vmatmul.bf16.gmra.mxu0 %v299
  %v453 = vpop.f32.mrf.mxu0
  %v454 = vadd.f32 %v405, %v453
  %v455 = vpop.f32.mrf.mxu0
  %v456 = vadd.f32 %v407, %v455
  %457 = vmatmul.bf16.gmra.mxu0 %v304
  %v458 = vpop.f32.mrf.mxu0
  %v459 = vadd.f32 %v410, %v458
  %v460 = vpop.f32.mrf.mxu0
  %v461 = vadd.f32 %v412, %v460
  %462 = vmatmul.bf16.gmra.mxu0 %v309
  %v463 = vpop.f32.mrf.mxu0
  %v464 = vadd.f32 %v415, %v463
  %v465 = vpop.f32.mrf.mxu0
  %v466 = vadd.f32 %v417, %v465
  %467 = vmatmul.bf16.gmra.mxu0 %v314
  %v468 = vpop.f32.mrf.mxu0
  %v469 = vadd.f32 %v420, %v468
  %v470 = vpop.f32.mrf.mxu0
  %v471 = vadd.f32 %v422, %v470
  %472 = vmatmul.bf16.gmra.mxu0 %v319
  %v473 = vpop.f32.mrf.mxu0
  %v474 = vadd.f32 %v425, %v473
  %v475 = vpop.f32.mrf.mxu0
  %v476 = vadd.f32 %v427, %v475
  %477 = vmatmul.bf16.gmra.mxu0 %v324
  %v478 = vpop.f32.mrf.mxu0
  %v479 = vadd.f32 %v430, %v478
  %v480 = vpop.f32.mrf.mxu0
  %v481 = vadd.f32 %v432, %v480
  %482 = vmatmul.bf16.gmra.mxu0 %v329
  %v483 = vpop.f32.mrf.mxu0
  %v484 = vadd.f32 %v435, %v483
  %v485 = vpop.f32.mrf.mxu0
  %v486 = vadd.f32 %v437, %v485
  %487 = vmatmul.bf16.gmra.mxu0 %v334
  %v488 = vpop.f32.mrf.mxu0
  %v489 = vadd.f32 %v440, %v488
  %v490 = vpop.f32.mrf.mxu0
  %v491 = vadd.f32 %v442, %v490
  %492 = vdwg.mxu0
  %493 = vmatpush.bf16.msra.mxu0 %v157
  %494 = vmatpush.bf16.msra.mxu0 %v156
  %495 = vmatpush.bf16.msra.mxu0 %v155
  %496 = vmatpush.bf16.msra.mxu0 %v154
  %497 = vmatpush.bf16.msra.mxu0 %v153
  %498 = vmatpush.bf16.msra.mxu0 %v152
  %499 = vmatpush.bf16.msra.mxu0 %v151
  %500 = vmatpush.bf16.msra.mxu0 %v150
  %501 = vmatmul.bf16.gmra.mxu0 %v300
  %v502 = vpop.f32.mrf.mxu0
  %v503 = vadd.f32 %v454, %v502
  %v504 = vpop.f32.mrf.mxu0
  %v505 = vadd.f32 %v456, %v504
  %506 = vmatmul.bf16.gmra.mxu0 %v305
  %v507 = vpop.f32.mrf.mxu0
  %v508 = vadd.f32 %v459, %v507
  %v509 = vpop.f32.mrf.mxu0
  %v510 = vadd.f32 %v461, %v509
  %511 = vmatmul.bf16.gmra.mxu0 %v310
  %v512 = vpop.f32.mrf.mxu0
  %v513 = vadd.f32 %v464, %v512
  %v514 = vpop.f32.mrf.mxu0
  %v515 = vadd.f32 %v466, %v514
  %516 = vmatmul.bf16.gmra.mxu0 %v315
  %v517 = vpop.f32.mrf.mxu0
  %v518 = vadd.f32 %v469, %v517
  %v519 = vpop.f32.mrf.mxu0
  %v520 = vadd.f32 %v471, %v519
  %521 = vmatmul.bf16.gmra.mxu0 %v320
  %v522 = vpop.f32.mrf.mxu0
  %v523 = vadd.f32 %v474, %v522
  %v524 = vpop.f32.mrf.mxu0
  %v525 = vadd.f32 %v476, %v524
  %526 = vmatmul.bf16.gmra.mxu0 %v325
  %v527 = vpop.f32.mrf.mxu0
  %v528 = vadd.f32 %v479, %v527
  %v529 = vpop.f32.mrf.mxu0
  %v530 = vadd.f32 %v481, %v529
  %531 = vmatmul.bf16.gmra.mxu0 %v330
  %v532 = vpop.f32.mrf.mxu0
  %v533 = vadd.f32 %v484, %v532
  %v534 = vpop.f32.mrf.mxu0
  %v535 = vadd.f32 %v486, %v534
  %536 = vmatmul.bf16.gmra.mxu0 %v335
  %v537 = vpop.f32.mrf.mxu0
  %v538 = vadd.f32 %v489, %v537
  %v539 = vpop.f32.mrf.mxu0
  %v540 = vadd.f32 %v491, %v539
  %541 = vdwg.mxu0
  %542 = vmatpush.bf16.msra.mxu0 %v165
  %543 = vmatpush.bf16.msra.mxu0 %v164
  %544 = vmatpush.bf16.msra.mxu0 %v163
  %545 = vmatpush.bf16.msra.mxu0 %v162
  %546 = vmatpush.bf16.msra.mxu0 %v161
  %547 = vmatpush.bf16.msra.mxu0 %v160
  %548 = vmatpush.bf16.msra.mxu0 %v159
  %549 = vmatpush.bf16.msra.mxu0 %v158
  %550 = vmatmul.bf16.gmra.mxu0 %v301
  %v551 = vpop.f32.mrf.mxu0
  %v552 = vadd.f32 %v503, %v551
  %v553 = vpop.f32.mrf.mxu0
  %v554 = vadd.f32 %v505, %v553
  %555 = vmatmul.bf16.gmra.mxu0 %v306
  %v556 = vpop.f32.mrf.mxu0
  %v557 = vadd.f32 %v508, %v556
  %v558 = vpop.f32.mrf.mxu0
  %v559 = vadd.f32 %v510, %v558
  %560 = vmatmul.bf16.gmra.mxu0 %v311
  %v561 = vpop.f32.mrf.mxu0
  %v562 = vadd.f32 %v513, %v561
  %v563 = vpop.f32.mrf.mxu0
  %v564 = vadd.f32 %v515, %v563
  %565 = vmatmul.bf16.gmra.mxu0 %v316
  %v566 = vpop.f32.mrf.mxu0
  %v567 = vadd.f32 %v518, %v566
  %v568 = vpop.f32.mrf.mxu0
  %v569 = vadd.f32 %v520, %v568
  %570 = vmatmul.bf16.gmra.mxu0 %v321
  %v571 = vpop.f32.mrf.mxu0
  %v572 = vadd.f32 %v523, %v571
  %v573 = vpop.f32.mrf.mxu0
  %v574 = vadd.f32 %v525, %v573
  %575 = vmatmul.bf16.gmra.mxu0 %v326
  %v576 = vpop.f32.mrf.mxu0
  %v577 = vadd.f32 %v528, %v576
  %v578 = vpop.f32.mrf.mxu0
  %v579 = vadd.f32 %v530, %v578
  %580 = vmatmul.bf16.gmra.mxu0 %v331
  %v581 = vpop.f32.mrf.mxu0
  %v582 = vadd.f32 %v533, %v581
  %v583 = vpop.f32.mrf.mxu0
  %v584 = vadd.f32 %v535, %v583
  %585 = vmatmul.bf16.gmra.mxu0 %v336
  %v586 = vpop.f32.mrf.mxu0
  %v587 = vadd.f32 %v538, %v586
  %v588 = vpop.f32.mrf.mxu0
  %v589 = vadd.f32 %v540, %v588
  %590 = vdwg.mxu0
  %591 = vmatpush.bf16.msra.mxu0 0
  %592 = vmatpush.bf16.msra.mxu0 0
  %593 = vmatpush.bf16.msra.mxu0 0
  %594 = vmatpush.bf16.msra.mxu0 0
  %595 = vmatpush.bf16.msra.mxu0 %v169
  %596 = vmatpush.bf16.msra.mxu0 %v168
  %597 = vmatpush.bf16.msra.mxu0 %v167
  %598 = vmatpush.bf16.msra.mxu0 %v166
  %599 = vmatmul.bf16.gmra.mxu0 %v372
  %v600 = vpop.f32.mrf.mxu0
  %v601 = vadd.f32 %v552, %v600
  %v602 = vpop.f32.mrf.mxu0
  %v603 = vadd.f32 %v554, %v602
  %604 = vmatmul.bf16.gmra.mxu0 %v375
  %v605 = vpop.f32.mrf.mxu0
  %v606 = vadd.f32 %v557, %v605
  %v607 = vpop.f32.mrf.mxu0
  %v608 = vadd.f32 %v559, %v607
  %609 = vmatmul.bf16.gmra.mxu0 %v378
  %v610 = vpop.f32.mrf.mxu0
  %v611 = vadd.f32 %v562, %v610
  %v612 = vpop.f32.mrf.mxu0
  %v613 = vadd.f32 %v564, %v612
  %614 = vmatmul.bf16.gmra.mxu0 %v381
  %v615 = vpop.f32.mrf.mxu0
  %v616 = vadd.f32 %v567, %v615
  %v617 = vpop.f32.mrf.mxu0
  %v618 = vadd.f32 %v569, %v617
  %619 = vmatmul.bf16.gmra.mxu0 %v384
  %v620 = vpop.f32.mrf.mxu0
  %v621 = vadd.f32 %v572, %v620
  %v622 = vpop.f32.mrf.mxu0
  %v623 = vadd.f32 %v574, %v622
  %624 = vmatmul.bf16.gmra.mxu0 %v387
  %v625 = vpop.f32.mrf.mxu0
  %v626 = vadd.f32 %v577, %v625
  %v627 = vpop.f32.mrf.mxu0
  %v628 = vadd.f32 %v579, %v627
  %629 = vmatmul.bf16.gmra.mxu0 %v390
  %v630 = vpop.f32.mrf.mxu0
  %v631 = vadd.f32 %v582, %v630
  %v632 = vpop.f32.mrf.mxu0
  %v633 = vadd.f32 %v584, %v632
  %634 = vmatmul.bf16.gmra.mxu0 %v393
  %v635 = vpop.f32.mrf.mxu0
  %v636 = vadd.f32 %v587, %v635
  %v637 = vpop.f32.mrf.mxu0
  %v638 = vadd.f32 %v589, %v637
  %639 = vdwg.mxu0
  %640 = vst.msk [vmem:[%s2] sm:$0xff] %vm370, %v601
  %641 = vst.msk [vmem:[%s2 + $0x8] sm:$0xff] %vm370, %v603
  %642 = vst.msk [vmem:[%s2 + $0x10] sm:$0xff] %vm370, %v606
  %643 = vst.msk [vmem:[%s2 + $0x18] sm:$0xff] %vm370, %v608
  %644 = vst.msk [vmem:[%s2 + $0x20] sm:$0xff] %vm370, %v611
  %645 = vst.msk [vmem:[%s2 + $0x28] sm:$0xff] %vm370, %v613
  %646 = vst.msk [vmem:[%s2 + $0x30] sm:$0xff] %vm370, %v616
  %647 = vst.msk [vmem:[%s2 + $0x38] sm:$0xff] %vm370, %v618
  %648 = vst.msk [vmem:[%s2 + $0x40] sm:$0xff] %vm370, %v621
  %649 = vst.msk [vmem:[%s2 + $0x48] sm:$0xff] %vm370, %v623
  %650 = vst.msk [vmem:[%s2 + $0x50] sm:$0xff] %vm370, %v626
  %651 = vst.msk [vmem:[%s2 + $0x58] sm:$0xff] %vm370, %v628
  %652 = vst.msk [vmem:[%s2 + $0x60] sm:$0xff] %vm370, %v631
  %653 = vst.msk [vmem:[%s2 + $0x68] sm:$0xff] %vm370, %v633
  %654 = vst.msk [vmem:[%s2 + $0x70] sm:$0xff] %vm370, %v636
  %655 = vst.msk [vmem:[%s2 + $0x78] sm:$0xff] %vm370, %v638
  %v656 = vsel %vm370, %v601, 0.0
  %v657 = vsel %vm370, %v603, 0.0
  %v658 = vadd.f32 %v656, %v657
  %v659 = vsel %vm370, %v606, 0.0
  %v660 = vadd.f32 %v658, %v659
  %v661 = vsel %vm370, %v608, 0.0
  %v662 = vadd.f32 %v660, %v661
  %v663 = vsel %vm370, %v611, 0.0
  %v664 = vadd.f32 %v662, %v663
  %v665 = vsel %vm370, %v613, 0.0
  %v666 = vadd.f32 %v664, %v665
  %v667 = vsel %vm370, %v616, 0.0
  %v668 = vadd.f32 %v666, %v667
  %v669 = vsel %vm370, %v618, 0.0
  %v670 = vadd.f32 %v668, %v669
  %v671 = vsel %vm370, %v621, 0.0
  %v672 = vadd.f32 %v670, %v671
  %v673 = vsel %vm370, %v623, 0.0
  %v674 = vadd.f32 %v672, %v673
  %v675 = vsel %vm370, %v626, 0.0
  %v676 = vadd.f32 %v674, %v675
  %v677 = vsel %vm370, %v628, 0.0
  %v678 = vadd.f32 %v676, %v677
  %v679 = vsel %vm370, %v631, 0.0
  %v680 = vadd.f32 %v678, %v679
  %v681 = vsel %vm370, %v633, 0.0
  %v682 = vadd.f32 %v680, %v681
  %v683 = vsel %vm370, %v636, 0.0
  %v684 = vadd.f32 %v682, %v683
  %v685 = vsel %vm370, %v638, 0.0
  %v686 = vadd.f32 %v684, %v685
  %v687 = vrot.slane %v686, 4
  %v688 = vadd.f32 %v686, %v687
  %v689 = vrot.slane %v688, 2
  %v690 = vadd.f32 %v688, %v689
  %v691 = vrot.slane %v690, 1
  %v692 = vadd.f32 %v690, %v691
  %vm693 = vcmask 516096
  %694 = vst.msk [vmem:[%s3] sm:$0x1] %vm693, %v692
  %v695 = vmul.f32 %v601, %v601
  %v696 = vmul.f32 %v603, %v603
  %v697 = vmul.f32 %v606, %v606
  %v698 = vmul.f32 %v608, %v608
  %v699 = vmul.f32 %v611, %v611
  %v700 = vmul.f32 %v613, %v613
  %v701 = vmul.f32 %v616, %v616
  %v702 = vmul.f32 %v618, %v618
  %v703 = vmul.f32 %v621, %v621
  %v704 = vmul.f32 %v623, %v623
  %v705 = vmul.f32 %v626, %v626
  %v706 = vmul.f32 %v628, %v628
  %v707 = vmul.f32 %v631, %v631
  %v708 = vmul.f32 %v633, %v633
  %v709 = vmul.f32 %v636, %v636
  %v710 = vmul.f32 %v638, %v638
  %v711 = vsel %vm370, %v695, 0.0
  %v712 = vsel %vm370, %v696, 0.0
  %v713 = vadd.f32 %v711, %v712
  %v714 = vsel %vm370, %v697, 0.0
  %v715 = vadd.f32 %v713, %v714
  %v716 = vsel %vm370, %v698, 0.0
  %v717 = vadd.f32 %v715, %v716
  %v718 = vsel %vm370, %v699, 0.0
  %v719 = vadd.f32 %v717, %v718
  %v720 = vsel %vm370, %v700, 0.0
  %v721 = vadd.f32 %v719, %v720
  %v722 = vsel %vm370, %v701, 0.0
  %v723 = vadd.f32 %v721, %v722
  %v724 = vsel %vm370, %v702, 0.0
  %v725 = vadd.f32 %v723, %v724
  %v726 = vsel %vm370, %v703, 0.0
  %v727 = vadd.f32 %v725, %v726
  %v728 = vsel %vm370, %v704, 0.0
  %v729 = vadd.f32 %v727, %v728
  %v730 = vsel %vm370, %v705, 0.0
  %v731 = vadd.f32 %v729, %v730
  %v732 = vsel %vm370, %v706, 0.0
  %v733 = vadd.f32 %v731, %v732
  %v734 = vsel %vm370, %v707, 0.0
  %v735 = vadd.f32 %v733, %v734
  %v736 = vsel %vm370, %v708, 0.0
  %v737 = vadd.f32 %v735, %v736
  %v738 = vsel %vm370, %v709, 0.0
  %v739 = vadd.f32 %v737, %v738
  %v740 = vsel %vm370, %v710, 0.0
  %v741 = vadd.f32 %v739, %v740
  %v742 = vrot.slane %v741, 4
  %v743 = vadd.f32 %v741, %v742
  %v744 = vrot.slane %v743, 2
  %v745 = vadd.f32 %v743, %v744
  %v746 = vrot.slane %v745, 1
  %v747 = vadd.f32 %v745, %v746
  %748 = vst.msk [vmem:[%s3 + $0x1] sm:$0x1] %vm693, %v747
  // Predicated region
  $region10: #{resnet_forward.67} parent=0 // pred_check
    _
  $region11: #{resnet_forward.67} parent=0 // pred_check_branch
    %750 = sbr.rel (0) target = $region13
  $region12: #{resnet_forward.67} parent=0 // pred_region
    _
  $region13: #{resnet_forward.67} parent=0 // pred_fallthru
    _
  // Predicated region
  $region14: #{resnet_forward.67} parent=0 // pred_check
    _
  $region15: #{resnet_forward.67} parent=0 // pred_check_branch
    %752 = sbr.rel (0) target = $region17
  $region16: #{resnet_forward.67} parent=0 // pred_region
    _
  $region17: #{resnet_forward.67} parent=0 // pred_fallthru
    _
  // Predicated region
  $region18: #{resnet_forward.67} parent=0 // pred_check
    _
  $region19: #{resnet_forward.67} parent=0 // pred_check_branch
    %754 = sbr.rel (0) target = $region21
  $region20: #{resnet_forward.67} parent=0 // pred_region
    _
  $region21: #{resnet_forward.67} parent=0 // pred_fallthru
    _
  // Predicated region
  $region22: #{resnet_forward.67} parent=0 // pred_check
    _
  $region23: #{resnet_forward.67} parent=0 // pred_check_branch
    %756 = sbr.rel (0) target = $region25
  $region24: #{resnet_forward.67} parent=0 // pred_region
    _
  $region25: #{resnet_forward.67} parent=0 // pred_fallthru
    _

// kernel: resnet_forward.68
$region0: #{resnet_forward.68}
  #allocation0 [shape = 'u32[]', space=smem, size = 0x4, offset = 0x4, fixed_abs, tag = 'smem constant byte address 0x4 - core index']
  #allocation1 [shape = 'u32[72,128]{1,0:T(1,128)}', space=vmem, size = 0x9000, scoped, tag = 'internal scratch']
  %s0 = inlined_call_operand.vmem [shape: f32[128,64], index: 0, kind: input, shape index: {}]
  %s1 = inlined_call_operand.vmem [shape: f32[1,64], index: 1, kind: input, shape index: {}]
  %s2 = inlined_call_operand.vmem [shape: f32[1,64], index: 2, kind: input, shape index: {}]
  %s3 = inlined_call_operand.vmem [shape: bf16[128,64], index: 3, kind: input, shape index: {}]
  %s4 = inlined_call_operand.vmem [shape: bf16[128,64], index: 4, kind: output, shape index: {}]
  %s5 = sld [smem:[#allocation0]]
  $region26: #{resnet_forward.68} parent=0
    _
  %s7 = ssub.s32 1, %s5
  %s8 = scalar_select 0, %s7, %s5
  // Predicated region
  $region2: #{resnet_forward.68} parent=0 // pred_check
    _
  $region3: #{resnet_forward.68} parent=0 // pred_check_branch
    %10 = sbr.rel (0) target = $region5
  $region4: #{resnet_forward.68} parent=0 // pred_region
    _
  $region5: #{resnet_forward.68} parent=0 // pred_fallthru
    _
  // Predicated region
  $region6: #{resnet_forward.68} parent=0 // pred_check
    _
  $region7: #{resnet_forward.68} parent=0 // pred_check_branch
    %12 = sbr.rel (0) target = $region9
  $region8: #{resnet_forward.68} parent=0 // pred_region
    _
  $region9: #{resnet_forward.68} parent=0 // pred_fallthru
    _
  // Predicated region
  $region10: #{resnet_forward.68} parent=0 // pred_check
    _
  $region11: #{resnet_forward.68} parent=0 // pred_check_branch
    %14 = sbr.rel (0) target = $region13
  $region12: #{resnet_forward.68} parent=0 // pred_region
    _
  $region13: #{resnet_forward.68} parent=0 // pred_fallthru
    _
  // Predicated region
  $region14: #{resnet_forward.68} parent=0 // pred_check
    _
  $region15: #{resnet_forward.68} parent=0 // pred_check_branch
    %16 = sbr.rel (0) target = $region17
  $region16: #{resnet_forward.68} parent=0 // pred_region
    _
  $region17: #{resnet_forward.68} parent=0 // pred_fallthru
    _
  %v17 = vld [vmem:[%s0] sm:$0xff]
  %v18 = vld [vmem:[%s0 + $0x8] sm:$0xff]
  %v19 = vld [vmem:[%s0 + $0x10] sm:$0xff]
  %v20 = vld [vmem:[%s0 + $0x18] sm:$0xff]
  %v21 = vld [vmem:[%s0 + $0x20] sm:$0xff]
  %v22 = vld [vmem:[%s0 + $0x28] sm:$0xff]
  %v23 = vld [vmem:[%s0 + $0x30] sm:$0xff]
  %v24 = vld [vmem:[%s0 + $0x38] sm:$0xff]
  %v25 = vld [vmem:[%s0 + $0x40] sm:$0xff]
  %v26 = vld [vmem:[%s0 + $0x48] sm:$0xff]
  %v27 = vld [vmem:[%s0 + $0x50] sm:$0xff]
  %v28 = vld [vmem:[%s0 + $0x58] sm:$0xff]
  %v29 = vld [vmem:[%s0 + $0x60] sm:$0xff]
  %v30 = vld [vmem:[%s0 + $0x68] sm:$0xff]
  %v31 = vld [vmem:[%s0 + $0x70] sm:$0xff]
  %v32 = vld [vmem:[%s0 + $0x78] sm:$0xff]
  %v33 = vld [vmem:[%s1] sm:$0x1]
  %v35 = vperm.slane %v33, 0
  %v37 = vmul.f32 %v17, %v35
  %v38 = vmul.f32 %v18, %v35
  %v39 = vmul.f32 %v19, %v35
  %v40 = vmul.f32 %v20, %v35
  %v41 = vmul.f32 %v21, %v35
  %v42 = vmul.f32 %v22, %v35
  %v43 = vmul.f32 %v23, %v35
  %v44 = vmul.f32 %v24, %v35
  %v45 = vmul.f32 %v25, %v35
  %v46 = vmul.f32 %v26, %v35
  %v47 = vmul.f32 %v27, %v35
  %v48 = vmul.f32 %v28, %v35
  %v49 = vmul.f32 %v29, %v35
  %v50 = vmul.f32 %v30, %v35
  %v51 = vmul.f32 %v31, %v35
  %v52 = vmul.f32 %v32, %v35
  %v53 = vld [vmem:[%s2] sm:$0x1]
  %v55 = vperm.slane %v53, 0
  %v57 = vadd.f32 %v37, %v55
  %v58 = vadd.f32 %v38, %v55
  %v59 = vadd.f32 %v39, %v55
  %v60 = vadd.f32 %v40, %v55
  %v61 = vadd.f32 %v41, %v55
  %v62 = vadd.f32 %v42, %v55
  %v63 = vadd.f32 %v43, %v55
  %v64 = vadd.f32 %v44, %v55
  %v65 = vadd.f32 %v45, %v55
  %v66 = vadd.f32 %v46, %v55
  %v67 = vadd.f32 %v47, %v55
  %v68 = vadd.f32 %v48, %v55
  %v69 = vadd.f32 %v49, %v55
  %v70 = vadd.f32 %v50, %v55
  %v71 = vadd.f32 %v51, %v55
  %v72 = vadd.f32 %v52, %v55
  %v73 = vld [vmem:[%s3] sm:$0xf]
  %v74 = vld [vmem:[%s3 + $0x4] sm:$0xf]
  %v75 = vld [vmem:[%s3 + $0x8] sm:$0xf]
  %v76 = vld [vmem:[%s3 + $0xc] sm:$0xf]
  %v77 = vld [vmem:[%s3 + $0x10] sm:$0xf]
  %v78 = vld [vmem:[%s3 + $0x14] sm:$0xf]
  %v79 = vld [vmem:[%s3 + $0x18] sm:$0xf]
  %v80 = vld [vmem:[%s3 + $0x1c] sm:$0xf]
  %v81 = vld [vmem:[%s3 + $0x20] sm:$0xf]
  %v82 = vld [vmem:[%s3 + $0x24] sm:$0xf]
  %v83 = vld [vmem:[%s3 + $0x28] sm:$0xf]
  %v84 = vld [vmem:[%s3 + $0x2c] sm:$0xf]
  %v85 = vld [vmem:[%s3 + $0x30] sm:$0xf]
  %v86 = vld [vmem:[%s3 + $0x34] sm:$0xf]
  %v87 = vld [vmem:[%s3 + $0x38] sm:$0xf]
  %v88 = vld [vmem:[%s3 + $0x3c] sm:$0xf]
  %v89 = vunpack.c.l.bf16 %v73
  %v90 = vunpack.c.l.bf16 %v74
  %v91 = vunpack.c.l.bf16 %v75
  %v92 = vunpack.c.l.bf16 %v76
  %v93 = vunpack.c.l.bf16 %v77
  %v94 = vunpack.c.l.bf16 %v78
  %v95 = vunpack.c.l.bf16 %v79
  %v96 = vunpack.c.l.bf16 %v80
  %v97 = vunpack.c.l.bf16 %v81
  %v98 = vunpack.c.l.bf16 %v82
  %v99 = vunpack.c.l.bf16 %v83
  %v100 = vunpack.c.l.bf16 %v84
  %v101 = vunpack.c.l.bf16 %v85
  %v102 = vunpack.c.l.bf16 %v86
  %v103 = vunpack.c.l.bf16 %v87
  %v104 = vunpack.c.l.bf16 %v88
  %v105 = vadd.f32 %v57, %v89
  %v106 = vadd.f32 %v58, %v90
  %v107 = vadd.f32 %v59, %v91
  %v108 = vadd.f32 %v60, %v92
  %v109 = vadd.f32 %v61, %v93
  %v110 = vadd.f32 %v62, %v94
  %v111 = vadd.f32 %v63, %v95
  %v112 = vadd.f32 %v64, %v96
  %v113 = vadd.f32 %v65, %v97
  %v114 = vadd.f32 %v66, %v98
  %v115 = vadd.f32 %v67, %v99
  %v116 = vadd.f32 %v68, %v100
  %v117 = vadd.f32 %v69, %v101
  %v118 = vadd.f32 %v70, %v102
  %v119 = vadd.f32 %v71, %v103
  %v120 = vadd.f32 %v72, %v104
  %v121 = vmax.f32 %v105, 0.0
  %v122 = vmax.f32 %v106, 0.0
  %v123 = vmax.f32 %v107, 0.0
  %v124 = vmax.f32 %v108, 0.0
  %v125 = vmax.f32 %v109, 0.0
  %v126 = vmax.f32 %v110, 0.0
  %v127 = vmax.f32 %v111, 0.0
  %v128 = vmax.f32 %v112, 0.0
  %v129 = vmax.f32 %v113, 0.0
  %v130 = vmax.f32 %v114, 0.0
  %v131 = vmax.f32 %v115, 0.0
  %v132 = vmax.f32 %v116, 0.0
  %v133 = vmax.f32 %v117, 0.0
  %v134 = vmax.f32 %v118, 0.0
  %v135 = vmax.f32 %v119, 0.0
  %v136 = vmax.f32 %v120, 0.0
  %v137 = vpack.c.bf16 %v121, %v121
  %v138 = vpack.c.bf16 %v122, %v122
  %v139 = vpack.c.bf16 %v123, %v123
  %v140 = vpack.c.bf16 %v124, %v124
  %v141 = vpack.c.bf16 %v125, %v125
  %v142 = vpack.c.bf16 %v126, %v126
  %v143 = vpack.c.bf16 %v127, %v127
  %v144 = vpack.c.bf16 %v128, %v128
  %v145 = vpack.c.bf16 %v129, %v129
  %v146 = vpack.c.bf16 %v130, %v130
  %v147 = vpack.c.bf16 %v131, %v131
  %v148 = vpack.c.bf16 %v132, %v132
  %v149 = vpack.c.bf16 %v133, %v133
  %v150 = vpack.c.bf16 %v134, %v134
  %v151 = vpack.c.bf16 %v135, %v135
  %v152 = vpack.c.bf16 %v136, %v136
  %vm153 = vcmask 519168
  %154 = vst.msk [vmem:[%s4] sm:$0xf] %vm153, %v137
  %155 = vst.msk [vmem:[%s4 + $0x4] sm:$0xf] %vm153, %v138
  %156 = vst.msk [vmem:[%s4 + $0x8] sm:$0xf] %vm153, %v139
  %157 = vst.msk [vmem:[%s4 + $0xc] sm:$0xf] %vm153, %v140
  %158 = vst.msk [vmem:[%s4 + $0x10] sm:$0xf] %vm153, %v141
  %159 = vst.msk [vmem:[%s4 + $0x14] sm:$0xf] %vm153, %v142
  %160 = vst.msk [vmem:[%s4 + $0x18] sm:$0xf] %vm153, %v143
  %161 = vst.msk [vmem:[%s4 + $0x1c] sm:$0xf] %vm153, %v144
  %162 = vst.msk [vmem:[%s4 + $0x20] sm:$0xf] %vm153, %v145
  %163 = vst.msk [vmem:[%s4 + $0x24] sm:$0xf] %vm153, %v146
  %164 = vst.msk [vmem:[%s4 + $0x28] sm:$0xf] %vm153, %v147
  %165 = vst.msk [vmem:[%s4 + $0x2c] sm:$0xf] %vm153, %v148
  %166 = vst.msk [vmem:[%s4 + $0x30] sm:$0xf] %vm153, %v149
  %167 = vst.msk [vmem:[%s4 + $0x34] sm:$0xf] %vm153, %v150
  %168 = vst.msk [vmem:[%s4 + $0x38] sm:$0xf] %vm153, %v151
  %169 = vst.msk [vmem:[%s4 + $0x3c] sm:$0xf] %vm153, %v152
  // Predicated region
  $region18: #{resnet_forward.68} parent=0 // pred_check
    _
  $region19: #{resnet_forward.68} parent=0 // pred_check_branch
    %171 = sbr.rel (0) target = $region21
  $region20: #{resnet_forward.68} parent=0 // pred_region
    _
  $region21: #{resnet_forward.68} parent=0 // pred_fallthru
    _
  // Predicated region
  $region22: #{resnet_forward.68} parent=0 // pred_check
    _
  $region23: #{resnet_forward.68} parent=0 // pred_check_branch
    %173 = sbr.rel (0) target = $region25
  $region24: #{resnet_forward.68} parent=0 // pred_region
    _
  $region25: #{resnet_forward.68} parent=0 // pred_fallthru
    _

// kernel: resnet_forward.77
$region0: #{resnet_forward.77}
  #allocation0 [shape = 'u32[]', space=smem, size = 0x4, offset = 0x4, fixed_abs, tag = 'smem constant byte address 0x4 - core index']
  #allocation1 [shape = 'u32[72,128]{1,0:T(1,128)}', space=vmem, size = 0x9000, scoped, tag = 'internal scratch']
  %s0 = inlined_call_operand.vmem [shape: bf16[2,64,64], index: 0, kind: input, shape index: {}]
  %s1 = inlined_call_operand.vmem [shape: f32[64,10], index: 1, kind: input, shape index: {}]
  %s2 = inlined_call_operand.vmem [shape: f32[1,10], index: 2, kind: input, shape index: {}]
  %s3 = inlined_call_operand.hbm [shape: f32[2,10], index: 3, kind: output, shape index: {}]
  %s4 = sld [smem:[#allocation0]]
  $region22: #{resnet_forward.77} parent=0
    _
  %s6 = ssub.s32 1, %s4
  %s7 = scalar_select 0, %s6, %s4
  $region1: #{resnet_forward.77} parent=0
    #allocation2 [shape = 'u8[1024]{0}', space=vmem, size = 0x400, scoped, tag = 'output window, operand 0, single buffered']
    #allocation3 [shape = 's32[1]{0}', space=sflag, size = 0x4, scoped, tag = 'scoped memory for resnet_forward.77']
    %8 = vsyncpa [#allocation3], 0
    // Predicated region
    $region2: #{resnet_forward.77} parent=1 // pred_check
      _
    $region3: #{resnet_forward.77} parent=1 // pred_check_branch
      %10 = sbr.rel (0) target = $region5
    $region4: #{resnet_forward.77} parent=1 // pred_region
      _
    $region5: #{resnet_forward.77} parent=1 // pred_fallthru
      _
    // Predicated region
    $region6: #{resnet_forward.77} parent=1 // pred_check
      _
    $region7: #{resnet_forward.77} parent=1 // pred_check_branch
      %12 = sbr.rel (0) target = $region9
    $region8: #{resnet_forward.77} parent=1 // pred_region
      _
    $region9: #{resnet_forward.77} parent=1 // pred_fallthru
      _
    // Predicated region
    $region10: #{resnet_forward.77} parent=1 // pred_check
      _
    $region11: #{resnet_forward.77} parent=1 // pred_check_branch
      %14 = sbr.rel (0) target = $region13
    $region12: #{resnet_forward.77} parent=1 // pred_region
      _
    $region13: #{resnet_forward.77} parent=1 // pred_fallthru
      _
    %v16 = vld [vmem:[%s0] sm:$0xf]
    %v17 = vld [vmem:[%s0 + $0x4] sm:$0xf]
    %v18 = vld [vmem:[%s0 + $0x8] sm:$0xf]
    %v19 = vld [vmem:[%s0 + $0xc] sm:$0xf]
    %v20 = vld [vmem:[%s0 + $0x10] sm:$0xf]
    %v21 = vld [vmem:[%s0 + $0x14] sm:$0xf]
    %v22 = vld [vmem:[%s0 + $0x18] sm:$0xf]
    %v23 = vld [vmem:[%s0 + $0x1c] sm:$0xf]
    %v24 = vld [vmem:[%s0 + $0x20] sm:$0xf]
    %v25 = vld [vmem:[%s0 + $0x24] sm:$0xf]
    %v26 = vld [vmem:[%s0 + $0x28] sm:$0xf]
    %v27 = vld [vmem:[%s0 + $0x2c] sm:$0xf]
    %v28 = vld [vmem:[%s0 + $0x30] sm:$0xf]
    %v29 = vld [vmem:[%s0 + $0x34] sm:$0xf]
    %v30 = vld [vmem:[%s0 + $0x38] sm:$0xf]
    %v31 = vld [vmem:[%s0 + $0x3c] sm:$0xf]
    %v32 = vunpack.c.l.bf16 %v16
    %v33 = vunpack.c.l.bf16 %v17
    %v34 = vunpack.c.l.bf16 %v18
    %v35 = vunpack.c.l.bf16 %v19
    %v36 = vunpack.c.l.bf16 %v20
    %v37 = vunpack.c.l.bf16 %v21
    %v38 = vunpack.c.l.bf16 %v22
    %v39 = vunpack.c.l.bf16 %v23
    %v40 = vunpack.c.l.bf16 %v24
    %v41 = vunpack.c.l.bf16 %v25
    %v42 = vunpack.c.l.bf16 %v26
    %v43 = vunpack.c.l.bf16 %v27
    %v44 = vunpack.c.l.bf16 %v28
    %v45 = vunpack.c.l.bf16 %v29
    %v46 = vunpack.c.l.bf16 %v30
    %v47 = vunpack.c.l.bf16 %v31
    %vm48 = vcmask 523264
    %v49 = vsel %vm48, %v32, 0.0
    %v50 = vsel %vm48, %v33, 0.0
    %v51 = vadd.f32 %v49, %v50
    %v52 = vsel %vm48, %v34, 0.0
    %v53 = vadd.f32 %v51, %v52
    %v54 = vsel %vm48, %v35, 0.0
    %v55 = vadd.f32 %v53, %v54
    %v56 = vsel %vm48, %v36, 0.0
    %v57 = vadd.f32 %v55, %v56
    %v58 = vsel %vm48, %v37, 0.0
    %v59 = vadd.f32 %v57, %v58
    %v60 = vsel %vm48, %v38, 0.0
    %v61 = vadd.f32 %v59, %v60
    %v62 = vsel %vm48, %v39, 0.0
    %v63 = vadd.f32 %v61, %v62
    %v64 = vrot.slane %v63, 4
    %v65 = vadd.f32 %v63, %v64
    %v66 = vrot.slane %v65, 2
    %v67 = vadd.f32 %v65, %v66
    %v68 = vrot.slane %v67, 1
    %v69 = vadd.f32 %v67, %v68
    %v70 = vsel %vm48, %v40, 0.0
    %v71 = vsel %vm48, %v41, 0.0
    %v72 = vadd.f32 %v70, %v71
    %v73 = vsel %vm48, %v42, 0.0
    %v74 = vadd.f32 %v72, %v73
    %v75 = vsel %vm48, %v43, 0.0
    %v76 = vadd.f32 %v74, %v75
    %v77 = vsel %vm48, %v44, 0.0
    %v78 = vadd.f32 %v76, %v77
    %v79 = vsel %vm48, %v45, 0.0
    %v80 = vadd.f32 %v78, %v79
    %v81 = vsel %vm48, %v46, 0.0
    %v82 = vadd.f32 %v80, %v81
    %v83 = vsel %vm48, %v47, 0.0
    %v84 = vadd.f32 %v82, %v83
    %v85 = vrot.slane %v84, 4
    %v86 = vadd.f32 %v84, %v85
    %v87 = vrot.slane %v86, 2
    %v88 = vadd.f32 %v86, %v87
    %v89 = vrot.slane %v88, 1
    %v90 = vadd.f32 %v88, %v89
    %v91 = vrcp.pop 64.0
    %v92 = vmul.f32 64.0, %v91
    %v93 = vsub.f32 1.0, %v92
    %v94 = vmul.f32 %v91, %v93
    %v95 = vadd.f32 %v91, %v94
    %vm96 = vweird.f32 %v91
    %v97 = vsel %vm96, %v91, %v95
    %v98 = vmul.f32 %v69, %v97
    %v99 = vmul.f32 %v90, %v97
    %v100 = vpack.c.bf16 %v98, %v98
    %v101 = vpack.c.bf16 %v99, %v99
    %v102 = vld [vmem:[%s1] sm:$0xff]
    %v103 = vld [vmem:[%s1 + $0x8] sm:$0xff]
    %v104 = vld [vmem:[%s1 + $0x10] sm:$0xff]
    %v105 = vld [vmem:[%s1 + $0x18] sm:$0xff]
    %v106 = vld [vmem:[%s1 + $0x20] sm:$0xff]
    %v107 = vld [vmem:[%s1 + $0x28] sm:$0xff]
    %v108 = vld [vmem:[%s1 + $0x30] sm:$0xff]
    %v109 = vld [vmem:[%s1 + $0x38] sm:$0xff]
    %v110 = vpack.c.bf16 %v103, %v102
    %v111 = vpack.c.bf16 %v105, %v104
    %v112 = vpack.c.bf16 %v107, %v106
    %v113 = vpack.c.bf16 %v109, %v108
    %v114 = vld [vmem:[%s2] sm:$0x1]
    %v116 = vperm.slane %v114, 0
    %v120 = vunpack.c.l.b16 %v100
    %v121 = vunpack.c.l.b16 %v101
    %vm122 = vcmask 1041409
    %v123 = vsel %vm122, %v121, %v120
    %v124 = vpack.c.b16 %v123, %v123
    %v126 = vsel %vm48, %v124, 0
    %128 = vmatpush.bf16.msra.mxu0 0
    %129 = vmatpush.bf16.msra.mxu0 0
    %130 = vmatpush.bf16.msra.mxu0 0
    %131 = vmatpush.bf16.msra.mxu0 0
    %132 = vmatpush.bf16.msra.mxu0 %v113
    %133 = vmatpush.bf16.msra.mxu0 %v112
    %134 = vmatpush.bf16.msra.mxu0 %v111
    %135 = vmatpush.bf16.msra.mxu0 %v110
    %136 = vmatmul.bf16.gmra.mxu0 %v126
    %v137 = vpop.f32.mrf.mxu0
    %v138 = vadd.f32 %v116, %v137
    %v139 = vpop.f32.mrf.mxu0
    %140 = vdwg.mxu0
    %vm141 = vcmask 74752
    %142 = vst.msk [vmem:[#allocation2] sm:$0x3] %vm141, %v138
    // Predicated region
    $region14: #{resnet_forward.77} parent=1 // pred_check
      _
    $region15: #{resnet_forward.77} parent=1 // pred_check_branch
      %144 = sbr.rel (0) target = $region17
    $region16: #{resnet_forward.77} parent=1 // pred_region
      %146 = vsyncadd [#allocation3], 0
      %s148 = sshll.u32 [#allocation2], 4
      %s149 = int_to_ptr.vmem [resolvable:$true] %s148
      %s150 = sshll.u32 %s3, 4
      %s151 = int_to_ptr.hbm [resolvable:$true] %s150
      %153 = dma.vmem_to_hbm [thread:$0]  %s149, 32, %s151, [#allocation3]
    $region17: #{resnet_forward.77} parent=1 // pred_fallthru
      _
    // Predicated region
    $region18: #{resnet_forward.77} parent=1 // pred_check
      _
    $region19: #{resnet_forward.77} parent=1 // pred_check_branch
      %155 = sbr.rel (0) target = $region21
    $region20: #{resnet_forward.77} parent=1 // pred_region
      %157 = dma.done [#allocation3], 32
    $region21: #{resnet_forward.77} parent=1 // pred_fallthru
      _
    %158 = vsyncpa [#allocation3], 1

</llo_original>
